<compile_context>
chip_gen: v7x
topology: tpu7x:2x2x1
jax: 0.10.0
libtpu: 0.0.40
codegen_flags: <defaults>
</compile_context>

<pallas_src>
import numpy as np
import jax
import jax.numpy as jnp
from jax.experimental import pallas as pl
from jax.experimental.pallas import tpu as pltpu

WINDOW_SIZE = 11
SIGMA = 1.5  # `mu` arg of create_window is actually the gaussian sigma


def _gaussian_1d(window_size=WINDOW_SIZE, sigma=SIGMA):
    # same math as gaussian() in the PyTorch module
    g = np.array(
        [np.exp(-((x - window_size // 2) ** 2) / (2.0 * sigma ** 2))
         for x in range(window_size)],
        dtype=np.float64,
    )
    return g / g.sum()


_W1D = _gaussian_1d()
_W2D = np.outer(_W1D, _W1D).astype(np.float32)     # 2-D window (reference only)


def _band_matrices(H, W, taps, pad):
    """T_v (H,H), T_h (W,W) so that blur(X) = T_v @ X @ T_h reproduces the
    zero-padded 2-D Gaussian convolution (padding encoded in the band)."""
    K = len(taps)
    tv = np.zeros((H, H), np.float32)
    for i in range(H):
        for k in range(K):
            r = i + k - pad
            if 0 <= r < H:
                tv[i, r] = taps[k]
    th = np.zeros((W, W), np.float32)
    for j in range(W):
        for k in range(K):
            c = j + k - pad
            if 0 <= c < W:
                th[c, j] = taps[k]
    return tv, th


def _vmem_capacity_bytes():
    try:
        info = pltpu.get_tpu_info()
        cap = getattr(info, "vmem_capacity_bytes", None)
        if cap:
            return int(cap)
    except Exception:
        pass
    return 64 * 2 ** 20   # conservative fallback (v7x per-TC VMEM)


def _ssim_kernel(tv_ref, th_ref, x1_ref, x2_ref, o_ref):
    """tv:(H,H) th:(W,W) banded Gaussian; x1,x2,o: (P,H,W) plane blocks."""
    P = x1_ref.shape[0]
    tv = tv_ref[...]
    th = th_ref[...]
    prec = jax.lax.Precision.HIGHEST
    C1 = 0.01 ** 2
    C2 = 0.03 ** 2

    def blur(x):  # (H, W) -> (H, W) on the MXU
        y = jnp.dot(tv, x, preferred_element_type=jnp.float32, precision=prec)
        return jnp.dot(y, th, preferred_element_type=jnp.float32, precision=prec)

    # Planes processed sequentially; each product is formed right before its
    # blur so at most one (H, W) product is live at a time.
    for p in range(P):
        a = x1_ref[p]
        b = x2_ref[p]
        mu1 = blur(a)
        mu2 = blur(b)
        m11 = blur(a * a)
        m22 = blur(b * b)
        m12 = blur(a * b)

        mu1_sq = mu1 * mu1
        mu2_sq = mu2 * mu2
        mu1_mu2 = mu1 * mu2
        sigma1_sq = m11 - mu1_sq
        sigma2_sq = m22 - mu2_sq
        sigma12 = m12 - mu1_mu2

        num = (2.0 * mu1_mu2 + C1) * (2.0 * sigma12 + C2)
        den = (mu1_sq + mu2_sq + C1) * (sigma1_sq + sigma2_sq + C2)
        o_ref[p] = (num / den).astype(o_ref.dtype)


def ssim_pallas(img1, img2, window_size=WINDOW_SIZE):
    """Returns the per-pixel SSIM map, shape (N, C, H, W), like SSIM.forward."""
    assert img1.shape == img2.shape
    N, C, H, W = img1.shape
    pad = window_size // 2
    NC = N * C

    x1 = img1.astype(jnp.float32).reshape(NC, H, W)
    x2 = img2.astype(jnp.float32).reshape(NC, H, W)

    taps = _gaussian_1d(window_size, SIGMA)
    tv_np, th_np = _band_matrices(H, W, taps, pad)
    tv = jnp.asarray(tv_np)
    th = jnp.asarray(th_np)

    # ---- VMEM-derived plane tiling --------------------------------------
    vmem_cap = _vmem_capacity_bytes()
    plane_bytes = H * W * 4
    live_factor = 13          # 2 inputs (x2 buffers) + output (x2) + ~7 temps
    budget = int(0.30 * vmem_cap)
    tile_p = max(1, budget // max(1, plane_bytes * live_factor))
    tile_p = min(tile_p, NC)
    if NC >= 4:
        tile_p = min(tile_p, NC // 4)   # >= 4 grid steps (>= 2 per core on v7x)
    elif NC >= 2:
        tile_p = min(tile_p, NC // 2)
    tile_p = max(1, tile_p)
    grid = (pl.cdiv(NC, tile_p),)

    band_bytes = 2 * (H * H + W * W) * 4                  # tv + th, x2 buffers
    need = (2 * 2 * tile_p * plane_bytes                  # x1, x2 (x2 buffers)
            + 2 * tile_p * plane_bytes                    # output (x2 buffers)
            + 9 * tile_p * plane_bytes                    # live temporaries
            + band_bytes)
    vmem_limit = int(min(0.85 * vmem_cap, max(32 * 2 ** 20, int(1.5 * need))))
    vmem_limit = max(vmem_limit, need)

    out = pl.pallas_call(
        _ssim_kernel,
        out_shape=jax.ShapeDtypeStruct((NC, H, W), jnp.float32),
        grid=grid,
        in_specs=[
            pl.BlockSpec((H, H), lambda i: (0, 0)),
            pl.BlockSpec((W, W), lambda i: (0, 0)),
            pl.BlockSpec((tile_p, H, W), lambda i: (i, 0, 0)),
            pl.BlockSpec((tile_p, H, W), lambda i: (i, 0, 0)),
        ],
        out_specs=pl.BlockSpec((tile_p, H, W), lambda i: (i, 0, 0)),
        compiler_params=pltpu.CompilerParams(
            dimension_semantics=("parallel",),
            vmem_limit_bytes=vmem_limit),
    )(tv, th, x1, x2)
    return out.reshape(N, C, H, W)


def ssim_ref(img1, img2, window_size=WINDOW_SIZE):
    """Pure-JAX reference (mirrors _ssim with F.conv2d groups=C)."""
    N, C, H, W = img1.shape
    pad = window_size // 2
    w = jnp.tile(jnp.asarray(_W2D)[None, None], (C, 1, 1, 1))  # (C,1,K,K)

    def conv(x):
        return jax.lax.conv_general_dilated(
            x, w, (1, 1), [(pad, pad), (pad, pad)],
            feature_group_count=C,
            dimension_numbers=("NCHW", "OIHW", "NCHW"),
            precision=jax.lax.Precision.HIGHEST)

    mu1, mu2 = conv(img1), conv(img2)
    mu1_sq, mu2_sq, mu1_mu2 = mu1 * mu1, mu2 * mu2, mu1 * mu2
    s1 = conv(img1 * img1) - mu1_sq
    s2 = conv(img2 * img2) - mu2_sq
    s12 = conv(img1 * img2) - mu1_mu2
    C1, C2 = 0.01 ** 2, 0.03 ** 2
    return ((2 * mu1_mu2 + C1) * (2 * s12 + C2)) / (
        (mu1_sq + mu2_sq + C1) * (s1 + s2 + C2))


if __name__ == "__main__":
    key = jax.random.PRNGKey(0)
    k1, k2 = jax.random.split(key)
    img1 = jax.random.uniform(k1, (2, 4, 16, 16), dtype=jnp.float32)
    img2 = jax.random.uniform(k2, (2, 4, 16, 16), dtype=jnp.float32)

    out = ssim_pallas(img1, img2)
    jax.block_until_ready(out)

    ref = ssim_ref(img1, img2)
    assert out.shape == (2, 4, 16, 16)
    np.testing.assert_allclose(np.asarray(out), np.asarray(ref),
                               rtol=1e-4, atol=1e-4)
    print("KERNEL_OK")
</pallas_src>

<mosaic_0001>
module attributes {stable_mosaic.version = 11 : i64} {
  func.func @_ssim_kernel(%arg0: i32, %arg1: memref<16x16xf32, #tpu.memory_space<vmem>>, %arg2: memref<16x16xf32, #tpu.memory_space<vmem>>, %arg3: memref<2x16x16xf32, #tpu.memory_space<vmem>>, %arg4: memref<2x16x16xf32, #tpu.memory_space<vmem>>, %arg5: memref<2x16x16xf32, #tpu.memory_space<vmem>>) attributes {dimension_semantics = [#tpu.dimension_semantics<parallel>], iteration_bounds = array<i64: 4>, scalar_prefetch = 0 : i64, scratch_operands = 0 : i64, tpu.core_type = #tpu.core_type<tc>, window_params = [{pipeline_mode = #tpu.pipeline_mode<synchronous>, transform_indices = @transform_0, window_bounds = array<i64: 16, 16>}, {pipeline_mode = #tpu.pipeline_mode<synchronous>, transform_indices = @transform_1, window_bounds = array<i64: 16, 16>}, {transform_indices = @transform_2, window_bounds = array<i64: 2, 16, 16>}, {transform_indices = @transform_3, window_bounds = array<i64: 2, 16, 16>}, {transform_indices = @transform_4, window_bounds = array<i64: 2, 16, 16>}]} {
    %c0 = arith.constant 0 : index
    %c0_0 = arith.constant 0 : index
    %0 = vector.load %arg1[%c0, %c0_0] : memref<16x16xf32, #tpu.memory_space<vmem>>, vector<16x16xf32>
    %c0_1 = arith.constant 0 : index
    %c0_2 = arith.constant 0 : index
    %1 = vector.load %arg2[%c0_1, %c0_2] : memref<16x16xf32, #tpu.memory_space<vmem>>, vector<16x16xf32>
    %c0_3 = arith.constant 0 : index
    %c0_4 = arith.constant 0 : index
    %c0_5 = arith.constant 0 : index
    %2 = vector.load %arg3[%c0_3, %c0_4, %c0_5] : memref<2x16x16xf32, #tpu.memory_space<vmem>>, vector<1x16x16xf32>
    %3 = vector.shape_cast %2 : vector<1x16x16xf32> to vector<16x16xf32>
    %c0_6 = arith.constant 0 : index
    %c0_7 = arith.constant 0 : index
    %c0_8 = arith.constant 0 : index
    %4 = vector.load %arg4[%c0_6, %c0_7, %c0_8] : memref<2x16x16xf32, #tpu.memory_space<vmem>>, vector<1x16x16xf32>
    %5 = vector.shape_cast %4 : vector<1x16x16xf32> to vector<16x16xf32>
    %cst = arith.constant dense<0.000000e+00> : vector<16x16xf32>
    %6 = tpu.matmul %0, %3, %cst {dimension_numbers = #tpu.dot_dimension_numbers<[1], [0], [0], [1], [0, 0, 1, 1], [], []>, precision = #tpu.contract_precision<fp32>} : vector<16x16xf32>, vector<16x16xf32>, vector<16x16xf32> -> vector<16x16xf32>
    %cst_9 = arith.constant dense<0.000000e+00> : vector<16x16xf32>
    %7 = tpu.matmul %6, %1, %cst_9 {dimension_numbers = #tpu.dot_dimension_numbers<[1], [0], [0], [1], [0, 0, 1, 1], [], []>, precision = #tpu.contract_precision<fp32>} : vector<16x16xf32>, vector<16x16xf32>, vector<16x16xf32> -> vector<16x16xf32>
    %cst_10 = arith.constant dense<0.000000e+00> : vector<16x16xf32>
    %8 = tpu.matmul %0, %5, %cst_10 {dimension_numbers = #tpu.dot_dimension_numbers<[1], [0], [0], [1], [0, 0, 1, 1], [], []>, precision = #tpu.contract_precision<fp32>} : vector<16x16xf32>, vector<16x16xf32>, vector<16x16xf32> -> vector<16x16xf32>
    %cst_11 = arith.constant dense<0.000000e+00> : vector<16x16xf32>
    %9 = tpu.matmul %8, %1, %cst_11 {dimension_numbers = #tpu.dot_dimension_numbers<[1], [0], [0], [1], [0, 0, 1, 1], [], []>, precision = #tpu.contract_precision<fp32>} : vector<16x16xf32>, vector<16x16xf32>, vector<16x16xf32> -> vector<16x16xf32>
    %10 = arith.mulf %3, %3 : vector<16x16xf32>
    %cst_12 = arith.constant dense<0.000000e+00> : vector<16x16xf32>
    %11 = tpu.matmul %0, %10, %cst_12 {dimension_numbers = #tpu.dot_dimension_numbers<[1], [0], [0], [1], [0, 0, 1, 1], [], []>, precision = #tpu.contract_precision<fp32>} : vector<16x16xf32>, vector<16x16xf32>, vector<16x16xf32> -> vector<16x16xf32>
    %cst_13 = arith.constant dense<0.000000e+00> : vector<16x16xf32>
    %12 = tpu.matmul %11, %1, %cst_13 {dimension_numbers = #tpu.dot_dimension_numbers<[1], [0], [0], [1], [0, 0, 1, 1], [], []>, precision = #tpu.contract_precision<fp32>} : vector<16x16xf32>, vector<16x16xf32>, vector<16x16xf32> -> vector<16x16xf32>
    %13 = arith.mulf %5, %5 : vector<16x16xf32>
    %cst_14 = arith.constant dense<0.000000e+00> : vector<16x16xf32>
    %14 = tpu.matmul %0, %13, %cst_14 {dimension_numbers = #tpu.dot_dimension_numbers<[1], [0], [0], [1], [0, 0, 1, 1], [], []>, precision = #tpu.contract_precision<fp32>} : vector<16x16xf32>, vector<16x16xf32>, vector<16x16xf32> -> vector<16x16xf32>
    %cst_15 = arith.constant dense<0.000000e+00> : vector<16x16xf32>
    %15 = tpu.matmul %14, %1, %cst_15 {dimension_numbers = #tpu.dot_dimension_numbers<[1], [0], [0], [1], [0, 0, 1, 1], [], []>, precision = #tpu.contract_precision<fp32>} : vector<16x16xf32>, vector<16x16xf32>, vector<16x16xf32> -> vector<16x16xf32>
    %16 = arith.mulf %3, %5 : vector<16x16xf32>
    %cst_16 = arith.constant dense<0.000000e+00> : vector<16x16xf32>
    %17 = tpu.matmul %0, %16, %cst_16 {dimension_numbers = #tpu.dot_dimension_numbers<[1], [0], [0], [1], [0, 0, 1, 1], [], []>, precision = #tpu.contract_precision<fp32>} : vector<16x16xf32>, vector<16x16xf32>, vector<16x16xf32> -> vector<16x16xf32>
    %cst_17 = arith.constant dense<0.000000e+00> : vector<16x16xf32>
    %18 = tpu.matmul %17, %1, %cst_17 {dimension_numbers = #tpu.dot_dimension_numbers<[1], [0], [0], [1], [0, 0, 1, 1], [], []>, precision = #tpu.contract_precision<fp32>} : vector<16x16xf32>, vector<16x16xf32>, vector<16x16xf32> -> vector<16x16xf32>
    %19 = arith.mulf %7, %7 : vector<16x16xf32>
    %20 = arith.mulf %9, %9 : vector<16x16xf32>
    %21 = arith.mulf %7, %9 : vector<16x16xf32>
    %22 = arith.subf %12, %19 : vector<16x16xf32>
    %23 = arith.subf %15, %20 : vector<16x16xf32>
    %24 = arith.subf %18, %21 : vector<16x16xf32>
    %cst_18 = arith.constant 2.000000e+00 : f32
    %25 = vector.broadcast %cst_18 : f32 to vector<16x16xf32>
    %26 = arith.mulf %25, %21 : vector<16x16xf32>
    %cst_19 = arith.constant 9.99999974E-5 : f32
    %27 = vector.broadcast %cst_19 : f32 to vector<16x16xf32>
    %28 = arith.addf %26, %27 : vector<16x16xf32>
    %cst_20 = arith.constant 2.000000e+00 : f32
    %29 = vector.broadcast %cst_20 : f32 to vector<16x16xf32>
    %30 = arith.mulf %29, %24 : vector<16x16xf32>
    %cst_21 = arith.constant 8.99999984E-4 : f32
    %31 = vector.broadcast %cst_21 : f32 to vector<16x16xf32>
    %32 = arith.addf %30, %31 : vector<16x16xf32>
    %33 = arith.mulf %28, %32 : vector<16x16xf32>
    %34 = arith.addf %19, %20 : vector<16x16xf32>
    %cst_22 = arith.constant 9.99999974E-5 : f32
    %35 = vector.broadcast %cst_22 : f32 to vector<16x16xf32>
    %36 = arith.addf %34, %35 : vector<16x16xf32>
    %37 = arith.addf %22, %23 : vector<16x16xf32>
    %cst_23 = arith.constant 8.99999984E-4 : f32
    %38 = vector.broadcast %cst_23 : f32 to vector<16x16xf32>
    %39 = arith.addf %37, %38 : vector<16x16xf32>
    %40 = arith.mulf %36, %39 : vector<16x16xf32>
    %41 = arith.divf %33, %40 : vector<16x16xf32>
    %c0_24 = arith.constant 0 : index
    %c0_25 = arith.constant 0 : index
    %c0_26 = arith.constant 0 : index
    %42 = vector.load %arg5[%c0_24, %c0_25, %c0_26] : memref<2x16x16xf32, #tpu.memory_space<vmem>>, vector<1x16x16xf32>
    %43 = vector.shape_cast %42 : vector<1x16x16xf32> to vector<16x16xf32>
    %44 = vector.shape_cast %41 : vector<16x16xf32> to vector<1x16x16xf32>
    tpu.vector_store %arg5[%c0_24, %c0_25, %c0_26], %44 {strides = array<i32>} : memref<2x16x16xf32, #tpu.memory_space<vmem>>, vector<1x16x16xf32>,
    %c1 = arith.constant 1 : index
    %c0_27 = arith.constant 0 : index
    %c0_28 = arith.constant 0 : index
    %45 = vector.load %arg3[%c1, %c0_27, %c0_28] : memref<2x16x16xf32, #tpu.memory_space<vmem>>, vector<1x16x16xf32>
    %46 = vector.shape_cast %45 : vector<1x16x16xf32> to vector<16x16xf32>
    %c1_29 = arith.constant 1 : index
    %c0_30 = arith.constant 0 : index
    %c0_31 = arith.constant 0 : index
    %47 = vector.load %arg4[%c1_29, %c0_30, %c0_31] : memref<2x16x16xf32, #tpu.memory_space<vmem>>, vector<1x16x16xf32>
    %48 = vector.shape_cast %47 : vector<1x16x16xf32> to vector<16x16xf32>
    %cst_32 = arith.constant dense<0.000000e+00> : vector<16x16xf32>
    %49 = tpu.matmul %0, %46, %cst_32 {dimension_numbers = #tpu.dot_dimension_numbers<[1], [0], [0], [1], [0, 0, 1, 1], [], []>, precision = #tpu.contract_precision<fp32>} : vector<16x16xf32>, vector<16x16xf32>, vector<16x16xf32> -> vector<16x16xf32>
    %cst_33 = arith.constant dense<0.000000e+00> : vector<16x16xf32>
    %50 = tpu.matmul %49, %1, %cst_33 {dimension_numbers = #tpu.dot_dimension_numbers<[1], [0], [0], [1], [0, 0, 1, 1], [], []>, precision = #tpu.contract_precision<fp32>} : vector<16x16xf32>, vector<16x16xf32>, vector<16x16xf32> -> vector<16x16xf32>
    %cst_34 = arith.constant dense<0.000000e+00> : vector<16x16xf32>
    %51 = tpu.matmul %0, %48, %cst_34 {dimension_numbers = #tpu.dot_dimension_numbers<[1], [0], [0], [1], [0, 0, 1, 1], [], []>, precision = #tpu.contract_precision<fp32>} : vector<16x16xf32>, vector<16x16xf32>, vector<16x16xf32> -> vector<16x16xf32>
    %cst_35 = arith.constant dense<0.000000e+00> : vector<16x16xf32>
    %52 = tpu.matmul %51, %1, %cst_35 {dimension_numbers = #tpu.dot_dimension_numbers<[1], [0], [0], [1], [0, 0, 1, 1], [], []>, precision = #tpu.contract_precision<fp32>} : vector<16x16xf32>, vector<16x16xf32>, vector<16x16xf32> -> vector<16x16xf32>
    %53 = arith.mulf %46, %46 : vector<16x16xf32>
    %cst_36 = arith.constant dense<0.000000e+00> : vector<16x16xf32>
    %54 = tpu.matmul %0, %53, %cst_36 {dimension_numbers = #tpu.dot_dimension_numbers<[1], [0], [0], [1], [0, 0, 1, 1], [], []>, precision = #tpu.contract_precision<fp32>} : vector<16x16xf32>, vector<16x16xf32>, vector<16x16xf32> -> vector<16x16xf32>
    %cst_37 = arith.constant dense<0.000000e+00> : vector<16x16xf32>
    %55 = tpu.matmul %54, %1, %cst_37 {dimension_numbers = #tpu.dot_dimension_numbers<[1], [0], [0], [1], [0, 0, 1, 1], [], []>, precision = #tpu.contract_precision<fp32>} : vector<16x16xf32>, vector<16x16xf32>, vector<16x16xf32> -> vector<16x16xf32>
    %56 = arith.mulf %48, %48 : vector<16x16xf32>
    %cst_38 = arith.constant dense<0.000000e+00> : vector<16x16xf32>
    %57 = tpu.matmul %0, %56, %cst_38 {dimension_numbers = #tpu.dot_dimension_numbers<[1], [0], [0], [1], [0, 0, 1, 1], [], []>, precision = #tpu.contract_precision<fp32>} : vector<16x16xf32>, vector<16x16xf32>, vector<16x16xf32> -> vector<16x16xf32>
    %cst_39 = arith.constant dense<0.000000e+00> : vector<16x16xf32>
    %58 = tpu.matmul %57, %1, %cst_39 {dimension_numbers = #tpu.dot_dimension_numbers<[1], [0], [0], [1], [0, 0, 1, 1], [], []>, precision = #tpu.contract_precision<fp32>} : vector<16x16xf32>, vector<16x16xf32>, vector<16x16xf32> -> vector<16x16xf32>
    %59 = arith.mulf %46, %48 : vector<16x16xf32>
    %cst_40 = arith.constant dense<0.000000e+00> : vector<16x16xf32>
    %60 = tpu.matmul %0, %59, %cst_40 {dimension_numbers = #tpu.dot_dimension_numbers<[1], [0], [0], [1], [0, 0, 1, 1], [], []>, precision = #tpu.contract_precision<fp32>} : vector<16x16xf32>, vector<16x16xf32>, vector<16x16xf32> -> vector<16x16xf32>
    %cst_41 = arith.constant dense<0.000000e+00> : vector<16x16xf32>
    %61 = tpu.matmul %60, %1, %cst_41 {dimension_numbers = #tpu.dot_dimension_numbers<[1], [0], [0], [1], [0, 0, 1, 1], [], []>, precision = #tpu.contract_precision<fp32>} : vector<16x16xf32>, vector<16x16xf32>, vector<16x16xf32> -> vector<16x16xf32>
    %62 = arith.mulf %50, %50 : vector<16x16xf32>
    %63 = arith.mulf %52, %52 : vector<16x16xf32>
    %64 = arith.mulf %50, %52 : vector<16x16xf32>
    %65 = arith.subf %55, %62 : vector<16x16xf32>
    %66 = arith.subf %58, %63 : vector<16x16xf32>
    %67 = arith.subf %61, %64 : vector<16x16xf32>
    %cst_42 = arith.constant 2.000000e+00 : f32
    %68 = vector.broadcast %cst_42 : f32 to vector<16x16xf32>
    %69 = arith.mulf %68, %64 : vector<16x16xf32>
    %cst_43 = arith.constant 9.99999974E-5 : f32
    %70 = vector.broadcast %cst_43 : f32 to vector<16x16xf32>
    %71 = arith.addf %69, %70 : vector<16x16xf32>
    %cst_44 = arith.constant 2.000000e+00 : f32
    %72 = vector.broadcast %cst_44 : f32 to vector<16x16xf32>
    %73 = arith.mulf %72, %67 : vector<16x16xf32>
    %cst_45 = arith.constant 8.99999984E-4 : f32
    %74 = vector.broadcast %cst_45 : f32 to vector<16x16xf32>
    %75 = arith.addf %73, %74 : vector<16x16xf32>
    %76 = arith.mulf %71, %75 : vector<16x16xf32>
    %77 = arith.addf %62, %63 : vector<16x16xf32>
    %cst_46 = arith.constant 9.99999974E-5 : f32
    %78 = vector.broadcast %cst_46 : f32 to vector<16x16xf32>
    %79 = arith.addf %77, %78 : vector<16x16xf32>
    %80 = arith.addf %65, %66 : vector<16x16xf32>
    %cst_47 = arith.constant 8.99999984E-4 : f32
    %81 = vector.broadcast %cst_47 : f32 to vector<16x16xf32>
    %82 = arith.addf %80, %81 : vector<16x16xf32>
    %83 = arith.mulf %79, %82 : vector<16x16xf32>
    %84 = arith.divf %76, %83 : vector<16x16xf32>
    %c1_48 = arith.constant 1 : index
    %c0_49 = arith.constant 0 : index
    %c0_50 = arith.constant 0 : index
    %85 = vector.load %arg5[%c1_48, %c0_49, %c0_50] : memref<2x16x16xf32, #tpu.memory_space<vmem>>, vector<1x16x16xf32>
    %86 = vector.shape_cast %85 : vector<1x16x16xf32> to vector<16x16xf32>
    %87 = vector.shape_cast %84 : vector<16x16xf32> to vector<1x16x16xf32>
    tpu.vector_store %arg5[%c1_48, %c0_49, %c0_50], %87 {strides = array<i32>} : memref<2x16x16xf32, #tpu.memory_space<vmem>>, vector<1x16x16xf32>,
    return
  }
  func.func @transform_0(%arg0: i32) -> (i32, i32) {
    %c0_i32 = arith.constant 0 : i32
    %c0_i32_0 = arith.constant 0 : i32
    %c0_i32_1 = arith.constant 0 : i32
    return %c0_i32, %c0_i32_0 : i32, i32
  }
  func.func @transform_1(%arg0: i32) -> (i32, i32) {
    %c0_i32 = arith.constant 0 : i32
    %c0_i32_0 = arith.constant 0 : i32
    %c0_i32_1 = arith.constant 0 : i32
    return %c0_i32, %c0_i32_0 : i32, i32
  }
  func.func @transform_2(%arg0: i32) -> (i32, i32, i32) {
    %c0_i32 = arith.constant 0 : i32
    %c0_i32_0 = arith.constant 0 : i32
    %c0_i32_1 = arith.constant 0 : i32
    return %arg0, %c0_i32, %c0_i32_0 : i32, i32, i32
  }
  func.func @transform_3(%arg0: i32) -> (i32, i32, i32) {
    %c0_i32 = arith.constant 0 : i32
    %c0_i32_0 = arith.constant 0 : i32
    %c0_i32_1 = arith.constant 0 : i32
    return %arg0, %c0_i32, %c0_i32_0 : i32, i32, i32
  }
  func.func @transform_4(%arg0: i32) -> (i32, i32, i32) {
    %c0_i32 = arith.constant 0 : i32
    %c0_i32_0 = arith.constant 0 : i32
    %c0_i32_1 = arith.constant 0 : i32
    return %arg0, %c0_i32, %c0_i32_0 : i32, i32, i32
  }
}

</mosaic_0001>

<llo_original>
// kernel: tpu_custom_call.1
$region0: #{tpu_custom_call.1}
  #allocation0 [shape = 'u32[]', space=smem, size = 0x4, offset = 0x4, fixed_abs, tag = 'smem constant byte address 0x4 - core index']
  #allocation1 [shape = 'u32[144,128]{1,0:T(1,128)}', space=vmem, size = 0x12000, scoped, tag = 'internal scratch']
  %s0 = inlined_call_operand.hbm [shape: f32[16,16], index: 0, kind: input, shape index: {}]
  %s1 = inlined_call_operand.hbm [shape: f32[16,16], index: 1, kind: input, shape index: {}]
  %s2 = inlined_call_operand.hbm [shape: f32[8,16,16], index: 2, kind: input, shape index: {}]
  %s3 = inlined_call_operand.hbm [shape: f32[8,16,16], index: 3, kind: input, shape index: {}]
  %s4 = inlined_call_operand.hbm [shape: f32[8,16,16], index: 4, kind: output, shape index: {}]
  %s5 = sld [smem:[#allocation0]]
  $region65: #{tpu_custom_call.1} parent=0
    _
  %s7 = ssub.s32 1, %s5
  %s8 = scalar_select 0, %s7, %s5
  $region1: #{tpu_custom_call.1} parent=0
    #allocation2 [shape = 'u8[8192]{0}', space=vmem, size = 0x2000, scoped, tag = 'input window, operand 0, single buffered']
    #allocation3 [shape = 's32[2]{0}', space=sflag, size = 0x8, scoped, tag = 'scoped memory for tpu_custom_call.1']
    #allocation4 [shape = 's32[2]{0}', space=sflag, size = 0x8, scoped, tag = 'scoped memory for tpu_custom_call.1']
    #allocation5 [shape = 'u8[8192]{0}', space=vmem, size = 0x2000, scoped, tag = 'input window, operand 1, single buffered']
    #allocation6 [shape = 's32[1]{0}', space=sflag, size = 0x4, scoped, tag = 'scoped memory for tpu_custom_call.1']
    #allocation7 [shape = 'u8[32768]{0}', space=vmem, size = 0x8000, scoped, tag = 'input window, operand 2']
    #allocation8 [shape = 'u8[32768]{0}', space=vmem, size = 0x8000, scoped, tag = 'input window, operand 3']
    #allocation9 [shape = 'u8[32768]{0}', space=vmem, size = 0x8000, scoped, tag = 'output window, operand 0']
    %9 = vsyncpa [#allocation3], 0
    %10 = vsyncpa [#allocation6], 0
    %11 = vsyncpa [#allocation4], 0
    %s12 = scalar_lea.sflag [#allocation4], 1
    %13 = vsyncpa %s12, 0
    loop: start=0, step=1, limit=6
    $region2: #{tpu_custom_call.1} parent=1 // loop_pre_header
      _
    $region3: #{tpu_custom_call.1} parent=1 // loop_header
      %s15 = sphi 0, %s19
      %p16 = scmp.ge.s32.totalorder %s15, 6
      %s23 = sphi 0, %s23
      %s25 = sphi 0, %s23
      %s26 = sphi 0, %s25
      %s40 = sphi 0, %s26
      %s44 = sphi 0, %s44
      %s46 = sphi 0, %s44
      %s47 = sphi 0, %s46
      %s61 = sphi 0, %s47
      %s67 = sphi 0, %s69
      %s70 = sphi 0, %s67
      %s71 = sphi 0, %s70
      %s87 = sphi 0, %s71
      %s93 = sphi 0, %s95
      %s96 = sphi 0, %s93
      %s97 = sphi 0, %s96
      %s113 = sphi 0, %s97
      %s119 = sphi 0, %s121
      %s122 = sphi 0, %s119
      %s123 = sphi 0, %s122
      %s139 = sphi 0, %s123
    $region4: #{tpu_custom_call.1} parent=1 // loop_header_branch
      %18 = sbr.rel (%p16) target = $region8
    $region5: #{tpu_custom_call.1} parent=1 // loop_body
      %s20 = ssub.s32 %s15, 1
      %s21 = ssub.s32 %s15, 2
      %s22 = sadd.s32 %s15, 1
      %s24 = sadd.s32 %s23, 1
      %p27 = scmp.eq.s32.totalorder %s15, 3
      %p28 = scmp.ne.s32.totalorder %s23, %s25
      %p29 = scmp.eq.s32.totalorder %s15, 0
      %p30 = por %p28, %p29
      %p31 = scmp.ne.s32.totalorder %s23, %s25
      %p32 = scmp.eq.s32.totalorder %s20, 3
      %p33 = por %p31, %p32
      %p34 = scmp.ne.s32.totalorder %s25, %s26
      %p35 = scmp.eq.s32.totalorder %s20, 0
      %p36 = por %p34, %p35
      %p37 = scmp.ne.s32.totalorder %s25, %s26
      %p38 = scmp.eq.s32.totalorder %s21, 3
      %p39 = por %p37, %p38
      %p41 = scmp.ne.s32.totalorder %s26, %s40
      %p42 = scmp.eq.s32.totalorder %s21, 0
      %p43 = por %p41, %p42
      %s45 = sadd.s32 %s44, 1
      %p48 = scmp.eq.s32.totalorder %s15, 3
      %p49 = scmp.ne.s32.totalorder %s44, %s46
      %p50 = scmp.eq.s32.totalorder %s15, 0
      %p51 = por %p49, %p50
      %p52 = scmp.ne.s32.totalorder %s44, %s46
      %p53 = scmp.eq.s32.totalorder %s20, 3
      %p54 = por %p52, %p53
      %p55 = scmp.ne.s32.totalorder %s46, %s47
      %p56 = scmp.eq.s32.totalorder %s20, 0
      %p57 = por %p55, %p56
      %p58 = scmp.ne.s32.totalorder %s46, %s47
      %p59 = scmp.eq.s32.totalorder %s21, 3
      %p60 = por %p58, %p59
      %p62 = scmp.ne.s32.totalorder %s47, %s61
      %p63 = scmp.eq.s32.totalorder %s21, 0
      %p64 = por %p62, %p63
      %s65 = ssub.s32 %s15, %s22
      %p66 = scmp.eq.s32.totalorder %s65, 0
      %s68 = sadd.s32 %s67, 1
      %s69 = scalar_select %p66, %s67, %s68
      %p72 = pneg %p66
      %p73 = scmp.eq.s32.totalorder %s15, 3
      %p74 = por %p72, %p73
      %p75 = scmp.ne.s32.totalorder %s67, %s70
      %p76 = scmp.eq.s32.totalorder %s15, 0
      %p77 = por %p75, %p76
      %p78 = scmp.ne.s32.totalorder %s67, %s70
      %p79 = scmp.eq.s32.totalorder %s20, 3
      %p80 = por %p78, %p79
      %p81 = scmp.ne.s32.totalorder %s70, %s71
      %p82 = scmp.eq.s32.totalorder %s20, 0
      %p83 = por %p81, %p82
      %p84 = scmp.ne.s32.totalorder %s70, %s71
      %p85 = scmp.eq.s32.totalorder %s21, 3
      %p86 = por %p84, %p85
      %p88 = scmp.ne.s32.totalorder %s71, %s87
      %p89 = scmp.eq.s32.totalorder %s21, 0
      %p90 = por %p88, %p89
      %s91 = ssub.s32 %s15, %s22
      %p92 = scmp.eq.s32.totalorder %s91, 0
      %s94 = sadd.s32 %s93, 1
      %s95 = scalar_select %p92, %s93, %s94
      %p98 = pneg %p92
      %p99 = scmp.eq.s32.totalorder %s15, 3
      %p100 = por %p98, %p99
      %p101 = scmp.ne.s32.totalorder %s93, %s96
      %p102 = scmp.eq.s32.totalorder %s15, 0
      %p103 = por %p101, %p102
      %p104 = scmp.ne.s32.totalorder %s93, %s96
      %p105 = scmp.eq.s32.totalorder %s20, 3
      %p106 = por %p104, %p105
      %p107 = scmp.ne.s32.totalorder %s96, %s97
      %p108 = scmp.eq.s32.totalorder %s20, 0
      %p109 = por %p107, %p108
      %p110 = scmp.ne.s32.totalorder %s96, %s97
      %p111 = scmp.eq.s32.totalorder %s21, 3
      %p112 = por %p110, %p111
      %p114 = scmp.ne.s32.totalorder %s97, %s113
      %p115 = scmp.eq.s32.totalorder %s21, 0
      %p116 = por %p114, %p115
      %s117 = ssub.s32 %s15, %s22
      %p118 = scmp.eq.s32.totalorder %s117, 0
      %s120 = sadd.s32 %s119, 1
      %s121 = scalar_select %p118, %s119, %s120
      %p124 = pneg %p118
      %p125 = scmp.eq.s32.totalorder %s15, 3
      %p126 = por %p124, %p125
      %p127 = scmp.ne.s32.totalorder %s119, %s122
      %p128 = scmp.eq.s32.totalorder %s15, 0
      %p129 = por %p127, %p128
      %p130 = scmp.ne.s32.totalorder %s119, %s122
      %p131 = scmp.eq.s32.totalorder %s20, 3
      %p132 = por %p130, %p131
      %p133 = scmp.ne.s32.totalorder %s122, %s123
      %p134 = scmp.eq.s32.totalorder %s20, 0
      %p135 = por %p133, %p134
      %p136 = scmp.ne.s32.totalorder %s122, %s123
      %p137 = scmp.eq.s32.totalorder %s21, 3
      %p138 = por %p136, %p137
      %p140 = scmp.ne.s32.totalorder %s123, %s139
      %p141 = scmp.eq.s32.totalorder %s21, 0
      %p142 = por %p140, %p141
      %p143 = scmp.le.s32.totalorder 1, %s15
      %p144 = scmp.lt.s32.totalorder %s15, 5
      %p145 = pnand %p143, %p144
      %p146 = pneg %p145
      // Predicated region
      $region9: #{tpu_custom_call.1} parent=5 // pred_check
        _
      $region10: #{tpu_custom_call.1} parent=5 // pred_check_branch
        %148 = sbr.rel (%p145) target = $region12
      $region11: #{tpu_custom_call.1} parent=5 // pred_region
        %s149 = ssub.s32 %s15, 1
        // Predicated region
        $region13: #{tpu_custom_call.1} parent=11 // pred_check
          %p150 = pneg %p36
        $region14: #{tpu_custom_call.1} parent=11 // pred_check_branch
          %152 = sbr.rel (%p150) target = $region16
        $region15: #{tpu_custom_call.1} parent=11 // pred_region
          %s154 = ssub.s32 256, 256
          %155 = vsyncadd [#allocation3], %s154
          %s156 = sshll.u32 [#allocation2], 4
          %s157 = int_to_ptr.vmem [resolvable:$true] %s156
          %162 = dma.hbm_to_vmem [thread:$0]  %s0, 256, %s157, [#allocation3], 128, 128, 8
        $region16: #{tpu_custom_call.1} parent=11 // pred_fallthru
          _
        // Predicated region
        $region17: #{tpu_custom_call.1} parent=11 // pred_check
          %p163 = pneg %p57
        $region18: #{tpu_custom_call.1} parent=11 // pred_check_branch
          %165 = sbr.rel (%p163) target = $region20
        $region19: #{tpu_custom_call.1} parent=11 // pred_region
          %s167 = ssub.s32 256, 256
          %168 = vsyncadd [#allocation6], %s167
          %s169 = sshll.u32 [#allocation5], 4
          %s170 = int_to_ptr.vmem [resolvable:$true] %s169
          %175 = dma.hbm_to_vmem [thread:$0]  %s1, 256, %s170, [#allocation6], 128, 128, 8
        $region20: #{tpu_custom_call.1} parent=11 // pred_fallthru
          _
      $region12: #{tpu_custom_call.1} parent=5 // pred_fallthru
        _
      %p176 = scmp.lt.s32.totalorder %s15, 4
      // Predicated region
      $region21: #{tpu_custom_call.1} parent=5 // pred_check
        %p177 = pneg %p176
      $region22: #{tpu_custom_call.1} parent=5 // pred_check_branch
        %179 = sbr.rel (%p177) target = $region24
      $region23: #{tpu_custom_call.1} parent=5 // pred_region
        // Predicated region
        $region25: #{tpu_custom_call.1} parent=23 // pred_check
          %p180 = pneg %p77
        $region26: #{tpu_custom_call.1} parent=23 // pred_check_branch
          %182 = sbr.rel (%p180) target = $region28
        $region27: #{tpu_custom_call.1} parent=23 // pred_region
          %s183 = sand.u32 %s15, 1
          %s184 = scalar_lea.sflag [#allocation3], %s183
          %s185 = sand.u32 %s67, 1
          %s186 = smul.addr %s185, 32
          %s187 = scalar_lea.vmem [#allocation7], %s186
          %s188 = smul.u32 2, %s15
          %s190 = ssub.s32 512, 512
          %191 = vsyncadd %s184, %s190
          %s192 = smul.addr %s188, 2
          %s193 = smul.addr %s192, 128
          %s194 = scalar_lea.hbm %s2, %s193
          %s195 = sshll.u32 %s187, 4
          %s196 = int_to_ptr.vmem [resolvable:$true] %s195
          %201 = dma.hbm_to_vmem [thread:$0]  %s194, 512, %s196, %s184, 128, 128, 8
        $region28: #{tpu_custom_call.1} parent=23 // pred_fallthru
          _
        // Predicated region
        $region29: #{tpu_custom_call.1} parent=23 // pred_check
          %p202 = pneg %p103
        $region30: #{tpu_custom_call.1} parent=23 // pred_check_branch
          %204 = sbr.rel (%p202) target = $region32
        $region31: #{tpu_custom_call.1} parent=23 // pred_region
          %s205 = sand.u32 %s15, 1
          %s206 = scalar_lea.sflag [#allocation3], %s205
          %s207 = sand.u32 %s93, 1
          %s208 = smul.addr %s207, 32
          %s209 = scalar_lea.vmem [#allocation8], %s208
          %s210 = smul.u32 2, %s15
          %s212 = ssub.s32 512, 512
          %213 = vsyncadd %s206, %s212
          %s214 = smul.addr %s210, 2
          %s215 = smul.addr %s214, 128
          %s216 = scalar_lea.hbm %s3, %s215
          %s217 = sshll.u32 %s209, 4
          %s218 = int_to_ptr.vmem [resolvable:$true] %s217
          %223 = dma.hbm_to_vmem [thread:$0]  %s216, 512, %s218, %s206, 128, 128, 8
        $region32: #{tpu_custom_call.1} parent=23 // pred_fallthru
          _
      $region24: #{tpu_custom_call.1} parent=5 // pred_fallthru
        _
      %p224 = scmp.le.s32.totalorder 1, %s15
      %p225 = scmp.lt.s32.totalorder %s15, 5
      %p226 = pnand %p224, %p225
      %p227 = pneg %p226
      // Predicated region
      $region33: #{tpu_custom_call.1} parent=5 // pred_check
        _
      $region34: #{tpu_custom_call.1} parent=5 // pred_check_branch
        %229 = sbr.rel (%p226) target = $region36
      $region35: #{tpu_custom_call.1} parent=5 // pred_region
        %s230 = ssub.s32 %s15, 1
        // Predicated region
        $region37: #{tpu_custom_call.1} parent=35 // pred_check
          %p231 = pneg %p36
        $region38: #{tpu_custom_call.1} parent=35 // pred_check_branch
          %233 = sbr.rel (%p231) target = $region40
        $region39: #{tpu_custom_call.1} parent=35 // pred_region
          %234 = dma.done [#allocation3], 256
        $region40: #{tpu_custom_call.1} parent=35 // pred_fallthru
          _
        // Predicated region
        $region41: #{tpu_custom_call.1} parent=35 // pred_check
          %p235 = pneg %p57
        $region42: #{tpu_custom_call.1} parent=35 // pred_check_branch
          %237 = sbr.rel (%p235) target = $region44
        $region43: #{tpu_custom_call.1} parent=35 // pred_region
          %238 = dma.done [#allocation6], 256
        $region44: #{tpu_custom_call.1} parent=35 // pred_fallthru
          _
        %s239 = sand.u32 %s20, 1
        %s240 = scalar_lea.sflag [#allocation3], %s239
        %s241 = sand.u32 %s70, 1
        %s242 = smul.addr %s241, 32
        %s243 = scalar_lea.vmem [#allocation7], %s242
        // Predicated region
        $region45: #{tpu_custom_call.1} parent=35 // pred_check
          %p244 = pneg %p83
        $region46: #{tpu_custom_call.1} parent=35 // pred_check_branch
          %246 = sbr.rel (%p244) target = $region48
        $region47: #{tpu_custom_call.1} parent=35 // pred_region
          %247 = dma.done %s240, 512
        $region48: #{tpu_custom_call.1} parent=35 // pred_fallthru
          _
        %s248 = sand.u32 %s20, 1
        %s249 = scalar_lea.sflag [#allocation3], %s248
        %s250 = sand.u32 %s96, 1
        %s251 = smul.addr %s250, 32
        %s252 = scalar_lea.vmem [#allocation8], %s251
        // Predicated region
        $region49: #{tpu_custom_call.1} parent=35 // pred_check
          %p253 = pneg %p109
        $region50: #{tpu_custom_call.1} parent=35 // pred_check_branch
          %255 = sbr.rel (%p253) target = $region52
        $region51: #{tpu_custom_call.1} parent=35 // pred_region
          %256 = dma.done %s249, 512
        $region52: #{tpu_custom_call.1} parent=35 // pred_fallthru
          _
        %p257 = pneg %p36
        %p258 = pneg %p33
        %p259 = pneg %p57
        %p260 = pneg %p54
        %s261 = sand.u32 %s20, 1
        %s262 = scalar_lea.sflag [#allocation3], %s261
        %s263 = sand.u32 %s70, 1
        %s264 = smul.addr %s263, 32
        %s265 = scalar_lea.vmem [#allocation7], %s264
        %p266 = pneg %p83
        %p267 = pneg %p80
        %s268 = sand.u32 %s20, 1
        %s269 = scalar_lea.sflag [#allocation3], %s268
        %s270 = sand.u32 %s96, 1
        %s271 = smul.addr %s270, 32
        %s272 = scalar_lea.vmem [#allocation8], %s271
        %p273 = pneg %p109
        %p274 = pneg %p106
        %p275 = pneg %p135
        %p276 = pneg %p132
        %s277 = sand.u32 %s122, 1
        %s278 = scalar_lea.sflag [#allocation4], %s277
        %s279 = sand.u32 %s122, 1
        %s280 = smul.addr %s279, 32
        %s281 = scalar_lea.vmem [#allocation9], %s280
        %s282 = smul.u32 2, %s20
        %s283 = smul.u32 2, %s20
        %s284 = smul.u32 2, %s20
        %v285 = vld [vmem:[#allocation2] sm:$0xff]
        %v286 = vld [vmem:[#allocation2 + $0x8] sm:$0xff]
        %v287 = vld [vmem:[#allocation5] sm:$0xff]
        %v288 = vld [vmem:[#allocation5 + $0x8] sm:$0xff]
        %v289 = vld [vmem:[%s243] sm:$0xff]
        %v290 = vld [vmem:[%s243 + $0x8] sm:$0xff]
        %v291 = vld [vmem:[%s252] sm:$0xff]
        %v292 = vld [vmem:[%s252 + $0x8] sm:$0xff]
        %vm293 = vcmask 130048
        %v295 = vsel %vm293, %v285, 0
        %v298 = vsel %vm293, %v286, 0
        %300 = vmatprep.subr.mxu0 0.0
        %v301 = vand.u32 %v289, 4294901760
        %302 = vmatpush1.msra.mxu0 %v301
        %303 = vmatprep.subr.mxu0 0.0
        %v304 = vand.u32 %v290, 4294901760
        %305 = vmatpush1.msra.mxu0 %v304
        %306 = vmatprep.subr.mxu0 0.0
        %307 = vmatpush1.msra.mxu0 0.0
        %308 = vmatprep.subr.mxu0 0.0
        %309 = vmatpush1.msra.mxu0 0.0
        %310 = vmatprep.subr.mxu0 0.0
        %311 = vmatpush1.msra.mxu0 0.0
        %312 = vmatprep.subr.mxu0 0.0
        %313 = vmatpush1.msra.mxu0 0.0
        %314 = vmatprep.subr.mxu0 0.0
        %315 = vmatpush1.msra.mxu0 0.0
        %316 = vmatprep.subr.mxu0 0.0
        %317 = vmatpush1.msra.mxu0 0.0
        %318 = vmatprep.subr.mxu0 0.0
        %319 = vmatpush1.msra.mxu0 0.0
        %320 = vmatprep.subr.mxu0 0.0
        %321 = vmatpush1.msra.mxu0 0.0
        %322 = vmatprep.subr.mxu0 0.0
        %323 = vmatpush1.msra.mxu0 0.0
        %324 = vmatprep.subr.mxu0 0.0
        %325 = vmatpush1.msra.mxu0 0.0
        %326 = vmatprep.subr.mxu0 0.0
        %327 = vmatpush1.msra.mxu0 0.0
        %328 = vmatprep.subr.mxu0 0.0
        %329 = vmatpush1.msra.mxu0 0.0
        %330 = vmatprep.subr.mxu0 0.0
        %331 = vmatpush1.msra.mxu0 0.0
        %332 = vmatprep.subr.mxu0 0.0
        %333 = vmatpush1.msra.mxu0 0.0
        %334 = vmatprep.subr.mxu0 0.0
        %335 = vmatpush1.msra.mxu0 0.0
        %336 = vmatprep.subr.mxu0 0.0
        %337 = vmatpush1.msra.mxu0 0.0
        %338 = vmatprep.subr.mxu0 0.0
        %339 = vmatpush1.msra.mxu0 0.0
        %340 = vmatprep.subr.mxu0 0.0
        %341 = vmatpush1.msra.mxu0 0.0
        %342 = vmatprep.subr.mxu0 0.0
        %343 = vmatpush1.msra.mxu0 0.0
        %344 = vmatprep.subr.mxu0 0.0
        %345 = vmatpush1.msra.mxu0 0.0
        %346 = vmatprep.subr.mxu0 0.0
        %347 = vmatpush1.msra.mxu0 0.0
        %348 = vmatprep.subr.mxu0 0.0
        %349 = vmatpush1.msra.mxu0 0.0
        %350 = vmatprep.subr.mxu0 0.0
        %351 = vmatpush1.msra.mxu0 0.0
        %352 = vmatprep.subr.mxu0 0.0
        %353 = vmatpush1.msra.mxu0 0.0
        %354 = vmatprep.subr.mxu0 0.0
        %355 = vmatpush1.msra.mxu0 0.0
        %356 = vmatprep.subr.mxu0 0.0
        %357 = vmatpush1.msra.mxu0 0.0
        %358 = vmatprep.subr.mxu0 0.0
        %359 = vmatpush1.msra.mxu0 0.0
        %360 = vmatprep.subr.mxu0 0.0
        %361 = vmatpush1.msra.mxu0 0.0
        %362 = vmatprep.subr.mxu0 0.0
        %363 = vmatpush1.msra.mxu0 0.0
        %364 = vmatprep.subr.mxu0 0.0
        %365 = vmatpush1.msra.mxu0 0.0
        %366 = vmatprep.mubr.f32.mxu0 0.0
        %v367 = vand.u32 %v295, 4294901760
        %v368 = vsub.f32 %v295, %v367
        %v369 = vand.u32 %v368, 4294901760
        %v370 = vsub.f32 %v368, %v369
        %v371 = vand.u32 %v370, 4294901760
        %372 = vmatmul.mubr.f32.gmra.mrb[0].mxu0 %v371
        %v373 = vpop.f32.mrb[0].mxu0
        %v374 = vadd.f32 0.0, %v373
        %v375 = vpop.f32.mrb[0].mxu0
        %376 = vmatprep.mubr.f32.mxu0 0.0
        %v377 = vand.u32 %v298, 4294901760
        %v378 = vsub.f32 %v298, %v377
        %v379 = vand.u32 %v378, 4294901760
        %v380 = vsub.f32 %v378, %v379
        %v381 = vand.u32 %v380, 4294901760
        %382 = vmatmul.mubr.f32.gmra.mrb[0].mxu0 %v381
        %v383 = vpop.f32.mrb[0].mxu0
        %v384 = vadd.f32 0.0, %v383
        %v385 = vpop.f32.mrb[0].mxu0
        %386 = vdwg.mxu0
        %387 = vmatprep.subr.mxu0 0.0
        %v388 = vand.u32 %v289, 4294901760
        %v389 = vsub.f32 %v289, %v388
        %v390 = vand.u32 %v389, 4294901760
        %v391 = vsub.f32 %v389, %v390
        %v392 = vand.u32 %v391, 4294901760
        %393 = vmatpush1.msra.mxu0 %v392
        %394 = vmatprep.subr.mxu0 0.0
        %v395 = vand.u32 %v290, 4294901760
        %v396 = vsub.f32 %v290, %v395
        %v397 = vand.u32 %v396, 4294901760
        %v398 = vsub.f32 %v396, %v397
        %v399 = vand.u32 %v398, 4294901760
        %400 = vmatpush1.msra.mxu0 %v399
        %401 = vmatprep.subr.mxu0 0.0
        %402 = vmatpush1.msra.mxu0 0.0
        %403 = vmatprep.subr.mxu0 0.0
        %404 = vmatpush1.msra.mxu0 0.0
        %405 = vmatprep.subr.mxu0 0.0
        %406 = vmatpush1.msra.mxu0 0.0
        %407 = vmatprep.subr.mxu0 0.0
        %408 = vmatpush1.msra.mxu0 0.0
        %409 = vmatprep.subr.mxu0 0.0
        %410 = vmatpush1.msra.mxu0 0.0
        %411 = vmatprep.subr.mxu0 0.0
        %412 = vmatpush1.msra.mxu0 0.0
        %413 = vmatprep.subr.mxu0 0.0
        %414 = vmatpush1.msra.mxu0 0.0
        %415 = vmatprep.subr.mxu0 0.0
        %416 = vmatpush1.msra.mxu0 0.0
        %417 = vmatprep.subr.mxu0 0.0
        %418 = vmatpush1.msra.mxu0 0.0
        %419 = vmatprep.subr.mxu0 0.0
        %420 = vmatpush1.msra.mxu0 0.0
        %421 = vmatprep.subr.mxu0 0.0
        %422 = vmatpush1.msra.mxu0 0.0
        %423 = vmatprep.subr.mxu0 0.0
        %424 = vmatpush1.msra.mxu0 0.0
        %425 = vmatprep.subr.mxu0 0.0
        %426 = vmatpush1.msra.mxu0 0.0
        %427 = vmatprep.subr.mxu0 0.0
        %428 = vmatpush1.msra.mxu0 0.0
        %429 = vmatprep.subr.mxu0 0.0
        %430 = vmatpush1.msra.mxu0 0.0
        %431 = vmatprep.subr.mxu0 0.0
        %432 = vmatpush1.msra.mxu0 0.0
        %433 = vmatprep.subr.mxu0 0.0
        %434 = vmatpush1.msra.mxu0 0.0
        %435 = vmatprep.subr.mxu0 0.0
        %436 = vmatpush1.msra.mxu0 0.0
        %437 = vmatprep.subr.mxu0 0.0
        %438 = vmatpush1.msra.mxu0 0.0
        %439 = vmatprep.subr.mxu0 0.0
        %440 = vmatpush1.msra.mxu0 0.0
        %441 = vmatprep.subr.mxu0 0.0
        %442 = vmatpush1.msra.mxu0 0.0
        %443 = vmatprep.subr.mxu0 0.0
        %444 = vmatpush1.msra.mxu0 0.0
        %445 = vmatprep.subr.mxu0 0.0
        %446 = vmatpush1.msra.mxu0 0.0
        %447 = vmatprep.subr.mxu0 0.0
        %448 = vmatpush1.msra.mxu0 0.0
        %449 = vmatprep.subr.mxu0 0.0
        %450 = vmatpush1.msra.mxu0 0.0
        %451 = vmatprep.subr.mxu0 0.0
        %452 = vmatpush1.msra.mxu0 0.0
        %453 = vmatprep.subr.mxu0 0.0
        %454 = vmatpush1.msra.mxu0 0.0
        %455 = vmatprep.subr.mxu0 0.0
        %456 = vmatpush1.msra.mxu0 0.0
        %457 = vmatprep.subr.mxu0 0.0
        %458 = vmatpush1.msra.mxu0 0.0
        %459 = vmatprep.subr.mxu0 0.0
        %460 = vmatpush1.msra.mxu0 0.0
        %461 = vmatprep.mubr.f32.mxu0 0.0
        %v462 = vand.u32 %v295, 4294901760
        %463 = vmatmul.mubr.f32.gmra.mrb[0].mxu0 %v462
        %v464 = vpop.f32.mrb[0].mxu0
        %v465 = vadd.f32 %v374, %v464
        %v466 = vpop.f32.mrb[0].mxu0
        %467 = vmatprep.mubr.f32.mxu0 0.0
        %v468 = vand.u32 %v298, 4294901760
        %469 = vmatmul.mubr.f32.gmra.mrb[0].mxu0 %v468
        %v470 = vpop.f32.mrb[0].mxu0
        %v471 = vadd.f32 %v384, %v470
        %v472 = vpop.f32.mrb[0].mxu0
        %473 = vdwg.mxu0
        %474 = vmatprep.subr.mxu0 0.0
        %v475 = vand.u32 %v289, 4294901760
        %v476 = vsub.f32 %v289, %v475
        %477 = vmatpush1.msra.mxu0 %v476
        %478 = vmatprep.subr.mxu0 0.0
        %v479 = vand.u32 %v290, 4294901760
        %v480 = vsub.f32 %v290, %v479
        %481 = vmatpush1.msra.mxu0 %v480
        %482 = vmatprep.subr.mxu0 0.0
        %483 = vmatpush1.msra.mxu0 0.0
        %484 = vmatprep.subr.mxu0 0.0
        %485 = vmatpush1.msra.mxu0 0.0
        %486 = vmatprep.subr.mxu0 0.0
        %487 = vmatpush1.msra.mxu0 0.0
        %488 = vmatprep.subr.mxu0 0.0
        %489 = vmatpush1.msra.mxu0 0.0
        %490 = vmatprep.subr.mxu0 0.0
        %491 = vmatpush1.msra.mxu0 0.0
        %492 = vmatprep.subr.mxu0 0.0
        %493 = vmatpush1.msra.mxu0 0.0
        %494 = vmatprep.subr.mxu0 0.0
        %495 = vmatpush1.msra.mxu0 0.0
        %496 = vmatprep.subr.mxu0 0.0
        %497 = vmatpush1.msra.mxu0 0.0
        %498 = vmatprep.subr.mxu0 0.0
        %499 = vmatpush1.msra.mxu0 0.0
        %500 = vmatprep.subr.mxu0 0.0
        %501 = vmatpush1.msra.mxu0 0.0
        %502 = vmatprep.subr.mxu0 0.0
        %503 = vmatpush1.msra.mxu0 0.0
        %504 = vmatprep.subr.mxu0 0.0
        %505 = vmatpush1.msra.mxu0 0.0
        %506 = vmatprep.subr.mxu0 0.0
        %507 = vmatpush1.msra.mxu0 0.0
        %508 = vmatprep.subr.mxu0 0.0
        %509 = vmatpush1.msra.mxu0 0.0
        %510 = vmatprep.subr.mxu0 0.0
        %511 = vmatpush1.msra.mxu0 0.0
        %512 = vmatprep.subr.mxu0 0.0
        %513 = vmatpush1.msra.mxu0 0.0
        %514 = vmatprep.subr.mxu0 0.0
        %515 = vmatpush1.msra.mxu0 0.0
        %516 = vmatprep.subr.mxu0 0.0
        %517 = vmatpush1.msra.mxu0 0.0
        %518 = vmatprep.subr.mxu0 0.0
        %519 = vmatpush1.msra.mxu0 0.0
        %520 = vmatprep.subr.mxu0 0.0
        %521 = vmatpush1.msra.mxu0 0.0
        %522 = vmatprep.subr.mxu0 0.0
        %523 = vmatpush1.msra.mxu0 0.0
        %524 = vmatprep.subr.mxu0 0.0
        %525 = vmatpush1.msra.mxu0 0.0
        %526 = vmatprep.subr.mxu0 0.0
        %527 = vmatpush1.msra.mxu0 0.0
        %528 = vmatprep.subr.mxu0 0.0
        %529 = vmatpush1.msra.mxu0 0.0
        %530 = vmatprep.subr.mxu0 0.0
        %531 = vmatpush1.msra.mxu0 0.0
        %532 = vmatprep.subr.mxu0 0.0
        %533 = vmatpush1.msra.mxu0 0.0
        %534 = vmatprep.subr.mxu0 0.0
        %535 = vmatpush1.msra.mxu0 0.0
        %536 = vmatprep.subr.mxu0 0.0
        %537 = vmatpush1.msra.mxu0 0.0
        %538 = vmatprep.subr.mxu0 0.0
        %539 = vmatpush1.msra.mxu0 0.0
        %540 = vmatprep.subr.mxu0 0.0
        %541 = vmatpush1.msra.mxu0 0.0
        %542 = vmatprep.mubr.f32.mxu0 0.0
        %v543 = vand.u32 %v295, 4294901760
        %v544 = vsub.f32 %v295, %v543
        %545 = vmatmul.mubr.f32.gmra.mrb[0].mxu0 %v544
        %v546 = vpop.f32.mrb[0].mxu0
        %v547 = vadd.f32 %v465, %v546
        %v548 = vpop.f32.mrb[0].mxu0
        %549 = vmatprep.mubr.f32.mxu0 0.0
        %v550 = vand.u32 %v298, 4294901760
        %v551 = vsub.f32 %v298, %v550
        %552 = vmatmul.mubr.f32.gmra.mrb[0].mxu0 %v551
        %v553 = vpop.f32.mrb[0].mxu0
        %v554 = vadd.f32 %v471, %v553
        %v555 = vpop.f32.mrb[0].mxu0
        %556 = vdwg.mxu0
        %557 = vmatprep.subr.mxu0 0.0
        %v558 = vand.u32 %v289, 4294901760
        %559 = vmatpush1.msra.mxu0 %v558
        %560 = vmatprep.subr.mxu0 0.0
        %v561 = vand.u32 %v290, 4294901760
        %562 = vmatpush1.msra.mxu0 %v561
        %563 = vmatprep.subr.mxu0 0.0
        %564 = vmatpush1.msra.mxu0 0.0
        %565 = vmatprep.subr.mxu0 0.0
        %566 = vmatpush1.msra.mxu0 0.0
        %567 = vmatprep.subr.mxu0 0.0
        %568 = vmatpush1.msra.mxu0 0.0
        %569 = vmatprep.subr.mxu0 0.0
        %570 = vmatpush1.msra.mxu0 0.0
        %571 = vmatprep.subr.mxu0 0.0
        %572 = vmatpush1.msra.mxu0 0.0
        %573 = vmatprep.subr.mxu0 0.0
        %574 = vmatpush1.msra.mxu0 0.0
        %575 = vmatprep.subr.mxu0 0.0
        %576 = vmatpush1.msra.mxu0 0.0
        %577 = vmatprep.subr.mxu0 0.0
        %578 = vmatpush1.msra.mxu0 0.0
        %579 = vmatprep.subr.mxu0 0.0
        %580 = vmatpush1.msra.mxu0 0.0
        %581 = vmatprep.subr.mxu0 0.0
        %582 = vmatpush1.msra.mxu0 0.0
        %583 = vmatprep.subr.mxu0 0.0
        %584 = vmatpush1.msra.mxu0 0.0
        %585 = vmatprep.subr.mxu0 0.0
        %586 = vmatpush1.msra.mxu0 0.0
        %587 = vmatprep.subr.mxu0 0.0
        %588 = vmatpush1.msra.mxu0 0.0
        %589 = vmatprep.subr.mxu0 0.0
        %590 = vmatpush1.msra.mxu0 0.0
        %591 = vmatprep.subr.mxu0 0.0
        %592 = vmatpush1.msra.mxu0 0.0
        %593 = vmatprep.subr.mxu0 0.0
        %594 = vmatpush1.msra.mxu0 0.0
        %595 = vmatprep.subr.mxu0 0.0
        %596 = vmatpush1.msra.mxu0 0.0
        %597 = vmatprep.subr.mxu0 0.0
        %598 = vmatpush1.msra.mxu0 0.0
        %599 = vmatprep.subr.mxu0 0.0
        %600 = vmatpush1.msra.mxu0 0.0
        %601 = vmatprep.subr.mxu0 0.0
        %602 = vmatpush1.msra.mxu0 0.0
        %603 = vmatprep.subr.mxu0 0.0
        %604 = vmatpush1.msra.mxu0 0.0
        %605 = vmatprep.subr.mxu0 0.0
        %606 = vmatpush1.msra.mxu0 0.0
        %607 = vmatprep.subr.mxu0 0.0
        %608 = vmatpush1.msra.mxu0 0.0
        %609 = vmatprep.subr.mxu0 0.0
        %610 = vmatpush1.msra.mxu0 0.0
        %611 = vmatprep.subr.mxu0 0.0
        %612 = vmatpush1.msra.mxu0 0.0
        %613 = vmatprep.subr.mxu0 0.0
        %614 = vmatpush1.msra.mxu0 0.0
        %615 = vmatprep.subr.mxu0 0.0
        %616 = vmatpush1.msra.mxu0 0.0
        %617 = vmatprep.subr.mxu0 0.0
        %618 = vmatpush1.msra.mxu0 0.0
        %619 = vmatprep.subr.mxu0 0.0
        %620 = vmatpush1.msra.mxu0 0.0
        %621 = vmatprep.subr.mxu0 0.0
        %622 = vmatpush1.msra.mxu0 0.0
        %623 = vmatprep.mubr.f32.mxu0 0.0
        %v624 = vand.u32 %v295, 4294901760
        %v625 = vsub.f32 %v295, %v624
        %v626 = vand.u32 %v625, 4294901760
        %627 = vmatmul.mubr.f32.gmra.mrb[0].mxu0 %v626
        %v628 = vpop.f32.mrb[0].mxu0
        %v629 = vadd.f32 %v547, %v628
        %v630 = vpop.f32.mrb[0].mxu0
        %631 = vmatprep.mubr.f32.mxu0 0.0
        %v632 = vand.u32 %v298, 4294901760
        %v633 = vsub.f32 %v298, %v632
        %v634 = vand.u32 %v633, 4294901760
        %635 = vmatmul.mubr.f32.gmra.mrb[0].mxu0 %v634
        %v636 = vpop.f32.mrb[0].mxu0
        %v637 = vadd.f32 %v554, %v636
        %v638 = vpop.f32.mrb[0].mxu0
        %639 = vdwg.mxu0
        %640 = vmatprep.subr.mxu0 0.0
        %v641 = vand.u32 %v289, 4294901760
        %v642 = vsub.f32 %v289, %v641
        %v643 = vand.u32 %v642, 4294901760
        %644 = vmatpush1.msra.mxu0 %v643
        %645 = vmatprep.subr.mxu0 0.0
        %v646 = vand.u32 %v290, 4294901760
        %v647 = vsub.f32 %v290, %v646
        %v648 = vand.u32 %v647, 4294901760
        %649 = vmatpush1.msra.mxu0 %v648
        %650 = vmatprep.subr.mxu0 0.0
        %651 = vmatpush1.msra.mxu0 0.0
        %652 = vmatprep.subr.mxu0 0.0
        %653 = vmatpush1.msra.mxu0 0.0
        %654 = vmatprep.subr.mxu0 0.0
        %655 = vmatpush1.msra.mxu0 0.0
        %656 = vmatprep.subr.mxu0 0.0
        %657 = vmatpush1.msra.mxu0 0.0
        %658 = vmatprep.subr.mxu0 0.0
        %659 = vmatpush1.msra.mxu0 0.0
        %660 = vmatprep.subr.mxu0 0.0
        %661 = vmatpush1.msra.mxu0 0.0
        %662 = vmatprep.subr.mxu0 0.0
        %663 = vmatpush1.msra.mxu0 0.0
        %664 = vmatprep.subr.mxu0 0.0
        %665 = vmatpush1.msra.mxu0 0.0
        %666 = vmatprep.subr.mxu0 0.0
        %667 = vmatpush1.msra.mxu0 0.0
        %668 = vmatprep.subr.mxu0 0.0
        %669 = vmatpush1.msra.mxu0 0.0
        %670 = vmatprep.subr.mxu0 0.0
        %671 = vmatpush1.msra.mxu0 0.0
        %672 = vmatprep.subr.mxu0 0.0
        %673 = vmatpush1.msra.mxu0 0.0
        %674 = vmatprep.subr.mxu0 0.0
        %675 = vmatpush1.msra.mxu0 0.0
        %676 = vmatprep.subr.mxu0 0.0
        %677 = vmatpush1.msra.mxu0 0.0
        %678 = vmatprep.subr.mxu0 0.0
        %679 = vmatpush1.msra.mxu0 0.0
        %680 = vmatprep.subr.mxu0 0.0
        %681 = vmatpush1.msra.mxu0 0.0
        %682 = vmatprep.subr.mxu0 0.0
        %683 = vmatpush1.msra.mxu0 0.0
        %684 = vmatprep.subr.mxu0 0.0
        %685 = vmatpush1.msra.mxu0 0.0
        %686 = vmatprep.subr.mxu0 0.0
        %687 = vmatpush1.msra.mxu0 0.0
        %688 = vmatprep.subr.mxu0 0.0
        %689 = vmatpush1.msra.mxu0 0.0
        %690 = vmatprep.subr.mxu0 0.0
        %691 = vmatpush1.msra.mxu0 0.0
        %692 = vmatprep.subr.mxu0 0.0
        %693 = vmatpush1.msra.mxu0 0.0
        %694 = vmatprep.subr.mxu0 0.0
        %695 = vmatpush1.msra.mxu0 0.0
        %696 = vmatprep.subr.mxu0 0.0
        %697 = vmatpush1.msra.mxu0 0.0
        %698 = vmatprep.subr.mxu0 0.0
        %699 = vmatpush1.msra.mxu0 0.0
        %700 = vmatprep.subr.mxu0 0.0
        %701 = vmatpush1.msra.mxu0 0.0
        %702 = vmatprep.subr.mxu0 0.0
        %703 = vmatpush1.msra.mxu0 0.0
        %704 = vmatprep.subr.mxu0 0.0
        %705 = vmatpush1.msra.mxu0 0.0
        %706 = vmatprep.subr.mxu0 0.0
        %707 = vmatpush1.msra.mxu0 0.0
        %708 = vmatprep.subr.mxu0 0.0
        %709 = vmatpush1.msra.mxu0 0.0
        %710 = vmatprep.mubr.f32.mxu0 0.0
        %v711 = vand.u32 %v295, 4294901760
        %712 = vmatmul.mubr.f32.gmra.mrb[0].mxu0 %v711
        %v713 = vpop.f32.mrb[0].mxu0
        %v714 = vadd.f32 %v629, %v713
        %v715 = vpop.f32.mrb[0].mxu0
        %716 = vmatprep.mubr.f32.mxu0 0.0
        %v717 = vand.u32 %v298, 4294901760
        %718 = vmatmul.mubr.f32.gmra.mrb[0].mxu0 %v717
        %v719 = vpop.f32.mrb[0].mxu0
        %v720 = vadd.f32 %v637, %v719
        %v721 = vpop.f32.mrb[0].mxu0
        %722 = vdwg.mxu0
        %723 = vmatprep.subr.mxu0 0.0
        %v724 = vand.u32 %v289, 4294901760
        %725 = vmatpush1.msra.mxu0 %v724
        %726 = vmatprep.subr.mxu0 0.0
        %v727 = vand.u32 %v290, 4294901760
        %728 = vmatpush1.msra.mxu0 %v727
        %729 = vmatprep.subr.mxu0 0.0
        %730 = vmatpush1.msra.mxu0 0.0
        %731 = vmatprep.subr.mxu0 0.0
        %732 = vmatpush1.msra.mxu0 0.0
        %733 = vmatprep.subr.mxu0 0.0
        %734 = vmatpush1.msra.mxu0 0.0
        %735 = vmatprep.subr.mxu0 0.0
        %736 = vmatpush1.msra.mxu0 0.0
        %737 = vmatprep.subr.mxu0 0.0
        %738 = vmatpush1.msra.mxu0 0.0
        %739 = vmatprep.subr.mxu0 0.0
        %740 = vmatpush1.msra.mxu0 0.0
        %741 = vmatprep.subr.mxu0 0.0
        %742 = vmatpush1.msra.mxu0 0.0
        %743 = vmatprep.subr.mxu0 0.0
        %744 = vmatpush1.msra.mxu0 0.0
        %745 = vmatprep.subr.mxu0 0.0
        %746 = vmatpush1.msra.mxu0 0.0
        %747 = vmatprep.subr.mxu0 0.0
        %748 = vmatpush1.msra.mxu0 0.0
        %749 = vmatprep.subr.mxu0 0.0
        %750 = vmatpush1.msra.mxu0 0.0
        %751 = vmatprep.subr.mxu0 0.0
        %752 = vmatpush1.msra.mxu0 0.0
        %753 = vmatprep.subr.mxu0 0.0
        %754 = vmatpush1.msra.mxu0 0.0
        %755 = vmatprep.subr.mxu0 0.0
        %756 = vmatpush1.msra.mxu0 0.0
        %757 = vmatprep.subr.mxu0 0.0
        %758 = vmatpush1.msra.mxu0 0.0
        %759 = vmatprep.subr.mxu0 0.0
        %760 = vmatpush1.msra.mxu0 0.0
        %761 = vmatprep.subr.mxu0 0.0
        %762 = vmatpush1.msra.mxu0 0.0
        %763 = vmatprep.subr.mxu0 0.0
        %764 = vmatpush1.msra.mxu0 0.0
        %765 = vmatprep.subr.mxu0 0.0
        %766 = vmatpush1.msra.mxu0 0.0
        %767 = vmatprep.subr.mxu0 0.0
        %768 = vmatpush1.msra.mxu0 0.0
        %769 = vmatprep.subr.mxu0 0.0
        %770 = vmatpush1.msra.mxu0 0.0
        %771 = vmatprep.subr.mxu0 0.0
        %772 = vmatpush1.msra.mxu0 0.0
        %773 = vmatprep.subr.mxu0 0.0
        %774 = vmatpush1.msra.mxu0 0.0
        %775 = vmatprep.subr.mxu0 0.0
        %776 = vmatpush1.msra.mxu0 0.0
        %777 = vmatprep.subr.mxu0 0.0
        %778 = vmatpush1.msra.mxu0 0.0
        %779 = vmatprep.subr.mxu0 0.0
        %780 = vmatpush1.msra.mxu0 0.0
        %781 = vmatprep.subr.mxu0 0.0
        %782 = vmatpush1.msra.mxu0 0.0
        %783 = vmatprep.subr.mxu0 0.0
        %784 = vmatpush1.msra.mxu0 0.0
        %785 = vmatprep.subr.mxu0 0.0
        %786 = vmatpush1.msra.mxu0 0.0
        %787 = vmatprep.subr.mxu0 0.0
        %788 = vmatpush1.msra.mxu0 0.0
        %789 = vmatprep.mubr.f32.mxu0 0.0
        %v790 = vand.u32 %v295, 4294901760
        %791 = vmatmul.mubr.f32.gmra.mrb[0].mxu0 %v790
        %v792 = vpop.f32.mrb[0].mxu0
        %v793 = vadd.f32 %v714, %v792
        %v794 = vpop.f32.mrb[0].mxu0
        %795 = vmatprep.mubr.f32.mxu0 0.0
        %v796 = vand.u32 %v298, 4294901760
        %797 = vmatmul.mubr.f32.gmra.mrb[0].mxu0 %v796
        %v798 = vpop.f32.mrb[0].mxu0
        %v799 = vadd.f32 %v720, %v798
        %v800 = vpop.f32.mrb[0].mxu0
        %801 = vdwg.mxu0
        %v803 = vsel %vm293, %v793, 0
        %v806 = vsel %vm293, %v799, 0
        %808 = vmatprep.subr.mxu0 0.0
        %v809 = vand.u32 %v287, 4294901760
        %810 = vmatpush1.msra.mxu0 %v809
        %811 = vmatprep.subr.mxu0 0.0
        %v812 = vand.u32 %v288, 4294901760
        %813 = vmatpush1.msra.mxu0 %v812
        %814 = vmatprep.subr.mxu0 0.0
        %815 = vmatpush1.msra.mxu0 0.0
        %816 = vmatprep.subr.mxu0 0.0
        %817 = vmatpush1.msra.mxu0 0.0
        %818 = vmatprep.subr.mxu0 0.0
        %819 = vmatpush1.msra.mxu0 0.0
        %820 = vmatprep.subr.mxu0 0.0
        %821 = vmatpush1.msra.mxu0 0.0
        %822 = vmatprep.subr.mxu0 0.0
        %823 = vmatpush1.msra.mxu0 0.0
        %824 = vmatprep.subr.mxu0 0.0
        %825 = vmatpush1.msra.mxu0 0.0
        %826 = vmatprep.subr.mxu0 0.0
        %827 = vmatpush1.msra.mxu0 0.0
        %828 = vmatprep.subr.mxu0 0.0
        %829 = vmatpush1.msra.mxu0 0.0
        %830 = vmatprep.subr.mxu0 0.0
        %831 = vmatpush1.msra.mxu0 0.0
        %832 = vmatprep.subr.mxu0 0.0
        %833 = vmatpush1.msra.mxu0 0.0
        %834 = vmatprep.subr.mxu0 0.0
        %835 = vmatpush1.msra.mxu0 0.0
        %836 = vmatprep.subr.mxu0 0.0
        %837 = vmatpush1.msra.mxu0 0.0
        %838 = vmatprep.subr.mxu0 0.0
        %839 = vmatpush1.msra.mxu0 0.0
        %840 = vmatprep.subr.mxu0 0.0
        %841 = vmatpush1.msra.mxu0 0.0
        %842 = vmatprep.subr.mxu0 0.0
        %843 = vmatpush1.msra.mxu0 0.0
        %844 = vmatprep.subr.mxu0 0.0
        %845 = vmatpush1.msra.mxu0 0.0
        %846 = vmatprep.subr.mxu0 0.0
        %847 = vmatpush1.msra.mxu0 0.0
        %848 = vmatprep.subr.mxu0 0.0
        %849 = vmatpush1.msra.mxu0 0.0
        %850 = vmatprep.subr.mxu0 0.0
        %851 = vmatpush1.msra.mxu0 0.0
        %852 = vmatprep.subr.mxu0 0.0
        %853 = vmatpush1.msra.mxu0 0.0
        %854 = vmatprep.subr.mxu0 0.0
        %855 = vmatpush1.msra.mxu0 0.0
        %856 = vmatprep.subr.mxu0 0.0
        %857 = vmatpush1.msra.mxu0 0.0
        %858 = vmatprep.subr.mxu0 0.0
        %859 = vmatpush1.msra.mxu0 0.0
        %860 = vmatprep.subr.mxu0 0.0
        %861 = vmatpush1.msra.mxu0 0.0
        %862 = vmatprep.subr.mxu0 0.0
        %863 = vmatpush1.msra.mxu0 0.0
        %864 = vmatprep.subr.mxu0 0.0
        %865 = vmatpush1.msra.mxu0 0.0
        %866 = vmatprep.subr.mxu0 0.0
        %867 = vmatpush1.msra.mxu0 0.0
        %868 = vmatprep.subr.mxu0 0.0
        %869 = vmatpush1.msra.mxu0 0.0
        %870 = vmatprep.subr.mxu0 0.0
        %871 = vmatpush1.msra.mxu0 0.0
        %872 = vmatprep.subr.mxu0 0.0
        %873 = vmatpush1.msra.mxu0 0.0
        %874 = vmatprep.mubr.f32.mxu0 0.0
        %v875 = vand.u32 %v803, 4294901760
        %v876 = vsub.f32 %v803, %v875
        %v877 = vand.u32 %v876, 4294901760
        %v878 = vsub.f32 %v876, %v877
        %v879 = vand.u32 %v878, 4294901760
        %880 = vmatmul.mubr.f32.gmra.mrb[0].mxu0 %v879
        %v881 = vpop.f32.mrb[0].mxu0
        %v882 = vadd.f32 0.0, %v881
        %v883 = vpop.f32.mrb[0].mxu0
        %884 = vmatprep.mubr.f32.mxu0 0.0
        %v885 = vand.u32 %v806, 4294901760
        %v886 = vsub.f32 %v806, %v885
        %v887 = vand.u32 %v886, 4294901760
        %v888 = vsub.f32 %v886, %v887
        %v889 = vand.u32 %v888, 4294901760
        %890 = vmatmul.mubr.f32.gmra.mrb[0].mxu0 %v889
        %v891 = vpop.f32.mrb[0].mxu0
        %v892 = vadd.f32 0.0, %v891
        %v893 = vpop.f32.mrb[0].mxu0
        %894 = vdwg.mxu0
        %895 = vmatprep.subr.mxu0 0.0
        %v896 = vand.u32 %v287, 4294901760
        %v897 = vsub.f32 %v287, %v896
        %v898 = vand.u32 %v897, 4294901760
        %v899 = vsub.f32 %v897, %v898
        %v900 = vand.u32 %v899, 4294901760
        %901 = vmatpush1.msra.mxu0 %v900
        %902 = vmatprep.subr.mxu0 0.0
        %v903 = vand.u32 %v288, 4294901760
        %v904 = vsub.f32 %v288, %v903
        %v905 = vand.u32 %v904, 4294901760
        %v906 = vsub.f32 %v904, %v905
        %v907 = vand.u32 %v906, 4294901760
        %908 = vmatpush1.msra.mxu0 %v907
        %909 = vmatprep.subr.mxu0 0.0
        %910 = vmatpush1.msra.mxu0 0.0
        %911 = vmatprep.subr.mxu0 0.0
        %912 = vmatpush1.msra.mxu0 0.0
        %913 = vmatprep.subr.mxu0 0.0
        %914 = vmatpush1.msra.mxu0 0.0
        %915 = vmatprep.subr.mxu0 0.0
        %916 = vmatpush1.msra.mxu0 0.0
        %917 = vmatprep.subr.mxu0 0.0
        %918 = vmatpush1.msra.mxu0 0.0
        %919 = vmatprep.subr.mxu0 0.0
        %920 = vmatpush1.msra.mxu0 0.0
        %921 = vmatprep.subr.mxu0 0.0
        %922 = vmatpush1.msra.mxu0 0.0
        %923 = vmatprep.subr.mxu0 0.0
        %924 = vmatpush1.msra.mxu0 0.0
        %925 = vmatprep.subr.mxu0 0.0
        %926 = vmatpush1.msra.mxu0 0.0
        %927 = vmatprep.subr.mxu0 0.0
        %928 = vmatpush1.msra.mxu0 0.0
        %929 = vmatprep.subr.mxu0 0.0
        %930 = vmatpush1.msra.mxu0 0.0
        %931 = vmatprep.subr.mxu0 0.0
        %932 = vmatpush1.msra.mxu0 0.0
        %933 = vmatprep.subr.mxu0 0.0
        %934 = vmatpush1.msra.mxu0 0.0
        %935 = vmatprep.subr.mxu0 0.0
        %936 = vmatpush1.msra.mxu0 0.0
        %937 = vmatprep.subr.mxu0 0.0
        %938 = vmatpush1.msra.mxu0 0.0
        %939 = vmatprep.subr.mxu0 0.0
        %940 = vmatpush1.msra.mxu0 0.0
        %941 = vmatprep.subr.mxu0 0.0
        %942 = vmatpush1.msra.mxu0 0.0
        %943 = vmatprep.subr.mxu0 0.0
        %944 = vmatpush1.msra.mxu0 0.0
        %945 = vmatprep.subr.mxu0 0.0
        %946 = vmatpush1.msra.mxu0 0.0
        %947 = vmatprep.subr.mxu0 0.0
        %948 = vmatpush1.msra.mxu0 0.0
        %949 = vmatprep.subr.mxu0 0.0
        %950 = vmatpush1.msra.mxu0 0.0
        %951 = vmatprep.subr.mxu0 0.0
        %952 = vmatpush1.msra.mxu0 0.0
        %953 = vmatprep.subr.mxu0 0.0
        %954 = vmatpush1.msra.mxu0 0.0
        %955 = vmatprep.subr.mxu0 0.0
        %956 = vmatpush1.msra.mxu0 0.0
        %957 = vmatprep.subr.mxu0 0.0
        %958 = vmatpush1.msra.mxu0 0.0
        %959 = vmatprep.subr.mxu0 0.0
        %960 = vmatpush1.msra.mxu0 0.0
        %961 = vmatprep.subr.mxu0 0.0
        %962 = vmatpush1.msra.mxu0 0.0
        %963 = vmatprep.subr.mxu0 0.0
        %964 = vmatpush1.msra.mxu0 0.0
        %965 = vmatprep.subr.mxu0 0.0
        %966 = vmatpush1.msra.mxu0 0.0
        %967 = vmatprep.subr.mxu0 0.0
        %968 = vmatpush1.msra.mxu0 0.0
        %969 = vmatprep.mubr.f32.mxu0 0.0
        %v970 = vand.u32 %v803, 4294901760
        %971 = vmatmul.mubr.f32.gmra.mrb[0].mxu0 %v970
        %v972 = vpop.f32.mrb[0].mxu0
        %v973 = vadd.f32 %v882, %v972
        %v974 = vpop.f32.mrb[0].mxu0
        %975 = vmatprep.mubr.f32.mxu0 0.0
        %v976 = vand.u32 %v806, 4294901760
        %977 = vmatmul.mubr.f32.gmra.mrb[0].mxu0 %v976
        %v978 = vpop.f32.mrb[0].mxu0
        %v979 = vadd.f32 %v892, %v978
        %v980 = vpop.f32.mrb[0].mxu0
        %981 = vdwg.mxu0
        %982 = vmatprep.subr.mxu0 0.0
        %v983 = vand.u32 %v287, 4294901760
        %v984 = vsub.f32 %v287, %v983
        %985 = vmatpush1.msra.mxu0 %v984
        %986 = vmatprep.subr.mxu0 0.0
        %v987 = vand.u32 %v288, 4294901760
        %v988 = vsub.f32 %v288, %v987
        %989 = vmatpush1.msra.mxu0 %v988
        %990 = vmatprep.subr.mxu0 0.0
        %991 = vmatpush1.msra.mxu0 0.0
        %992 = vmatprep.subr.mxu0 0.0
        %993 = vmatpush1.msra.mxu0 0.0
        %994 = vmatprep.subr.mxu0 0.0
        %995 = vmatpush1.msra.mxu0 0.0
        %996 = vmatprep.subr.mxu0 0.0
        %997 = vmatpush1.msra.mxu0 0.0
        %998 = vmatprep.subr.mxu0 0.0
        %999 = vmatpush1.msra.mxu0 0.0
        %1000 = vmatprep.subr.mxu0 0.0
        %1001 = vmatpush1.msra.mxu0 0.0
        %1002 = vmatprep.subr.mxu0 0.0
        %1003 = vmatpush1.msra.mxu0 0.0
        %1004 = vmatprep.subr.mxu0 0.0
        %1005 = vmatpush1.msra.mxu0 0.0
        %1006 = vmatprep.subr.mxu0 0.0
        %1007 = vmatpush1.msra.mxu0 0.0
        %1008 = vmatprep.subr.mxu0 0.0
        %1009 = vmatpush1.msra.mxu0 0.0
        %1010 = vmatprep.subr.mxu0 0.0
        %1011 = vmatpush1.msra.mxu0 0.0
        %1012 = vmatprep.subr.mxu0 0.0
        %1013 = vmatpush1.msra.mxu0 0.0
        %1014 = vmatprep.subr.mxu0 0.0
        %1015 = vmatpush1.msra.mxu0 0.0
        %1016 = vmatprep.subr.mxu0 0.0
        %1017 = vmatpush1.msra.mxu0 0.0
        %1018 = vmatprep.subr.mxu0 0.0
        %1019 = vmatpush1.msra.mxu0 0.0
        %1020 = vmatprep.subr.mxu0 0.0
        %1021 = vmatpush1.msra.mxu0 0.0
        %1022 = vmatprep.subr.mxu0 0.0
        %1023 = vmatpush1.msra.mxu0 0.0
        %1024 = vmatprep.subr.mxu0 0.0
        %1025 = vmatpush1.msra.mxu0 0.0
        %1026 = vmatprep.subr.mxu0 0.0
        %1027 = vmatpush1.msra.mxu0 0.0
        %1028 = vmatprep.subr.mxu0 0.0
        %1029 = vmatpush1.msra.mxu0 0.0
        %1030 = vmatprep.subr.mxu0 0.0
        %1031 = vmatpush1.msra.mxu0 0.0
        %1032 = vmatprep.subr.mxu0 0.0
        %1033 = vmatpush1.msra.mxu0 0.0
        %1034 = vmatprep.subr.mxu0 0.0
        %1035 = vmatpush1.msra.mxu0 0.0
        %1036 = vmatprep.subr.mxu0 0.0
        %1037 = vmatpush1.msra.mxu0 0.0
        %1038 = vmatprep.subr.mxu0 0.0
        %1039 = vmatpush1.msra.mxu0 0.0
        %1040 = vmatprep.subr.mxu0 0.0
        %1041 = vmatpush1.msra.mxu0 0.0
        %1042 = vmatprep.subr.mxu0 0.0
        %1043 = vmatpush1.msra.mxu0 0.0
        %1044 = vmatprep.subr.mxu0 0.0
        %1045 = vmatpush1.msra.mxu0 0.0
        %1046 = vmatprep.subr.mxu0 0.0
        %1047 = vmatpush1.msra.mxu0 0.0
        %1048 = vmatprep.subr.mxu0 0.0
        %1049 = vmatpush1.msra.mxu0 0.0
        %1050 = vmatprep.mubr.f32.mxu0 0.0
        %v1051 = vand.u32 %v803, 4294901760
        %v1052 = vsub.f32 %v803, %v1051
        %1053 = vmatmul.mubr.f32.gmra.mrb[0].mxu0 %v1052
        %v1054 = vpop.f32.mrb[0].mxu0
        %v1055 = vadd.f32 %v973, %v1054
        %v1056 = vpop.f32.mrb[0].mxu0
        %1057 = vmatprep.mubr.f32.mxu0 0.0
        %v1058 = vand.u32 %v806, 4294901760
        %v1059 = vsub.f32 %v806, %v1058
        %1060 = vmatmul.mubr.f32.gmra.mrb[0].mxu0 %v1059
        %v1061 = vpop.f32.mrb[0].mxu0
        %v1062 = vadd.f32 %v979, %v1061
        %v1063 = vpop.f32.mrb[0].mxu0
        %1064 = vdwg.mxu0
        %1065 = vmatprep.subr.mxu0 0.0
        %v1066 = vand.u32 %v287, 4294901760
        %1067 = vmatpush1.msra.mxu0 %v1066
        %1068 = vmatprep.subr.mxu0 0.0
        %v1069 = vand.u32 %v288, 4294901760
        %1070 = vmatpush1.msra.mxu0 %v1069
        %1071 = vmatprep.subr.mxu0 0.0
        %1072 = vmatpush1.msra.mxu0 0.0
        %1073 = vmatprep.subr.mxu0 0.0
        %1074 = vmatpush1.msra.mxu0 0.0
        %1075 = vmatprep.subr.mxu0 0.0
        %1076 = vmatpush1.msra.mxu0 0.0
        %1077 = vmatprep.subr.mxu0 0.0
        %1078 = vmatpush1.msra.mxu0 0.0
        %1079 = vmatprep.subr.mxu0 0.0
        %1080 = vmatpush1.msra.mxu0 0.0
        %1081 = vmatprep.subr.mxu0 0.0
        %1082 = vmatpush1.msra.mxu0 0.0
        %1083 = vmatprep.subr.mxu0 0.0
        %1084 = vmatpush1.msra.mxu0 0.0
        %1085 = vmatprep.subr.mxu0 0.0
        %1086 = vmatpush1.msra.mxu0 0.0
        %1087 = vmatprep.subr.mxu0 0.0
        %1088 = vmatpush1.msra.mxu0 0.0
        %1089 = vmatprep.subr.mxu0 0.0
        %1090 = vmatpush1.msra.mxu0 0.0
        %1091 = vmatprep.subr.mxu0 0.0
        %1092 = vmatpush1.msra.mxu0 0.0
        %1093 = vmatprep.subr.mxu0 0.0
        %1094 = vmatpush1.msra.mxu0 0.0
        %1095 = vmatprep.subr.mxu0 0.0
        %1096 = vmatpush1.msra.mxu0 0.0
        %1097 = vmatprep.subr.mxu0 0.0
        %1098 = vmatpush1.msra.mxu0 0.0
        %1099 = vmatprep.subr.mxu0 0.0
        %1100 = vmatpush1.msra.mxu0 0.0
        %1101 = vmatprep.subr.mxu0 0.0
        %1102 = vmatpush1.msra.mxu0 0.0
        %1103 = vmatprep.subr.mxu0 0.0
        %1104 = vmatpush1.msra.mxu0 0.0
        %1105 = vmatprep.subr.mxu0 0.0
        %1106 = vmatpush1.msra.mxu0 0.0
        %1107 = vmatprep.subr.mxu0 0.0
        %1108 = vmatpush1.msra.mxu0 0.0
        %1109 = vmatprep.subr.mxu0 0.0
        %1110 = vmatpush1.msra.mxu0 0.0
        %1111 = vmatprep.subr.mxu0 0.0
        %1112 = vmatpush1.msra.mxu0 0.0
        %1113 = vmatprep.subr.mxu0 0.0
        %1114 = vmatpush1.msra.mxu0 0.0
        %1115 = vmatprep.subr.mxu0 0.0
        %1116 = vmatpush1.msra.mxu0 0.0
        %1117 = vmatprep.subr.mxu0 0.0
        %1118 = vmatpush1.msra.mxu0 0.0
        %1119 = vmatprep.subr.mxu0 0.0
        %1120 = vmatpush1.msra.mxu0 0.0
        %1121 = vmatprep.subr.mxu0 0.0
        %1122 = vmatpush1.msra.mxu0 0.0
        %1123 = vmatprep.subr.mxu0 0.0
        %1124 = vmatpush1.msra.mxu0 0.0
        %1125 = vmatprep.subr.mxu0 0.0
        %1126 = vmatpush1.msra.mxu0 0.0
        %1127 = vmatprep.subr.mxu0 0.0
        %1128 = vmatpush1.msra.mxu0 0.0
        %1129 = vmatprep.subr.mxu0 0.0
        %1130 = vmatpush1.msra.mxu0 0.0
        %1131 = vmatprep.mubr.f32.mxu0 0.0
        %v1132 = vand.u32 %v803, 4294901760
        %v1133 = vsub.f32 %v803, %v1132
        %v1134 = vand.u32 %v1133, 4294901760
        %1135 = vmatmul.mubr.f32.gmra.mrb[0].mxu0 %v1134
        %v1136 = vpop.f32.mrb[0].mxu0
        %v1137 = vadd.f32 %v1055, %v1136
        %v1138 = vpop.f32.mrb[0].mxu0
        %1139 = vmatprep.mubr.f32.mxu0 0.0
        %v1140 = vand.u32 %v806, 4294901760
        %v1141 = vsub.f32 %v806, %v1140
        %v1142 = vand.u32 %v1141, 4294901760
        %1143 = vmatmul.mubr.f32.gmra.mrb[0].mxu0 %v1142
        %v1144 = vpop.f32.mrb[0].mxu0
        %v1145 = vadd.f32 %v1062, %v1144
        %v1146 = vpop.f32.mrb[0].mxu0
        %1147 = vdwg.mxu0
        %1148 = vmatprep.subr.mxu0 0.0
        %v1149 = vand.u32 %v287, 4294901760
        %v1150 = vsub.f32 %v287, %v1149
        %v1151 = vand.u32 %v1150, 4294901760
        %1152 = vmatpush1.msra.mxu0 %v1151
        %1153 = vmatprep.subr.mxu0 0.0
        %v1154 = vand.u32 %v288, 4294901760
        %v1155 = vsub.f32 %v288, %v1154
        %v1156 = vand.u32 %v1155, 4294901760
        %1157 = vmatpush1.msra.mxu0 %v1156
        %1158 = vmatprep.subr.mxu0 0.0
        %1159 = vmatpush1.msra.mxu0 0.0
        %1160 = vmatprep.subr.mxu0 0.0
        %1161 = vmatpush1.msra.mxu0 0.0
        %1162 = vmatprep.subr.mxu0 0.0
        %1163 = vmatpush1.msra.mxu0 0.0
        %1164 = vmatprep.subr.mxu0 0.0
        %1165 = vmatpush1.msra.mxu0 0.0
        %1166 = vmatprep.subr.mxu0 0.0
        %1167 = vmatpush1.msra.mxu0 0.0
        %1168 = vmatprep.subr.mxu0 0.0
        %1169 = vmatpush1.msra.mxu0 0.0
        %1170 = vmatprep.subr.mxu0 0.0
        %1171 = vmatpush1.msra.mxu0 0.0
        %1172 = vmatprep.subr.mxu0 0.0
        %1173 = vmatpush1.msra.mxu0 0.0
        %1174 = vmatprep.subr.mxu0 0.0
        %1175 = vmatpush1.msra.mxu0 0.0
        %1176 = vmatprep.subr.mxu0 0.0
        %1177 = vmatpush1.msra.mxu0 0.0
        %1178 = vmatprep.subr.mxu0 0.0
        %1179 = vmatpush1.msra.mxu0 0.0
        %1180 = vmatprep.subr.mxu0 0.0
        %1181 = vmatpush1.msra.mxu0 0.0
        %1182 = vmatprep.subr.mxu0 0.0
        %1183 = vmatpush1.msra.mxu0 0.0
        %1184 = vmatprep.subr.mxu0 0.0
        %1185 = vmatpush1.msra.mxu0 0.0
        %1186 = vmatprep.subr.mxu0 0.0
        %1187 = vmatpush1.msra.mxu0 0.0
        %1188 = vmatprep.subr.mxu0 0.0
        %1189 = vmatpush1.msra.mxu0 0.0
        %1190 = vmatprep.subr.mxu0 0.0
        %1191 = vmatpush1.msra.mxu0 0.0
        %1192 = vmatprep.subr.mxu0 0.0
        %1193 = vmatpush1.msra.mxu0 0.0
        %1194 = vmatprep.subr.mxu0 0.0
        %1195 = vmatpush1.msra.mxu0 0.0
        %1196 = vmatprep.subr.mxu0 0.0
        %1197 = vmatpush1.msra.mxu0 0.0
        %1198 = vmatprep.subr.mxu0 0.0
        %1199 = vmatpush1.msra.mxu0 0.0
        %1200 = vmatprep.subr.mxu0 0.0
        %1201 = vmatpush1.msra.mxu0 0.0
        %1202 = vmatprep.subr.mxu0 0.0
        %1203 = vmatpush1.msra.mxu0 0.0
        %1204 = vmatprep.subr.mxu0 0.0
        %1205 = vmatpush1.msra.mxu0 0.0
        %1206 = vmatprep.subr.mxu0 0.0
        %1207 = vmatpush1.msra.mxu0 0.0
        %1208 = vmatprep.subr.mxu0 0.0
        %1209 = vmatpush1.msra.mxu0 0.0
        %1210 = vmatprep.subr.mxu0 0.0
        %1211 = vmatpush1.msra.mxu0 0.0
        %1212 = vmatprep.subr.mxu0 0.0
        %1213 = vmatpush1.msra.mxu0 0.0
        %1214 = vmatprep.subr.mxu0 0.0
        %1215 = vmatpush1.msra.mxu0 0.0
        %1216 = vmatprep.subr.mxu0 0.0
        %1217 = vmatpush1.msra.mxu0 0.0
        %1218 = vmatprep.mubr.f32.mxu0 0.0
        %v1219 = vand.u32 %v803, 4294901760
        %1220 = vmatmul.mubr.f32.gmra.mrb[0].mxu0 %v1219
        %v1221 = vpop.f32.mrb[0].mxu0
        %v1222 = vadd.f32 %v1137, %v1221
        %v1223 = vpop.f32.mrb[0].mxu0
        %1224 = vmatprep.mubr.f32.mxu0 0.0
        %v1225 = vand.u32 %v806, 4294901760
        %1226 = vmatmul.mubr.f32.gmra.mrb[0].mxu0 %v1225
        %v1227 = vpop.f32.mrb[0].mxu0
        %v1228 = vadd.f32 %v1145, %v1227
        %v1229 = vpop.f32.mrb[0].mxu0
        %1230 = vdwg.mxu0
        %1231 = vmatprep.subr.mxu0 0.0
        %v1232 = vand.u32 %v287, 4294901760
        %1233 = vmatpush1.msra.mxu0 %v1232
        %1234 = vmatprep.subr.mxu0 0.0
        %v1235 = vand.u32 %v288, 4294901760
        %1236 = vmatpush1.msra.mxu0 %v1235
        %1237 = vmatprep.subr.mxu0 0.0
        %1238 = vmatpush1.msra.mxu0 0.0
        %1239 = vmatprep.subr.mxu0 0.0
        %1240 = vmatpush1.msra.mxu0 0.0
        %1241 = vmatprep.subr.mxu0 0.0
        %1242 = vmatpush1.msra.mxu0 0.0
        %1243 = vmatprep.subr.mxu0 0.0
        %1244 = vmatpush1.msra.mxu0 0.0
        %1245 = vmatprep.subr.mxu0 0.0
        %1246 = vmatpush1.msra.mxu0 0.0
        %1247 = vmatprep.subr.mxu0 0.0
        %1248 = vmatpush1.msra.mxu0 0.0
        %1249 = vmatprep.subr.mxu0 0.0
        %1250 = vmatpush1.msra.mxu0 0.0
        %1251 = vmatprep.subr.mxu0 0.0
        %1252 = vmatpush1.msra.mxu0 0.0
        %1253 = vmatprep.subr.mxu0 0.0
        %1254 = vmatpush1.msra.mxu0 0.0
        %1255 = vmatprep.subr.mxu0 0.0
        %1256 = vmatpush1.msra.mxu0 0.0
        %1257 = vmatprep.subr.mxu0 0.0
        %1258 = vmatpush1.msra.mxu0 0.0
        %1259 = vmatprep.subr.mxu0 0.0
        %1260 = vmatpush1.msra.mxu0 0.0
        %1261 = vmatprep.subr.mxu0 0.0
        %1262 = vmatpush1.msra.mxu0 0.0
        %1263 = vmatprep.subr.mxu0 0.0
        %1264 = vmatpush1.msra.mxu0 0.0
        %1265 = vmatprep.subr.mxu0 0.0
        %1266 = vmatpush1.msra.mxu0 0.0
        %1267 = vmatprep.subr.mxu0 0.0
        %1268 = vmatpush1.msra.mxu0 0.0
        %1269 = vmatprep.subr.mxu0 0.0
        %1270 = vmatpush1.msra.mxu0 0.0
        %1271 = vmatprep.subr.mxu0 0.0
        %1272 = vmatpush1.msra.mxu0 0.0
        %1273 = vmatprep.subr.mxu0 0.0
        %1274 = vmatpush1.msra.mxu0 0.0
        %1275 = vmatprep.subr.mxu0 0.0
        %1276 = vmatpush1.msra.mxu0 0.0
        %1277 = vmatprep.subr.mxu0 0.0
        %1278 = vmatpush1.msra.mxu0 0.0
        %1279 = vmatprep.subr.mxu0 0.0
        %1280 = vmatpush1.msra.mxu0 0.0
        %1281 = vmatprep.subr.mxu0 0.0
        %1282 = vmatpush1.msra.mxu0 0.0
        %1283 = vmatprep.subr.mxu0 0.0
        %1284 = vmatpush1.msra.mxu0 0.0
        %1285 = vmatprep.subr.mxu0 0.0
        %1286 = vmatpush1.msra.mxu0 0.0
        %1287 = vmatprep.subr.mxu0 0.0
        %1288 = vmatpush1.msra.mxu0 0.0
        %1289 = vmatprep.subr.mxu0 0.0
        %1290 = vmatpush1.msra.mxu0 0.0
        %1291 = vmatprep.subr.mxu0 0.0
        %1292 = vmatpush1.msra.mxu0 0.0
        %1293 = vmatprep.subr.mxu0 0.0
        %1294 = vmatpush1.msra.mxu0 0.0
        %1295 = vmatprep.subr.mxu0 0.0
        %1296 = vmatpush1.msra.mxu0 0.0
        %1297 = vmatprep.mubr.f32.mxu0 0.0
        %v1298 = vand.u32 %v803, 4294901760
        %1299 = vmatmul.mubr.f32.gmra.mrb[0].mxu0 %v1298
        %v1300 = vpop.f32.mrb[0].mxu0
        %v1301 = vadd.f32 %v1222, %v1300
        %v1302 = vpop.f32.mrb[0].mxu0
        %1303 = vmatprep.mubr.f32.mxu0 0.0
        %v1304 = vand.u32 %v806, 4294901760
        %1305 = vmatmul.mubr.f32.gmra.mrb[0].mxu0 %v1304
        %v1306 = vpop.f32.mrb[0].mxu0
        %v1307 = vadd.f32 %v1228, %v1306
        %v1308 = vpop.f32.mrb[0].mxu0
        %1309 = vdwg.mxu0
        %1310 = vmatprep.subr.mxu0 0.0
        %v1311 = vand.u32 %v291, 4294901760
        %1312 = vmatpush1.msra.mxu0 %v1311
        %1313 = vmatprep.subr.mxu0 0.0
        %v1314 = vand.u32 %v292, 4294901760
        %1315 = vmatpush1.msra.mxu0 %v1314
        %1316 = vmatprep.subr.mxu0 0.0
        %1317 = vmatpush1.msra.mxu0 0.0
        %1318 = vmatprep.subr.mxu0 0.0
        %1319 = vmatpush1.msra.mxu0 0.0
        %1320 = vmatprep.subr.mxu0 0.0
        %1321 = vmatpush1.msra.mxu0 0.0
        %1322 = vmatprep.subr.mxu0 0.0
        %1323 = vmatpush1.msra.mxu0 0.0
        %1324 = vmatprep.subr.mxu0 0.0
        %1325 = vmatpush1.msra.mxu0 0.0
        %1326 = vmatprep.subr.mxu0 0.0
        %1327 = vmatpush1.msra.mxu0 0.0
        %1328 = vmatprep.subr.mxu0 0.0
        %1329 = vmatpush1.msra.mxu0 0.0
        %1330 = vmatprep.subr.mxu0 0.0
        %1331 = vmatpush1.msra.mxu0 0.0
        %1332 = vmatprep.subr.mxu0 0.0
        %1333 = vmatpush1.msra.mxu0 0.0
        %1334 = vmatprep.subr.mxu0 0.0
        %1335 = vmatpush1.msra.mxu0 0.0
        %1336 = vmatprep.subr.mxu0 0.0
        %1337 = vmatpush1.msra.mxu0 0.0
        %1338 = vmatprep.subr.mxu0 0.0
        %1339 = vmatpush1.msra.mxu0 0.0
        %1340 = vmatprep.subr.mxu0 0.0
        %1341 = vmatpush1.msra.mxu0 0.0
        %1342 = vmatprep.subr.mxu0 0.0
        %1343 = vmatpush1.msra.mxu0 0.0
        %1344 = vmatprep.subr.mxu0 0.0
        %1345 = vmatpush1.msra.mxu0 0.0
        %1346 = vmatprep.subr.mxu0 0.0
        %1347 = vmatpush1.msra.mxu0 0.0
        %1348 = vmatprep.subr.mxu0 0.0
        %1349 = vmatpush1.msra.mxu0 0.0
        %1350 = vmatprep.subr.mxu0 0.0
        %1351 = vmatpush1.msra.mxu0 0.0
        %1352 = vmatprep.subr.mxu0 0.0
        %1353 = vmatpush1.msra.mxu0 0.0
        %1354 = vmatprep.subr.mxu0 0.0
        %1355 = vmatpush1.msra.mxu0 0.0
        %1356 = vmatprep.subr.mxu0 0.0
        %1357 = vmatpush1.msra.mxu0 0.0
        %1358 = vmatprep.subr.mxu0 0.0
        %1359 = vmatpush1.msra.mxu0 0.0
        %1360 = vmatprep.subr.mxu0 0.0
        %1361 = vmatpush1.msra.mxu0 0.0
        %1362 = vmatprep.subr.mxu0 0.0
        %1363 = vmatpush1.msra.mxu0 0.0
        %1364 = vmatprep.subr.mxu0 0.0
        %1365 = vmatpush1.msra.mxu0 0.0
        %1366 = vmatprep.subr.mxu0 0.0
        %1367 = vmatpush1.msra.mxu0 0.0
        %1368 = vmatprep.subr.mxu0 0.0
        %1369 = vmatpush1.msra.mxu0 0.0
        %1370 = vmatprep.subr.mxu0 0.0
        %1371 = vmatpush1.msra.mxu0 0.0
        %1372 = vmatprep.subr.mxu0 0.0
        %1373 = vmatpush1.msra.mxu0 0.0
        %1374 = vmatprep.subr.mxu0 0.0
        %1375 = vmatpush1.msra.mxu0 0.0
        %1376 = vmatprep.mubr.f32.mxu0 0.0
        %v1377 = vand.u32 %v295, 4294901760
        %v1378 = vsub.f32 %v295, %v1377
        %v1379 = vand.u32 %v1378, 4294901760
        %v1380 = vsub.f32 %v1378, %v1379
        %v1381 = vand.u32 %v1380, 4294901760
        %1382 = vmatmul.mubr.f32.gmra.mrb[0].mxu0 %v1381
        %v1383 = vpop.f32.mrb[0].mxu0
        %v1384 = vadd.f32 0.0, %v1383
        %v1385 = vpop.f32.mrb[0].mxu0
        %1386 = vmatprep.mubr.f32.mxu0 0.0
        %v1387 = vand.u32 %v298, 4294901760
        %v1388 = vsub.f32 %v298, %v1387
        %v1389 = vand.u32 %v1388, 4294901760
        %v1390 = vsub.f32 %v1388, %v1389
        %v1391 = vand.u32 %v1390, 4294901760
        %1392 = vmatmul.mubr.f32.gmra.mrb[0].mxu0 %v1391
        %v1393 = vpop.f32.mrb[0].mxu0
        %v1394 = vadd.f32 0.0, %v1393
        %v1395 = vpop.f32.mrb[0].mxu0
        %1396 = vdwg.mxu0
        %1397 = vmatprep.subr.mxu0 0.0
        %v1398 = vand.u32 %v291, 4294901760
        %v1399 = vsub.f32 %v291, %v1398
        %v1400 = vand.u32 %v1399, 4294901760
        %v1401 = vsub.f32 %v1399, %v1400
        %v1402 = vand.u32 %v1401, 4294901760
        %1403 = vmatpush1.msra.mxu0 %v1402
        %1404 = vmatprep.subr.mxu0 0.0
        %v1405 = vand.u32 %v292, 4294901760
        %v1406 = vsub.f32 %v292, %v1405
        %v1407 = vand.u32 %v1406, 4294901760
        %v1408 = vsub.f32 %v1406, %v1407
        %v1409 = vand.u32 %v1408, 4294901760
        %1410 = vmatpush1.msra.mxu0 %v1409
        %1411 = vmatprep.subr.mxu0 0.0
        %1412 = vmatpush1.msra.mxu0 0.0
        %1413 = vmatprep.subr.mxu0 0.0
        %1414 = vmatpush1.msra.mxu0 0.0
        %1415 = vmatprep.subr.mxu0 0.0
        %1416 = vmatpush1.msra.mxu0 0.0
        %1417 = vmatprep.subr.mxu0 0.0
        %1418 = vmatpush1.msra.mxu0 0.0
        %1419 = vmatprep.subr.mxu0 0.0
        %1420 = vmatpush1.msra.mxu0 0.0
        %1421 = vmatprep.subr.mxu0 0.0
        %1422 = vmatpush1.msra.mxu0 0.0
        %1423 = vmatprep.subr.mxu0 0.0
        %1424 = vmatpush1.msra.mxu0 0.0
        %1425 = vmatprep.subr.mxu0 0.0
        %1426 = vmatpush1.msra.mxu0 0.0
        %1427 = vmatprep.subr.mxu0 0.0
        %1428 = vmatpush1.msra.mxu0 0.0
        %1429 = vmatprep.subr.mxu0 0.0
        %1430 = vmatpush1.msra.mxu0 0.0
        %1431 = vmatprep.subr.mxu0 0.0
        %1432 = vmatpush1.msra.mxu0 0.0
        %1433 = vmatprep.subr.mxu0 0.0
        %1434 = vmatpush1.msra.mxu0 0.0
        %1435 = vmatprep.subr.mxu0 0.0
        %1436 = vmatpush1.msra.mxu0 0.0
        %1437 = vmatprep.subr.mxu0 0.0
        %1438 = vmatpush1.msra.mxu0 0.0
        %1439 = vmatprep.subr.mxu0 0.0
        %1440 = vmatpush1.msra.mxu0 0.0
        %1441 = vmatprep.subr.mxu0 0.0
        %1442 = vmatpush1.msra.mxu0 0.0
        %1443 = vmatprep.subr.mxu0 0.0
        %1444 = vmatpush1.msra.mxu0 0.0
        %1445 = vmatprep.subr.mxu0 0.0
        %1446 = vmatpush1.msra.mxu0 0.0
        %1447 = vmatprep.subr.mxu0 0.0
        %1448 = vmatpush1.msra.mxu0 0.0
        %1449 = vmatprep.subr.mxu0 0.0
        %1450 = vmatpush1.msra.mxu0 0.0
        %1451 = vmatprep.subr.mxu0 0.0
        %1452 = vmatpush1.msra.mxu0 0.0
        %1453 = vmatprep.subr.mxu0 0.0
        %1454 = vmatpush1.msra.mxu0 0.0
        %1455 = vmatprep.subr.mxu0 0.0
        %1456 = vmatpush1.msra.mxu0 0.0
        %1457 = vmatprep.subr.mxu0 0.0
        %1458 = vmatpush1.msra.mxu0 0.0
        %1459 = vmatprep.subr.mxu0 0.0
        %1460 = vmatpush1.msra.mxu0 0.0
        %1461 = vmatprep.subr.mxu0 0.0
        %1462 = vmatpush1.msra.mxu0 0.0
        %1463 = vmatprep.subr.mxu0 0.0
        %1464 = vmatpush1.msra.mxu0 0.0
        %1465 = vmatprep.subr.mxu0 0.0
        %1466 = vmatpush1.msra.mxu0 0.0
        %1467 = vmatprep.subr.mxu0 0.0
        %1468 = vmatpush1.msra.mxu0 0.0
        %1469 = vmatprep.subr.mxu0 0.0
        %1470 = vmatpush1.msra.mxu0 0.0
        %1471 = vmatprep.mubr.f32.mxu0 0.0
        %v1472 = vand.u32 %v295, 4294901760
        %1473 = vmatmul.mubr.f32.gmra.mrb[0].mxu0 %v1472
        %v1474 = vpop.f32.mrb[0].mxu0
        %v1475 = vadd.f32 %v1384, %v1474
        %v1476 = vpop.f32.mrb[0].mxu0
        %1477 = vmatprep.mubr.f32.mxu0 0.0
        %v1478 = vand.u32 %v298, 4294901760
        %1479 = vmatmul.mubr.f32.gmra.mrb[0].mxu0 %v1478
        %v1480 = vpop.f32.mrb[0].mxu0
        %v1481 = vadd.f32 %v1394, %v1480
        %v1482 = vpop.f32.mrb[0].mxu0
        %1483 = vdwg.mxu0
        %1484 = vmatprep.subr.mxu0 0.0
        %v1485 = vand.u32 %v291, 4294901760
        %v1486 = vsub.f32 %v291, %v1485
        %1487 = vmatpush1.msra.mxu0 %v1486
        %1488 = vmatprep.subr.mxu0 0.0
        %v1489 = vand.u32 %v292, 4294901760
        %v1490 = vsub.f32 %v292, %v1489
        %1491 = vmatpush1.msra.mxu0 %v1490
        %1492 = vmatprep.subr.mxu0 0.0
        %1493 = vmatpush1.msra.mxu0 0.0
        %1494 = vmatprep.subr.mxu0 0.0
        %1495 = vmatpush1.msra.mxu0 0.0
        %1496 = vmatprep.subr.mxu0 0.0
        %1497 = vmatpush1.msra.mxu0 0.0
        %1498 = vmatprep.subr.mxu0 0.0
        %1499 = vmatpush1.msra.mxu0 0.0
        %1500 = vmatprep.subr.mxu0 0.0
        %1501 = vmatpush1.msra.mxu0 0.0
        %1502 = vmatprep.subr.mxu0 0.0
        %1503 = vmatpush1.msra.mxu0 0.0
        %1504 = vmatprep.subr.mxu0 0.0
        %1505 = vmatpush1.msra.mxu0 0.0
        %1506 = vmatprep.subr.mxu0 0.0
        %1507 = vmatpush1.msra.mxu0 0.0
        %1508 = vmatprep.subr.mxu0 0.0
        %1509 = vmatpush1.msra.mxu0 0.0
        %1510 = vmatprep.subr.mxu0 0.0
        %1511 = vmatpush1.msra.mxu0 0.0
        %1512 = vmatprep.subr.mxu0 0.0
        %1513 = vmatpush1.msra.mxu0 0.0
        %1514 = vmatprep.subr.mxu0 0.0
        %1515 = vmatpush1.msra.mxu0 0.0
        %1516 = vmatprep.subr.mxu0 0.0
        %1517 = vmatpush1.msra.mxu0 0.0
        %1518 = vmatprep.subr.mxu0 0.0
        %1519 = vmatpush1.msra.mxu0 0.0
        %1520 = vmatprep.subr.mxu0 0.0
        %1521 = vmatpush1.msra.mxu0 0.0
        %1522 = vmatprep.subr.mxu0 0.0
        %1523 = vmatpush1.msra.mxu0 0.0
        %1524 = vmatprep.subr.mxu0 0.0
        %1525 = vmatpush1.msra.mxu0 0.0
        %1526 = vmatprep.subr.mxu0 0.0
        %1527 = vmatpush1.msra.mxu0 0.0
        %1528 = vmatprep.subr.mxu0 0.0
        %1529 = vmatpush1.msra.mxu0 0.0
        %1530 = vmatprep.subr.mxu0 0.0
        %1531 = vmatpush1.msra.mxu0 0.0
        %1532 = vmatprep.subr.mxu0 0.0
        %1533 = vmatpush1.msra.mxu0 0.0
        %1534 = vmatprep.subr.mxu0 0.0
        %1535 = vmatpush1.msra.mxu0 0.0
        %1536 = vmatprep.subr.mxu0 0.0
        %1537 = vmatpush1.msra.mxu0 0.0
        %1538 = vmatprep.subr.mxu0 0.0
        %1539 = vmatpush1.msra.mxu0 0.0
        %1540 = vmatprep.subr.mxu0 0.0
        %1541 = vmatpush1.msra.mxu0 0.0
        %1542 = vmatprep.subr.mxu0 0.0
        %1543 = vmatpush1.msra.mxu0 0.0
        %1544 = vmatprep.subr.mxu0 0.0
        %1545 = vmatpush1.msra.mxu0 0.0
        %1546 = vmatprep.subr.mxu0 0.0
        %1547 = vmatpush1.msra.mxu0 0.0
        %1548 = vmatprep.subr.mxu0 0.0
        %1549 = vmatpush1.msra.mxu0 0.0
        %1550 = vmatprep.subr.mxu0 0.0
        %1551 = vmatpush1.msra.mxu0 0.0
        %1552 = vmatprep.mubr.f32.mxu0 0.0
        %v1553 = vand.u32 %v295, 4294901760
        %v1554 = vsub.f32 %v295, %v1553
        %1555 = vmatmul.mubr.f32.gmra.mrb[0].mxu0 %v1554
        %v1556 = vpop.f32.mrb[0].mxu0
        %v1557 = vadd.f32 %v1475, %v1556
        %v1558 = vpop.f32.mrb[0].mxu0
        %1559 = vmatprep.mubr.f32.mxu0 0.0
        %v1560 = vand.u32 %v298, 4294901760
        %v1561 = vsub.f32 %v298, %v1560
        %1562 = vmatmul.mubr.f32.gmra.mrb[0].mxu0 %v1561
        %v1563 = vpop.f32.mrb[0].mxu0
        %v1564 = vadd.f32 %v1481, %v1563
        %v1565 = vpop.f32.mrb[0].mxu0
        %1566 = vdwg.mxu0
        %1567 = vmatprep.subr.mxu0 0.0
        %v1568 = vand.u32 %v291, 4294901760
        %1569 = vmatpush1.msra.mxu0 %v1568
        %1570 = vmatprep.subr.mxu0 0.0
        %v1571 = vand.u32 %v292, 4294901760
        %1572 = vmatpush1.msra.mxu0 %v1571
        %1573 = vmatprep.subr.mxu0 0.0
        %1574 = vmatpush1.msra.mxu0 0.0
        %1575 = vmatprep.subr.mxu0 0.0
        %1576 = vmatpush1.msra.mxu0 0.0
        %1577 = vmatprep.subr.mxu0 0.0
        %1578 = vmatpush1.msra.mxu0 0.0
        %1579 = vmatprep.subr.mxu0 0.0
        %1580 = vmatpush1.msra.mxu0 0.0
        %1581 = vmatprep.subr.mxu0 0.0
        %1582 = vmatpush1.msra.mxu0 0.0
        %1583 = vmatprep.subr.mxu0 0.0
        %1584 = vmatpush1.msra.mxu0 0.0
        %1585 = vmatprep.subr.mxu0 0.0
        %1586 = vmatpush1.msra.mxu0 0.0
        %1587 = vmatprep.subr.mxu0 0.0
        %1588 = vmatpush1.msra.mxu0 0.0
        %1589 = vmatprep.subr.mxu0 0.0
        %1590 = vmatpush1.msra.mxu0 0.0
        %1591 = vmatprep.subr.mxu0 0.0
        %1592 = vmatpush1.msra.mxu0 0.0
        %1593 = vmatprep.subr.mxu0 0.0
        %1594 = vmatpush1.msra.mxu0 0.0
        %1595 = vmatprep.subr.mxu0 0.0
        %1596 = vmatpush1.msra.mxu0 0.0
        %1597 = vmatprep.subr.mxu0 0.0
        %1598 = vmatpush1.msra.mxu0 0.0
        %1599 = vmatprep.subr.mxu0 0.0
        %1600 = vmatpush1.msra.mxu0 0.0
        %1601 = vmatprep.subr.mxu0 0.0
        %1602 = vmatpush1.msra.mxu0 0.0
        %1603 = vmatprep.subr.mxu0 0.0
        %1604 = vmatpush1.msra.mxu0 0.0
        %1605 = vmatprep.subr.mxu0 0.0
        %1606 = vmatpush1.msra.mxu0 0.0
        %1607 = vmatprep.subr.mxu0 0.0
        %1608 = vmatpush1.msra.mxu0 0.0
        %1609 = vmatprep.subr.mxu0 0.0
        %1610 = vmatpush1.msra.mxu0 0.0
        %1611 = vmatprep.subr.mxu0 0.0
        %1612 = vmatpush1.msra.mxu0 0.0
        %1613 = vmatprep.subr.mxu0 0.0
        %1614 = vmatpush1.msra.mxu0 0.0
        %1615 = vmatprep.subr.mxu0 0.0
        %1616 = vmatpush1.msra.mxu0 0.0
        %1617 = vmatprep.subr.mxu0 0.0
        %1618 = vmatpush1.msra.mxu0 0.0
        %1619 = vmatprep.subr.mxu0 0.0
        %1620 = vmatpush1.msra.mxu0 0.0
        %1621 = vmatprep.subr.mxu0 0.0
        %1622 = vmatpush1.msra.mxu0 0.0
        %1623 = vmatprep.subr.mxu0 0.0
        %1624 = vmatpush1.msra.mxu0 0.0
        %1625 = vmatprep.subr.mxu0 0.0
        %1626 = vmatpush1.msra.mxu0 0.0
        %1627 = vmatprep.subr.mxu0 0.0
        %1628 = vmatpush1.msra.mxu0 0.0
        %1629 = vmatprep.subr.mxu0 0.0
        %1630 = vmatpush1.msra.mxu0 0.0
        %1631 = vmatprep.subr.mxu0 0.0
        %1632 = vmatpush1.msra.mxu0 0.0
        %1633 = vmatprep.mubr.f32.mxu0 0.0
        %v1634 = vand.u32 %v295, 4294901760
        %v1635 = vsub.f32 %v295, %v1634
        %v1636 = vand.u32 %v1635, 4294901760
        %1637 = vmatmul.mubr.f32.gmra.mrb[0].mxu0 %v1636
        %v1638 = vpop.f32.mrb[0].mxu0
        %v1639 = vadd.f32 %v1557, %v1638
        %v1640 = vpop.f32.mrb[0].mxu0
        %1641 = vmatprep.mubr.f32.mxu0 0.0
        %v1642 = vand.u32 %v298, 4294901760
        %v1643 = vsub.f32 %v298, %v1642
        %v1644 = vand.u32 %v1643, 4294901760
        %1645 = vmatmul.mubr.f32.gmra.mrb[0].mxu0 %v1644
        %v1646 = vpop.f32.mrb[0].mxu0
        %v1647 = vadd.f32 %v1564, %v1646
        %v1648 = vpop.f32.mrb[0].mxu0
        %1649 = vdwg.mxu0
        %1650 = vmatprep.subr.mxu0 0.0
        %v1651 = vand.u32 %v291, 4294901760
        %v1652 = vsub.f32 %v291, %v1651
        %v1653 = vand.u32 %v1652, 4294901760
        %1654 = vmatpush1.msra.mxu0 %v1653
        %1655 = vmatprep.subr.mxu0 0.0
        %v1656 = vand.u32 %v292, 4294901760
        %v1657 = vsub.f32 %v292, %v1656
        %v1658 = vand.u32 %v1657, 4294901760
        %1659 = vmatpush1.msra.mxu0 %v1658
        %1660 = vmatprep.subr.mxu0 0.0
        %1661 = vmatpush1.msra.mxu0 0.0
        %1662 = vmatprep.subr.mxu0 0.0
        %1663 = vmatpush1.msra.mxu0 0.0
        %1664 = vmatprep.subr.mxu0 0.0
        %1665 = vmatpush1.msra.mxu0 0.0
        %1666 = vmatprep.subr.mxu0 0.0
        %1667 = vmatpush1.msra.mxu0 0.0
        %1668 = vmatprep.subr.mxu0 0.0
        %1669 = vmatpush1.msra.mxu0 0.0
        %1670 = vmatprep.subr.mxu0 0.0
        %1671 = vmatpush1.msra.mxu0 0.0
        %1672 = vmatprep.subr.mxu0 0.0
        %1673 = vmatpush1.msra.mxu0 0.0
        %1674 = vmatprep.subr.mxu0 0.0
        %1675 = vmatpush1.msra.mxu0 0.0
        %1676 = vmatprep.subr.mxu0 0.0
        %1677 = vmatpush1.msra.mxu0 0.0
        %1678 = vmatprep.subr.mxu0 0.0
        %1679 = vmatpush1.msra.mxu0 0.0
        %1680 = vmatprep.subr.mxu0 0.0
        %1681 = vmatpush1.msra.mxu0 0.0
        %1682 = vmatprep.subr.mxu0 0.0
        %1683 = vmatpush1.msra.mxu0 0.0
        %1684 = vmatprep.subr.mxu0 0.0
        %1685 = vmatpush1.msra.mxu0 0.0
        %1686 = vmatprep.subr.mxu0 0.0
        %1687 = vmatpush1.msra.mxu0 0.0
        %1688 = vmatprep.subr.mxu0 0.0
        %1689 = vmatpush1.msra.mxu0 0.0
        %1690 = vmatprep.subr.mxu0 0.0
        %1691 = vmatpush1.msra.mxu0 0.0
        %1692 = vmatprep.subr.mxu0 0.0
        %1693 = vmatpush1.msra.mxu0 0.0
        %1694 = vmatprep.subr.mxu0 0.0
        %1695 = vmatpush1.msra.mxu0 0.0
        %1696 = vmatprep.subr.mxu0 0.0
        %1697 = vmatpush1.msra.mxu0 0.0
        %1698 = vmatprep.subr.mxu0 0.0
        %1699 = vmatpush1.msra.mxu0 0.0
        %1700 = vmatprep.subr.mxu0 0.0
        %1701 = vmatpush1.msra.mxu0 0.0
        %1702 = vmatprep.subr.mxu0 0.0
        %1703 = vmatpush1.msra.mxu0 0.0
        %1704 = vmatprep.subr.mxu0 0.0
        %1705 = vmatpush1.msra.mxu0 0.0
        %1706 = vmatprep.subr.mxu0 0.0
        %1707 = vmatpush1.msra.mxu0 0.0
        %1708 = vmatprep.subr.mxu0 0.0
        %1709 = vmatpush1.msra.mxu0 0.0
        %1710 = vmatprep.subr.mxu0 0.0
        %1711 = vmatpush1.msra.mxu0 0.0
        %1712 = vmatprep.subr.mxu0 0.0
        %1713 = vmatpush1.msra.mxu0 0.0
        %1714 = vmatprep.subr.mxu0 0.0
        %1715 = vmatpush1.msra.mxu0 0.0
        %1716 = vmatprep.subr.mxu0 0.0
        %1717 = vmatpush1.msra.mxu0 0.0
        %1718 = vmatprep.subr.mxu0 0.0
        %1719 = vmatpush1.msra.mxu0 0.0
        %1720 = vmatprep.mubr.f32.mxu0 0.0
        %v1721 = vand.u32 %v295, 4294901760
        %1722 = vmatmul.mubr.f32.gmra.mrb[0].mxu0 %v1721
        %v1723 = vpop.f32.mrb[0].mxu0
        %v1724 = vadd.f32 %v1639, %v1723
        %v1725 = vpop.f32.mrb[0].mxu0
        %1726 = vmatprep.mubr.f32.mxu0 0.0
        %v1727 = vand.u32 %v298, 4294901760
        %1728 = vmatmul.mubr.f32.gmra.mrb[0].mxu0 %v1727
        %v1729 = vpop.f32.mrb[0].mxu0
        %v1730 = vadd.f32 %v1647, %v1729
        %v1731 = vpop.f32.mrb[0].mxu0
        %1732 = vdwg.mxu0
        %1733 = vmatprep.subr.mxu0 0.0
        %v1734 = vand.u32 %v291, 4294901760
        %1735 = vmatpush1.msra.mxu0 %v1734
        %1736 = vmatprep.subr.mxu0 0.0
        %v1737 = vand.u32 %v292, 4294901760
        %1738 = vmatpush1.msra.mxu0 %v1737
        %1739 = vmatprep.subr.mxu0 0.0
        %1740 = vmatpush1.msra.mxu0 0.0
        %1741 = vmatprep.subr.mxu0 0.0
        %1742 = vmatpush1.msra.mxu0 0.0
        %1743 = vmatprep.subr.mxu0 0.0
        %1744 = vmatpush1.msra.mxu0 0.0
        %1745 = vmatprep.subr.mxu0 0.0
        %1746 = vmatpush1.msra.mxu0 0.0
        %1747 = vmatprep.subr.mxu0 0.0
        %1748 = vmatpush1.msra.mxu0 0.0
        %1749 = vmatprep.subr.mxu0 0.0
        %1750 = vmatpush1.msra.mxu0 0.0
        %1751 = vmatprep.subr.mxu0 0.0
        %1752 = vmatpush1.msra.mxu0 0.0
        %1753 = vmatprep.subr.mxu0 0.0
        %1754 = vmatpush1.msra.mxu0 0.0
        %1755 = vmatprep.subr.mxu0 0.0
        %1756 = vmatpush1.msra.mxu0 0.0
        %1757 = vmatprep.subr.mxu0 0.0
        %1758 = vmatpush1.msra.mxu0 0.0
        %1759 = vmatprep.subr.mxu0 0.0
        %1760 = vmatpush1.msra.mxu0 0.0
        %1761 = vmatprep.subr.mxu0 0.0
        %1762 = vmatpush1.msra.mxu0 0.0
        %1763 = vmatprep.subr.mxu0 0.0
        %1764 = vmatpush1.msra.mxu0 0.0
        %1765 = vmatprep.subr.mxu0 0.0
        %1766 = vmatpush1.msra.mxu0 0.0
        %1767 = vmatprep.subr.mxu0 0.0
        %1768 = vmatpush1.msra.mxu0 0.0
        %1769 = vmatprep.subr.mxu0 0.0
        %1770 = vmatpush1.msra.mxu0 0.0
        %1771 = vmatprep.subr.mxu0 0.0
        %1772 = vmatpush1.msra.mxu0 0.0
        %1773 = vmatprep.subr.mxu0 0.0
        %1774 = vmatpush1.msra.mxu0 0.0
        %1775 = vmatprep.subr.mxu0 0.0
        %1776 = vmatpush1.msra.mxu0 0.0
        %1777 = vmatprep.subr.mxu0 0.0
        %1778 = vmatpush1.msra.mxu0 0.0
        %1779 = vmatprep.subr.mxu0 0.0
        %1780 = vmatpush1.msra.mxu0 0.0
        %1781 = vmatprep.subr.mxu0 0.0
        %1782 = vmatpush1.msra.mxu0 0.0
        %1783 = vmatprep.subr.mxu0 0.0
        %1784 = vmatpush1.msra.mxu0 0.0
        %1785 = vmatprep.subr.mxu0 0.0
        %1786 = vmatpush1.msra.mxu0 0.0
        %1787 = vmatprep.subr.mxu0 0.0
        %1788 = vmatpush1.msra.mxu0 0.0
        %1789 = vmatprep.subr.mxu0 0.0
        %1790 = vmatpush1.msra.mxu0 0.0
        %1791 = vmatprep.subr.mxu0 0.0
        %1792 = vmatpush1.msra.mxu0 0.0
        %1793 = vmatprep.subr.mxu0 0.0
        %1794 = vmatpush1.msra.mxu0 0.0
        %1795 = vmatprep.subr.mxu0 0.0
        %1796 = vmatpush1.msra.mxu0 0.0
        %1797 = vmatprep.subr.mxu0 0.0
        %1798 = vmatpush1.msra.mxu0 0.0
        %1799 = vmatprep.mubr.f32.mxu0 0.0
        %v1800 = vand.u32 %v295, 4294901760
        %1801 = vmatmul.mubr.f32.gmra.mrb[0].mxu0 %v1800
        %v1802 = vpop.f32.mrb[0].mxu0
        %v1803 = vadd.f32 %v1724, %v1802
        %v1804 = vpop.f32.mrb[0].mxu0
        %1805 = vmatprep.mubr.f32.mxu0 0.0
        %v1806 = vand.u32 %v298, 4294901760
        %1807 = vmatmul.mubr.f32.gmra.mrb[0].mxu0 %v1806
        %v1808 = vpop.f32.mrb[0].mxu0
        %v1809 = vadd.f32 %v1730, %v1808
        %v1810 = vpop.f32.mrb[0].mxu0
        %1811 = vdwg.mxu0
        %v1813 = vsel %vm293, %v1803, 0
        %v1816 = vsel %vm293, %v1809, 0
        %1818 = vmatprep.subr.mxu0 0.0
        %v1819 = vand.u32 %v287, 4294901760
        %1820 = vmatpush1.msra.mxu0 %v1819
        %1821 = vmatprep.subr.mxu0 0.0
        %v1822 = vand.u32 %v288, 4294901760
        %1823 = vmatpush1.msra.mxu0 %v1822
        %1824 = vmatprep.subr.mxu0 0.0
        %1825 = vmatpush1.msra.mxu0 0.0
        %1826 = vmatprep.subr.mxu0 0.0
        %1827 = vmatpush1.msra.mxu0 0.0
        %1828 = vmatprep.subr.mxu0 0.0
        %1829 = vmatpush1.msra.mxu0 0.0
        %1830 = vmatprep.subr.mxu0 0.0
        %1831 = vmatpush1.msra.mxu0 0.0
        %1832 = vmatprep.subr.mxu0 0.0
        %1833 = vmatpush1.msra.mxu0 0.0
        %1834 = vmatprep.subr.mxu0 0.0
        %1835 = vmatpush1.msra.mxu0 0.0
        %1836 = vmatprep.subr.mxu0 0.0
        %1837 = vmatpush1.msra.mxu0 0.0
        %1838 = vmatprep.subr.mxu0 0.0
        %1839 = vmatpush1.msra.mxu0 0.0
        %1840 = vmatprep.subr.mxu0 0.0
        %1841 = vmatpush1.msra.mxu0 0.0
        %1842 = vmatprep.subr.mxu0 0.0
        %1843 = vmatpush1.msra.mxu0 0.0
        %1844 = vmatprep.subr.mxu0 0.0
        %1845 = vmatpush1.msra.mxu0 0.0
        %1846 = vmatprep.subr.mxu0 0.0
        %1847 = vmatpush1.msra.mxu0 0.0
        %1848 = vmatprep.subr.mxu0 0.0
        %1849 = vmatpush1.msra.mxu0 0.0
        %1850 = vmatprep.subr.mxu0 0.0
        %1851 = vmatpush1.msra.mxu0 0.0
        %1852 = vmatprep.subr.mxu0 0.0
        %1853 = vmatpush1.msra.mxu0 0.0
        %1854 = vmatprep.subr.mxu0 0.0
        %1855 = vmatpush1.msra.mxu0 0.0
        %1856 = vmatprep.subr.mxu0 0.0
        %1857 = vmatpush1.msra.mxu0 0.0
        %1858 = vmatprep.subr.mxu0 0.0
        %1859 = vmatpush1.msra.mxu0 0.0
        %1860 = vmatprep.subr.mxu0 0.0
        %1861 = vmatpush1.msra.mxu0 0.0
        %1862 = vmatprep.subr.mxu0 0.0
        %1863 = vmatpush1.msra.mxu0 0.0
        %1864 = vmatprep.subr.mxu0 0.0
        %1865 = vmatpush1.msra.mxu0 0.0
        %1866 = vmatprep.subr.mxu0 0.0
        %1867 = vmatpush1.msra.mxu0 0.0
        %1868 = vmatprep.subr.mxu0 0.0
        %1869 = vmatpush1.msra.mxu0 0.0
        %1870 = vmatprep.subr.mxu0 0.0
        %1871 = vmatpush1.msra.mxu0 0.0
        %1872 = vmatprep.subr.mxu0 0.0
        %1873 = vmatpush1.msra.mxu0 0.0
        %1874 = vmatprep.subr.mxu0 0.0
        %1875 = vmatpush1.msra.mxu0 0.0
        %1876 = vmatprep.subr.mxu0 0.0
        %1877 = vmatpush1.msra.mxu0 0.0
        %1878 = vmatprep.subr.mxu0 0.0
        %1879 = vmatpush1.msra.mxu0 0.0
        %1880 = vmatprep.subr.mxu0 0.0
        %1881 = vmatpush1.msra.mxu0 0.0
        %1882 = vmatprep.subr.mxu0 0.0
        %1883 = vmatpush1.msra.mxu0 0.0
        %1884 = vmatprep.mubr.f32.mxu0 0.0
        %v1885 = vand.u32 %v1813, 4294901760
        %v1886 = vsub.f32 %v1813, %v1885
        %v1887 = vand.u32 %v1886, 4294901760
        %v1888 = vsub.f32 %v1886, %v1887
        %v1889 = vand.u32 %v1888, 4294901760
        %1890 = vmatmul.mubr.f32.gmra.mrb[0].mxu0 %v1889
        %v1891 = vpop.f32.mrb[0].mxu0
        %v1892 = vadd.f32 0.0, %v1891
        %v1893 = vpop.f32.mrb[0].mxu0
        %1894 = vmatprep.mubr.f32.mxu0 0.0
        %v1895 = vand.u32 %v1816, 4294901760
        %v1896 = vsub.f32 %v1816, %v1895
        %v1897 = vand.u32 %v1896, 4294901760
        %v1898 = vsub.f32 %v1896, %v1897
        %v1899 = vand.u32 %v1898, 4294901760
        %1900 = vmatmul.mubr.f32.gmra.mrb[0].mxu0 %v1899
        %v1901 = vpop.f32.mrb[0].mxu0
        %v1902 = vadd.f32 0.0, %v1901
        %v1903 = vpop.f32.mrb[0].mxu0
        %1904 = vdwg.mxu0
        %1905 = vmatprep.subr.mxu0 0.0
        %v1906 = vand.u32 %v287, 4294901760
        %v1907 = vsub.f32 %v287, %v1906
        %v1908 = vand.u32 %v1907, 4294901760
        %v1909 = vsub.f32 %v1907, %v1908
        %v1910 = vand.u32 %v1909, 4294901760
        %1911 = vmatpush1.msra.mxu0 %v1910
        %1912 = vmatprep.subr.mxu0 0.0
        %v1913 = vand.u32 %v288, 4294901760
        %v1914 = vsub.f32 %v288, %v1913
        %v1915 = vand.u32 %v1914, 4294901760
        %v1916 = vsub.f32 %v1914, %v1915
        %v1917 = vand.u32 %v1916, 4294901760
        %1918 = vmatpush1.msra.mxu0 %v1917
        %1919 = vmatprep.subr.mxu0 0.0
        %1920 = vmatpush1.msra.mxu0 0.0
        %1921 = vmatprep.subr.mxu0 0.0
        %1922 = vmatpush1.msra.mxu0 0.0
        %1923 = vmatprep.subr.mxu0 0.0
        %1924 = vmatpush1.msra.mxu0 0.0
        %1925 = vmatprep.subr.mxu0 0.0
        %1926 = vmatpush1.msra.mxu0 0.0
        %1927 = vmatprep.subr.mxu0 0.0
        %1928 = vmatpush1.msra.mxu0 0.0
        %1929 = vmatprep.subr.mxu0 0.0
        %1930 = vmatpush1.msra.mxu0 0.0
        %1931 = vmatprep.subr.mxu0 0.0
        %1932 = vmatpush1.msra.mxu0 0.0
        %1933 = vmatprep.subr.mxu0 0.0
        %1934 = vmatpush1.msra.mxu0 0.0
        %1935 = vmatprep.subr.mxu0 0.0
        %1936 = vmatpush1.msra.mxu0 0.0
        %1937 = vmatprep.subr.mxu0 0.0
        %1938 = vmatpush1.msra.mxu0 0.0
        %1939 = vmatprep.subr.mxu0 0.0
        %1940 = vmatpush1.msra.mxu0 0.0
        %1941 = vmatprep.subr.mxu0 0.0
        %1942 = vmatpush1.msra.mxu0 0.0
        %1943 = vmatprep.subr.mxu0 0.0
        %1944 = vmatpush1.msra.mxu0 0.0
        %1945 = vmatprep.subr.mxu0 0.0
        %1946 = vmatpush1.msra.mxu0 0.0
        %1947 = vmatprep.subr.mxu0 0.0
        %1948 = vmatpush1.msra.mxu0 0.0
        %1949 = vmatprep.subr.mxu0 0.0
        %1950 = vmatpush1.msra.mxu0 0.0
        %1951 = vmatprep.subr.mxu0 0.0
        %1952 = vmatpush1.msra.mxu0 0.0
        %1953 = vmatprep.subr.mxu0 0.0
        %1954 = vmatpush1.msra.mxu0 0.0
        %1955 = vmatprep.subr.mxu0 0.0
        %1956 = vmatpush1.msra.mxu0 0.0
        %1957 = vmatprep.subr.mxu0 0.0
        %1958 = vmatpush1.msra.mxu0 0.0
        %1959 = vmatprep.subr.mxu0 0.0
        %1960 = vmatpush1.msra.mxu0 0.0
        %1961 = vmatprep.subr.mxu0 0.0
        %1962 = vmatpush1.msra.mxu0 0.0
        %1963 = vmatprep.subr.mxu0 0.0
        %1964 = vmatpush1.msra.mxu0 0.0
        %1965 = vmatprep.subr.mxu0 0.0
        %1966 = vmatpush1.msra.mxu0 0.0
        %1967 = vmatprep.subr.mxu0 0.0
        %1968 = vmatpush1.msra.mxu0 0.0
        %1969 = vmatprep.subr.mxu0 0.0
        %1970 = vmatpush1.msra.mxu0 0.0
        %1971 = vmatprep.subr.mxu0 0.0
        %1972 = vmatpush1.msra.mxu0 0.0
        %1973 = vmatprep.subr.mxu0 0.0
        %1974 = vmatpush1.msra.mxu0 0.0
        %1975 = vmatprep.subr.mxu0 0.0
        %1976 = vmatpush1.msra.mxu0 0.0
        %1977 = vmatprep.subr.mxu0 0.0
        %1978 = vmatpush1.msra.mxu0 0.0
        %1979 = vmatprep.mubr.f32.mxu0 0.0
        %v1980 = vand.u32 %v1813, 4294901760
        %1981 = vmatmul.mubr.f32.gmra.mrb[0].mxu0 %v1980
        %v1982 = vpop.f32.mrb[0].mxu0
        %v1983 = vadd.f32 %v1892, %v1982
        %v1984 = vpop.f32.mrb[0].mxu0
        %1985 = vmatprep.mubr.f32.mxu0 0.0
        %v1986 = vand.u32 %v1816, 4294901760
        %1987 = vmatmul.mubr.f32.gmra.mrb[0].mxu0 %v1986
        %v1988 = vpop.f32.mrb[0].mxu0
        %v1989 = vadd.f32 %v1902, %v1988
        %v1990 = vpop.f32.mrb[0].mxu0
        %1991 = vdwg.mxu0
        %1992 = vmatprep.subr.mxu0 0.0
        %v1993 = vand.u32 %v287, 4294901760
        %v1994 = vsub.f32 %v287, %v1993
        %1995 = vmatpush1.msra.mxu0 %v1994
        %1996 = vmatprep.subr.mxu0 0.0
        %v1997 = vand.u32 %v288, 4294901760
        %v1998 = vsub.f32 %v288, %v1997
        %1999 = vmatpush1.msra.mxu0 %v1998
        %2000 = vmatprep.subr.mxu0 0.0
        %2001 = vmatpush1.msra.mxu0 0.0
        %2002 = vmatprep.subr.mxu0 0.0
        %2003 = vmatpush1.msra.mxu0 0.0
        %2004 = vmatprep.subr.mxu0 0.0
        %2005 = vmatpush1.msra.mxu0 0.0
        %2006 = vmatprep.subr.mxu0 0.0
        %2007 = vmatpush1.msra.mxu0 0.0
        %2008 = vmatprep.subr.mxu0 0.0
        %2009 = vmatpush1.msra.mxu0 0.0
        %2010 = vmatprep.subr.mxu0 0.0
        %2011 = vmatpush1.msra.mxu0 0.0
        %2012 = vmatprep.subr.mxu0 0.0
        %2013 = vmatpush1.msra.mxu0 0.0
        %2014 = vmatprep.subr.mxu0 0.0
        %2015 = vmatpush1.msra.mxu0 0.0
        %2016 = vmatprep.subr.mxu0 0.0
        %2017 = vmatpush1.msra.mxu0 0.0
        %2018 = vmatprep.subr.mxu0 0.0
        %2019 = vmatpush1.msra.mxu0 0.0
        %2020 = vmatprep.subr.mxu0 0.0
        %2021 = vmatpush1.msra.mxu0 0.0
        %2022 = vmatprep.subr.mxu0 0.0
        %2023 = vmatpush1.msra.mxu0 0.0
        %2024 = vmatprep.subr.mxu0 0.0
        %2025 = vmatpush1.msra.mxu0 0.0
        %2026 = vmatprep.subr.mxu0 0.0
        %2027 = vmatpush1.msra.mxu0 0.0
        %2028 = vmatprep.subr.mxu0 0.0
        %2029 = vmatpush1.msra.mxu0 0.0
        %2030 = vmatprep.subr.mxu0 0.0
        %2031 = vmatpush1.msra.mxu0 0.0
        %2032 = vmatprep.subr.mxu0 0.0
        %2033 = vmatpush1.msra.mxu0 0.0
        %2034 = vmatprep.subr.mxu0 0.0
        %2035 = vmatpush1.msra.mxu0 0.0
        %2036 = vmatprep.subr.mxu0 0.0
        %2037 = vmatpush1.msra.mxu0 0.0
        %2038 = vmatprep.subr.mxu0 0.0
        %2039 = vmatpush1.msra.mxu0 0.0
        %2040 = vmatprep.subr.mxu0 0.0
        %2041 = vmatpush1.msra.mxu0 0.0
        %2042 = vmatprep.subr.mxu0 0.0
        %2043 = vmatpush1.msra.mxu0 0.0
        %2044 = vmatprep.subr.mxu0 0.0
        %2045 = vmatpush1.msra.mxu0 0.0
        %2046 = vmatprep.subr.mxu0 0.0
        %2047 = vmatpush1.msra.mxu0 0.0
        %2048 = vmatprep.subr.mxu0 0.0
        %2049 = vmatpush1.msra.mxu0 0.0
        %2050 = vmatprep.subr.mxu0 0.0
        %2051 = vmatpush1.msra.mxu0 0.0
        %2052 = vmatprep.subr.mxu0 0.0
        %2053 = vmatpush1.msra.mxu0 0.0
        %2054 = vmatprep.subr.mxu0 0.0
        %2055 = vmatpush1.msra.mxu0 0.0
        %2056 = vmatprep.subr.mxu0 0.0
        %2057 = vmatpush1.msra.mxu0 0.0
        %2058 = vmatprep.subr.mxu0 0.0
        %2059 = vmatpush1.msra.mxu0 0.0
        %2060 = vmatprep.mubr.f32.mxu0 0.0
        %v2061 = vand.u32 %v1813, 4294901760
        %v2062 = vsub.f32 %v1813, %v2061
        %2063 = vmatmul.mubr.f32.gmra.mrb[0].mxu0 %v2062
        %v2064 = vpop.f32.mrb[0].mxu0
        %v2065 = vadd.f32 %v1983, %v2064
        %v2066 = vpop.f32.mrb[0].mxu0
        %2067 = vmatprep.mubr.f32.mxu0 0.0
        %v2068 = vand.u32 %v1816, 4294901760
        %v2069 = vsub.f32 %v1816, %v2068
        %2070 = vmatmul.mubr.f32.gmra.mrb[0].mxu0 %v2069
        %v2071 = vpop.f32.mrb[0].mxu0
        %v2072 = vadd.f32 %v1989, %v2071
        %v2073 = vpop.f32.mrb[0].mxu0
        %2074 = vdwg.mxu0
        %2075 = vmatprep.subr.mxu0 0.0
        %v2076 = vand.u32 %v287, 4294901760
        %2077 = vmatpush1.msra.mxu0 %v2076
        %2078 = vmatprep.subr.mxu0 0.0
        %v2079 = vand.u32 %v288, 4294901760
        %2080 = vmatpush1.msra.mxu0 %v2079
        %2081 = vmatprep.subr.mxu0 0.0
        %2082 = vmatpush1.msra.mxu0 0.0
        %2083 = vmatprep.subr.mxu0 0.0
        %2084 = vmatpush1.msra.mxu0 0.0
        %2085 = vmatprep.subr.mxu0 0.0
        %2086 = vmatpush1.msra.mxu0 0.0
        %2087 = vmatprep.subr.mxu0 0.0
        %2088 = vmatpush1.msra.mxu0 0.0
        %2089 = vmatprep.subr.mxu0 0.0
        %2090 = vmatpush1.msra.mxu0 0.0
        %2091 = vmatprep.subr.mxu0 0.0
        %2092 = vmatpush1.msra.mxu0 0.0
        %2093 = vmatprep.subr.mxu0 0.0
        %2094 = vmatpush1.msra.mxu0 0.0
        %2095 = vmatprep.subr.mxu0 0.0
        %2096 = vmatpush1.msra.mxu0 0.0
        %2097 = vmatprep.subr.mxu0 0.0
        %2098 = vmatpush1.msra.mxu0 0.0
        %2099 = vmatprep.subr.mxu0 0.0
        %2100 = vmatpush1.msra.mxu0 0.0
        %2101 = vmatprep.subr.mxu0 0.0
        %2102 = vmatpush1.msra.mxu0 0.0
        %2103 = vmatprep.subr.mxu0 0.0
        %2104 = vmatpush1.msra.mxu0 0.0
        %2105 = vmatprep.subr.mxu0 0.0
        %2106 = vmatpush1.msra.mxu0 0.0
        %2107 = vmatprep.subr.mxu0 0.0
        %2108 = vmatpush1.msra.mxu0 0.0
        %2109 = vmatprep.subr.mxu0 0.0
        %2110 = vmatpush1.msra.mxu0 0.0
        %2111 = vmatprep.subr.mxu0 0.0
        %2112 = vmatpush1.msra.mxu0 0.0
        %2113 = vmatprep.subr.mxu0 0.0
        %2114 = vmatpush1.msra.mxu0 0.0
        %2115 = vmatprep.subr.mxu0 0.0
        %2116 = vmatpush1.msra.mxu0 0.0
        %2117 = vmatprep.subr.mxu0 0.0
        %2118 = vmatpush1.msra.mxu0 0.0
        %2119 = vmatprep.subr.mxu0 0.0
        %2120 = vmatpush1.msra.mxu0 0.0
        %2121 = vmatprep.subr.mxu0 0.0
        %2122 = vmatpush1.msra.mxu0 0.0
        %2123 = vmatprep.subr.mxu0 0.0
        %2124 = vmatpush1.msra.mxu0 0.0
        %2125 = vmatprep.subr.mxu0 0.0
        %2126 = vmatpush1.msra.mxu0 0.0
        %2127 = vmatprep.subr.mxu0 0.0
        %2128 = vmatpush1.msra.mxu0 0.0
        %2129 = vmatprep.subr.mxu0 0.0
        %2130 = vmatpush1.msra.mxu0 0.0
        %2131 = vmatprep.subr.mxu0 0.0
        %2132 = vmatpush1.msra.mxu0 0.0
        %2133 = vmatprep.subr.mxu0 0.0
        %2134 = vmatpush1.msra.mxu0 0.0
        %2135 = vmatprep.subr.mxu0 0.0
        %2136 = vmatpush1.msra.mxu0 0.0
        %2137 = vmatprep.subr.mxu0 0.0
        %2138 = vmatpush1.msra.mxu0 0.0
        %2139 = vmatprep.subr.mxu0 0.0
        %2140 = vmatpush1.msra.mxu0 0.0
        %2141 = vmatprep.mubr.f32.mxu0 0.0
        %v2142 = vand.u32 %v1813, 4294901760
        %v2143 = vsub.f32 %v1813, %v2142
        %v2144 = vand.u32 %v2143, 4294901760
        %2145 = vmatmul.mubr.f32.gmra.mrb[0].mxu0 %v2144
        %v2146 = vpop.f32.mrb[0].mxu0
        %v2147 = vadd.f32 %v2065, %v2146
        %v2148 = vpop.f32.mrb[0].mxu0
        %2149 = vmatprep.mubr.f32.mxu0 0.0
        %v2150 = vand.u32 %v1816, 4294901760
        %v2151 = vsub.f32 %v1816, %v2150
        %v2152 = vand.u32 %v2151, 4294901760
        %2153 = vmatmul.mubr.f32.gmra.mrb[0].mxu0 %v2152
        %v2154 = vpop.f32.mrb[0].mxu0
        %v2155 = vadd.f32 %v2072, %v2154
        %v2156 = vpop.f32.mrb[0].mxu0
        %2157 = vdwg.mxu0
        %2158 = vmatprep.subr.mxu0 0.0
        %v2159 = vand.u32 %v287, 4294901760
        %v2160 = vsub.f32 %v287, %v2159
        %v2161 = vand.u32 %v2160, 4294901760
        %2162 = vmatpush1.msra.mxu0 %v2161
        %2163 = vmatprep.subr.mxu0 0.0
        %v2164 = vand.u32 %v288, 4294901760
        %v2165 = vsub.f32 %v288, %v2164
        %v2166 = vand.u32 %v2165, 4294901760
        %2167 = vmatpush1.msra.mxu0 %v2166
        %2168 = vmatprep.subr.mxu0 0.0
        %2169 = vmatpush1.msra.mxu0 0.0
        %2170 = vmatprep.subr.mxu0 0.0
        %2171 = vmatpush1.msra.mxu0 0.0
        %2172 = vmatprep.subr.mxu0 0.0
        %2173 = vmatpush1.msra.mxu0 0.0
        %2174 = vmatprep.subr.mxu0 0.0
        %2175 = vmatpush1.msra.mxu0 0.0
        %2176 = vmatprep.subr.mxu0 0.0
        %2177 = vmatpush1.msra.mxu0 0.0
        %2178 = vmatprep.subr.mxu0 0.0
        %2179 = vmatpush1.msra.mxu0 0.0
        %2180 = vmatprep.subr.mxu0 0.0
        %2181 = vmatpush1.msra.mxu0 0.0
        %2182 = vmatprep.subr.mxu0 0.0
        %2183 = vmatpush1.msra.mxu0 0.0
        %2184 = vmatprep.subr.mxu0 0.0
        %2185 = vmatpush1.msra.mxu0 0.0
        %2186 = vmatprep.subr.mxu0 0.0
        %2187 = vmatpush1.msra.mxu0 0.0
        %2188 = vmatprep.subr.mxu0 0.0
        %2189 = vmatpush1.msra.mxu0 0.0
        %2190 = vmatprep.subr.mxu0 0.0
        %2191 = vmatpush1.msra.mxu0 0.0
        %2192 = vmatprep.subr.mxu0 0.0
        %2193 = vmatpush1.msra.mxu0 0.0
        %2194 = vmatprep.subr.mxu0 0.0
        %2195 = vmatpush1.msra.mxu0 0.0
        %2196 = vmatprep.subr.mxu0 0.0
        %2197 = vmatpush1.msra.mxu0 0.0
        %2198 = vmatprep.subr.mxu0 0.0
        %2199 = vmatpush1.msra.mxu0 0.0
        %2200 = vmatprep.subr.mxu0 0.0
        %2201 = vmatpush1.msra.mxu0 0.0
        %2202 = vmatprep.subr.mxu0 0.0
        %2203 = vmatpush1.msra.mxu0 0.0
        %2204 = vmatprep.subr.mxu0 0.0
        %2205 = vmatpush1.msra.mxu0 0.0
        %2206 = vmatprep.subr.mxu0 0.0
        %2207 = vmatpush1.msra.mxu0 0.0
        %2208 = vmatprep.subr.mxu0 0.0
        %2209 = vmatpush1.msra.mxu0 0.0
        %2210 = vmatprep.subr.mxu0 0.0
        %2211 = vmatpush1.msra.mxu0 0.0
        %2212 = vmatprep.subr.mxu0 0.0
        %2213 = vmatpush1.msra.mxu0 0.0
        %2214 = vmatprep.subr.mxu0 0.0
        %2215 = vmatpush1.msra.mxu0 0.0
        %2216 = vmatprep.subr.mxu0 0.0
        %2217 = vmatpush1.msra.mxu0 0.0
        %2218 = vmatprep.subr.mxu0 0.0
        %2219 = vmatpush1.msra.mxu0 0.0
        %2220 = vmatprep.subr.mxu0 0.0
        %2221 = vmatpush1.msra.mxu0 0.0
        %2222 = vmatprep.subr.mxu0 0.0
        %2223 = vmatpush1.msra.mxu0 0.0
        %2224 = vmatprep.subr.mxu0 0.0
        %2225 = vmatpush1.msra.mxu0 0.0
        %2226 = vmatprep.subr.mxu0 0.0
        %2227 = vmatpush1.msra.mxu0 0.0
        %2228 = vmatprep.mubr.f32.mxu0 0.0
        %v2229 = vand.u32 %v1813, 4294901760
        %2230 = vmatmul.mubr.f32.gmra.mrb[0].mxu0 %v2229
        %v2231 = vpop.f32.mrb[0].mxu0
        %v2232 = vadd.f32 %v2147, %v2231
        %v2233 = vpop.f32.mrb[0].mxu0
        %2234 = vmatprep.mubr.f32.mxu0 0.0
        %v2235 = vand.u32 %v1816, 4294901760
        %2236 = vmatmul.mubr.f32.gmra.mrb[0].mxu0 %v2235
        %v2237 = vpop.f32.mrb[0].mxu0
        %v2238 = vadd.f32 %v2155, %v2237
        %v2239 = vpop.f32.mrb[0].mxu0
        %2240 = vdwg.mxu0
        %2241 = vmatprep.subr.mxu0 0.0
        %v2242 = vand.u32 %v287, 4294901760
        %2243 = vmatpush1.msra.mxu0 %v2242
        %2244 = vmatprep.subr.mxu0 0.0
        %v2245 = vand.u32 %v288, 4294901760
        %2246 = vmatpush1.msra.mxu0 %v2245
        %2247 = vmatprep.subr.mxu0 0.0
        %2248 = vmatpush1.msra.mxu0 0.0
        %2249 = vmatprep.subr.mxu0 0.0
        %2250 = vmatpush1.msra.mxu0 0.0
        %2251 = vmatprep.subr.mxu0 0.0
        %2252 = vmatpush1.msra.mxu0 0.0
        %2253 = vmatprep.subr.mxu0 0.0
        %2254 = vmatpush1.msra.mxu0 0.0
        %2255 = vmatprep.subr.mxu0 0.0
        %2256 = vmatpush1.msra.mxu0 0.0
        %2257 = vmatprep.subr.mxu0 0.0
        %2258 = vmatpush1.msra.mxu0 0.0
        %2259 = vmatprep.subr.mxu0 0.0
        %2260 = vmatpush1.msra.mxu0 0.0
        %2261 = vmatprep.subr.mxu0 0.0
        %2262 = vmatpush1.msra.mxu0 0.0
        %2263 = vmatprep.subr.mxu0 0.0
        %2264 = vmatpush1.msra.mxu0 0.0
        %2265 = vmatprep.subr.mxu0 0.0
        %2266 = vmatpush1.msra.mxu0 0.0
        %2267 = vmatprep.subr.mxu0 0.0
        %2268 = vmatpush1.msra.mxu0 0.0
        %2269 = vmatprep.subr.mxu0 0.0
        %2270 = vmatpush1.msra.mxu0 0.0
        %2271 = vmatprep.subr.mxu0 0.0
        %2272 = vmatpush1.msra.mxu0 0.0
        %2273 = vmatprep.subr.mxu0 0.0
        %2274 = vmatpush1.msra.mxu0 0.0
        %2275 = vmatprep.subr.mxu0 0.0
        %2276 = vmatpush1.msra.mxu0 0.0
        %2277 = vmatprep.subr.mxu0 0.0
        %2278 = vmatpush1.msra.mxu0 0.0
        %2279 = vmatprep.subr.mxu0 0.0
        %2280 = vmatpush1.msra.mxu0 0.0
        %2281 = vmatprep.subr.mxu0 0.0
        %2282 = vmatpush1.msra.mxu0 0.0
        %2283 = vmatprep.subr.mxu0 0.0
        %2284 = vmatpush1.msra.mxu0 0.0
        %2285 = vmatprep.subr.mxu0 0.0
        %2286 = vmatpush1.msra.mxu0 0.0
        %2287 = vmatprep.subr.mxu0 0.0
        %2288 = vmatpush1.msra.mxu0 0.0
        %2289 = vmatprep.subr.mxu0 0.0
        %2290 = vmatpush1.msra.mxu0 0.0
        %2291 = vmatprep.subr.mxu0 0.0
        %2292 = vmatpush1.msra.mxu0 0.0
        %2293 = vmatprep.subr.mxu0 0.0
        %2294 = vmatpush1.msra.mxu0 0.0
        %2295 = vmatprep.subr.mxu0 0.0
        %2296 = vmatpush1.msra.mxu0 0.0
        %2297 = vmatprep.subr.mxu0 0.0
        %2298 = vmatpush1.msra.mxu0 0.0
        %2299 = vmatprep.subr.mxu0 0.0
        %2300 = vmatpush1.msra.mxu0 0.0
        %2301 = vmatprep.subr.mxu0 0.0
        %2302 = vmatpush1.msra.mxu0 0.0
        %2303 = vmatprep.subr.mxu0 0.0
        %2304 = vmatpush1.msra.mxu0 0.0
        %2305 = vmatprep.subr.mxu0 0.0
        %2306 = vmatpush1.msra.mxu0 0.0
        %2307 = vmatprep.mubr.f32.mxu0 0.0
        %v2308 = vand.u32 %v1813, 4294901760
        %2309 = vmatmul.mubr.f32.gmra.mrb[0].mxu0 %v2308
        %v2310 = vpop.f32.mrb[0].mxu0
        %v2311 = vadd.f32 %v2232, %v2310
        %v2312 = vpop.f32.mrb[0].mxu0
        %2313 = vmatprep.mubr.f32.mxu0 0.0
        %v2314 = vand.u32 %v1816, 4294901760
        %2315 = vmatmul.mubr.f32.gmra.mrb[0].mxu0 %v2314
        %v2316 = vpop.f32.mrb[0].mxu0
        %v2317 = vadd.f32 %v2238, %v2316
        %v2318 = vpop.f32.mrb[0].mxu0
        %2319 = vdwg.mxu0
        %v2320 = vmul.f32 %v289, %v289
        %v2321 = vmul.f32 %v290, %v290
        %2322 = vmatprep.subr.mxu0 0.0
        %v2323 = vand.u32 %v2320, 4294901760
        %2324 = vmatpush1.msra.mxu0 %v2323
        %2325 = vmatprep.subr.mxu0 0.0
        %v2326 = vand.u32 %v2321, 4294901760
        %2327 = vmatpush1.msra.mxu0 %v2326
        %2328 = vmatprep.subr.mxu0 0.0
        %2329 = vmatpush1.msra.mxu0 0.0
        %2330 = vmatprep.subr.mxu0 0.0
        %2331 = vmatpush1.msra.mxu0 0.0
        %2332 = vmatprep.subr.mxu0 0.0
        %2333 = vmatpush1.msra.mxu0 0.0
        %2334 = vmatprep.subr.mxu0 0.0
        %2335 = vmatpush1.msra.mxu0 0.0
        %2336 = vmatprep.subr.mxu0 0.0
        %2337 = vmatpush1.msra.mxu0 0.0
        %2338 = vmatprep.subr.mxu0 0.0
        %2339 = vmatpush1.msra.mxu0 0.0
        %2340 = vmatprep.subr.mxu0 0.0
        %2341 = vmatpush1.msra.mxu0 0.0
        %2342 = vmatprep.subr.mxu0 0.0
        %2343 = vmatpush1.msra.mxu0 0.0
        %2344 = vmatprep.subr.mxu0 0.0
        %2345 = vmatpush1.msra.mxu0 0.0
        %2346 = vmatprep.subr.mxu0 0.0
        %2347 = vmatpush1.msra.mxu0 0.0
        %2348 = vmatprep.subr.mxu0 0.0
        %2349 = vmatpush1.msra.mxu0 0.0
        %2350 = vmatprep.subr.mxu0 0.0
        %2351 = vmatpush1.msra.mxu0 0.0
        %2352 = vmatprep.subr.mxu0 0.0
        %2353 = vmatpush1.msra.mxu0 0.0
        %2354 = vmatprep.subr.mxu0 0.0
        %2355 = vmatpush1.msra.mxu0 0.0
        %2356 = vmatprep.subr.mxu0 0.0
        %2357 = vmatpush1.msra.mxu0 0.0
        %2358 = vmatprep.subr.mxu0 0.0
        %2359 = vmatpush1.msra.mxu0 0.0
        %2360 = vmatprep.subr.mxu0 0.0
        %2361 = vmatpush1.msra.mxu0 0.0
        %2362 = vmatprep.subr.mxu0 0.0
        %2363 = vmatpush1.msra.mxu0 0.0
        %2364 = vmatprep.subr.mxu0 0.0
        %2365 = vmatpush1.msra.mxu0 0.0
        %2366 = vmatprep.subr.mxu0 0.0
        %2367 = vmatpush1.msra.mxu0 0.0
        %2368 = vmatprep.subr.mxu0 0.0
        %2369 = vmatpush1.msra.mxu0 0.0
        %2370 = vmatprep.subr.mxu0 0.0
        %2371 = vmatpush1.msra.mxu0 0.0
        %2372 = vmatprep.subr.mxu0 0.0
        %2373 = vmatpush1.msra.mxu0 0.0
        %2374 = vmatprep.subr.mxu0 0.0
        %2375 = vmatpush1.msra.mxu0 0.0
        %2376 = vmatprep.subr.mxu0 0.0
        %2377 = vmatpush1.msra.mxu0 0.0
        %2378 = vmatprep.subr.mxu0 0.0
        %2379 = vmatpush1.msra.mxu0 0.0
        %2380 = vmatprep.subr.mxu0 0.0
        %2381 = vmatpush1.msra.mxu0 0.0
        %2382 = vmatprep.subr.mxu0 0.0
        %2383 = vmatpush1.msra.mxu0 0.0
        %2384 = vmatprep.subr.mxu0 0.0
        %2385 = vmatpush1.msra.mxu0 0.0
        %2386 = vmatprep.subr.mxu0 0.0
        %2387 = vmatpush1.msra.mxu0 0.0
        %2388 = vmatprep.mubr.f32.mxu0 0.0
        %v2389 = vand.u32 %v295, 4294901760
        %v2390 = vsub.f32 %v295, %v2389
        %v2391 = vand.u32 %v2390, 4294901760
        %v2392 = vsub.f32 %v2390, %v2391
        %v2393 = vand.u32 %v2392, 4294901760
        %2394 = vmatmul.mubr.f32.gmra.mrb[0].mxu0 %v2393
        %v2395 = vpop.f32.mrb[0].mxu0
        %v2396 = vadd.f32 0.0, %v2395
        %v2397 = vpop.f32.mrb[0].mxu0
        %2398 = vmatprep.mubr.f32.mxu0 0.0
        %v2399 = vand.u32 %v298, 4294901760
        %v2400 = vsub.f32 %v298, %v2399
        %v2401 = vand.u32 %v2400, 4294901760
        %v2402 = vsub.f32 %v2400, %v2401
        %v2403 = vand.u32 %v2402, 4294901760
        %2404 = vmatmul.mubr.f32.gmra.mrb[0].mxu0 %v2403
        %v2405 = vpop.f32.mrb[0].mxu0
        %v2406 = vadd.f32 0.0, %v2405
        %v2407 = vpop.f32.mrb[0].mxu0
        %2408 = vdwg.mxu0
        %2409 = vmatprep.subr.mxu0 0.0
        %v2410 = vand.u32 %v2320, 4294901760
        %v2411 = vsub.f32 %v2320, %v2410
        %v2412 = vand.u32 %v2411, 4294901760
        %v2413 = vsub.f32 %v2411, %v2412
        %v2414 = vand.u32 %v2413, 4294901760
        %2415 = vmatpush1.msra.mxu0 %v2414
        %2416 = vmatprep.subr.mxu0 0.0
        %v2417 = vand.u32 %v2321, 4294901760
        %v2418 = vsub.f32 %v2321, %v2417
        %v2419 = vand.u32 %v2418, 4294901760
        %v2420 = vsub.f32 %v2418, %v2419
        %v2421 = vand.u32 %v2420, 4294901760
        %2422 = vmatpush1.msra.mxu0 %v2421
        %2423 = vmatprep.subr.mxu0 0.0
        %2424 = vmatpush1.msra.mxu0 0.0
        %2425 = vmatprep.subr.mxu0 0.0
        %2426 = vmatpush1.msra.mxu0 0.0
        %2427 = vmatprep.subr.mxu0 0.0
        %2428 = vmatpush1.msra.mxu0 0.0
        %2429 = vmatprep.subr.mxu0 0.0
        %2430 = vmatpush1.msra.mxu0 0.0
        %2431 = vmatprep.subr.mxu0 0.0
        %2432 = vmatpush1.msra.mxu0 0.0
        %2433 = vmatprep.subr.mxu0 0.0
        %2434 = vmatpush1.msra.mxu0 0.0
        %2435 = vmatprep.subr.mxu0 0.0
        %2436 = vmatpush1.msra.mxu0 0.0
        %2437 = vmatprep.subr.mxu0 0.0
        %2438 = vmatpush1.msra.mxu0 0.0
        %2439 = vmatprep.subr.mxu0 0.0
        %2440 = vmatpush1.msra.mxu0 0.0
        %2441 = vmatprep.subr.mxu0 0.0
        %2442 = vmatpush1.msra.mxu0 0.0
        %2443 = vmatprep.subr.mxu0 0.0
        %2444 = vmatpush1.msra.mxu0 0.0
        %2445 = vmatprep.subr.mxu0 0.0
        %2446 = vmatpush1.msra.mxu0 0.0
        %2447 = vmatprep.subr.mxu0 0.0
        %2448 = vmatpush1.msra.mxu0 0.0
        %2449 = vmatprep.subr.mxu0 0.0
        %2450 = vmatpush1.msra.mxu0 0.0
        %2451 = vmatprep.subr.mxu0 0.0
        %2452 = vmatpush1.msra.mxu0 0.0
        %2453 = vmatprep.subr.mxu0 0.0
        %2454 = vmatpush1.msra.mxu0 0.0
        %2455 = vmatprep.subr.mxu0 0.0
        %2456 = vmatpush1.msra.mxu0 0.0
        %2457 = vmatprep.subr.mxu0 0.0
        %2458 = vmatpush1.msra.mxu0 0.0
        %2459 = vmatprep.subr.mxu0 0.0
        %2460 = vmatpush1.msra.mxu0 0.0
        %2461 = vmatprep.subr.mxu0 0.0
        %2462 = vmatpush1.msra.mxu0 0.0
        %2463 = vmatprep.subr.mxu0 0.0
        %2464 = vmatpush1.msra.mxu0 0.0
        %2465 = vmatprep.subr.mxu0 0.0
        %2466 = vmatpush1.msra.mxu0 0.0
        %2467 = vmatprep.subr.mxu0 0.0
        %2468 = vmatpush1.msra.mxu0 0.0
        %2469 = vmatprep.subr.mxu0 0.0
        %2470 = vmatpush1.msra.mxu0 0.0
        %2471 = vmatprep.subr.mxu0 0.0
        %2472 = vmatpush1.msra.mxu0 0.0
        %2473 = vmatprep.subr.mxu0 0.0
        %2474 = vmatpush1.msra.mxu0 0.0
        %2475 = vmatprep.subr.mxu0 0.0
        %2476 = vmatpush1.msra.mxu0 0.0
        %2477 = vmatprep.subr.mxu0 0.0
        %2478 = vmatpush1.msra.mxu0 0.0
        %2479 = vmatprep.subr.mxu0 0.0
        %2480 = vmatpush1.msra.mxu0 0.0
        %2481 = vmatprep.subr.mxu0 0.0
        %2482 = vmatpush1.msra.mxu0 0.0
        %2483 = vmatprep.mubr.f32.mxu0 0.0
        %v2484 = vand.u32 %v295, 4294901760
        %2485 = vmatmul.mubr.f32.gmra.mrb[0].mxu0 %v2484
        %v2486 = vpop.f32.mrb[0].mxu0
        %v2487 = vadd.f32 %v2396, %v2486
        %v2488 = vpop.f32.mrb[0].mxu0
        %2489 = vmatprep.mubr.f32.mxu0 0.0
        %v2490 = vand.u32 %v298, 4294901760
        %2491 = vmatmul.mubr.f32.gmra.mrb[0].mxu0 %v2490
        %v2492 = vpop.f32.mrb[0].mxu0
        %v2493 = vadd.f32 %v2406, %v2492
        %v2494 = vpop.f32.mrb[0].mxu0
        %2495 = vdwg.mxu0
        %2496 = vmatprep.subr.mxu0 0.0
        %v2497 = vand.u32 %v2320, 4294901760
        %v2498 = vsub.f32 %v2320, %v2497
        %2499 = vmatpush1.msra.mxu0 %v2498
        %2500 = vmatprep.subr.mxu0 0.0
        %v2501 = vand.u32 %v2321, 4294901760
        %v2502 = vsub.f32 %v2321, %v2501
        %2503 = vmatpush1.msra.mxu0 %v2502
        %2504 = vmatprep.subr.mxu0 0.0
        %2505 = vmatpush1.msra.mxu0 0.0
        %2506 = vmatprep.subr.mxu0 0.0
        %2507 = vmatpush1.msra.mxu0 0.0
        %2508 = vmatprep.subr.mxu0 0.0
        %2509 = vmatpush1.msra.mxu0 0.0
        %2510 = vmatprep.subr.mxu0 0.0
        %2511 = vmatpush1.msra.mxu0 0.0
        %2512 = vmatprep.subr.mxu0 0.0
        %2513 = vmatpush1.msra.mxu0 0.0
        %2514 = vmatprep.subr.mxu0 0.0
        %2515 = vmatpush1.msra.mxu0 0.0
        %2516 = vmatprep.subr.mxu0 0.0
        %2517 = vmatpush1.msra.mxu0 0.0
        %2518 = vmatprep.subr.mxu0 0.0
        %2519 = vmatpush1.msra.mxu0 0.0
        %2520 = vmatprep.subr.mxu0 0.0
        %2521 = vmatpush1.msra.mxu0 0.0
        %2522 = vmatprep.subr.mxu0 0.0
        %2523 = vmatpush1.msra.mxu0 0.0
        %2524 = vmatprep.subr.mxu0 0.0
        %2525 = vmatpush1.msra.mxu0 0.0
        %2526 = vmatprep.subr.mxu0 0.0
        %2527 = vmatpush1.msra.mxu0 0.0
        %2528 = vmatprep.subr.mxu0 0.0
        %2529 = vmatpush1.msra.mxu0 0.0
        %2530 = vmatprep.subr.mxu0 0.0
        %2531 = vmatpush1.msra.mxu0 0.0
        %2532 = vmatprep.subr.mxu0 0.0
        %2533 = vmatpush1.msra.mxu0 0.0
        %2534 = vmatprep.subr.mxu0 0.0
        %2535 = vmatpush1.msra.mxu0 0.0
        %2536 = vmatprep.subr.mxu0 0.0
        %2537 = vmatpush1.msra.mxu0 0.0
        %2538 = vmatprep.subr.mxu0 0.0
        %2539 = vmatpush1.msra.mxu0 0.0
        %2540 = vmatprep.subr.mxu0 0.0
        %2541 = vmatpush1.msra.mxu0 0.0
        %2542 = vmatprep.subr.mxu0 0.0
        %2543 = vmatpush1.msra.mxu0 0.0
        %2544 = vmatprep.subr.mxu0 0.0
        %2545 = vmatpush1.msra.mxu0 0.0
        %2546 = vmatprep.subr.mxu0 0.0
        %2547 = vmatpush1.msra.mxu0 0.0
        %2548 = vmatprep.subr.mxu0 0.0
        %2549 = vmatpush1.msra.mxu0 0.0
        %2550 = vmatprep.subr.mxu0 0.0
        %2551 = vmatpush1.msra.mxu0 0.0
        %2552 = vmatprep.subr.mxu0 0.0
        %2553 = vmatpush1.msra.mxu0 0.0
        %2554 = vmatprep.subr.mxu0 0.0
        %2555 = vmatpush1.msra.mxu0 0.0
        %2556 = vmatprep.subr.mxu0 0.0
        %2557 = vmatpush1.msra.mxu0 0.0
        %2558 = vmatprep.subr.mxu0 0.0
        %2559 = vmatpush1.msra.mxu0 0.0
        %2560 = vmatprep.subr.mxu0 0.0
        %2561 = vmatpush1.msra.mxu0 0.0
        %2562 = vmatprep.subr.mxu0 0.0
        %2563 = vmatpush1.msra.mxu0 0.0
        %2564 = vmatprep.mubr.f32.mxu0 0.0
        %v2565 = vand.u32 %v295, 4294901760
        %v2566 = vsub.f32 %v295, %v2565
        %2567 = vmatmul.mubr.f32.gmra.mrb[0].mxu0 %v2566
        %v2568 = vpop.f32.mrb[0].mxu0
        %v2569 = vadd.f32 %v2487, %v2568
        %v2570 = vpop.f32.mrb[0].mxu0
        %2571 = vmatprep.mubr.f32.mxu0 0.0
        %v2572 = vand.u32 %v298, 4294901760
        %v2573 = vsub.f32 %v298, %v2572
        %2574 = vmatmul.mubr.f32.gmra.mrb[0].mxu0 %v2573
        %v2575 = vpop.f32.mrb[0].mxu0
        %v2576 = vadd.f32 %v2493, %v2575
        %v2577 = vpop.f32.mrb[0].mxu0
        %2578 = vdwg.mxu0
        %2579 = vmatprep.subr.mxu0 0.0
        %v2580 = vand.u32 %v2320, 4294901760
        %2581 = vmatpush1.msra.mxu0 %v2580
        %2582 = vmatprep.subr.mxu0 0.0
        %v2583 = vand.u32 %v2321, 4294901760
        %2584 = vmatpush1.msra.mxu0 %v2583
        %2585 = vmatprep.subr.mxu0 0.0
        %2586 = vmatpush1.msra.mxu0 0.0
        %2587 = vmatprep.subr.mxu0 0.0
        %2588 = vmatpush1.msra.mxu0 0.0
        %2589 = vmatprep.subr.mxu0 0.0
        %2590 = vmatpush1.msra.mxu0 0.0
        %2591 = vmatprep.subr.mxu0 0.0
        %2592 = vmatpush1.msra.mxu0 0.0
        %2593 = vmatprep.subr.mxu0 0.0
        %2594 = vmatpush1.msra.mxu0 0.0
        %2595 = vmatprep.subr.mxu0 0.0
        %2596 = vmatpush1.msra.mxu0 0.0
        %2597 = vmatprep.subr.mxu0 0.0
        %2598 = vmatpush1.msra.mxu0 0.0
        %2599 = vmatprep.subr.mxu0 0.0
        %2600 = vmatpush1.msra.mxu0 0.0
        %2601 = vmatprep.subr.mxu0 0.0
        %2602 = vmatpush1.msra.mxu0 0.0
        %2603 = vmatprep.subr.mxu0 0.0
        %2604 = vmatpush1.msra.mxu0 0.0
        %2605 = vmatprep.subr.mxu0 0.0
        %2606 = vmatpush1.msra.mxu0 0.0
        %2607 = vmatprep.subr.mxu0 0.0
        %2608 = vmatpush1.msra.mxu0 0.0
        %2609 = vmatprep.subr.mxu0 0.0
        %2610 = vmatpush1.msra.mxu0 0.0
        %2611 = vmatprep.subr.mxu0 0.0
        %2612 = vmatpush1.msra.mxu0 0.0
        %2613 = vmatprep.subr.mxu0 0.0
        %2614 = vmatpush1.msra.mxu0 0.0
        %2615 = vmatprep.subr.mxu0 0.0
        %2616 = vmatpush1.msra.mxu0 0.0
        %2617 = vmatprep.subr.mxu0 0.0
        %2618 = vmatpush1.msra.mxu0 0.0
        %2619 = vmatprep.subr.mxu0 0.0
        %2620 = vmatpush1.msra.mxu0 0.0
        %2621 = vmatprep.subr.mxu0 0.0
        %2622 = vmatpush1.msra.mxu0 0.0
        %2623 = vmatprep.subr.mxu0 0.0
        %2624 = vmatpush1.msra.mxu0 0.0
        %2625 = vmatprep.subr.mxu0 0.0
        %2626 = vmatpush1.msra.mxu0 0.0
        %2627 = vmatprep.subr.mxu0 0.0
        %2628 = vmatpush1.msra.mxu0 0.0
        %2629 = vmatprep.subr.mxu0 0.0
        %2630 = vmatpush1.msra.mxu0 0.0
        %2631 = vmatprep.subr.mxu0 0.0
        %2632 = vmatpush1.msra.mxu0 0.0
        %2633 = vmatprep.subr.mxu0 0.0
        %2634 = vmatpush1.msra.mxu0 0.0
        %2635 = vmatprep.subr.mxu0 0.0
        %2636 = vmatpush1.msra.mxu0 0.0
        %2637 = vmatprep.subr.mxu0 0.0
        %2638 = vmatpush1.msra.mxu0 0.0
        %2639 = vmatprep.subr.mxu0 0.0
        %2640 = vmatpush1.msra.mxu0 0.0
        %2641 = vmatprep.subr.mxu0 0.0
        %2642 = vmatpush1.msra.mxu0 0.0
        %2643 = vmatprep.subr.mxu0 0.0
        %2644 = vmatpush1.msra.mxu0 0.0
        %2645 = vmatprep.mubr.f32.mxu0 0.0
        %v2646 = vand.u32 %v295, 4294901760
        %v2647 = vsub.f32 %v295, %v2646
        %v2648 = vand.u32 %v2647, 4294901760
        %2649 = vmatmul.mubr.f32.gmra.mrb[0].mxu0 %v2648
        %v2650 = vpop.f32.mrb[0].mxu0
        %v2651 = vadd.f32 %v2569, %v2650
        %v2652 = vpop.f32.mrb[0].mxu0
        %2653 = vmatprep.mubr.f32.mxu0 0.0
        %v2654 = vand.u32 %v298, 4294901760
        %v2655 = vsub.f32 %v298, %v2654
        %v2656 = vand.u32 %v2655, 4294901760
        %2657 = vmatmul.mubr.f32.gmra.mrb[0].mxu0 %v2656
        %v2658 = vpop.f32.mrb[0].mxu0
        %v2659 = vadd.f32 %v2576, %v2658
        %v2660 = vpop.f32.mrb[0].mxu0
        %2661 = vdwg.mxu0
        %2662 = vmatprep.subr.mxu0 0.0
        %v2663 = vand.u32 %v2320, 4294901760
        %v2664 = vsub.f32 %v2320, %v2663
        %v2665 = vand.u32 %v2664, 4294901760
        %2666 = vmatpush1.msra.mxu0 %v2665
        %2667 = vmatprep.subr.mxu0 0.0
        %v2668 = vand.u32 %v2321, 4294901760
        %v2669 = vsub.f32 %v2321, %v2668
        %v2670 = vand.u32 %v2669, 4294901760
        %2671 = vmatpush1.msra.mxu0 %v2670
        %2672 = vmatprep.subr.mxu0 0.0
        %2673 = vmatpush1.msra.mxu0 0.0
        %2674 = vmatprep.subr.mxu0 0.0
        %2675 = vmatpush1.msra.mxu0 0.0
        %2676 = vmatprep.subr.mxu0 0.0
        %2677 = vmatpush1.msra.mxu0 0.0
        %2678 = vmatprep.subr.mxu0 0.0
        %2679 = vmatpush1.msra.mxu0 0.0
        %2680 = vmatprep.subr.mxu0 0.0
        %2681 = vmatpush1.msra.mxu0 0.0
        %2682 = vmatprep.subr.mxu0 0.0
        %2683 = vmatpush1.msra.mxu0 0.0
        %2684 = vmatprep.subr.mxu0 0.0
        %2685 = vmatpush1.msra.mxu0 0.0
        %2686 = vmatprep.subr.mxu0 0.0
        %2687 = vmatpush1.msra.mxu0 0.0
        %2688 = vmatprep.subr.mxu0 0.0
        %2689 = vmatpush1.msra.mxu0 0.0
        %2690 = vmatprep.subr.mxu0 0.0
        %2691 = vmatpush1.msra.mxu0 0.0
        %2692 = vmatprep.subr.mxu0 0.0
        %2693 = vmatpush1.msra.mxu0 0.0
        %2694 = vmatprep.subr.mxu0 0.0
        %2695 = vmatpush1.msra.mxu0 0.0
        %2696 = vmatprep.subr.mxu0 0.0
        %2697 = vmatpush1.msra.mxu0 0.0
        %2698 = vmatprep.subr.mxu0 0.0
        %2699 = vmatpush1.msra.mxu0 0.0
        %2700 = vmatprep.subr.mxu0 0.0
        %2701 = vmatpush1.msra.mxu0 0.0
        %2702 = vmatprep.subr.mxu0 0.0
        %2703 = vmatpush1.msra.mxu0 0.0
        %2704 = vmatprep.subr.mxu0 0.0
        %2705 = vmatpush1.msra.mxu0 0.0
        %2706 = vmatprep.subr.mxu0 0.0
        %2707 = vmatpush1.msra.mxu0 0.0
        %2708 = vmatprep.subr.mxu0 0.0
        %2709 = vmatpush1.msra.mxu0 0.0
        %2710 = vmatprep.subr.mxu0 0.0
        %2711 = vmatpush1.msra.mxu0 0.0
        %2712 = vmatprep.subr.mxu0 0.0
        %2713 = vmatpush1.msra.mxu0 0.0
        %2714 = vmatprep.subr.mxu0 0.0
        %2715 = vmatpush1.msra.mxu0 0.0
        %2716 = vmatprep.subr.mxu0 0.0
        %2717 = vmatpush1.msra.mxu0 0.0
        %2718 = vmatprep.subr.mxu0 0.0
        %2719 = vmatpush1.msra.mxu0 0.0
        %2720 = vmatprep.subr.mxu0 0.0
        %2721 = vmatpush1.msra.mxu0 0.0
        %2722 = vmatprep.subr.mxu0 0.0
        %2723 = vmatpush1.msra.mxu0 0.0
        %2724 = vmatprep.subr.mxu0 0.0
        %2725 = vmatpush1.msra.mxu0 0.0
        %2726 = vmatprep.subr.mxu0 0.0
        %2727 = vmatpush1.msra.mxu0 0.0
        %2728 = vmatprep.subr.mxu0 0.0
        %2729 = vmatpush1.msra.mxu0 0.0
        %2730 = vmatprep.subr.mxu0 0.0
        %2731 = vmatpush1.msra.mxu0 0.0
        %2732 = vmatprep.mubr.f32.mxu0 0.0
        %v2733 = vand.u32 %v295, 4294901760
        %2734 = vmatmul.mubr.f32.gmra.mrb[0].mxu0 %v2733
        %v2735 = vpop.f32.mrb[0].mxu0
        %v2736 = vadd.f32 %v2651, %v2735
        %v2737 = vpop.f32.mrb[0].mxu0
        %2738 = vmatprep.mubr.f32.mxu0 0.0
        %v2739 = vand.u32 %v298, 4294901760
        %2740 = vmatmul.mubr.f32.gmra.mrb[0].mxu0 %v2739
        %v2741 = vpop.f32.mrb[0].mxu0
        %v2742 = vadd.f32 %v2659, %v2741
        %v2743 = vpop.f32.mrb[0].mxu0
        %2744 = vdwg.mxu0
        %2745 = vmatprep.subr.mxu0 0.0
        %v2746 = vand.u32 %v2320, 4294901760
        %2747 = vmatpush1.msra.mxu0 %v2746
        %2748 = vmatprep.subr.mxu0 0.0
        %v2749 = vand.u32 %v2321, 4294901760
        %2750 = vmatpush1.msra.mxu0 %v2749
        %2751 = vmatprep.subr.mxu0 0.0
        %2752 = vmatpush1.msra.mxu0 0.0
        %2753 = vmatprep.subr.mxu0 0.0
        %2754 = vmatpush1.msra.mxu0 0.0
        %2755 = vmatprep.subr.mxu0 0.0
        %2756 = vmatpush1.msra.mxu0 0.0
        %2757 = vmatprep.subr.mxu0 0.0
        %2758 = vmatpush1.msra.mxu0 0.0
        %2759 = vmatprep.subr.mxu0 0.0
        %2760 = vmatpush1.msra.mxu0 0.0
        %2761 = vmatprep.subr.mxu0 0.0
        %2762 = vmatpush1.msra.mxu0 0.0
        %2763 = vmatprep.subr.mxu0 0.0
        %2764 = vmatpush1.msra.mxu0 0.0
        %2765 = vmatprep.subr.mxu0 0.0
        %2766 = vmatpush1.msra.mxu0 0.0
        %2767 = vmatprep.subr.mxu0 0.0
        %2768 = vmatpush1.msra.mxu0 0.0
        %2769 = vmatprep.subr.mxu0 0.0
        %2770 = vmatpush1.msra.mxu0 0.0
        %2771 = vmatprep.subr.mxu0 0.0
        %2772 = vmatpush1.msra.mxu0 0.0
        %2773 = vmatprep.subr.mxu0 0.0
        %2774 = vmatpush1.msra.mxu0 0.0
        %2775 = vmatprep.subr.mxu0 0.0
        %2776 = vmatpush1.msra.mxu0 0.0
        %2777 = vmatprep.subr.mxu0 0.0
        %2778 = vmatpush1.msra.mxu0 0.0
        %2779 = vmatprep.subr.mxu0 0.0
        %2780 = vmatpush1.msra.mxu0 0.0
        %2781 = vmatprep.subr.mxu0 0.0
        %2782 = vmatpush1.msra.mxu0 0.0
        %2783 = vmatprep.subr.mxu0 0.0
        %2784 = vmatpush1.msra.mxu0 0.0
        %2785 = vmatprep.subr.mxu0 0.0
        %2786 = vmatpush1.msra.mxu0 0.0
        %2787 = vmatprep.subr.mxu0 0.0
        %2788 = vmatpush1.msra.mxu0 0.0
        %2789 = vmatprep.subr.mxu0 0.0
        %2790 = vmatpush1.msra.mxu0 0.0
        %2791 = vmatprep.subr.mxu0 0.0
        %2792 = vmatpush1.msra.mxu0 0.0
        %2793 = vmatprep.subr.mxu0 0.0
        %2794 = vmatpush1.msra.mxu0 0.0
        %2795 = vmatprep.subr.mxu0 0.0
        %2796 = vmatpush1.msra.mxu0 0.0
        %2797 = vmatprep.subr.mxu0 0.0
        %2798 = vmatpush1.msra.mxu0 0.0
        %2799 = vmatprep.subr.mxu0 0.0
        %2800 = vmatpush1.msra.mxu0 0.0
        %2801 = vmatprep.subr.mxu0 0.0
        %2802 = vmatpush1.msra.mxu0 0.0
        %2803 = vmatprep.subr.mxu0 0.0
        %2804 = vmatpush1.msra.mxu0 0.0
        %2805 = vmatprep.subr.mxu0 0.0
        %2806 = vmatpush1.msra.mxu0 0.0
        %2807 = vmatprep.subr.mxu0 0.0
        %2808 = vmatpush1.msra.mxu0 0.0
        %2809 = vmatprep.subr.mxu0 0.0
        %2810 = vmatpush1.msra.mxu0 0.0
        %2811 = vmatprep.mubr.f32.mxu0 0.0
        %v2812 = vand.u32 %v295, 4294901760
        %2813 = vmatmul.mubr.f32.gmra.mrb[0].mxu0 %v2812
        %v2814 = vpop.f32.mrb[0].mxu0
        %v2815 = vadd.f32 %v2736, %v2814
        %v2816 = vpop.f32.mrb[0].mxu0
        %2817 = vmatprep.mubr.f32.mxu0 0.0
        %v2818 = vand.u32 %v298, 4294901760
        %2819 = vmatmul.mubr.f32.gmra.mrb[0].mxu0 %v2818
        %v2820 = vpop.f32.mrb[0].mxu0
        %v2821 = vadd.f32 %v2742, %v2820
        %v2822 = vpop.f32.mrb[0].mxu0
        %2823 = vdwg.mxu0
        %v2825 = vsel %vm293, %v2815, 0
        %v2828 = vsel %vm293, %v2821, 0
        %2830 = vmatprep.subr.mxu0 0.0
        %v2831 = vand.u32 %v287, 4294901760
        %2832 = vmatpush1.msra.mxu0 %v2831
        %2833 = vmatprep.subr.mxu0 0.0
        %v2834 = vand.u32 %v288, 4294901760
        %2835 = vmatpush1.msra.mxu0 %v2834
        %2836 = vmatprep.subr.mxu0 0.0
        %2837 = vmatpush1.msra.mxu0 0.0
        %2838 = vmatprep.subr.mxu0 0.0
        %2839 = vmatpush1.msra.mxu0 0.0
        %2840 = vmatprep.subr.mxu0 0.0
        %2841 = vmatpush1.msra.mxu0 0.0
        %2842 = vmatprep.subr.mxu0 0.0
        %2843 = vmatpush1.msra.mxu0 0.0
        %2844 = vmatprep.subr.mxu0 0.0
        %2845 = vmatpush1.msra.mxu0 0.0
        %2846 = vmatprep.subr.mxu0 0.0
        %2847 = vmatpush1.msra.mxu0 0.0
        %2848 = vmatprep.subr.mxu0 0.0
        %2849 = vmatpush1.msra.mxu0 0.0
        %2850 = vmatprep.subr.mxu0 0.0
        %2851 = vmatpush1.msra.mxu0 0.0
        %2852 = vmatprep.subr.mxu0 0.0
        %2853 = vmatpush1.msra.mxu0 0.0
        %2854 = vmatprep.subr.mxu0 0.0
        %2855 = vmatpush1.msra.mxu0 0.0
        %2856 = vmatprep.subr.mxu0 0.0
        %2857 = vmatpush1.msra.mxu0 0.0
        %2858 = vmatprep.subr.mxu0 0.0
        %2859 = vmatpush1.msra.mxu0 0.0
        %2860 = vmatprep.subr.mxu0 0.0
        %2861 = vmatpush1.msra.mxu0 0.0
        %2862 = vmatprep.subr.mxu0 0.0
        %2863 = vmatpush1.msra.mxu0 0.0
        %2864 = vmatprep.subr.mxu0 0.0
        %2865 = vmatpush1.msra.mxu0 0.0
        %2866 = vmatprep.subr.mxu0 0.0
        %2867 = vmatpush1.msra.mxu0 0.0
        %2868 = vmatprep.subr.mxu0 0.0
        %2869 = vmatpush1.msra.mxu0 0.0
        %2870 = vmatprep.subr.mxu0 0.0
        %2871 = vmatpush1.msra.mxu0 0.0
        %2872 = vmatprep.subr.mxu0 0.0
        %2873 = vmatpush1.msra.mxu0 0.0
        %2874 = vmatprep.subr.mxu0 0.0
        %2875 = vmatpush1.msra.mxu0 0.0
        %2876 = vmatprep.subr.mxu0 0.0
        %2877 = vmatpush1.msra.mxu0 0.0
        %2878 = vmatprep.subr.mxu0 0.0
        %2879 = vmatpush1.msra.mxu0 0.0
        %2880 = vmatprep.subr.mxu0 0.0
        %2881 = vmatpush1.msra.mxu0 0.0
        %2882 = vmatprep.subr.mxu0 0.0
        %2883 = vmatpush1.msra.mxu0 0.0
        %2884 = vmatprep.subr.mxu0 0.0
        %2885 = vmatpush1.msra.mxu0 0.0
        %2886 = vmatprep.subr.mxu0 0.0
        %2887 = vmatpush1.msra.mxu0 0.0
        %2888 = vmatprep.subr.mxu0 0.0
        %2889 = vmatpush1.msra.mxu0 0.0
        %2890 = vmatprep.subr.mxu0 0.0
        %2891 = vmatpush1.msra.mxu0 0.0
        %2892 = vmatprep.subr.mxu0 0.0
        %2893 = vmatpush1.msra.mxu0 0.0
        %2894 = vmatprep.subr.mxu0 0.0
        %2895 = vmatpush1.msra.mxu0 0.0
        %2896 = vmatprep.mubr.f32.mxu0 0.0
        %v2897 = vand.u32 %v2825, 4294901760
        %v2898 = vsub.f32 %v2825, %v2897
        %v2899 = vand.u32 %v2898, 4294901760
        %v2900 = vsub.f32 %v2898, %v2899
        %v2901 = vand.u32 %v2900, 4294901760
        %2902 = vmatmul.mubr.f32.gmra.mrb[0].mxu0 %v2901
        %v2903 = vpop.f32.mrb[0].mxu0
        %v2904 = vadd.f32 0.0, %v2903
        %v2905 = vpop.f32.mrb[0].mxu0
        %2906 = vmatprep.mubr.f32.mxu0 0.0
        %v2907 = vand.u32 %v2828, 4294901760
        %v2908 = vsub.f32 %v2828, %v2907
        %v2909 = vand.u32 %v2908, 4294901760
        %v2910 = vsub.f32 %v2908, %v2909
        %v2911 = vand.u32 %v2910, 4294901760
        %2912 = vmatmul.mubr.f32.gmra.mrb[0].mxu0 %v2911
        %v2913 = vpop.f32.mrb[0].mxu0
        %v2914 = vadd.f32 0.0, %v2913
        %v2915 = vpop.f32.mrb[0].mxu0
        %2916 = vdwg.mxu0
        %2917 = vmatprep.subr.mxu0 0.0
        %v2918 = vand.u32 %v287, 4294901760
        %v2919 = vsub.f32 %v287, %v2918
        %v2920 = vand.u32 %v2919, 4294901760
        %v2921 = vsub.f32 %v2919, %v2920
        %v2922 = vand.u32 %v2921, 4294901760
        %2923 = vmatpush1.msra.mxu0 %v2922
        %2924 = vmatprep.subr.mxu0 0.0
        %v2925 = vand.u32 %v288, 4294901760
        %v2926 = vsub.f32 %v288, %v2925
        %v2927 = vand.u32 %v2926, 4294901760
        %v2928 = vsub.f32 %v2926, %v2927
        %v2929 = vand.u32 %v2928, 4294901760
        %2930 = vmatpush1.msra.mxu0 %v2929
        %2931 = vmatprep.subr.mxu0 0.0
        %2932 = vmatpush1.msra.mxu0 0.0
        %2933 = vmatprep.subr.mxu0 0.0
        %2934 = vmatpush1.msra.mxu0 0.0
        %2935 = vmatprep.subr.mxu0 0.0
        %2936 = vmatpush1.msra.mxu0 0.0
        %2937 = vmatprep.subr.mxu0 0.0
        %2938 = vmatpush1.msra.mxu0 0.0
        %2939 = vmatprep.subr.mxu0 0.0
        %2940 = vmatpush1.msra.mxu0 0.0
        %2941 = vmatprep.subr.mxu0 0.0
        %2942 = vmatpush1.msra.mxu0 0.0
        %2943 = vmatprep.subr.mxu0 0.0
        %2944 = vmatpush1.msra.mxu0 0.0
        %2945 = vmatprep.subr.mxu0 0.0
        %2946 = vmatpush1.msra.mxu0 0.0
        %2947 = vmatprep.subr.mxu0 0.0
        %2948 = vmatpush1.msra.mxu0 0.0
        %2949 = vmatprep.subr.mxu0 0.0
        %2950 = vmatpush1.msra.mxu0 0.0
        %2951 = vmatprep.subr.mxu0 0.0
        %2952 = vmatpush1.msra.mxu0 0.0
        %2953 = vmatprep.subr.mxu0 0.0
        %2954 = vmatpush1.msra.mxu0 0.0
        %2955 = vmatprep.subr.mxu0 0.0
        %2956 = vmatpush1.msra.mxu0 0.0
        %2957 = vmatprep.subr.mxu0 0.0
        %2958 = vmatpush1.msra.mxu0 0.0
        %2959 = vmatprep.subr.mxu0 0.0
        %2960 = vmatpush1.msra.mxu0 0.0
        %2961 = vmatprep.subr.mxu0 0.0
        %2962 = vmatpush1.msra.mxu0 0.0
        %2963 = vmatprep.subr.mxu0 0.0
        %2964 = vmatpush1.msra.mxu0 0.0
        %2965 = vmatprep.subr.mxu0 0.0
        %2966 = vmatpush1.msra.mxu0 0.0
        %2967 = vmatprep.subr.mxu0 0.0
        %2968 = vmatpush1.msra.mxu0 0.0
        %2969 = vmatprep.subr.mxu0 0.0
        %2970 = vmatpush1.msra.mxu0 0.0
        %2971 = vmatprep.subr.mxu0 0.0
        %2972 = vmatpush1.msra.mxu0 0.0
        %2973 = vmatprep.subr.mxu0 0.0
        %2974 = vmatpush1.msra.mxu0 0.0
        %2975 = vmatprep.subr.mxu0 0.0
        %2976 = vmatpush1.msra.mxu0 0.0
        %2977 = vmatprep.subr.mxu0 0.0
        %2978 = vmatpush1.msra.mxu0 0.0
        %2979 = vmatprep.subr.mxu0 0.0
        %2980 = vmatpush1.msra.mxu0 0.0
        %2981 = vmatprep.subr.mxu0 0.0
        %2982 = vmatpush1.msra.mxu0 0.0
        %2983 = vmatprep.subr.mxu0 0.0
        %2984 = vmatpush1.msra.mxu0 0.0
        %2985 = vmatprep.subr.mxu0 0.0
        %2986 = vmatpush1.msra.mxu0 0.0
        %2987 = vmatprep.subr.mxu0 0.0
        %2988 = vmatpush1.msra.mxu0 0.0
        %2989 = vmatprep.subr.mxu0 0.0
        %2990 = vmatpush1.msra.mxu0 0.0
        %2991 = vmatprep.mubr.f32.mxu0 0.0
        %v2992 = vand.u32 %v2825, 4294901760
        %2993 = vmatmul.mubr.f32.gmra.mrb[0].mxu0 %v2992
        %v2994 = vpop.f32.mrb[0].mxu0
        %v2995 = vadd.f32 %v2904, %v2994
        %v2996 = vpop.f32.mrb[0].mxu0
        %2997 = vmatprep.mubr.f32.mxu0 0.0
        %v2998 = vand.u32 %v2828, 4294901760
        %2999 = vmatmul.mubr.f32.gmra.mrb[0].mxu0 %v2998
        %v3000 = vpop.f32.mrb[0].mxu0
        %v3001 = vadd.f32 %v2914, %v3000
        %v3002 = vpop.f32.mrb[0].mxu0
        %3003 = vdwg.mxu0
        %3004 = vmatprep.subr.mxu0 0.0
        %v3005 = vand.u32 %v287, 4294901760
        %v3006 = vsub.f32 %v287, %v3005
        %3007 = vmatpush1.msra.mxu0 %v3006
        %3008 = vmatprep.subr.mxu0 0.0
        %v3009 = vand.u32 %v288, 4294901760
        %v3010 = vsub.f32 %v288, %v3009
        %3011 = vmatpush1.msra.mxu0 %v3010
        %3012 = vmatprep.subr.mxu0 0.0
        %3013 = vmatpush1.msra.mxu0 0.0
        %3014 = vmatprep.subr.mxu0 0.0
        %3015 = vmatpush1.msra.mxu0 0.0
        %3016 = vmatprep.subr.mxu0 0.0
        %3017 = vmatpush1.msra.mxu0 0.0
        %3018 = vmatprep.subr.mxu0 0.0
        %3019 = vmatpush1.msra.mxu0 0.0
        %3020 = vmatprep.subr.mxu0 0.0
        %3021 = vmatpush1.msra.mxu0 0.0
        %3022 = vmatprep.subr.mxu0 0.0
        %3023 = vmatpush1.msra.mxu0 0.0
        %3024 = vmatprep.subr.mxu0 0.0
        %3025 = vmatpush1.msra.mxu0 0.0
        %3026 = vmatprep.subr.mxu0 0.0
        %3027 = vmatpush1.msra.mxu0 0.0
        %3028 = vmatprep.subr.mxu0 0.0
        %3029 = vmatpush1.msra.mxu0 0.0
        %3030 = vmatprep.subr.mxu0 0.0
        %3031 = vmatpush1.msra.mxu0 0.0
        %3032 = vmatprep.subr.mxu0 0.0
        %3033 = vmatpush1.msra.mxu0 0.0
        %3034 = vmatprep.subr.mxu0 0.0
        %3035 = vmatpush1.msra.mxu0 0.0
        %3036 = vmatprep.subr.mxu0 0.0
        %3037 = vmatpush1.msra.mxu0 0.0
        %3038 = vmatprep.subr.mxu0 0.0
        %3039 = vmatpush1.msra.mxu0 0.0
        %3040 = vmatprep.subr.mxu0 0.0
        %3041 = vmatpush1.msra.mxu0 0.0
        %3042 = vmatprep.subr.mxu0 0.0
        %3043 = vmatpush1.msra.mxu0 0.0
        %3044 = vmatprep.subr.mxu0 0.0
        %3045 = vmatpush1.msra.mxu0 0.0
        %3046 = vmatprep.subr.mxu0 0.0
        %3047 = vmatpush1.msra.mxu0 0.0
        %3048 = vmatprep.subr.mxu0 0.0
        %3049 = vmatpush1.msra.mxu0 0.0
        %3050 = vmatprep.subr.mxu0 0.0
        %3051 = vmatpush1.msra.mxu0 0.0
        %3052 = vmatprep.subr.mxu0 0.0
        %3053 = vmatpush1.msra.mxu0 0.0
        %3054 = vmatprep.subr.mxu0 0.0
        %3055 = vmatpush1.msra.mxu0 0.0
        %3056 = vmatprep.subr.mxu0 0.0
        %3057 = vmatpush1.msra.mxu0 0.0
        %3058 = vmatprep.subr.mxu0 0.0
        %3059 = vmatpush1.msra.mxu0 0.0
        %3060 = vmatprep.subr.mxu0 0.0
        %3061 = vmatpush1.msra.mxu0 0.0
        %3062 = vmatprep.subr.mxu0 0.0
        %3063 = vmatpush1.msra.mxu0 0.0
        %3064 = vmatprep.subr.mxu0 0.0
        %3065 = vmatpush1.msra.mxu0 0.0
        %3066 = vmatprep.subr.mxu0 0.0
        %3067 = vmatpush1.msra.mxu0 0.0
        %3068 = vmatprep.subr.mxu0 0.0
        %3069 = vmatpush1.msra.mxu0 0.0
        %3070 = vmatprep.subr.mxu0 0.0
        %3071 = vmatpush1.msra.mxu0 0.0
        %3072 = vmatprep.mubr.f32.mxu0 0.0
        %v3073 = vand.u32 %v2825, 4294901760
        %v3074 = vsub.f32 %v2825, %v3073
        %3075 = vmatmul.mubr.f32.gmra.mrb[0].mxu0 %v3074
        %v3076 = vpop.f32.mrb[0].mxu0
        %v3077 = vadd.f32 %v2995, %v3076
        %v3078 = vpop.f32.mrb[0].mxu0
        %3079 = vmatprep.mubr.f32.mxu0 0.0
        %v3080 = vand.u32 %v2828, 4294901760
        %v3081 = vsub.f32 %v2828, %v3080
        %3082 = vmatmul.mubr.f32.gmra.mrb[0].mxu0 %v3081
        %v3083 = vpop.f32.mrb[0].mxu0
        %v3084 = vadd.f32 %v3001, %v3083
        %v3085 = vpop.f32.mrb[0].mxu0
        %3086 = vdwg.mxu0
        %3087 = vmatprep.subr.mxu0 0.0
        %v3088 = vand.u32 %v287, 4294901760
        %3089 = vmatpush1.msra.mxu0 %v3088
        %3090 = vmatprep.subr.mxu0 0.0
        %v3091 = vand.u32 %v288, 4294901760
        %3092 = vmatpush1.msra.mxu0 %v3091
        %3093 = vmatprep.subr.mxu0 0.0
        %3094 = vmatpush1.msra.mxu0 0.0
        %3095 = vmatprep.subr.mxu0 0.0
        %3096 = vmatpush1.msra.mxu0 0.0
        %3097 = vmatprep.subr.mxu0 0.0
        %3098 = vmatpush1.msra.mxu0 0.0
        %3099 = vmatprep.subr.mxu0 0.0
        %3100 = vmatpush1.msra.mxu0 0.0
        %3101 = vmatprep.subr.mxu0 0.0
        %3102 = vmatpush1.msra.mxu0 0.0
        %3103 = vmatprep.subr.mxu0 0.0
        %3104 = vmatpush1.msra.mxu0 0.0
        %3105 = vmatprep.subr.mxu0 0.0
        %3106 = vmatpush1.msra.mxu0 0.0
        %3107 = vmatprep.subr.mxu0 0.0
        %3108 = vmatpush1.msra.mxu0 0.0
        %3109 = vmatprep.subr.mxu0 0.0
        %3110 = vmatpush1.msra.mxu0 0.0
        %3111 = vmatprep.subr.mxu0 0.0
        %3112 = vmatpush1.msra.mxu0 0.0
        %3113 = vmatprep.subr.mxu0 0.0
        %3114 = vmatpush1.msra.mxu0 0.0
        %3115 = vmatprep.subr.mxu0 0.0
        %3116 = vmatpush1.msra.mxu0 0.0
        %3117 = vmatprep.subr.mxu0 0.0
        %3118 = vmatpush1.msra.mxu0 0.0
        %3119 = vmatprep.subr.mxu0 0.0
        %3120 = vmatpush1.msra.mxu0 0.0
        %3121 = vmatprep.subr.mxu0 0.0
        %3122 = vmatpush1.msra.mxu0 0.0
        %3123 = vmatprep.subr.mxu0 0.0
        %3124 = vmatpush1.msra.mxu0 0.0
        %3125 = vmatprep.subr.mxu0 0.0
        %3126 = vmatpush1.msra.mxu0 0.0
        %3127 = vmatprep.subr.mxu0 0.0
        %3128 = vmatpush1.msra.mxu0 0.0
        %3129 = vmatprep.subr.mxu0 0.0
        %3130 = vmatpush1.msra.mxu0 0.0
        %3131 = vmatprep.subr.mxu0 0.0
        %3132 = vmatpush1.msra.mxu0 0.0
        %3133 = vmatprep.subr.mxu0 0.0
        %3134 = vmatpush1.msra.mxu0 0.0
        %3135 = vmatprep.subr.mxu0 0.0
        %3136 = vmatpush1.msra.mxu0 0.0
        %3137 = vmatprep.subr.mxu0 0.0
        %3138 = vmatpush1.msra.mxu0 0.0
        %3139 = vmatprep.subr.mxu0 0.0
        %3140 = vmatpush1.msra.mxu0 0.0
        %3141 = vmatprep.subr.mxu0 0.0
        %3142 = vmatpush1.msra.mxu0 0.0
        %3143 = vmatprep.subr.mxu0 0.0
        %3144 = vmatpush1.msra.mxu0 0.0
        %3145 = vmatprep.subr.mxu0 0.0
        %3146 = vmatpush1.msra.mxu0 0.0
        %3147 = vmatprep.subr.mxu0 0.0
        %3148 = vmatpush1.msra.mxu0 0.0
        %3149 = vmatprep.subr.mxu0 0.0
        %3150 = vmatpush1.msra.mxu0 0.0
        %3151 = vmatprep.subr.mxu0 0.0
        %3152 = vmatpush1.msra.mxu0 0.0
        %3153 = vmatprep.mubr.f32.mxu0 0.0
        %v3154 = vand.u32 %v2825, 4294901760
        %v3155 = vsub.f32 %v2825, %v3154
        %v3156 = vand.u32 %v3155, 4294901760
        %3157 = vmatmul.mubr.f32.gmra.mrb[0].mxu0 %v3156
        %v3158 = vpop.f32.mrb[0].mxu0
        %v3159 = vadd.f32 %v3077, %v3158
        %v3160 = vpop.f32.mrb[0].mxu0
        %3161 = vmatprep.mubr.f32.mxu0 0.0
        %v3162 = vand.u32 %v2828, 4294901760
        %v3163 = vsub.f32 %v2828, %v3162
        %v3164 = vand.u32 %v3163, 4294901760
        %3165 = vmatmul.mubr.f32.gmra.mrb[0].mxu0 %v3164
        %v3166 = vpop.f32.mrb[0].mxu0
        %v3167 = vadd.f32 %v3084, %v3166
        %v3168 = vpop.f32.mrb[0].mxu0
        %3169 = vdwg.mxu0
        %3170 = vmatprep.subr.mxu0 0.0
        %v3171 = vand.u32 %v287, 4294901760
        %v3172 = vsub.f32 %v287, %v3171
        %v3173 = vand.u32 %v3172, 4294901760
        %3174 = vmatpush1.msra.mxu0 %v3173
        %3175 = vmatprep.subr.mxu0 0.0
        %v3176 = vand.u32 %v288, 4294901760
        %v3177 = vsub.f32 %v288, %v3176
        %v3178 = vand.u32 %v3177, 4294901760
        %3179 = vmatpush1.msra.mxu0 %v3178
        %3180 = vmatprep.subr.mxu0 0.0
        %3181 = vmatpush1.msra.mxu0 0.0
        %3182 = vmatprep.subr.mxu0 0.0
        %3183 = vmatpush1.msra.mxu0 0.0
        %3184 = vmatprep.subr.mxu0 0.0
        %3185 = vmatpush1.msra.mxu0 0.0
        %3186 = vmatprep.subr.mxu0 0.0
        %3187 = vmatpush1.msra.mxu0 0.0
        %3188 = vmatprep.subr.mxu0 0.0
        %3189 = vmatpush1.msra.mxu0 0.0
        %3190 = vmatprep.subr.mxu0 0.0
        %3191 = vmatpush1.msra.mxu0 0.0
        %3192 = vmatprep.subr.mxu0 0.0
        %3193 = vmatpush1.msra.mxu0 0.0
        %3194 = vmatprep.subr.mxu0 0.0
        %3195 = vmatpush1.msra.mxu0 0.0
        %3196 = vmatprep.subr.mxu0 0.0
        %3197 = vmatpush1.msra.mxu0 0.0
        %3198 = vmatprep.subr.mxu0 0.0
        %3199 = vmatpush1.msra.mxu0 0.0
        %3200 = vmatprep.subr.mxu0 0.0
        %3201 = vmatpush1.msra.mxu0 0.0
        %3202 = vmatprep.subr.mxu0 0.0
        %3203 = vmatpush1.msra.mxu0 0.0
        %3204 = vmatprep.subr.mxu0 0.0
        %3205 = vmatpush1.msra.mxu0 0.0
        %3206 = vmatprep.subr.mxu0 0.0
        %3207 = vmatpush1.msra.mxu0 0.0
        %3208 = vmatprep.subr.mxu0 0.0
        %3209 = vmatpush1.msra.mxu0 0.0
        %3210 = vmatprep.subr.mxu0 0.0
        %3211 = vmatpush1.msra.mxu0 0.0
        %3212 = vmatprep.subr.mxu0 0.0
        %3213 = vmatpush1.msra.mxu0 0.0
        %3214 = vmatprep.subr.mxu0 0.0
        %3215 = vmatpush1.msra.mxu0 0.0
        %3216 = vmatprep.subr.mxu0 0.0
        %3217 = vmatpush1.msra.mxu0 0.0
        %3218 = vmatprep.subr.mxu0 0.0
        %3219 = vmatpush1.msra.mxu0 0.0
        %3220 = vmatprep.subr.mxu0 0.0
        %3221 = vmatpush1.msra.mxu0 0.0
        %3222 = vmatprep.subr.mxu0 0.0
        %3223 = vmatpush1.msra.mxu0 0.0
        %3224 = vmatprep.subr.mxu0 0.0
        %3225 = vmatpush1.msra.mxu0 0.0
        %3226 = vmatprep.subr.mxu0 0.0
        %3227 = vmatpush1.msra.mxu0 0.0
        %3228 = vmatprep.subr.mxu0 0.0
        %3229 = vmatpush1.msra.mxu0 0.0
        %3230 = vmatprep.subr.mxu0 0.0
        %3231 = vmatpush1.msra.mxu0 0.0
        %3232 = vmatprep.subr.mxu0 0.0
        %3233 = vmatpush1.msra.mxu0 0.0
        %3234 = vmatprep.subr.mxu0 0.0
        %3235 = vmatpush1.msra.mxu0 0.0
        %3236 = vmatprep.subr.mxu0 0.0
        %3237 = vmatpush1.msra.mxu0 0.0
        %3238 = vmatprep.subr.mxu0 0.0
        %3239 = vmatpush1.msra.mxu0 0.0
        %3240 = vmatprep.mubr.f32.mxu0 0.0
        %v3241 = vand.u32 %v2825, 4294901760
        %3242 = vmatmul.mubr.f32.gmra.mrb[0].mxu0 %v3241
        %v3243 = vpop.f32.mrb[0].mxu0
        %v3244 = vadd.f32 %v3159, %v3243
        %v3245 = vpop.f32.mrb[0].mxu0
        %3246 = vmatprep.mubr.f32.mxu0 0.0
        %v3247 = vand.u32 %v2828, 4294901760
        %3248 = vmatmul.mubr.f32.gmra.mrb[0].mxu0 %v3247
        %v3249 = vpop.f32.mrb[0].mxu0
        %v3250 = vadd.f32 %v3167, %v3249
        %v3251 = vpop.f32.mrb[0].mxu0
        %3252 = vdwg.mxu0
        %3253 = vmatprep.subr.mxu0 0.0
        %v3254 = vand.u32 %v287, 4294901760
        %3255 = vmatpush1.msra.mxu0 %v3254
        %3256 = vmatprep.subr.mxu0 0.0
        %v3257 = vand.u32 %v288, 4294901760
        %3258 = vmatpush1.msra.mxu0 %v3257
        %3259 = vmatprep.subr.mxu0 0.0
        %3260 = vmatpush1.msra.mxu0 0.0
        %3261 = vmatprep.subr.mxu0 0.0
        %3262 = vmatpush1.msra.mxu0 0.0
        %3263 = vmatprep.subr.mxu0 0.0
        %3264 = vmatpush1.msra.mxu0 0.0
        %3265 = vmatprep.subr.mxu0 0.0
        %3266 = vmatpush1.msra.mxu0 0.0
        %3267 = vmatprep.subr.mxu0 0.0
        %3268 = vmatpush1.msra.mxu0 0.0
        %3269 = vmatprep.subr.mxu0 0.0
        %3270 = vmatpush1.msra.mxu0 0.0
        %3271 = vmatprep.subr.mxu0 0.0
        %3272 = vmatpush1.msra.mxu0 0.0
        %3273 = vmatprep.subr.mxu0 0.0
        %3274 = vmatpush1.msra.mxu0 0.0
        %3275 = vmatprep.subr.mxu0 0.0
        %3276 = vmatpush1.msra.mxu0 0.0
        %3277 = vmatprep.subr.mxu0 0.0
        %3278 = vmatpush1.msra.mxu0 0.0
        %3279 = vmatprep.subr.mxu0 0.0
        %3280 = vmatpush1.msra.mxu0 0.0
        %3281 = vmatprep.subr.mxu0 0.0
        %3282 = vmatpush1.msra.mxu0 0.0
        %3283 = vmatprep.subr.mxu0 0.0
        %3284 = vmatpush1.msra.mxu0 0.0
        %3285 = vmatprep.subr.mxu0 0.0
        %3286 = vmatpush1.msra.mxu0 0.0
        %3287 = vmatprep.subr.mxu0 0.0
        %3288 = vmatpush1.msra.mxu0 0.0
        %3289 = vmatprep.subr.mxu0 0.0
        %3290 = vmatpush1.msra.mxu0 0.0
        %3291 = vmatprep.subr.mxu0 0.0
        %3292 = vmatpush1.msra.mxu0 0.0
        %3293 = vmatprep.subr.mxu0 0.0
        %3294 = vmatpush1.msra.mxu0 0.0
        %3295 = vmatprep.subr.mxu0 0.0
        %3296 = vmatpush1.msra.mxu0 0.0
        %3297 = vmatprep.subr.mxu0 0.0
        %3298 = vmatpush1.msra.mxu0 0.0
        %3299 = vmatprep.subr.mxu0 0.0
        %3300 = vmatpush1.msra.mxu0 0.0
        %3301 = vmatprep.subr.mxu0 0.0
        %3302 = vmatpush1.msra.mxu0 0.0
        %3303 = vmatprep.subr.mxu0 0.0
        %3304 = vmatpush1.msra.mxu0 0.0
        %3305 = vmatprep.subr.mxu0 0.0
        %3306 = vmatpush1.msra.mxu0 0.0
        %3307 = vmatprep.subr.mxu0 0.0
        %3308 = vmatpush1.msra.mxu0 0.0
        %3309 = vmatprep.subr.mxu0 0.0
        %3310 = vmatpush1.msra.mxu0 0.0
        %3311 = vmatprep.subr.mxu0 0.0
        %3312 = vmatpush1.msra.mxu0 0.0
        %3313 = vmatprep.subr.mxu0 0.0
        %3314 = vmatpush1.msra.mxu0 0.0
        %3315 = vmatprep.subr.mxu0 0.0
        %3316 = vmatpush1.msra.mxu0 0.0
        %3317 = vmatprep.subr.mxu0 0.0
        %3318 = vmatpush1.msra.mxu0 0.0
        %3319 = vmatprep.mubr.f32.mxu0 0.0
        %v3320 = vand.u32 %v2825, 4294901760
        %3321 = vmatmul.mubr.f32.gmra.mrb[0].mxu0 %v3320
        %v3322 = vpop.f32.mrb[0].mxu0
        %v3323 = vadd.f32 %v3244, %v3322
        %v3324 = vpop.f32.mrb[0].mxu0
        %3325 = vmatprep.mubr.f32.mxu0 0.0
        %v3326 = vand.u32 %v2828, 4294901760
        %3327 = vmatmul.mubr.f32.gmra.mrb[0].mxu0 %v3326
        %v3328 = vpop.f32.mrb[0].mxu0
        %v3329 = vadd.f32 %v3250, %v3328
        %v3330 = vpop.f32.mrb[0].mxu0
        %3331 = vdwg.mxu0
        %v3332 = vmul.f32 %v291, %v291
        %v3333 = vmul.f32 %v292, %v292
        %3334 = vmatprep.subr.mxu0 0.0
        %v3335 = vand.u32 %v3332, 4294901760
        %3336 = vmatpush1.msra.mxu0 %v3335
        %3337 = vmatprep.subr.mxu0 0.0
        %v3338 = vand.u32 %v3333, 4294901760
        %3339 = vmatpush1.msra.mxu0 %v3338
        %3340 = vmatprep.subr.mxu0 0.0
        %3341 = vmatpush1.msra.mxu0 0.0
        %3342 = vmatprep.subr.mxu0 0.0
        %3343 = vmatpush1.msra.mxu0 0.0
        %3344 = vmatprep.subr.mxu0 0.0
        %3345 = vmatpush1.msra.mxu0 0.0
        %3346 = vmatprep.subr.mxu0 0.0
        %3347 = vmatpush1.msra.mxu0 0.0
        %3348 = vmatprep.subr.mxu0 0.0
        %3349 = vmatpush1.msra.mxu0 0.0
        %3350 = vmatprep.subr.mxu0 0.0
        %3351 = vmatpush1.msra.mxu0 0.0
        %3352 = vmatprep.subr.mxu0 0.0
        %3353 = vmatpush1.msra.mxu0 0.0
        %3354 = vmatprep.subr.mxu0 0.0
        %3355 = vmatpush1.msra.mxu0 0.0
        %3356 = vmatprep.subr.mxu0 0.0
        %3357 = vmatpush1.msra.mxu0 0.0
        %3358 = vmatprep.subr.mxu0 0.0
        %3359 = vmatpush1.msra.mxu0 0.0
        %3360 = vmatprep.subr.mxu0 0.0
        %3361 = vmatpush1.msra.mxu0 0.0
        %3362 = vmatprep.subr.mxu0 0.0
        %3363 = vmatpush1.msra.mxu0 0.0
        %3364 = vmatprep.subr.mxu0 0.0
        %3365 = vmatpush1.msra.mxu0 0.0
        %3366 = vmatprep.subr.mxu0 0.0
        %3367 = vmatpush1.msra.mxu0 0.0
        %3368 = vmatprep.subr.mxu0 0.0
        %3369 = vmatpush1.msra.mxu0 0.0
        %3370 = vmatprep.subr.mxu0 0.0
        %3371 = vmatpush1.msra.mxu0 0.0
        %3372 = vmatprep.subr.mxu0 0.0
        %3373 = vmatpush1.msra.mxu0 0.0
        %3374 = vmatprep.subr.mxu0 0.0
        %3375 = vmatpush1.msra.mxu0 0.0
        %3376 = vmatprep.subr.mxu0 0.0
        %3377 = vmatpush1.msra.mxu0 0.0
        %3378 = vmatprep.subr.mxu0 0.0
        %3379 = vmatpush1.msra.mxu0 0.0
        %3380 = vmatprep.subr.mxu0 0.0
        %3381 = vmatpush1.msra.mxu0 0.0
        %3382 = vmatprep.subr.mxu0 0.0
        %3383 = vmatpush1.msra.mxu0 0.0
        %3384 = vmatprep.subr.mxu0 0.0
        %3385 = vmatpush1.msra.mxu0 0.0
        %3386 = vmatprep.subr.mxu0 0.0
        %3387 = vmatpush1.msra.mxu0 0.0
        %3388 = vmatprep.subr.mxu0 0.0
        %3389 = vmatpush1.msra.mxu0 0.0
        %3390 = vmatprep.subr.mxu0 0.0
        %3391 = vmatpush1.msra.mxu0 0.0
        %3392 = vmatprep.subr.mxu0 0.0
        %3393 = vmatpush1.msra.mxu0 0.0
        %3394 = vmatprep.subr.mxu0 0.0
        %3395 = vmatpush1.msra.mxu0 0.0
        %3396 = vmatprep.subr.mxu0 0.0
        %3397 = vmatpush1.msra.mxu0 0.0
        %3398 = vmatprep.subr.mxu0 0.0
        %3399 = vmatpush1.msra.mxu0 0.0
        %3400 = vmatprep.mubr.f32.mxu0 0.0
        %v3401 = vand.u32 %v295, 4294901760
        %v3402 = vsub.f32 %v295, %v3401
        %v3403 = vand.u32 %v3402, 4294901760
        %v3404 = vsub.f32 %v3402, %v3403
        %v3405 = vand.u32 %v3404, 4294901760
        %3406 = vmatmul.mubr.f32.gmra.mrb[0].mxu0 %v3405
        %v3407 = vpop.f32.mrb[0].mxu0
        %v3408 = vadd.f32 0.0, %v3407
        %v3409 = vpop.f32.mrb[0].mxu0
        %3410 = vmatprep.mubr.f32.mxu0 0.0
        %v3411 = vand.u32 %v298, 4294901760
        %v3412 = vsub.f32 %v298, %v3411
        %v3413 = vand.u32 %v3412, 4294901760
        %v3414 = vsub.f32 %v3412, %v3413
        %v3415 = vand.u32 %v3414, 4294901760
        %3416 = vmatmul.mubr.f32.gmra.mrb[0].mxu0 %v3415
        %v3417 = vpop.f32.mrb[0].mxu0
        %v3418 = vadd.f32 0.0, %v3417
        %v3419 = vpop.f32.mrb[0].mxu0
        %3420 = vdwg.mxu0
        %3421 = vmatprep.subr.mxu0 0.0
        %v3422 = vand.u32 %v3332, 4294901760
        %v3423 = vsub.f32 %v3332, %v3422
        %v3424 = vand.u32 %v3423, 4294901760
        %v3425 = vsub.f32 %v3423, %v3424
        %v3426 = vand.u32 %v3425, 4294901760
        %3427 = vmatpush1.msra.mxu0 %v3426
        %3428 = vmatprep.subr.mxu0 0.0
        %v3429 = vand.u32 %v3333, 4294901760
        %v3430 = vsub.f32 %v3333, %v3429
        %v3431 = vand.u32 %v3430, 4294901760
        %v3432 = vsub.f32 %v3430, %v3431
        %v3433 = vand.u32 %v3432, 4294901760
        %3434 = vmatpush1.msra.mxu0 %v3433
        %3435 = vmatprep.subr.mxu0 0.0
        %3436 = vmatpush1.msra.mxu0 0.0
        %3437 = vmatprep.subr.mxu0 0.0
        %3438 = vmatpush1.msra.mxu0 0.0
        %3439 = vmatprep.subr.mxu0 0.0
        %3440 = vmatpush1.msra.mxu0 0.0
        %3441 = vmatprep.subr.mxu0 0.0
        %3442 = vmatpush1.msra.mxu0 0.0
        %3443 = vmatprep.subr.mxu0 0.0
        %3444 = vmatpush1.msra.mxu0 0.0
        %3445 = vmatprep.subr.mxu0 0.0
        %3446 = vmatpush1.msra.mxu0 0.0
        %3447 = vmatprep.subr.mxu0 0.0
        %3448 = vmatpush1.msra.mxu0 0.0
        %3449 = vmatprep.subr.mxu0 0.0
        %3450 = vmatpush1.msra.mxu0 0.0
        %3451 = vmatprep.subr.mxu0 0.0
        %3452 = vmatpush1.msra.mxu0 0.0
        %3453 = vmatprep.subr.mxu0 0.0
        %3454 = vmatpush1.msra.mxu0 0.0
        %3455 = vmatprep.subr.mxu0 0.0
        %3456 = vmatpush1.msra.mxu0 0.0
        %3457 = vmatprep.subr.mxu0 0.0
        %3458 = vmatpush1.msra.mxu0 0.0
        %3459 = vmatprep.subr.mxu0 0.0
        %3460 = vmatpush1.msra.mxu0 0.0
        %3461 = vmatprep.subr.mxu0 0.0
        %3462 = vmatpush1.msra.mxu0 0.0
        %3463 = vmatprep.subr.mxu0 0.0
        %3464 = vmatpush1.msra.mxu0 0.0
        %3465 = vmatprep.subr.mxu0 0.0
        %3466 = vmatpush1.msra.mxu0 0.0
        %3467 = vmatprep.subr.mxu0 0.0
        %3468 = vmatpush1.msra.mxu0 0.0
        %3469 = vmatprep.subr.mxu0 0.0
        %3470 = vmatpush1.msra.mxu0 0.0
        %3471 = vmatprep.subr.mxu0 0.0
        %3472 = vmatpush1.msra.mxu0 0.0
        %3473 = vmatprep.subr.mxu0 0.0
        %3474 = vmatpush1.msra.mxu0 0.0
        %3475 = vmatprep.subr.mxu0 0.0
        %3476 = vmatpush1.msra.mxu0 0.0
        %3477 = vmatprep.subr.mxu0 0.0
        %3478 = vmatpush1.msra.mxu0 0.0
        %3479 = vmatprep.subr.mxu0 0.0
        %3480 = vmatpush1.msra.mxu0 0.0
        %3481 = vmatprep.subr.mxu0 0.0
        %3482 = vmatpush1.msra.mxu0 0.0
        %3483 = vmatprep.subr.mxu0 0.0
        %3484 = vmatpush1.msra.mxu0 0.0
        %3485 = vmatprep.subr.mxu0 0.0
        %3486 = vmatpush1.msra.mxu0 0.0
        %3487 = vmatprep.subr.mxu0 0.0
        %3488 = vmatpush1.msra.mxu0 0.0
        %3489 = vmatprep.subr.mxu0 0.0
        %3490 = vmatpush1.msra.mxu0 0.0
        %3491 = vmatprep.subr.mxu0 0.0
        %3492 = vmatpush1.msra.mxu0 0.0
        %3493 = vmatprep.subr.mxu0 0.0
        %3494 = vmatpush1.msra.mxu0 0.0
        %3495 = vmatprep.mubr.f32.mxu0 0.0
        %v3496 = vand.u32 %v295, 4294901760
        %3497 = vmatmul.mubr.f32.gmra.mrb[0].mxu0 %v3496
        %v3498 = vpop.f32.mrb[0].mxu0
        %v3499 = vadd.f32 %v3408, %v3498
        %v3500 = vpop.f32.mrb[0].mxu0
        %3501 = vmatprep.mubr.f32.mxu0 0.0
        %v3502 = vand.u32 %v298, 4294901760
        %3503 = vmatmul.mubr.f32.gmra.mrb[0].mxu0 %v3502
        %v3504 = vpop.f32.mrb[0].mxu0
        %v3505 = vadd.f32 %v3418, %v3504
        %v3506 = vpop.f32.mrb[0].mxu0
        %3507 = vdwg.mxu0
        %3508 = vmatprep.subr.mxu0 0.0
        %v3509 = vand.u32 %v3332, 4294901760
        %v3510 = vsub.f32 %v3332, %v3509
        %3511 = vmatpush1.msra.mxu0 %v3510
        %3512 = vmatprep.subr.mxu0 0.0
        %v3513 = vand.u32 %v3333, 4294901760
        %v3514 = vsub.f32 %v3333, %v3513
        %3515 = vmatpush1.msra.mxu0 %v3514
        %3516 = vmatprep.subr.mxu0 0.0
        %3517 = vmatpush1.msra.mxu0 0.0
        %3518 = vmatprep.subr.mxu0 0.0
        %3519 = vmatpush1.msra.mxu0 0.0
        %3520 = vmatprep.subr.mxu0 0.0
        %3521 = vmatpush1.msra.mxu0 0.0
        %3522 = vmatprep.subr.mxu0 0.0
        %3523 = vmatpush1.msra.mxu0 0.0
        %3524 = vmatprep.subr.mxu0 0.0
        %3525 = vmatpush1.msra.mxu0 0.0
        %3526 = vmatprep.subr.mxu0 0.0
        %3527 = vmatpush1.msra.mxu0 0.0
        %3528 = vmatprep.subr.mxu0 0.0
        %3529 = vmatpush1.msra.mxu0 0.0
        %3530 = vmatprep.subr.mxu0 0.0
        %3531 = vmatpush1.msra.mxu0 0.0
        %3532 = vmatprep.subr.mxu0 0.0
        %3533 = vmatpush1.msra.mxu0 0.0
        %3534 = vmatprep.subr.mxu0 0.0
        %3535 = vmatpush1.msra.mxu0 0.0
        %3536 = vmatprep.subr.mxu0 0.0
        %3537 = vmatpush1.msra.mxu0 0.0
        %3538 = vmatprep.subr.mxu0 0.0
        %3539 = vmatpush1.msra.mxu0 0.0
        %3540 = vmatprep.subr.mxu0 0.0
        %3541 = vmatpush1.msra.mxu0 0.0
        %3542 = vmatprep.subr.mxu0 0.0
        %3543 = vmatpush1.msra.mxu0 0.0
        %3544 = vmatprep.subr.mxu0 0.0
        %3545 = vmatpush1.msra.mxu0 0.0
        %3546 = vmatprep.subr.mxu0 0.0
        %3547 = vmatpush1.msra.mxu0 0.0
        %3548 = vmatprep.subr.mxu0 0.0
        %3549 = vmatpush1.msra.mxu0 0.0
        %3550 = vmatprep.subr.mxu0 0.0
        %3551 = vmatpush1.msra.mxu0 0.0
        %3552 = vmatprep.subr.mxu0 0.0
        %3553 = vmatpush1.msra.mxu0 0.0
        %3554 = vmatprep.subr.mxu0 0.0
        %3555 = vmatpush1.msra.mxu0 0.0
        %3556 = vmatprep.subr.mxu0 0.0
        %3557 = vmatpush1.msra.mxu0 0.0
        %3558 = vmatprep.subr.mxu0 0.0
        %3559 = vmatpush1.msra.mxu0 0.0
        %3560 = vmatprep.subr.mxu0 0.0
        %3561 = vmatpush1.msra.mxu0 0.0
        %3562 = vmatprep.subr.mxu0 0.0
        %3563 = vmatpush1.msra.mxu0 0.0
        %3564 = vmatprep.subr.mxu0 0.0
        %3565 = vmatpush1.msra.mxu0 0.0
        %3566 = vmatprep.subr.mxu0 0.0
        %3567 = vmatpush1.msra.mxu0 0.0
        %3568 = vmatprep.subr.mxu0 0.0
        %3569 = vmatpush1.msra.mxu0 0.0
        %3570 = vmatprep.subr.mxu0 0.0
        %3571 = vmatpush1.msra.mxu0 0.0
        %3572 = vmatprep.subr.mxu0 0.0
        %3573 = vmatpush1.msra.mxu0 0.0
        %3574 = vmatprep.subr.mxu0 0.0
        %3575 = vmatpush1.msra.mxu0 0.0
        %3576 = vmatprep.mubr.f32.mxu0 0.0
        %v3577 = vand.u32 %v295, 4294901760
        %v3578 = vsub.f32 %v295, %v3577
        %3579 = vmatmul.mubr.f32.gmra.mrb[0].mxu0 %v3578
        %v3580 = vpop.f32.mrb[0].mxu0
        %v3581 = vadd.f32 %v3499, %v3580
        %v3582 = vpop.f32.mrb[0].mxu0
        %3583 = vmatprep.mubr.f32.mxu0 0.0
        %v3584 = vand.u32 %v298, 4294901760
        %v3585 = vsub.f32 %v298, %v3584
        %3586 = vmatmul.mubr.f32.gmra.mrb[0].mxu0 %v3585
        %v3587 = vpop.f32.mrb[0].mxu0
        %v3588 = vadd.f32 %v3505, %v3587
        %v3589 = vpop.f32.mrb[0].mxu0
        %3590 = vdwg.mxu0
        %3591 = vmatprep.subr.mxu0 0.0
        %v3592 = vand.u32 %v3332, 4294901760
        %3593 = vmatpush1.msra.mxu0 %v3592
        %3594 = vmatprep.subr.mxu0 0.0
        %v3595 = vand.u32 %v3333, 4294901760
        %3596 = vmatpush1.msra.mxu0 %v3595
        %3597 = vmatprep.subr.mxu0 0.0
        %3598 = vmatpush1.msra.mxu0 0.0
        %3599 = vmatprep.subr.mxu0 0.0
        %3600 = vmatpush1.msra.mxu0 0.0
        %3601 = vmatprep.subr.mxu0 0.0
        %3602 = vmatpush1.msra.mxu0 0.0
        %3603 = vmatprep.subr.mxu0 0.0
        %3604 = vmatpush1.msra.mxu0 0.0
        %3605 = vmatprep.subr.mxu0 0.0
        %3606 = vmatpush1.msra.mxu0 0.0
        %3607 = vmatprep.subr.mxu0 0.0
        %3608 = vmatpush1.msra.mxu0 0.0
        %3609 = vmatprep.subr.mxu0 0.0
        %3610 = vmatpush1.msra.mxu0 0.0
        %3611 = vmatprep.subr.mxu0 0.0
        %3612 = vmatpush1.msra.mxu0 0.0
        %3613 = vmatprep.subr.mxu0 0.0
        %3614 = vmatpush1.msra.mxu0 0.0
        %3615 = vmatprep.subr.mxu0 0.0
        %3616 = vmatpush1.msra.mxu0 0.0
        %3617 = vmatprep.subr.mxu0 0.0
        %3618 = vmatpush1.msra.mxu0 0.0
        %3619 = vmatprep.subr.mxu0 0.0
        %3620 = vmatpush1.msra.mxu0 0.0
        %3621 = vmatprep.subr.mxu0 0.0
        %3622 = vmatpush1.msra.mxu0 0.0
        %3623 = vmatprep.subr.mxu0 0.0
        %3624 = vmatpush1.msra.mxu0 0.0
        %3625 = vmatprep.subr.mxu0 0.0
        %3626 = vmatpush1.msra.mxu0 0.0
        %3627 = vmatprep.subr.mxu0 0.0
        %3628 = vmatpush1.msra.mxu0 0.0
        %3629 = vmatprep.subr.mxu0 0.0
        %3630 = vmatpush1.msra.mxu0 0.0
        %3631 = vmatprep.subr.mxu0 0.0
        %3632 = vmatpush1.msra.mxu0 0.0
        %3633 = vmatprep.subr.mxu0 0.0
        %3634 = vmatpush1.msra.mxu0 0.0
        %3635 = vmatprep.subr.mxu0 0.0
        %3636 = vmatpush1.msra.mxu0 0.0
        %3637 = vmatprep.subr.mxu0 0.0
        %3638 = vmatpush1.msra.mxu0 0.0
        %3639 = vmatprep.subr.mxu0 0.0
        %3640 = vmatpush1.msra.mxu0 0.0
        %3641 = vmatprep.subr.mxu0 0.0
        %3642 = vmatpush1.msra.mxu0 0.0
        %3643 = vmatprep.subr.mxu0 0.0
        %3644 = vmatpush1.msra.mxu0 0.0
        %3645 = vmatprep.subr.mxu0 0.0
        %3646 = vmatpush1.msra.mxu0 0.0
        %3647 = vmatprep.subr.mxu0 0.0
        %3648 = vmatpush1.msra.mxu0 0.0
        %3649 = vmatprep.subr.mxu0 0.0
        %3650 = vmatpush1.msra.mxu0 0.0
        %3651 = vmatprep.subr.mxu0 0.0
        %3652 = vmatpush1.msra.mxu0 0.0
        %3653 = vmatprep.subr.mxu0 0.0
        %3654 = vmatpush1.msra.mxu0 0.0
        %3655 = vmatprep.subr.mxu0 0.0
        %3656 = vmatpush1.msra.mxu0 0.0
        %3657 = vmatprep.mubr.f32.mxu0 0.0
        %v3658 = vand.u32 %v295, 4294901760
        %v3659 = vsub.f32 %v295, %v3658
        %v3660 = vand.u32 %v3659, 4294901760
        %3661 = vmatmul.mubr.f32.gmra.mrb[0].mxu0 %v3660
        %v3662 = vpop.f32.mrb[0].mxu0
        %v3663 = vadd.f32 %v3581, %v3662
        %v3664 = vpop.f32.mrb[0].mxu0
        %3665 = vmatprep.mubr.f32.mxu0 0.0
        %v3666 = vand.u32 %v298, 4294901760
        %v3667 = vsub.f32 %v298, %v3666
        %v3668 = vand.u32 %v3667, 4294901760
        %3669 = vmatmul.mubr.f32.gmra.mrb[0].mxu0 %v3668
        %v3670 = vpop.f32.mrb[0].mxu0
        %v3671 = vadd.f32 %v3588, %v3670
        %v3672 = vpop.f32.mrb[0].mxu0
        %3673 = vdwg.mxu0
        %3674 = vmatprep.subr.mxu0 0.0
        %v3675 = vand.u32 %v3332, 4294901760
        %v3676 = vsub.f32 %v3332, %v3675
        %v3677 = vand.u32 %v3676, 4294901760
        %3678 = vmatpush1.msra.mxu0 %v3677
        %3679 = vmatprep.subr.mxu0 0.0
        %v3680 = vand.u32 %v3333, 4294901760
        %v3681 = vsub.f32 %v3333, %v3680
        %v3682 = vand.u32 %v3681, 4294901760
        %3683 = vmatpush1.msra.mxu0 %v3682
        %3684 = vmatprep.subr.mxu0 0.0
        %3685 = vmatpush1.msra.mxu0 0.0
        %3686 = vmatprep.subr.mxu0 0.0
        %3687 = vmatpush1.msra.mxu0 0.0
        %3688 = vmatprep.subr.mxu0 0.0
        %3689 = vmatpush1.msra.mxu0 0.0
        %3690 = vmatprep.subr.mxu0 0.0
        %3691 = vmatpush1.msra.mxu0 0.0
        %3692 = vmatprep.subr.mxu0 0.0
        %3693 = vmatpush1.msra.mxu0 0.0
        %3694 = vmatprep.subr.mxu0 0.0
        %3695 = vmatpush1.msra.mxu0 0.0
        %3696 = vmatprep.subr.mxu0 0.0
        %3697 = vmatpush1.msra.mxu0 0.0
        %3698 = vmatprep.subr.mxu0 0.0
        %3699 = vmatpush1.msra.mxu0 0.0
        %3700 = vmatprep.subr.mxu0 0.0
        %3701 = vmatpush1.msra.mxu0 0.0
        %3702 = vmatprep.subr.mxu0 0.0
        %3703 = vmatpush1.msra.mxu0 0.0
        %3704 = vmatprep.subr.mxu0 0.0
        %3705 = vmatpush1.msra.mxu0 0.0
        %3706 = vmatprep.subr.mxu0 0.0
        %3707 = vmatpush1.msra.mxu0 0.0
        %3708 = vmatprep.subr.mxu0 0.0
        %3709 = vmatpush1.msra.mxu0 0.0
        %3710 = vmatprep.subr.mxu0 0.0
        %3711 = vmatpush1.msra.mxu0 0.0
        %3712 = vmatprep.subr.mxu0 0.0
        %3713 = vmatpush1.msra.mxu0 0.0
        %3714 = vmatprep.subr.mxu0 0.0
        %3715 = vmatpush1.msra.mxu0 0.0
        %3716 = vmatprep.subr.mxu0 0.0
        %3717 = vmatpush1.msra.mxu0 0.0
        %3718 = vmatprep.subr.mxu0 0.0
        %3719 = vmatpush1.msra.mxu0 0.0
        %3720 = vmatprep.subr.mxu0 0.0
        %3721 = vmatpush1.msra.mxu0 0.0
        %3722 = vmatprep.subr.mxu0 0.0
        %3723 = vmatpush1.msra.mxu0 0.0
        %3724 = vmatprep.subr.mxu0 0.0
        %3725 = vmatpush1.msra.mxu0 0.0
        %3726 = vmatprep.subr.mxu0 0.0
        %3727 = vmatpush1.msra.mxu0 0.0
        %3728 = vmatprep.subr.mxu0 0.0
        %3729 = vmatpush1.msra.mxu0 0.0
        %3730 = vmatprep.subr.mxu0 0.0
        %3731 = vmatpush1.msra.mxu0 0.0
        %3732 = vmatprep.subr.mxu0 0.0
        %3733 = vmatpush1.msra.mxu0 0.0
        %3734 = vmatprep.subr.mxu0 0.0
        %3735 = vmatpush1.msra.mxu0 0.0
        %3736 = vmatprep.subr.mxu0 0.0
        %3737 = vmatpush1.msra.mxu0 0.0
        %3738 = vmatprep.subr.mxu0 0.0
        %3739 = vmatpush1.msra.mxu0 0.0
        %3740 = vmatprep.subr.mxu0 0.0
        %3741 = vmatpush1.msra.mxu0 0.0
        %3742 = vmatprep.subr.mxu0 0.0
        %3743 = vmatpush1.msra.mxu0 0.0
        %3744 = vmatprep.mubr.f32.mxu0 0.0
        %v3745 = vand.u32 %v295, 4294901760
        %3746 = vmatmul.mubr.f32.gmra.mrb[0].mxu0 %v3745
        %v3747 = vpop.f32.mrb[0].mxu0
        %v3748 = vadd.f32 %v3663, %v3747
        %v3749 = vpop.f32.mrb[0].mxu0
        %3750 = vmatprep.mubr.f32.mxu0 0.0
        %v3751 = vand.u32 %v298, 4294901760
        %3752 = vmatmul.mubr.f32.gmra.mrb[0].mxu0 %v3751
        %v3753 = vpop.f32.mrb[0].mxu0
        %v3754 = vadd.f32 %v3671, %v3753
        %v3755 = vpop.f32.mrb[0].mxu0
        %3756 = vdwg.mxu0
        %3757 = vmatprep.subr.mxu0 0.0
        %v3758 = vand.u32 %v3332, 4294901760
        %3759 = vmatpush1.msra.mxu0 %v3758
        %3760 = vmatprep.subr.mxu0 0.0
        %v3761 = vand.u32 %v3333, 4294901760
        %3762 = vmatpush1.msra.mxu0 %v3761
        %3763 = vmatprep.subr.mxu0 0.0
        %3764 = vmatpush1.msra.mxu0 0.0
        %3765 = vmatprep.subr.mxu0 0.0
        %3766 = vmatpush1.msra.mxu0 0.0
        %3767 = vmatprep.subr.mxu0 0.0
        %3768 = vmatpush1.msra.mxu0 0.0
        %3769 = vmatprep.subr.mxu0 0.0
        %3770 = vmatpush1.msra.mxu0 0.0
        %3771 = vmatprep.subr.mxu0 0.0
        %3772 = vmatpush1.msra.mxu0 0.0
        %3773 = vmatprep.subr.mxu0 0.0
        %3774 = vmatpush1.msra.mxu0 0.0
        %3775 = vmatprep.subr.mxu0 0.0
        %3776 = vmatpush1.msra.mxu0 0.0
        %3777 = vmatprep.subr.mxu0 0.0
        %3778 = vmatpush1.msra.mxu0 0.0
        %3779 = vmatprep.subr.mxu0 0.0
        %3780 = vmatpush1.msra.mxu0 0.0
        %3781 = vmatprep.subr.mxu0 0.0
        %3782 = vmatpush1.msra.mxu0 0.0
        %3783 = vmatprep.subr.mxu0 0.0
        %3784 = vmatpush1.msra.mxu0 0.0
        %3785 = vmatprep.subr.mxu0 0.0
        %3786 = vmatpush1.msra.mxu0 0.0
        %3787 = vmatprep.subr.mxu0 0.0
        %3788 = vmatpush1.msra.mxu0 0.0
        %3789 = vmatprep.subr.mxu0 0.0
        %3790 = vmatpush1.msra.mxu0 0.0
        %3791 = vmatprep.subr.mxu0 0.0
        %3792 = vmatpush1.msra.mxu0 0.0
        %3793 = vmatprep.subr.mxu0 0.0
        %3794 = vmatpush1.msra.mxu0 0.0
        %3795 = vmatprep.subr.mxu0 0.0
        %3796 = vmatpush1.msra.mxu0 0.0
        %3797 = vmatprep.subr.mxu0 0.0
        %3798 = vmatpush1.msra.mxu0 0.0
        %3799 = vmatprep.subr.mxu0 0.0
        %3800 = vmatpush1.msra.mxu0 0.0
        %3801 = vmatprep.subr.mxu0 0.0
        %3802 = vmatpush1.msra.mxu0 0.0
        %3803 = vmatprep.subr.mxu0 0.0
        %3804 = vmatpush1.msra.mxu0 0.0
        %3805 = vmatprep.subr.mxu0 0.0
        %3806 = vmatpush1.msra.mxu0 0.0
        %3807 = vmatprep.subr.mxu0 0.0
        %3808 = vmatpush1.msra.mxu0 0.0
        %3809 = vmatprep.subr.mxu0 0.0
        %3810 = vmatpush1.msra.mxu0 0.0
        %3811 = vmatprep.subr.mxu0 0.0
        %3812 = vmatpush1.msra.mxu0 0.0
        %3813 = vmatprep.subr.mxu0 0.0
        %3814 = vmatpush1.msra.mxu0 0.0
        %3815 = vmatprep.subr.mxu0 0.0
        %3816 = vmatpush1.msra.mxu0 0.0
        %3817 = vmatprep.subr.mxu0 0.0
        %3818 = vmatpush1.msra.mxu0 0.0
        %3819 = vmatprep.subr.mxu0 0.0
        %3820 = vmatpush1.msra.mxu0 0.0
        %3821 = vmatprep.subr.mxu0 0.0
        %3822 = vmatpush1.msra.mxu0 0.0
        %3823 = vmatprep.mubr.f32.mxu0 0.0
        %v3824 = vand.u32 %v295, 4294901760
        %3825 = vmatmul.mubr.f32.gmra.mrb[0].mxu0 %v3824
        %v3826 = vpop.f32.mrb[0].mxu0
        %v3827 = vadd.f32 %v3748, %v3826
        %v3828 = vpop.f32.mrb[0].mxu0
        %3829 = vmatprep.mubr.f32.mxu0 0.0
        %v3830 = vand.u32 %v298, 4294901760
        %3831 = vmatmul.mubr.f32.gmra.mrb[0].mxu0 %v3830
        %v3832 = vpop.f32.mrb[0].mxu0
        %v3833 = vadd.f32 %v3754, %v3832
        %v3834 = vpop.f32.mrb[0].mxu0
        %3835 = vdwg.mxu0
        %v3837 = vsel %vm293, %v3827, 0
        %v3840 = vsel %vm293, %v3833, 0
        %3842 = vmatprep.subr.mxu0 0.0
        %v3843 = vand.u32 %v287, 4294901760
        %3844 = vmatpush1.msra.mxu0 %v3843
        %3845 = vmatprep.subr.mxu0 0.0
        %v3846 = vand.u32 %v288, 4294901760
        %3847 = vmatpush1.msra.mxu0 %v3846
        %3848 = vmatprep.subr.mxu0 0.0
        %3849 = vmatpush1.msra.mxu0 0.0
        %3850 = vmatprep.subr.mxu0 0.0
        %3851 = vmatpush1.msra.mxu0 0.0
        %3852 = vmatprep.subr.mxu0 0.0
        %3853 = vmatpush1.msra.mxu0 0.0
        %3854 = vmatprep.subr.mxu0 0.0
        %3855 = vmatpush1.msra.mxu0 0.0
        %3856 = vmatprep.subr.mxu0 0.0
        %3857 = vmatpush1.msra.mxu0 0.0
        %3858 = vmatprep.subr.mxu0 0.0
        %3859 = vmatpush1.msra.mxu0 0.0
        %3860 = vmatprep.subr.mxu0 0.0
        %3861 = vmatpush1.msra.mxu0 0.0
        %3862 = vmatprep.subr.mxu0 0.0
        %3863 = vmatpush1.msra.mxu0 0.0
        %3864 = vmatprep.subr.mxu0 0.0
        %3865 = vmatpush1.msra.mxu0 0.0
        %3866 = vmatprep.subr.mxu0 0.0
        %3867 = vmatpush1.msra.mxu0 0.0
        %3868 = vmatprep.subr.mxu0 0.0
        %3869 = vmatpush1.msra.mxu0 0.0
        %3870 = vmatprep.subr.mxu0 0.0
        %3871 = vmatpush1.msra.mxu0 0.0
        %3872 = vmatprep.subr.mxu0 0.0
        %3873 = vmatpush1.msra.mxu0 0.0
        %3874 = vmatprep.subr.mxu0 0.0
        %3875 = vmatpush1.msra.mxu0 0.0
        %3876 = vmatprep.subr.mxu0 0.0
        %3877 = vmatpush1.msra.mxu0 0.0
        %3878 = vmatprep.subr.mxu0 0.0
        %3879 = vmatpush1.msra.mxu0 0.0
        %3880 = vmatprep.subr.mxu0 0.0
        %3881 = vmatpush1.msra.mxu0 0.0
        %3882 = vmatprep.subr.mxu0 0.0
        %3883 = vmatpush1.msra.mxu0 0.0
        %3884 = vmatprep.subr.mxu0 0.0
        %3885 = vmatpush1.msra.mxu0 0.0
        %3886 = vmatprep.subr.mxu0 0.0
        %3887 = vmatpush1.msra.mxu0 0.0
        %3888 = vmatprep.subr.mxu0 0.0
        %3889 = vmatpush1.msra.mxu0 0.0
        %3890 = vmatprep.subr.mxu0 0.0
        %3891 = vmatpush1.msra.mxu0 0.0
        %3892 = vmatprep.subr.mxu0 0.0
        %3893 = vmatpush1.msra.mxu0 0.0
        %3894 = vmatprep.subr.mxu0 0.0
        %3895 = vmatpush1.msra.mxu0 0.0
        %3896 = vmatprep.subr.mxu0 0.0
        %3897 = vmatpush1.msra.mxu0 0.0
        %3898 = vmatprep.subr.mxu0 0.0
        %3899 = vmatpush1.msra.mxu0 0.0
        %3900 = vmatprep.subr.mxu0 0.0
        %3901 = vmatpush1.msra.mxu0 0.0
        %3902 = vmatprep.subr.mxu0 0.0
        %3903 = vmatpush1.msra.mxu0 0.0
        %3904 = vmatprep.subr.mxu0 0.0
        %3905 = vmatpush1.msra.mxu0 0.0
        %3906 = vmatprep.subr.mxu0 0.0
        %3907 = vmatpush1.msra.mxu0 0.0
        %3908 = vmatprep.mubr.f32.mxu0 0.0
        %v3909 = vand.u32 %v3837, 4294901760
        %v3910 = vsub.f32 %v3837, %v3909
        %v3911 = vand.u32 %v3910, 4294901760
        %v3912 = vsub.f32 %v3910, %v3911
        %v3913 = vand.u32 %v3912, 4294901760
        %3914 = vmatmul.mubr.f32.gmra.mrb[0].mxu0 %v3913
        %v3915 = vpop.f32.mrb[0].mxu0
        %v3916 = vadd.f32 0.0, %v3915
        %v3917 = vpop.f32.mrb[0].mxu0
        %3918 = vmatprep.mubr.f32.mxu0 0.0
        %v3919 = vand.u32 %v3840, 4294901760
        %v3920 = vsub.f32 %v3840, %v3919
        %v3921 = vand.u32 %v3920, 4294901760
        %v3922 = vsub.f32 %v3920, %v3921
        %v3923 = vand.u32 %v3922, 4294901760
        %3924 = vmatmul.mubr.f32.gmra.mrb[0].mxu0 %v3923
        %v3925 = vpop.f32.mrb[0].mxu0
        %v3926 = vadd.f32 0.0, %v3925
        %v3927 = vpop.f32.mrb[0].mxu0
        %3928 = vdwg.mxu0
        %3929 = vmatprep.subr.mxu0 0.0
        %v3930 = vand.u32 %v287, 4294901760
        %v3931 = vsub.f32 %v287, %v3930
        %v3932 = vand.u32 %v3931, 4294901760
        %v3933 = vsub.f32 %v3931, %v3932
        %v3934 = vand.u32 %v3933, 4294901760
        %3935 = vmatpush1.msra.mxu0 %v3934
        %3936 = vmatprep.subr.mxu0 0.0
        %v3937 = vand.u32 %v288, 4294901760
        %v3938 = vsub.f32 %v288, %v3937
        %v3939 = vand.u32 %v3938, 4294901760
        %v3940 = vsub.f32 %v3938, %v3939
        %v3941 = vand.u32 %v3940, 4294901760
        %3942 = vmatpush1.msra.mxu0 %v3941
        %3943 = vmatprep.subr.mxu0 0.0
        %3944 = vmatpush1.msra.mxu0 0.0
        %3945 = vmatprep.subr.mxu0 0.0
        %3946 = vmatpush1.msra.mxu0 0.0
        %3947 = vmatprep.subr.mxu0 0.0
        %3948 = vmatpush1.msra.mxu0 0.0
        %3949 = vmatprep.subr.mxu0 0.0
        %3950 = vmatpush1.msra.mxu0 0.0
        %3951 = vmatprep.subr.mxu0 0.0
        %3952 = vmatpush1.msra.mxu0 0.0
        %3953 = vmatprep.subr.mxu0 0.0
        %3954 = vmatpush1.msra.mxu0 0.0
        %3955 = vmatprep.subr.mxu0 0.0
        %3956 = vmatpush1.msra.mxu0 0.0
        %3957 = vmatprep.subr.mxu0 0.0
        %3958 = vmatpush1.msra.mxu0 0.0
        %3959 = vmatprep.subr.mxu0 0.0
        %3960 = vmatpush1.msra.mxu0 0.0
        %3961 = vmatprep.subr.mxu0 0.0
        %3962 = vmatpush1.msra.mxu0 0.0
        %3963 = vmatprep.subr.mxu0 0.0
        %3964 = vmatpush1.msra.mxu0 0.0
        %3965 = vmatprep.subr.mxu0 0.0
        %3966 = vmatpush1.msra.mxu0 0.0
        %3967 = vmatprep.subr.mxu0 0.0
        %3968 = vmatpush1.msra.mxu0 0.0
        %3969 = vmatprep.subr.mxu0 0.0
        %3970 = vmatpush1.msra.mxu0 0.0
        %3971 = vmatprep.subr.mxu0 0.0
        %3972 = vmatpush1.msra.mxu0 0.0
        %3973 = vmatprep.subr.mxu0 0.0
        %3974 = vmatpush1.msra.mxu0 0.0
        %3975 = vmatprep.subr.mxu0 0.0
        %3976 = vmatpush1.msra.mxu0 0.0
        %3977 = vmatprep.subr.mxu0 0.0
        %3978 = vmatpush1.msra.mxu0 0.0
        %3979 = vmatprep.subr.mxu0 0.0
        %3980 = vmatpush1.msra.mxu0 0.0
        %3981 = vmatprep.subr.mxu0 0.0
        %3982 = vmatpush1.msra.mxu0 0.0
        %3983 = vmatprep.subr.mxu0 0.0
        %3984 = vmatpush1.msra.mxu0 0.0
        %3985 = vmatprep.subr.mxu0 0.0
        %3986 = vmatpush1.msra.mxu0 0.0
        %3987 = vmatprep.subr.mxu0 0.0
        %3988 = vmatpush1.msra.mxu0 0.0
        %3989 = vmatprep.subr.mxu0 0.0
        %3990 = vmatpush1.msra.mxu0 0.0
        %3991 = vmatprep.subr.mxu0 0.0
        %3992 = vmatpush1.msra.mxu0 0.0
        %3993 = vmatprep.subr.mxu0 0.0
        %3994 = vmatpush1.msra.mxu0 0.0
        %3995 = vmatprep.subr.mxu0 0.0
        %3996 = vmatpush1.msra.mxu0 0.0
        %3997 = vmatprep.subr.mxu0 0.0
        %3998 = vmatpush1.msra.mxu0 0.0
        %3999 = vmatprep.subr.mxu0 0.0
        %4000 = vmatpush1.msra.mxu0 0.0
        %4001 = vmatprep.subr.mxu0 0.0
        %4002 = vmatpush1.msra.mxu0 0.0
        %4003 = vmatprep.mubr.f32.mxu0 0.0
        %v4004 = vand.u32 %v3837, 4294901760
        %4005 = vmatmul.mubr.f32.gmra.mrb[0].mxu0 %v4004
        %v4006 = vpop.f32.mrb[0].mxu0
        %v4007 = vadd.f32 %v3916, %v4006
        %v4008 = vpop.f32.mrb[0].mxu0
        %4009 = vmatprep.mubr.f32.mxu0 0.0
        %v4010 = vand.u32 %v3840, 4294901760
        %4011 = vmatmul.mubr.f32.gmra.mrb[0].mxu0 %v4010
        %v4012 = vpop.f32.mrb[0].mxu0
        %v4013 = vadd.f32 %v3926, %v4012
        %v4014 = vpop.f32.mrb[0].mxu0
        %4015 = vdwg.mxu0
        %4016 = vmatprep.subr.mxu0 0.0
        %v4017 = vand.u32 %v287, 4294901760
        %v4018 = vsub.f32 %v287, %v4017
        %4019 = vmatpush1.msra.mxu0 %v4018
        %4020 = vmatprep.subr.mxu0 0.0
        %v4021 = vand.u32 %v288, 4294901760
        %v4022 = vsub.f32 %v288, %v4021
        %4023 = vmatpush1.msra.mxu0 %v4022
        %4024 = vmatprep.subr.mxu0 0.0
        %4025 = vmatpush1.msra.mxu0 0.0
        %4026 = vmatprep.subr.mxu0 0.0
        %4027 = vmatpush1.msra.mxu0 0.0
        %4028 = vmatprep.subr.mxu0 0.0
        %4029 = vmatpush1.msra.mxu0 0.0
        %4030 = vmatprep.subr.mxu0 0.0
        %4031 = vmatpush1.msra.mxu0 0.0
        %4032 = vmatprep.subr.mxu0 0.0
        %4033 = vmatpush1.msra.mxu0 0.0
        %4034 = vmatprep.subr.mxu0 0.0
        %4035 = vmatpush1.msra.mxu0 0.0
        %4036 = vmatprep.subr.mxu0 0.0
        %4037 = vmatpush1.msra.mxu0 0.0
        %4038 = vmatprep.subr.mxu0 0.0
        %4039 = vmatpush1.msra.mxu0 0.0
        %4040 = vmatprep.subr.mxu0 0.0
        %4041 = vmatpush1.msra.mxu0 0.0
        %4042 = vmatprep.subr.mxu0 0.0
        %4043 = vmatpush1.msra.mxu0 0.0
        %4044 = vmatprep.subr.mxu0 0.0
        %4045 = vmatpush1.msra.mxu0 0.0
        %4046 = vmatprep.subr.mxu0 0.0
        %4047 = vmatpush1.msra.mxu0 0.0
        %4048 = vmatprep.subr.mxu0 0.0
        %4049 = vmatpush1.msra.mxu0 0.0
        %4050 = vmatprep.subr.mxu0 0.0
        %4051 = vmatpush1.msra.mxu0 0.0
        %4052 = vmatprep.subr.mxu0 0.0
        %4053 = vmatpush1.msra.mxu0 0.0
        %4054 = vmatprep.subr.mxu0 0.0
        %4055 = vmatpush1.msra.mxu0 0.0
        %4056 = vmatprep.subr.mxu0 0.0
        %4057 = vmatpush1.msra.mxu0 0.0
        %4058 = vmatprep.subr.mxu0 0.0
        %4059 = vmatpush1.msra.mxu0 0.0
        %4060 = vmatprep.subr.mxu0 0.0
        %4061 = vmatpush1.msra.mxu0 0.0
        %4062 = vmatprep.subr.mxu0 0.0
        %4063 = vmatpush1.msra.mxu0 0.0
        %4064 = vmatprep.subr.mxu0 0.0
        %4065 = vmatpush1.msra.mxu0 0.0
        %4066 = vmatprep.subr.mxu0 0.0
        %4067 = vmatpush1.msra.mxu0 0.0
        %4068 = vmatprep.subr.mxu0 0.0
        %4069 = vmatpush1.msra.mxu0 0.0
        %4070 = vmatprep.subr.mxu0 0.0
        %4071 = vmatpush1.msra.mxu0 0.0
        %4072 = vmatprep.subr.mxu0 0.0
        %4073 = vmatpush1.msra.mxu0 0.0
        %4074 = vmatprep.subr.mxu0 0.0
        %4075 = vmatpush1.msra.mxu0 0.0
        %4076 = vmatprep.subr.mxu0 0.0
        %4077 = vmatpush1.msra.mxu0 0.0
        %4078 = vmatprep.subr.mxu0 0.0
        %4079 = vmatpush1.msra.mxu0 0.0
        %4080 = vmatprep.subr.mxu0 0.0
        %4081 = vmatpush1.msra.mxu0 0.0
        %4082 = vmatprep.subr.mxu0 0.0
        %4083 = vmatpush1.msra.mxu0 0.0
        %4084 = vmatprep.mubr.f32.mxu0 0.0
        %v4085 = vand.u32 %v3837, 4294901760
        %v4086 = vsub.f32 %v3837, %v4085
        %4087 = vmatmul.mubr.f32.gmra.mrb[0].mxu0 %v4086
        %v4088 = vpop.f32.mrb[0].mxu0
        %v4089 = vadd.f32 %v4007, %v4088
        %v4090 = vpop.f32.mrb[0].mxu0
        %4091 = vmatprep.mubr.f32.mxu0 0.0
        %v4092 = vand.u32 %v3840, 4294901760
        %v4093 = vsub.f32 %v3840, %v4092
        %4094 = vmatmul.mubr.f32.gmra.mrb[0].mxu0 %v4093
        %v4095 = vpop.f32.mrb[0].mxu0
        %v4096 = vadd.f32 %v4013, %v4095
        %v4097 = vpop.f32.mrb[0].mxu0
        %4098 = vdwg.mxu0
        %4099 = vmatprep.subr.mxu0 0.0
        %v4100 = vand.u32 %v287, 4294901760
        %4101 = vmatpush1.msra.mxu0 %v4100
        %4102 = vmatprep.subr.mxu0 0.0
        %v4103 = vand.u32 %v288, 4294901760
        %4104 = vmatpush1.msra.mxu0 %v4103
        %4105 = vmatprep.subr.mxu0 0.0
        %4106 = vmatpush1.msra.mxu0 0.0
        %4107 = vmatprep.subr.mxu0 0.0
        %4108 = vmatpush1.msra.mxu0 0.0
        %4109 = vmatprep.subr.mxu0 0.0
        %4110 = vmatpush1.msra.mxu0 0.0
        %4111 = vmatprep.subr.mxu0 0.0
        %4112 = vmatpush1.msra.mxu0 0.0
        %4113 = vmatprep.subr.mxu0 0.0
        %4114 = vmatpush1.msra.mxu0 0.0
        %4115 = vmatprep.subr.mxu0 0.0
        %4116 = vmatpush1.msra.mxu0 0.0
        %4117 = vmatprep.subr.mxu0 0.0
        %4118 = vmatpush1.msra.mxu0 0.0
        %4119 = vmatprep.subr.mxu0 0.0
        %4120 = vmatpush1.msra.mxu0 0.0
        %4121 = vmatprep.subr.mxu0 0.0
        %4122 = vmatpush1.msra.mxu0 0.0
        %4123 = vmatprep.subr.mxu0 0.0
        %4124 = vmatpush1.msra.mxu0 0.0
        %4125 = vmatprep.subr.mxu0 0.0
        %4126 = vmatpush1.msra.mxu0 0.0
        %4127 = vmatprep.subr.mxu0 0.0
        %4128 = vmatpush1.msra.mxu0 0.0
        %4129 = vmatprep.subr.mxu0 0.0
        %4130 = vmatpush1.msra.mxu0 0.0
        %4131 = vmatprep.subr.mxu0 0.0
        %4132 = vmatpush1.msra.mxu0 0.0
        %4133 = vmatprep.subr.mxu0 0.0
        %4134 = vmatpush1.msra.mxu0 0.0
        %4135 = vmatprep.subr.mxu0 0.0
        %4136 = vmatpush1.msra.mxu0 0.0
        %4137 = vmatprep.subr.mxu0 0.0
        %4138 = vmatpush1.msra.mxu0 0.0
        %4139 = vmatprep.subr.mxu0 0.0
        %4140 = vmatpush1.msra.mxu0 0.0
        %4141 = vmatprep.subr.mxu0 0.0
        %4142 = vmatpush1.msra.mxu0 0.0
        %4143 = vmatprep.subr.mxu0 0.0
        %4144 = vmatpush1.msra.mxu0 0.0
        %4145 = vmatprep.subr.mxu0 0.0
        %4146 = vmatpush1.msra.mxu0 0.0
        %4147 = vmatprep.subr.mxu0 0.0
        %4148 = vmatpush1.msra.mxu0 0.0
        %4149 = vmatprep.subr.mxu0 0.0
        %4150 = vmatpush1.msra.mxu0 0.0
        %4151 = vmatprep.subr.mxu0 0.0
        %4152 = vmatpush1.msra.mxu0 0.0
        %4153 = vmatprep.subr.mxu0 0.0
        %4154 = vmatpush1.msra.mxu0 0.0
        %4155 = vmatprep.subr.mxu0 0.0
        %4156 = vmatpush1.msra.mxu0 0.0
        %4157 = vmatprep.subr.mxu0 0.0
        %4158 = vmatpush1.msra.mxu0 0.0
        %4159 = vmatprep.subr.mxu0 0.0
        %4160 = vmatpush1.msra.mxu0 0.0
        %4161 = vmatprep.subr.mxu0 0.0
        %4162 = vmatpush1.msra.mxu0 0.0
        %4163 = vmatprep.subr.mxu0 0.0
        %4164 = vmatpush1.msra.mxu0 0.0
        %4165 = vmatprep.mubr.f32.mxu0 0.0
        %v4166 = vand.u32 %v3837, 4294901760
        %v4167 = vsub.f32 %v3837, %v4166
        %v4168 = vand.u32 %v4167, 4294901760
        %4169 = vmatmul.mubr.f32.gmra.mrb[0].mxu0 %v4168
        %v4170 = vpop.f32.mrb[0].mxu0
        %v4171 = vadd.f32 %v4089, %v4170
        %v4172 = vpop.f32.mrb[0].mxu0
        %4173 = vmatprep.mubr.f32.mxu0 0.0
        %v4174 = vand.u32 %v3840, 4294901760
        %v4175 = vsub.f32 %v3840, %v4174
        %v4176 = vand.u32 %v4175, 4294901760
        %4177 = vmatmul.mubr.f32.gmra.mrb[0].mxu0 %v4176
        %v4178 = vpop.f32.mrb[0].mxu0
        %v4179 = vadd.f32 %v4096, %v4178
        %v4180 = vpop.f32.mrb[0].mxu0
        %4181 = vdwg.mxu0
        %4182 = vmatprep.subr.mxu0 0.0
        %v4183 = vand.u32 %v287, 4294901760
        %v4184 = vsub.f32 %v287, %v4183
        %v4185 = vand.u32 %v4184, 4294901760
        %4186 = vmatpush1.msra.mxu0 %v4185
        %4187 = vmatprep.subr.mxu0 0.0
        %v4188 = vand.u32 %v288, 4294901760
        %v4189 = vsub.f32 %v288, %v4188
        %v4190 = vand.u32 %v4189, 4294901760
        %4191 = vmatpush1.msra.mxu0 %v4190
        %4192 = vmatprep.subr.mxu0 0.0
        %4193 = vmatpush1.msra.mxu0 0.0
        %4194 = vmatprep.subr.mxu0 0.0
        %4195 = vmatpush1.msra.mxu0 0.0
        %4196 = vmatprep.subr.mxu0 0.0
        %4197 = vmatpush1.msra.mxu0 0.0
        %4198 = vmatprep.subr.mxu0 0.0
        %4199 = vmatpush1.msra.mxu0 0.0
        %4200 = vmatprep.subr.mxu0 0.0
        %4201 = vmatpush1.msra.mxu0 0.0
        %4202 = vmatprep.subr.mxu0 0.0
        %4203 = vmatpush1.msra.mxu0 0.0
        %4204 = vmatprep.subr.mxu0 0.0
        %4205 = vmatpush1.msra.mxu0 0.0
        %4206 = vmatprep.subr.mxu0 0.0
        %4207 = vmatpush1.msra.mxu0 0.0
        %4208 = vmatprep.subr.mxu0 0.0
        %4209 = vmatpush1.msra.mxu0 0.0
        %4210 = vmatprep.subr.mxu0 0.0
        %4211 = vmatpush1.msra.mxu0 0.0
        %4212 = vmatprep.subr.mxu0 0.0
        %4213 = vmatpush1.msra.mxu0 0.0
        %4214 = vmatprep.subr.mxu0 0.0
        %4215 = vmatpush1.msra.mxu0 0.0
        %4216 = vmatprep.subr.mxu0 0.0
        %4217 = vmatpush1.msra.mxu0 0.0
        %4218 = vmatprep.subr.mxu0 0.0
        %4219 = vmatpush1.msra.mxu0 0.0
        %4220 = vmatprep.subr.mxu0 0.0
        %4221 = vmatpush1.msra.mxu0 0.0
        %4222 = vmatprep.subr.mxu0 0.0
        %4223 = vmatpush1.msra.mxu0 0.0
        %4224 = vmatprep.subr.mxu0 0.0
        %4225 = vmatpush1.msra.mxu0 0.0
        %4226 = vmatprep.subr.mxu0 0.0
        %4227 = vmatpush1.msra.mxu0 0.0
        %4228 = vmatprep.subr.mxu0 0.0
        %4229 = vmatpush1.msra.mxu0 0.0
        %4230 = vmatprep.subr.mxu0 0.0
        %4231 = vmatpush1.msra.mxu0 0.0
        %4232 = vmatprep.subr.mxu0 0.0
        %4233 = vmatpush1.msra.mxu0 0.0
        %4234 = vmatprep.subr.mxu0 0.0
        %4235 = vmatpush1.msra.mxu0 0.0
        %4236 = vmatprep.subr.mxu0 0.0
        %4237 = vmatpush1.msra.mxu0 0.0
        %4238 = vmatprep.subr.mxu0 0.0
        %4239 = vmatpush1.msra.mxu0 0.0
        %4240 = vmatprep.subr.mxu0 0.0
        %4241 = vmatpush1.msra.mxu0 0.0
        %4242 = vmatprep.subr.mxu0 0.0
        %4243 = vmatpush1.msra.mxu0 0.0
        %4244 = vmatprep.subr.mxu0 0.0
        %4245 = vmatpush1.msra.mxu0 0.0
        %4246 = vmatprep.subr.mxu0 0.0
        %4247 = vmatpush1.msra.mxu0 0.0
        %4248 = vmatprep.subr.mxu0 0.0
        %4249 = vmatpush1.msra.mxu0 0.0
        %4250 = vmatprep.subr.mxu0 0.0
        %4251 = vmatpush1.msra.mxu0 0.0
        %4252 = vmatprep.mubr.f32.mxu0 0.0
        %v4253 = vand.u32 %v3837, 4294901760
        %4254 = vmatmul.mubr.f32.gmra.mrb[0].mxu0 %v4253
        %v4255 = vpop.f32.mrb[0].mxu0
        %v4256 = vadd.f32 %v4171, %v4255
        %v4257 = vpop.f32.mrb[0].mxu0
        %4258 = vmatprep.mubr.f32.mxu0 0.0
        %v4259 = vand.u32 %v3840, 4294901760
        %4260 = vmatmul.mubr.f32.gmra.mrb[0].mxu0 %v4259
        %v4261 = vpop.f32.mrb[0].mxu0
        %v4262 = vadd.f32 %v4179, %v4261
        %v4263 = vpop.f32.mrb[0].mxu0
        %4264 = vdwg.mxu0
        %4265 = vmatprep.subr.mxu0 0.0
        %v4266 = vand.u32 %v287, 4294901760
        %4267 = vmatpush1.msra.mxu0 %v4266
        %4268 = vmatprep.subr.mxu0 0.0
        %v4269 = vand.u32 %v288, 4294901760
        %4270 = vmatpush1.msra.mxu0 %v4269
        %4271 = vmatprep.subr.mxu0 0.0
        %4272 = vmatpush1.msra.mxu0 0.0
        %4273 = vmatprep.subr.mxu0 0.0
        %4274 = vmatpush1.msra.mxu0 0.0
        %4275 = vmatprep.subr.mxu0 0.0
        %4276 = vmatpush1.msra.mxu0 0.0
        %4277 = vmatprep.subr.mxu0 0.0
        %4278 = vmatpush1.msra.mxu0 0.0
        %4279 = vmatprep.subr.mxu0 0.0
        %4280 = vmatpush1.msra.mxu0 0.0
        %4281 = vmatprep.subr.mxu0 0.0
        %4282 = vmatpush1.msra.mxu0 0.0
        %4283 = vmatprep.subr.mxu0 0.0
        %4284 = vmatpush1.msra.mxu0 0.0
        %4285 = vmatprep.subr.mxu0 0.0
        %4286 = vmatpush1.msra.mxu0 0.0
        %4287 = vmatprep.subr.mxu0 0.0
        %4288 = vmatpush1.msra.mxu0 0.0
        %4289 = vmatprep.subr.mxu0 0.0
        %4290 = vmatpush1.msra.mxu0 0.0
        %4291 = vmatprep.subr.mxu0 0.0
        %4292 = vmatpush1.msra.mxu0 0.0
        %4293 = vmatprep.subr.mxu0 0.0
        %4294 = vmatpush1.msra.mxu0 0.0
        %4295 = vmatprep.subr.mxu0 0.0
        %4296 = vmatpush1.msra.mxu0 0.0
        %4297 = vmatprep.subr.mxu0 0.0
        %4298 = vmatpush1.msra.mxu0 0.0
        %4299 = vmatprep.subr.mxu0 0.0
        %4300 = vmatpush1.msra.mxu0 0.0
        %4301 = vmatprep.subr.mxu0 0.0
        %4302 = vmatpush1.msra.mxu0 0.0
        %4303 = vmatprep.subr.mxu0 0.0
        %4304 = vmatpush1.msra.mxu0 0.0
        %4305 = vmatprep.subr.mxu0 0.0
        %4306 = vmatpush1.msra.mxu0 0.0
        %4307 = vmatprep.subr.mxu0 0.0
        %4308 = vmatpush1.msra.mxu0 0.0
        %4309 = vmatprep.subr.mxu0 0.0
        %4310 = vmatpush1.msra.mxu0 0.0
        %4311 = vmatprep.subr.mxu0 0.0
        %4312 = vmatpush1.msra.mxu0 0.0
        %4313 = vmatprep.subr.mxu0 0.0
        %4314 = vmatpush1.msra.mxu0 0.0
        %4315 = vmatprep.subr.mxu0 0.0
        %4316 = vmatpush1.msra.mxu0 0.0
        %4317 = vmatprep.subr.mxu0 0.0
        %4318 = vmatpush1.msra.mxu0 0.0
        %4319 = vmatprep.subr.mxu0 0.0
        %4320 = vmatpush1.msra.mxu0 0.0
        %4321 = vmatprep.subr.mxu0 0.0
        %4322 = vmatpush1.msra.mxu0 0.0
        %4323 = vmatprep.subr.mxu0 0.0
        %4324 = vmatpush1.msra.mxu0 0.0
        %4325 = vmatprep.subr.mxu0 0.0
        %4326 = vmatpush1.msra.mxu0 0.0
        %4327 = vmatprep.subr.mxu0 0.0
        %4328 = vmatpush1.msra.mxu0 0.0
        %4329 = vmatprep.subr.mxu0 0.0
        %4330 = vmatpush1.msra.mxu0 0.0
        %4331 = vmatprep.mubr.f32.mxu0 0.0
        %v4332 = vand.u32 %v3837, 4294901760
        %4333 = vmatmul.mubr.f32.gmra.mrb[0].mxu0 %v4332
        %v4334 = vpop.f32.mrb[0].mxu0
        %v4335 = vadd.f32 %v4256, %v4334
        %v4336 = vpop.f32.mrb[0].mxu0
        %4337 = vmatprep.mubr.f32.mxu0 0.0
        %v4338 = vand.u32 %v3840, 4294901760
        %4339 = vmatmul.mubr.f32.gmra.mrb[0].mxu0 %v4338
        %v4340 = vpop.f32.mrb[0].mxu0
        %v4341 = vadd.f32 %v4262, %v4340
        %v4342 = vpop.f32.mrb[0].mxu0
        %4343 = vdwg.mxu0
        %v4344 = vmul.f32 %v289, %v291
        %v4345 = vmul.f32 %v290, %v292
        %4346 = vmatprep.subr.mxu0 0.0
        %v4347 = vand.u32 %v4344, 4294901760
        %4348 = vmatpush1.msra.mxu0 %v4347
        %4349 = vmatprep.subr.mxu0 0.0
        %v4350 = vand.u32 %v4345, 4294901760
        %4351 = vmatpush1.msra.mxu0 %v4350
        %4352 = vmatprep.subr.mxu0 0.0
        %4353 = vmatpush1.msra.mxu0 0.0
        %4354 = vmatprep.subr.mxu0 0.0
        %4355 = vmatpush1.msra.mxu0 0.0
        %4356 = vmatprep.subr.mxu0 0.0
        %4357 = vmatpush1.msra.mxu0 0.0
        %4358 = vmatprep.subr.mxu0 0.0
        %4359 = vmatpush1.msra.mxu0 0.0
        %4360 = vmatprep.subr.mxu0 0.0
        %4361 = vmatpush1.msra.mxu0 0.0
        %4362 = vmatprep.subr.mxu0 0.0
        %4363 = vmatpush1.msra.mxu0 0.0
        %4364 = vmatprep.subr.mxu0 0.0
        %4365 = vmatpush1.msra.mxu0 0.0
        %4366 = vmatprep.subr.mxu0 0.0
        %4367 = vmatpush1.msra.mxu0 0.0
        %4368 = vmatprep.subr.mxu0 0.0
        %4369 = vmatpush1.msra.mxu0 0.0
        %4370 = vmatprep.subr.mxu0 0.0
        %4371 = vmatpush1.msra.mxu0 0.0
        %4372 = vmatprep.subr.mxu0 0.0
        %4373 = vmatpush1.msra.mxu0 0.0
        %4374 = vmatprep.subr.mxu0 0.0
        %4375 = vmatpush1.msra.mxu0 0.0
        %4376 = vmatprep.subr.mxu0 0.0
        %4377 = vmatpush1.msra.mxu0 0.0
        %4378 = vmatprep.subr.mxu0 0.0
        %4379 = vmatpush1.msra.mxu0 0.0
        %4380 = vmatprep.subr.mxu0 0.0
        %4381 = vmatpush1.msra.mxu0 0.0
        %4382 = vmatprep.subr.mxu0 0.0
        %4383 = vmatpush1.msra.mxu0 0.0
        %4384 = vmatprep.subr.mxu0 0.0
        %4385 = vmatpush1.msra.mxu0 0.0
        %4386 = vmatprep.subr.mxu0 0.0
        %4387 = vmatpush1.msra.mxu0 0.0
        %4388 = vmatprep.subr.mxu0 0.0
        %4389 = vmatpush1.msra.mxu0 0.0
        %4390 = vmatprep.subr.mxu0 0.0
        %4391 = vmatpush1.msra.mxu0 0.0
        %4392 = vmatprep.subr.mxu0 0.0
        %4393 = vmatpush1.msra.mxu0 0.0
        %4394 = vmatprep.subr.mxu0 0.0
        %4395 = vmatpush1.msra.mxu0 0.0
        %4396 = vmatprep.subr.mxu0 0.0
        %4397 = vmatpush1.msra.mxu0 0.0
        %4398 = vmatprep.subr.mxu0 0.0
        %4399 = vmatpush1.msra.mxu0 0.0
        %4400 = vmatprep.subr.mxu0 0.0
        %4401 = vmatpush1.msra.mxu0 0.0
        %4402 = vmatprep.subr.mxu0 0.0
        %4403 = vmatpush1.msra.mxu0 0.0
        %4404 = vmatprep.subr.mxu0 0.0
        %4405 = vmatpush1.msra.mxu0 0.0
        %4406 = vmatprep.subr.mxu0 0.0
        %4407 = vmatpush1.msra.mxu0 0.0
        %4408 = vmatprep.subr.mxu0 0.0
        %4409 = vmatpush1.msra.mxu0 0.0
        %4410 = vmatprep.subr.mxu0 0.0
        %4411 = vmatpush1.msra.mxu0 0.0
        %4412 = vmatprep.mubr.f32.mxu0 0.0
        %v4413 = vand.u32 %v295, 4294901760
        %v4414 = vsub.f32 %v295, %v4413
        %v4415 = vand.u32 %v4414, 4294901760
        %v4416 = vsub.f32 %v4414, %v4415
        %v4417 = vand.u32 %v4416, 4294901760
        %4418 = vmatmul.mubr.f32.gmra.mrb[0].mxu0 %v4417
        %v4419 = vpop.f32.mrb[0].mxu0
        %v4420 = vadd.f32 0.0, %v4419
        %v4421 = vpop.f32.mrb[0].mxu0
        %4422 = vmatprep.mubr.f32.mxu0 0.0
        %v4423 = vand.u32 %v298, 4294901760
        %v4424 = vsub.f32 %v298, %v4423
        %v4425 = vand.u32 %v4424, 4294901760
        %v4426 = vsub.f32 %v4424, %v4425
        %v4427 = vand.u32 %v4426, 4294901760
        %4428 = vmatmul.mubr.f32.gmra.mrb[0].mxu0 %v4427
        %v4429 = vpop.f32.mrb[0].mxu0
        %v4430 = vadd.f32 0.0, %v4429
        %v4431 = vpop.f32.mrb[0].mxu0
        %4432 = vdwg.mxu0
        %4433 = vmatprep.subr.mxu0 0.0
        %v4434 = vand.u32 %v4344, 4294901760
        %v4435 = vsub.f32 %v4344, %v4434
        %v4436 = vand.u32 %v4435, 4294901760
        %v4437 = vsub.f32 %v4435, %v4436
        %v4438 = vand.u32 %v4437, 4294901760
        %4439 = vmatpush1.msra.mxu0 %v4438
        %4440 = vmatprep.subr.mxu0 0.0
        %v4441 = vand.u32 %v4345, 4294901760
        %v4442 = vsub.f32 %v4345, %v4441
        %v4443 = vand.u32 %v4442, 4294901760
        %v4444 = vsub.f32 %v4442, %v4443
        %v4445 = vand.u32 %v4444, 4294901760
        %4446 = vmatpush1.msra.mxu0 %v4445
        %4447 = vmatprep.subr.mxu0 0.0
        %4448 = vmatpush1.msra.mxu0 0.0
        %4449 = vmatprep.subr.mxu0 0.0
        %4450 = vmatpush1.msra.mxu0 0.0
        %4451 = vmatprep.subr.mxu0 0.0
        %4452 = vmatpush1.msra.mxu0 0.0
        %4453 = vmatprep.subr.mxu0 0.0
        %4454 = vmatpush1.msra.mxu0 0.0
        %4455 = vmatprep.subr.mxu0 0.0
        %4456 = vmatpush1.msra.mxu0 0.0
        %4457 = vmatprep.subr.mxu0 0.0
        %4458 = vmatpush1.msra.mxu0 0.0
        %4459 = vmatprep.subr.mxu0 0.0
        %4460 = vmatpush1.msra.mxu0 0.0
        %4461 = vmatprep.subr.mxu0 0.0
        %4462 = vmatpush1.msra.mxu0 0.0
        %4463 = vmatprep.subr.mxu0 0.0
        %4464 = vmatpush1.msra.mxu0 0.0
        %4465 = vmatprep.subr.mxu0 0.0
        %4466 = vmatpush1.msra.mxu0 0.0
        %4467 = vmatprep.subr.mxu0 0.0
        %4468 = vmatpush1.msra.mxu0 0.0
        %4469 = vmatprep.subr.mxu0 0.0
        %4470 = vmatpush1.msra.mxu0 0.0
        %4471 = vmatprep.subr.mxu0 0.0
        %4472 = vmatpush1.msra.mxu0 0.0
        %4473 = vmatprep.subr.mxu0 0.0
        %4474 = vmatpush1.msra.mxu0 0.0
        %4475 = vmatprep.subr.mxu0 0.0
        %4476 = vmatpush1.msra.mxu0 0.0
        %4477 = vmatprep.subr.mxu0 0.0
        %4478 = vmatpush1.msra.mxu0 0.0
        %4479 = vmatprep.subr.mxu0 0.0
        %4480 = vmatpush1.msra.mxu0 0.0
        %4481 = vmatprep.subr.mxu0 0.0
        %4482 = vmatpush1.msra.mxu0 0.0
        %4483 = vmatprep.subr.mxu0 0.0
        %4484 = vmatpush1.msra.mxu0 0.0
        %4485 = vmatprep.subr.mxu0 0.0
        %4486 = vmatpush1.msra.mxu0 0.0
        %4487 = vmatprep.subr.mxu0 0.0
        %4488 = vmatpush1.msra.mxu0 0.0
        %4489 = vmatprep.subr.mxu0 0.0
        %4490 = vmatpush1.msra.mxu0 0.0
        %4491 = vmatprep.subr.mxu0 0.0
        %4492 = vmatpush1.msra.mxu0 0.0
        %4493 = vmatprep.subr.mxu0 0.0
        %4494 = vmatpush1.msra.mxu0 0.0
        %4495 = vmatprep.subr.mxu0 0.0
        %4496 = vmatpush1.msra.mxu0 0.0
        %4497 = vmatprep.subr.mxu0 0.0
        %4498 = vmatpush1.msra.mxu0 0.0
        %4499 = vmatprep.subr.mxu0 0.0
        %4500 = vmatpush1.msra.mxu0 0.0
        %4501 = vmatprep.subr.mxu0 0.0
        %4502 = vmatpush1.msra.mxu0 0.0
        %4503 = vmatprep.subr.mxu0 0.0
        %4504 = vmatpush1.msra.mxu0 0.0
        %4505 = vmatprep.subr.mxu0 0.0
        %4506 = vmatpush1.msra.mxu0 0.0
        %4507 = vmatprep.mubr.f32.mxu0 0.0
        %v4508 = vand.u32 %v295, 4294901760
        %4509 = vmatmul.mubr.f32.gmra.mrb[0].mxu0 %v4508
        %v4510 = vpop.f32.mrb[0].mxu0
        %v4511 = vadd.f32 %v4420, %v4510
        %v4512 = vpop.f32.mrb[0].mxu0
        %4513 = vmatprep.mubr.f32.mxu0 0.0
        %v4514 = vand.u32 %v298, 4294901760
        %4515 = vmatmul.mubr.f32.gmra.mrb[0].mxu0 %v4514
        %v4516 = vpop.f32.mrb[0].mxu0
        %v4517 = vadd.f32 %v4430, %v4516
        %v4518 = vpop.f32.mrb[0].mxu0
        %4519 = vdwg.mxu0
        %4520 = vmatprep.subr.mxu0 0.0
        %v4521 = vand.u32 %v4344, 4294901760
        %v4522 = vsub.f32 %v4344, %v4521
        %4523 = vmatpush1.msra.mxu0 %v4522
        %4524 = vmatprep.subr.mxu0 0.0
        %v4525 = vand.u32 %v4345, 4294901760
        %v4526 = vsub.f32 %v4345, %v4525
        %4527 = vmatpush1.msra.mxu0 %v4526
        %4528 = vmatprep.subr.mxu0 0.0
        %4529 = vmatpush1.msra.mxu0 0.0
        %4530 = vmatprep.subr.mxu0 0.0
        %4531 = vmatpush1.msra.mxu0 0.0
        %4532 = vmatprep.subr.mxu0 0.0
        %4533 = vmatpush1.msra.mxu0 0.0
        %4534 = vmatprep.subr.mxu0 0.0
        %4535 = vmatpush1.msra.mxu0 0.0
        %4536 = vmatprep.subr.mxu0 0.0
        %4537 = vmatpush1.msra.mxu0 0.0
        %4538 = vmatprep.subr.mxu0 0.0
        %4539 = vmatpush1.msra.mxu0 0.0
        %4540 = vmatprep.subr.mxu0 0.0
        %4541 = vmatpush1.msra.mxu0 0.0
        %4542 = vmatprep.subr.mxu0 0.0
        %4543 = vmatpush1.msra.mxu0 0.0
        %4544 = vmatprep.subr.mxu0 0.0
        %4545 = vmatpush1.msra.mxu0 0.0
        %4546 = vmatprep.subr.mxu0 0.0
        %4547 = vmatpush1.msra.mxu0 0.0
        %4548 = vmatprep.subr.mxu0 0.0
        %4549 = vmatpush1.msra.mxu0 0.0
        %4550 = vmatprep.subr.mxu0 0.0
        %4551 = vmatpush1.msra.mxu0 0.0
        %4552 = vmatprep.subr.mxu0 0.0
        %4553 = vmatpush1.msra.mxu0 0.0
        %4554 = vmatprep.subr.mxu0 0.0
        %4555 = vmatpush1.msra.mxu0 0.0
        %4556 = vmatprep.subr.mxu0 0.0
        %4557 = vmatpush1.msra.mxu0 0.0
        %4558 = vmatprep.subr.mxu0 0.0
        %4559 = vmatpush1.msra.mxu0 0.0
        %4560 = vmatprep.subr.mxu0 0.0
        %4561 = vmatpush1.msra.mxu0 0.0
        %4562 = vmatprep.subr.mxu0 0.0
        %4563 = vmatpush1.msra.mxu0 0.0
        %4564 = vmatprep.subr.mxu0 0.0
        %4565 = vmatpush1.msra.mxu0 0.0
        %4566 = vmatprep.subr.mxu0 0.0
        %4567 = vmatpush1.msra.mxu0 0.0
        %4568 = vmatprep.subr.mxu0 0.0
        %4569 = vmatpush1.msra.mxu0 0.0
        %4570 = vmatprep.subr.mxu0 0.0
        %4571 = vmatpush1.msra.mxu0 0.0
        %4572 = vmatprep.subr.mxu0 0.0
        %4573 = vmatpush1.msra.mxu0 0.0
        %4574 = vmatprep.subr.mxu0 0.0
        %4575 = vmatpush1.msra.mxu0 0.0
        %4576 = vmatprep.subr.mxu0 0.0
        %4577 = vmatpush1.msra.mxu0 0.0
        %4578 = vmatprep.subr.mxu0 0.0
        %4579 = vmatpush1.msra.mxu0 0.0
        %4580 = vmatprep.subr.mxu0 0.0
        %4581 = vmatpush1.msra.mxu0 0.0
        %4582 = vmatprep.subr.mxu0 0.0
        %4583 = vmatpush1.msra.mxu0 0.0
        %4584 = vmatprep.subr.mxu0 0.0
        %4585 = vmatpush1.msra.mxu0 0.0
        %4586 = vmatprep.subr.mxu0 0.0
        %4587 = vmatpush1.msra.mxu0 0.0
        %4588 = vmatprep.mubr.f32.mxu0 0.0
        %v4589 = vand.u32 %v295, 4294901760
        %v4590 = vsub.f32 %v295, %v4589
        %4591 = vmatmul.mubr.f32.gmra.mrb[0].mxu0 %v4590
        %v4592 = vpop.f32.mrb[0].mxu0
        %v4593 = vadd.f32 %v4511, %v4592
        %v4594 = vpop.f32.mrb[0].mxu0
        %4595 = vmatprep.mubr.f32.mxu0 0.0
        %v4596 = vand.u32 %v298, 4294901760
        %v4597 = vsub.f32 %v298, %v4596
        %4598 = vmatmul.mubr.f32.gmra.mrb[0].mxu0 %v4597
        %v4599 = vpop.f32.mrb[0].mxu0
        %v4600 = vadd.f32 %v4517, %v4599
        %v4601 = vpop.f32.mrb[0].mxu0
        %4602 = vdwg.mxu0
        %4603 = vmatprep.subr.mxu0 0.0
        %v4604 = vand.u32 %v4344, 4294901760
        %4605 = vmatpush1.msra.mxu0 %v4604
        %4606 = vmatprep.subr.mxu0 0.0
        %v4607 = vand.u32 %v4345, 4294901760
        %4608 = vmatpush1.msra.mxu0 %v4607
        %4609 = vmatprep.subr.mxu0 0.0
        %4610 = vmatpush1.msra.mxu0 0.0
        %4611 = vmatprep.subr.mxu0 0.0
        %4612 = vmatpush1.msra.mxu0 0.0
        %4613 = vmatprep.subr.mxu0 0.0
        %4614 = vmatpush1.msra.mxu0 0.0
        %4615 = vmatprep.subr.mxu0 0.0
        %4616 = vmatpush1.msra.mxu0 0.0
        %4617 = vmatprep.subr.mxu0 0.0
        %4618 = vmatpush1.msra.mxu0 0.0
        %4619 = vmatprep.subr.mxu0 0.0
        %4620 = vmatpush1.msra.mxu0 0.0
        %4621 = vmatprep.subr.mxu0 0.0
        %4622 = vmatpush1.msra.mxu0 0.0
        %4623 = vmatprep.subr.mxu0 0.0
        %4624 = vmatpush1.msra.mxu0 0.0
        %4625 = vmatprep.subr.mxu0 0.0
        %4626 = vmatpush1.msra.mxu0 0.0
        %4627 = vmatprep.subr.mxu0 0.0
        %4628 = vmatpush1.msra.mxu0 0.0
        %4629 = vmatprep.subr.mxu0 0.0
        %4630 = vmatpush1.msra.mxu0 0.0
        %4631 = vmatprep.subr.mxu0 0.0
        %4632 = vmatpush1.msra.mxu0 0.0
        %4633 = vmatprep.subr.mxu0 0.0
        %4634 = vmatpush1.msra.mxu0 0.0
        %4635 = vmatprep.subr.mxu0 0.0
        %4636 = vmatpush1.msra.mxu0 0.0
        %4637 = vmatprep.subr.mxu0 0.0
        %4638 = vmatpush1.msra.mxu0 0.0
        %4639 = vmatprep.subr.mxu0 0.0
        %4640 = vmatpush1.msra.mxu0 0.0
        %4641 = vmatprep.subr.mxu0 0.0
        %4642 = vmatpush1.msra.mxu0 0.0
        %4643 = vmatprep.subr.mxu0 0.0
        %4644 = vmatpush1.msra.mxu0 0.0
        %4645 = vmatprep.subr.mxu0 0.0
        %4646 = vmatpush1.msra.mxu0 0.0
        %4647 = vmatprep.subr.mxu0 0.0
        %4648 = vmatpush1.msra.mxu0 0.0
        %4649 = vmatprep.subr.mxu0 0.0
        %4650 = vmatpush1.msra.mxu0 0.0
        %4651 = vmatprep.subr.mxu0 0.0
        %4652 = vmatpush1.msra.mxu0 0.0
        %4653 = vmatprep.subr.mxu0 0.0
        %4654 = vmatpush1.msra.mxu0 0.0
        %4655 = vmatprep.subr.mxu0 0.0
        %4656 = vmatpush1.msra.mxu0 0.0
        %4657 = vmatprep.subr.mxu0 0.0
        %4658 = vmatpush1.msra.mxu0 0.0
        %4659 = vmatprep.subr.mxu0 0.0
        %4660 = vmatpush1.msra.mxu0 0.0
        %4661 = vmatprep.subr.mxu0 0.0
        %4662 = vmatpush1.msra.mxu0 0.0
        %4663 = vmatprep.subr.mxu0 0.0
        %4664 = vmatpush1.msra.mxu0 0.0
        %4665 = vmatprep.subr.mxu0 0.0
        %4666 = vmatpush1.msra.mxu0 0.0
        %4667 = vmatprep.subr.mxu0 0.0
        %4668 = vmatpush1.msra.mxu0 0.0
        %4669 = vmatprep.mubr.f32.mxu0 0.0
        %v4670 = vand.u32 %v295, 4294901760
        %v4671 = vsub.f32 %v295, %v4670
        %v4672 = vand.u32 %v4671, 4294901760
        %4673 = vmatmul.mubr.f32.gmra.mrb[0].mxu0 %v4672
        %v4674 = vpop.f32.mrb[0].mxu0
        %v4675 = vadd.f32 %v4593, %v4674
        %v4676 = vpop.f32.mrb[0].mxu0
        %4677 = vmatprep.mubr.f32.mxu0 0.0
        %v4678 = vand.u32 %v298, 4294901760
        %v4679 = vsub.f32 %v298, %v4678
        %v4680 = vand.u32 %v4679, 4294901760
        %4681 = vmatmul.mubr.f32.gmra.mrb[0].mxu0 %v4680
        %v4682 = vpop.f32.mrb[0].mxu0
        %v4683 = vadd.f32 %v4600, %v4682
        %v4684 = vpop.f32.mrb[0].mxu0
        %4685 = vdwg.mxu0
        %4686 = vmatprep.subr.mxu0 0.0
        %v4687 = vand.u32 %v4344, 4294901760
        %v4688 = vsub.f32 %v4344, %v4687
        %v4689 = vand.u32 %v4688, 4294901760
        %4690 = vmatpush1.msra.mxu0 %v4689
        %4691 = vmatprep.subr.mxu0 0.0
        %v4692 = vand.u32 %v4345, 4294901760
        %v4693 = vsub.f32 %v4345, %v4692
        %v4694 = vand.u32 %v4693, 4294901760
        %4695 = vmatpush1.msra.mxu0 %v4694
        %4696 = vmatprep.subr.mxu0 0.0
        %4697 = vmatpush1.msra.mxu0 0.0
        %4698 = vmatprep.subr.mxu0 0.0
        %4699 = vmatpush1.msra.mxu0 0.0
        %4700 = vmatprep.subr.mxu0 0.0
        %4701 = vmatpush1.msra.mxu0 0.0
        %4702 = vmatprep.subr.mxu0 0.0
        %4703 = vmatpush1.msra.mxu0 0.0
        %4704 = vmatprep.subr.mxu0 0.0
        %4705 = vmatpush1.msra.mxu0 0.0
        %4706 = vmatprep.subr.mxu0 0.0
        %4707 = vmatpush1.msra.mxu0 0.0
        %4708 = vmatprep.subr.mxu0 0.0
        %4709 = vmatpush1.msra.mxu0 0.0
        %4710 = vmatprep.subr.mxu0 0.0
        %4711 = vmatpush1.msra.mxu0 0.0
        %4712 = vmatprep.subr.mxu0 0.0
        %4713 = vmatpush1.msra.mxu0 0.0
        %4714 = vmatprep.subr.mxu0 0.0
        %4715 = vmatpush1.msra.mxu0 0.0
        %4716 = vmatprep.subr.mxu0 0.0
        %4717 = vmatpush1.msra.mxu0 0.0
        %4718 = vmatprep.subr.mxu0 0.0
        %4719 = vmatpush1.msra.mxu0 0.0
        %4720 = vmatprep.subr.mxu0 0.0
        %4721 = vmatpush1.msra.mxu0 0.0
        %4722 = vmatprep.subr.mxu0 0.0
        %4723 = vmatpush1.msra.mxu0 0.0
        %4724 = vmatprep.subr.mxu0 0.0
        %4725 = vmatpush1.msra.mxu0 0.0
        %4726 = vmatprep.subr.mxu0 0.0
        %4727 = vmatpush1.msra.mxu0 0.0
        %4728 = vmatprep.subr.mxu0 0.0
        %4729 = vmatpush1.msra.mxu0 0.0
        %4730 = vmatprep.subr.mxu0 0.0
        %4731 = vmatpush1.msra.mxu0 0.0
        %4732 = vmatprep.subr.mxu0 0.0
        %4733 = vmatpush1.msra.mxu0 0.0
        %4734 = vmatprep.subr.mxu0 0.0
        %4735 = vmatpush1.msra.mxu0 0.0
        %4736 = vmatprep.subr.mxu0 0.0
        %4737 = vmatpush1.msra.mxu0 0.0
        %4738 = vmatprep.subr.mxu0 0.0
        %4739 = vmatpush1.msra.mxu0 0.0
        %4740 = vmatprep.subr.mxu0 0.0
        %4741 = vmatpush1.msra.mxu0 0.0
        %4742 = vmatprep.subr.mxu0 0.0
        %4743 = vmatpush1.msra.mxu0 0.0
        %4744 = vmatprep.subr.mxu0 0.0
        %4745 = vmatpush1.msra.mxu0 0.0
        %4746 = vmatprep.subr.mxu0 0.0
        %4747 = vmatpush1.msra.mxu0 0.0
        %4748 = vmatprep.subr.mxu0 0.0
        %4749 = vmatpush1.msra.mxu0 0.0
        %4750 = vmatprep.subr.mxu0 0.0
        %4751 = vmatpush1.msra.mxu0 0.0
        %4752 = vmatprep.subr.mxu0 0.0
        %4753 = vmatpush1.msra.mxu0 0.0
        %4754 = vmatprep.subr.mxu0 0.0
        %4755 = vmatpush1.msra.mxu0 0.0
        %4756 = vmatprep.mubr.f32.mxu0 0.0
        %v4757 = vand.u32 %v295, 4294901760
        %4758 = vmatmul.mubr.f32.gmra.mrb[0].mxu0 %v4757
        %v4759 = vpop.f32.mrb[0].mxu0
        %v4760 = vadd.f32 %v4675, %v4759
        %v4761 = vpop.f32.mrb[0].mxu0
        %4762 = vmatprep.mubr.f32.mxu0 0.0
        %v4763 = vand.u32 %v298, 4294901760
        %4764 = vmatmul.mubr.f32.gmra.mrb[0].mxu0 %v4763
        %v4765 = vpop.f32.mrb[0].mxu0
        %v4766 = vadd.f32 %v4683, %v4765
        %v4767 = vpop.f32.mrb[0].mxu0
        %4768 = vdwg.mxu0
        %4769 = vmatprep.subr.mxu0 0.0
        %v4770 = vand.u32 %v4344, 4294901760
        %4771 = vmatpush1.msra.mxu0 %v4770
        %4772 = vmatprep.subr.mxu0 0.0
        %v4773 = vand.u32 %v4345, 4294901760
        %4774 = vmatpush1.msra.mxu0 %v4773
        %4775 = vmatprep.subr.mxu0 0.0
        %4776 = vmatpush1.msra.mxu0 0.0
        %4777 = vmatprep.subr.mxu0 0.0
        %4778 = vmatpush1.msra.mxu0 0.0
        %4779 = vmatprep.subr.mxu0 0.0
        %4780 = vmatpush1.msra.mxu0 0.0
        %4781 = vmatprep.subr.mxu0 0.0
        %4782 = vmatpush1.msra.mxu0 0.0
        %4783 = vmatprep.subr.mxu0 0.0
        %4784 = vmatpush1.msra.mxu0 0.0
        %4785 = vmatprep.subr.mxu0 0.0
        %4786 = vmatpush1.msra.mxu0 0.0
        %4787 = vmatprep.subr.mxu0 0.0
        %4788 = vmatpush1.msra.mxu0 0.0
        %4789 = vmatprep.subr.mxu0 0.0
        %4790 = vmatpush1.msra.mxu0 0.0
        %4791 = vmatprep.subr.mxu0 0.0
        %4792 = vmatpush1.msra.mxu0 0.0
        %4793 = vmatprep.subr.mxu0 0.0
        %4794 = vmatpush1.msra.mxu0 0.0
        %4795 = vmatprep.subr.mxu0 0.0
        %4796 = vmatpush1.msra.mxu0 0.0
        %4797 = vmatprep.subr.mxu0 0.0
        %4798 = vmatpush1.msra.mxu0 0.0
        %4799 = vmatprep.subr.mxu0 0.0
        %4800 = vmatpush1.msra.mxu0 0.0
        %4801 = vmatprep.subr.mxu0 0.0
        %4802 = vmatpush1.msra.mxu0 0.0
        %4803 = vmatprep.subr.mxu0 0.0
        %4804 = vmatpush1.msra.mxu0 0.0
        %4805 = vmatprep.subr.mxu0 0.0
        %4806 = vmatpush1.msra.mxu0 0.0
        %4807 = vmatprep.subr.mxu0 0.0
        %4808 = vmatpush1.msra.mxu0 0.0
        %4809 = vmatprep.subr.mxu0 0.0
        %4810 = vmatpush1.msra.mxu0 0.0
        %4811 = vmatprep.subr.mxu0 0.0
        %4812 = vmatpush1.msra.mxu0 0.0
        %4813 = vmatprep.subr.mxu0 0.0
        %4814 = vmatpush1.msra.mxu0 0.0
        %4815 = vmatprep.subr.mxu0 0.0
        %4816 = vmatpush1.msra.mxu0 0.0
        %4817 = vmatprep.subr.mxu0 0.0
        %4818 = vmatpush1.msra.mxu0 0.0
        %4819 = vmatprep.subr.mxu0 0.0
        %4820 = vmatpush1.msra.mxu0 0.0
        %4821 = vmatprep.subr.mxu0 0.0
        %4822 = vmatpush1.msra.mxu0 0.0
        %4823 = vmatprep.subr.mxu0 0.0
        %4824 = vmatpush1.msra.mxu0 0.0
        %4825 = vmatprep.subr.mxu0 0.0
        %4826 = vmatpush1.msra.mxu0 0.0
        %4827 = vmatprep.subr.mxu0 0.0
        %4828 = vmatpush1.msra.mxu0 0.0
        %4829 = vmatprep.subr.mxu0 0.0
        %4830 = vmatpush1.msra.mxu0 0.0
        %4831 = vmatprep.subr.mxu0 0.0
        %4832 = vmatpush1.msra.mxu0 0.0
        %4833 = vmatprep.subr.mxu0 0.0
        %4834 = vmatpush1.msra.mxu0 0.0
        %4835 = vmatprep.mubr.f32.mxu0 0.0
        %v4836 = vand.u32 %v295, 4294901760
        %4837 = vmatmul.mubr.f32.gmra.mrb[0].mxu0 %v4836
        %v4838 = vpop.f32.mrb[0].mxu0
        %v4839 = vadd.f32 %v4760, %v4838
        %v4840 = vpop.f32.mrb[0].mxu0
        %4841 = vmatprep.mubr.f32.mxu0 0.0
        %v4842 = vand.u32 %v298, 4294901760
        %4843 = vmatmul.mubr.f32.gmra.mrb[0].mxu0 %v4842
        %v4844 = vpop.f32.mrb[0].mxu0
        %v4845 = vadd.f32 %v4766, %v4844
        %v4846 = vpop.f32.mrb[0].mxu0
        %4847 = vdwg.mxu0
        %v4849 = vsel %vm293, %v4839, 0
        %v4852 = vsel %vm293, %v4845, 0
        %4854 = vmatprep.subr.mxu0 0.0
        %v4855 = vand.u32 %v287, 4294901760
        %4856 = vmatpush1.msra.mxu0 %v4855
        %4857 = vmatprep.subr.mxu0 0.0
        %v4858 = vand.u32 %v288, 4294901760
        %4859 = vmatpush1.msra.mxu0 %v4858
        %4860 = vmatprep.subr.mxu0 0.0
        %4861 = vmatpush1.msra.mxu0 0.0
        %4862 = vmatprep.subr.mxu0 0.0
        %4863 = vmatpush1.msra.mxu0 0.0
        %4864 = vmatprep.subr.mxu0 0.0
        %4865 = vmatpush1.msra.mxu0 0.0
        %4866 = vmatprep.subr.mxu0 0.0
        %4867 = vmatpush1.msra.mxu0 0.0
        %4868 = vmatprep.subr.mxu0 0.0
        %4869 = vmatpush1.msra.mxu0 0.0
        %4870 = vmatprep.subr.mxu0 0.0
        %4871 = vmatpush1.msra.mxu0 0.0
        %4872 = vmatprep.subr.mxu0 0.0
        %4873 = vmatpush1.msra.mxu0 0.0
        %4874 = vmatprep.subr.mxu0 0.0
        %4875 = vmatpush1.msra.mxu0 0.0
        %4876 = vmatprep.subr.mxu0 0.0
        %4877 = vmatpush1.msra.mxu0 0.0
        %4878 = vmatprep.subr.mxu0 0.0
        %4879 = vmatpush1.msra.mxu0 0.0
        %4880 = vmatprep.subr.mxu0 0.0
        %4881 = vmatpush1.msra.mxu0 0.0
        %4882 = vmatprep.subr.mxu0 0.0
        %4883 = vmatpush1.msra.mxu0 0.0
        %4884 = vmatprep.subr.mxu0 0.0
        %4885 = vmatpush1.msra.mxu0 0.0
        %4886 = vmatprep.subr.mxu0 0.0
        %4887 = vmatpush1.msra.mxu0 0.0
        %4888 = vmatprep.subr.mxu0 0.0
        %4889 = vmatpush1.msra.mxu0 0.0
        %4890 = vmatprep.subr.mxu0 0.0
        %4891 = vmatpush1.msra.mxu0 0.0
        %4892 = vmatprep.subr.mxu0 0.0
        %4893 = vmatpush1.msra.mxu0 0.0
        %4894 = vmatprep.subr.mxu0 0.0
        %4895 = vmatpush1.msra.mxu0 0.0
        %4896 = vmatprep.subr.mxu0 0.0
        %4897 = vmatpush1.msra.mxu0 0.0
        %4898 = vmatprep.subr.mxu0 0.0
        %4899 = vmatpush1.msra.mxu0 0.0
        %4900 = vmatprep.subr.mxu0 0.0
        %4901 = vmatpush1.msra.mxu0 0.0
        %4902 = vmatprep.subr.mxu0 0.0
        %4903 = vmatpush1.msra.mxu0 0.0
        %4904 = vmatprep.subr.mxu0 0.0
        %4905 = vmatpush1.msra.mxu0 0.0
        %4906 = vmatprep.subr.mxu0 0.0
        %4907 = vmatpush1.msra.mxu0 0.0
        %4908 = vmatprep.subr.mxu0 0.0
        %4909 = vmatpush1.msra.mxu0 0.0
        %4910 = vmatprep.subr.mxu0 0.0
        %4911 = vmatpush1.msra.mxu0 0.0
        %4912 = vmatprep.subr.mxu0 0.0
        %4913 = vmatpush1.msra.mxu0 0.0
        %4914 = vmatprep.subr.mxu0 0.0
        %4915 = vmatpush1.msra.mxu0 0.0
        %4916 = vmatprep.subr.mxu0 0.0
        %4917 = vmatpush1.msra.mxu0 0.0
        %4918 = vmatprep.subr.mxu0 0.0
        %4919 = vmatpush1.msra.mxu0 0.0
        %4920 = vmatprep.mubr.f32.mxu0 0.0
        %v4921 = vand.u32 %v4849, 4294901760
        %v4922 = vsub.f32 %v4849, %v4921
        %v4923 = vand.u32 %v4922, 4294901760
        %v4924 = vsub.f32 %v4922, %v4923
        %v4925 = vand.u32 %v4924, 4294901760
        %4926 = vmatmul.mubr.f32.gmra.mrb[0].mxu0 %v4925
        %v4927 = vpop.f32.mrb[0].mxu0
        %v4928 = vadd.f32 0.0, %v4927
        %v4929 = vpop.f32.mrb[0].mxu0
        %4930 = vmatprep.mubr.f32.mxu0 0.0
        %v4931 = vand.u32 %v4852, 4294901760
        %v4932 = vsub.f32 %v4852, %v4931
        %v4933 = vand.u32 %v4932, 4294901760
        %v4934 = vsub.f32 %v4932, %v4933
        %v4935 = vand.u32 %v4934, 4294901760
        %4936 = vmatmul.mubr.f32.gmra.mrb[0].mxu0 %v4935
        %v4937 = vpop.f32.mrb[0].mxu0
        %v4938 = vadd.f32 0.0, %v4937
        %v4939 = vpop.f32.mrb[0].mxu0
        %4940 = vdwg.mxu0
        %4941 = vmatprep.subr.mxu0 0.0
        %v4942 = vand.u32 %v287, 4294901760
        %v4943 = vsub.f32 %v287, %v4942
        %v4944 = vand.u32 %v4943, 4294901760
        %v4945 = vsub.f32 %v4943, %v4944
        %v4946 = vand.u32 %v4945, 4294901760
        %4947 = vmatpush1.msra.mxu0 %v4946
        %4948 = vmatprep.subr.mxu0 0.0
        %v4949 = vand.u32 %v288, 4294901760
        %v4950 = vsub.f32 %v288, %v4949
        %v4951 = vand.u32 %v4950, 4294901760
        %v4952 = vsub.f32 %v4950, %v4951
        %v4953 = vand.u32 %v4952, 4294901760
        %4954 = vmatpush1.msra.mxu0 %v4953
        %4955 = vmatprep.subr.mxu0 0.0
        %4956 = vmatpush1.msra.mxu0 0.0
        %4957 = vmatprep.subr.mxu0 0.0
        %4958 = vmatpush1.msra.mxu0 0.0
        %4959 = vmatprep.subr.mxu0 0.0
        %4960 = vmatpush1.msra.mxu0 0.0
        %4961 = vmatprep.subr.mxu0 0.0
        %4962 = vmatpush1.msra.mxu0 0.0
        %4963 = vmatprep.subr.mxu0 0.0
        %4964 = vmatpush1.msra.mxu0 0.0
        %4965 = vmatprep.subr.mxu0 0.0
        %4966 = vmatpush1.msra.mxu0 0.0
        %4967 = vmatprep.subr.mxu0 0.0
        %4968 = vmatpush1.msra.mxu0 0.0
        %4969 = vmatprep.subr.mxu0 0.0
        %4970 = vmatpush1.msra.mxu0 0.0
        %4971 = vmatprep.subr.mxu0 0.0
        %4972 = vmatpush1.msra.mxu0 0.0
        %4973 = vmatprep.subr.mxu0 0.0
        %4974 = vmatpush1.msra.mxu0 0.0
        %4975 = vmatprep.subr.mxu0 0.0
        %4976 = vmatpush1.msra.mxu0 0.0
        %4977 = vmatprep.subr.mxu0 0.0
        %4978 = vmatpush1.msra.mxu0 0.0
        %4979 = vmatprep.subr.mxu0 0.0
        %4980 = vmatpush1.msra.mxu0 0.0
        %4981 = vmatprep.subr.mxu0 0.0
        %4982 = vmatpush1.msra.mxu0 0.0
        %4983 = vmatprep.subr.mxu0 0.0
        %4984 = vmatpush1.msra.mxu0 0.0
        %4985 = vmatprep.subr.mxu0 0.0
        %4986 = vmatpush1.msra.mxu0 0.0
        %4987 = vmatprep.subr.mxu0 0.0
        %4988 = vmatpush1.msra.mxu0 0.0
        %4989 = vmatprep.subr.mxu0 0.0
        %4990 = vmatpush1.msra.mxu0 0.0
        %4991 = vmatprep.subr.mxu0 0.0
        %4992 = vmatpush1.msra.mxu0 0.0
        %4993 = vmatprep.subr.mxu0 0.0
        %4994 = vmatpush1.msra.mxu0 0.0
        %4995 = vmatprep.subr.mxu0 0.0
        %4996 = vmatpush1.msra.mxu0 0.0
        %4997 = vmatprep.subr.mxu0 0.0
        %4998 = vmatpush1.msra.mxu0 0.0
        %4999 = vmatprep.subr.mxu0 0.0
        %5000 = vmatpush1.msra.mxu0 0.0
        %5001 = vmatprep.subr.mxu0 0.0
        %5002 = vmatpush1.msra.mxu0 0.0
        %5003 = vmatprep.subr.mxu0 0.0
        %5004 = vmatpush1.msra.mxu0 0.0
        %5005 = vmatprep.subr.mxu0 0.0
        %5006 = vmatpush1.msra.mxu0 0.0
        %5007 = vmatprep.subr.mxu0 0.0
        %5008 = vmatpush1.msra.mxu0 0.0
        %5009 = vmatprep.subr.mxu0 0.0
        %5010 = vmatpush1.msra.mxu0 0.0
        %5011 = vmatprep.subr.mxu0 0.0
        %5012 = vmatpush1.msra.mxu0 0.0
        %5013 = vmatprep.subr.mxu0 0.0
        %5014 = vmatpush1.msra.mxu0 0.0
        %5015 = vmatprep.mubr.f32.mxu0 0.0
        %v5016 = vand.u32 %v4849, 4294901760
        %5017 = vmatmul.mubr.f32.gmra.mrb[0].mxu0 %v5016
        %v5018 = vpop.f32.mrb[0].mxu0
        %v5019 = vadd.f32 %v4928, %v5018
        %v5020 = vpop.f32.mrb[0].mxu0
        %5021 = vmatprep.mubr.f32.mxu0 0.0
        %v5022 = vand.u32 %v4852, 4294901760
        %5023 = vmatmul.mubr.f32.gmra.mrb[0].mxu0 %v5022
        %v5024 = vpop.f32.mrb[0].mxu0
        %v5025 = vadd.f32 %v4938, %v5024
        %v5026 = vpop.f32.mrb[0].mxu0
        %5027 = vdwg.mxu0
        %5028 = vmatprep.subr.mxu0 0.0
        %v5029 = vand.u32 %v287, 4294901760
        %v5030 = vsub.f32 %v287, %v5029
        %5031 = vmatpush1.msra.mxu0 %v5030
        %5032 = vmatprep.subr.mxu0 0.0
        %v5033 = vand.u32 %v288, 4294901760
        %v5034 = vsub.f32 %v288, %v5033
        %5035 = vmatpush1.msra.mxu0 %v5034
        %5036 = vmatprep.subr.mxu0 0.0
        %5037 = vmatpush1.msra.mxu0 0.0
        %5038 = vmatprep.subr.mxu0 0.0
        %5039 = vmatpush1.msra.mxu0 0.0
        %5040 = vmatprep.subr.mxu0 0.0
        %5041 = vmatpush1.msra.mxu0 0.0
        %5042 = vmatprep.subr.mxu0 0.0
        %5043 = vmatpush1.msra.mxu0 0.0
        %5044 = vmatprep.subr.mxu0 0.0
        %5045 = vmatpush1.msra.mxu0 0.0
        %5046 = vmatprep.subr.mxu0 0.0
        %5047 = vmatpush1.msra.mxu0 0.0
        %5048 = vmatprep.subr.mxu0 0.0
        %5049 = vmatpush1.msra.mxu0 0.0
        %5050 = vmatprep.subr.mxu0 0.0
        %5051 = vmatpush1.msra.mxu0 0.0
        %5052 = vmatprep.subr.mxu0 0.0
        %5053 = vmatpush1.msra.mxu0 0.0
        %5054 = vmatprep.subr.mxu0 0.0
        %5055 = vmatpush1.msra.mxu0 0.0
        %5056 = vmatprep.subr.mxu0 0.0
        %5057 = vmatpush1.msra.mxu0 0.0
        %5058 = vmatprep.subr.mxu0 0.0
        %5059 = vmatpush1.msra.mxu0 0.0
        %5060 = vmatprep.subr.mxu0 0.0
        %5061 = vmatpush1.msra.mxu0 0.0
        %5062 = vmatprep.subr.mxu0 0.0
        %5063 = vmatpush1.msra.mxu0 0.0
        %5064 = vmatprep.subr.mxu0 0.0
        %5065 = vmatpush1.msra.mxu0 0.0
        %5066 = vmatprep.subr.mxu0 0.0
        %5067 = vmatpush1.msra.mxu0 0.0
        %5068 = vmatprep.subr.mxu0 0.0
        %5069 = vmatpush1.msra.mxu0 0.0
        %5070 = vmatprep.subr.mxu0 0.0
        %5071 = vmatpush1.msra.mxu0 0.0
        %5072 = vmatprep.subr.mxu0 0.0
        %5073 = vmatpush1.msra.mxu0 0.0
        %5074 = vmatprep.subr.mxu0 0.0
        %5075 = vmatpush1.msra.mxu0 0.0
        %5076 = vmatprep.subr.mxu0 0.0
        %5077 = vmatpush1.msra.mxu0 0.0
        %5078 = vmatprep.subr.mxu0 0.0
        %5079 = vmatpush1.msra.mxu0 0.0
        %5080 = vmatprep.subr.mxu0 0.0
        %5081 = vmatpush1.msra.mxu0 0.0
        %5082 = vmatprep.subr.mxu0 0.0
        %5083 = vmatpush1.msra.mxu0 0.0
        %5084 = vmatprep.subr.mxu0 0.0
        %5085 = vmatpush1.msra.mxu0 0.0
        %5086 = vmatprep.subr.mxu0 0.0
        %5087 = vmatpush1.msra.mxu0 0.0
        %5088 = vmatprep.subr.mxu0 0.0
        %5089 = vmatpush1.msra.mxu0 0.0
        %5090 = vmatprep.subr.mxu0 0.0
        %5091 = vmatpush1.msra.mxu0 0.0
        %5092 = vmatprep.subr.mxu0 0.0
        %5093 = vmatpush1.msra.mxu0 0.0
        %5094 = vmatprep.subr.mxu0 0.0
        %5095 = vmatpush1.msra.mxu0 0.0
        %5096 = vmatprep.mubr.f32.mxu0 0.0
        %v5097 = vand.u32 %v4849, 4294901760
        %v5098 = vsub.f32 %v4849, %v5097
        %5099 = vmatmul.mubr.f32.gmra.mrb[0].mxu0 %v5098
        %v5100 = vpop.f32.mrb[0].mxu0
        %v5101 = vadd.f32 %v5019, %v5100
        %v5102 = vpop.f32.mrb[0].mxu0
        %5103 = vmatprep.mubr.f32.mxu0 0.0
        %v5104 = vand.u32 %v4852, 4294901760
        %v5105 = vsub.f32 %v4852, %v5104
        %5106 = vmatmul.mubr.f32.gmra.mrb[0].mxu0 %v5105
        %v5107 = vpop.f32.mrb[0].mxu0
        %v5108 = vadd.f32 %v5025, %v5107
        %v5109 = vpop.f32.mrb[0].mxu0
        %5110 = vdwg.mxu0
        %5111 = vmatprep.subr.mxu0 0.0
        %v5112 = vand.u32 %v287, 4294901760
        %5113 = vmatpush1.msra.mxu0 %v5112
        %5114 = vmatprep.subr.mxu0 0.0
        %v5115 = vand.u32 %v288, 4294901760
        %5116 = vmatpush1.msra.mxu0 %v5115
        %5117 = vmatprep.subr.mxu0 0.0
        %5118 = vmatpush1.msra.mxu0 0.0
        %5119 = vmatprep.subr.mxu0 0.0
        %5120 = vmatpush1.msra.mxu0 0.0
        %5121 = vmatprep.subr.mxu0 0.0
        %5122 = vmatpush1.msra.mxu0 0.0
        %5123 = vmatprep.subr.mxu0 0.0
        %5124 = vmatpush1.msra.mxu0 0.0
        %5125 = vmatprep.subr.mxu0 0.0
        %5126 = vmatpush1.msra.mxu0 0.0
        %5127 = vmatprep.subr.mxu0 0.0
        %5128 = vmatpush1.msra.mxu0 0.0
        %5129 = vmatprep.subr.mxu0 0.0
        %5130 = vmatpush1.msra.mxu0 0.0
        %5131 = vmatprep.subr.mxu0 0.0
        %5132 = vmatpush1.msra.mxu0 0.0
        %5133 = vmatprep.subr.mxu0 0.0
        %5134 = vmatpush1.msra.mxu0 0.0
        %5135 = vmatprep.subr.mxu0 0.0
        %5136 = vmatpush1.msra.mxu0 0.0
        %5137 = vmatprep.subr.mxu0 0.0
        %5138 = vmatpush1.msra.mxu0 0.0
        %5139 = vmatprep.subr.mxu0 0.0
        %5140 = vmatpush1.msra.mxu0 0.0
        %5141 = vmatprep.subr.mxu0 0.0
        %5142 = vmatpush1.msra.mxu0 0.0
        %5143 = vmatprep.subr.mxu0 0.0
        %5144 = vmatpush1.msra.mxu0 0.0
        %5145 = vmatprep.subr.mxu0 0.0
        %5146 = vmatpush1.msra.mxu0 0.0
        %5147 = vmatprep.subr.mxu0 0.0
        %5148 = vmatpush1.msra.mxu0 0.0
        %5149 = vmatprep.subr.mxu0 0.0
        %5150 = vmatpush1.msra.mxu0 0.0
        %5151 = vmatprep.subr.mxu0 0.0
        %5152 = vmatpush1.msra.mxu0 0.0
        %5153 = vmatprep.subr.mxu0 0.0
        %5154 = vmatpush1.msra.mxu0 0.0
        %5155 = vmatprep.subr.mxu0 0.0
        %5156 = vmatpush1.msra.mxu0 0.0
        %5157 = vmatprep.subr.mxu0 0.0
        %5158 = vmatpush1.msra.mxu0 0.0
        %5159 = vmatprep.subr.mxu0 0.0
        %5160 = vmatpush1.msra.mxu0 0.0
        %5161 = vmatprep.subr.mxu0 0.0
        %5162 = vmatpush1.msra.mxu0 0.0
        %5163 = vmatprep.subr.mxu0 0.0
        %5164 = vmatpush1.msra.mxu0 0.0
        %5165 = vmatprep.subr.mxu0 0.0
        %5166 = vmatpush1.msra.mxu0 0.0
        %5167 = vmatprep.subr.mxu0 0.0
        %5168 = vmatpush1.msra.mxu0 0.0
        %5169 = vmatprep.subr.mxu0 0.0
        %5170 = vmatpush1.msra.mxu0 0.0
        %5171 = vmatprep.subr.mxu0 0.0
        %5172 = vmatpush1.msra.mxu0 0.0
        %5173 = vmatprep.subr.mxu0 0.0
        %5174 = vmatpush1.msra.mxu0 0.0
        %5175 = vmatprep.subr.mxu0 0.0
        %5176 = vmatpush1.msra.mxu0 0.0
        %5177 = vmatprep.mubr.f32.mxu0 0.0
        %v5178 = vand.u32 %v4849, 4294901760
        %v5179 = vsub.f32 %v4849, %v5178
        %v5180 = vand.u32 %v5179, 4294901760
        %5181 = vmatmul.mubr.f32.gmra.mrb[0].mxu0 %v5180
        %v5182 = vpop.f32.mrb[0].mxu0
        %v5183 = vadd.f32 %v5101, %v5182
        %v5184 = vpop.f32.mrb[0].mxu0
        %5185 = vmatprep.mubr.f32.mxu0 0.0
        %v5186 = vand.u32 %v4852, 4294901760
        %v5187 = vsub.f32 %v4852, %v5186
        %v5188 = vand.u32 %v5187, 4294901760
        %5189 = vmatmul.mubr.f32.gmra.mrb[0].mxu0 %v5188
        %v5190 = vpop.f32.mrb[0].mxu0
        %v5191 = vadd.f32 %v5108, %v5190
        %v5192 = vpop.f32.mrb[0].mxu0
        %5193 = vdwg.mxu0
        %5194 = vmatprep.subr.mxu0 0.0
        %v5195 = vand.u32 %v287, 4294901760
        %v5196 = vsub.f32 %v287, %v5195
        %v5197 = vand.u32 %v5196, 4294901760
        %5198 = vmatpush1.msra.mxu0 %v5197
        %5199 = vmatprep.subr.mxu0 0.0
        %v5200 = vand.u32 %v288, 4294901760
        %v5201 = vsub.f32 %v288, %v5200
        %v5202 = vand.u32 %v5201, 4294901760
        %5203 = vmatpush1.msra.mxu0 %v5202
        %5204 = vmatprep.subr.mxu0 0.0
        %5205 = vmatpush1.msra.mxu0 0.0
        %5206 = vmatprep.subr.mxu0 0.0
        %5207 = vmatpush1.msra.mxu0 0.0
        %5208 = vmatprep.subr.mxu0 0.0
        %5209 = vmatpush1.msra.mxu0 0.0
        %5210 = vmatprep.subr.mxu0 0.0
        %5211 = vmatpush1.msra.mxu0 0.0
        %5212 = vmatprep.subr.mxu0 0.0
        %5213 = vmatpush1.msra.mxu0 0.0
        %5214 = vmatprep.subr.mxu0 0.0
        %5215 = vmatpush1.msra.mxu0 0.0
        %5216 = vmatprep.subr.mxu0 0.0
        %5217 = vmatpush1.msra.mxu0 0.0
        %5218 = vmatprep.subr.mxu0 0.0
        %5219 = vmatpush1.msra.mxu0 0.0
        %5220 = vmatprep.subr.mxu0 0.0
        %5221 = vmatpush1.msra.mxu0 0.0
        %5222 = vmatprep.subr.mxu0 0.0
        %5223 = vmatpush1.msra.mxu0 0.0
        %5224 = vmatprep.subr.mxu0 0.0
        %5225 = vmatpush1.msra.mxu0 0.0
        %5226 = vmatprep.subr.mxu0 0.0
        %5227 = vmatpush1.msra.mxu0 0.0
        %5228 = vmatprep.subr.mxu0 0.0
        %5229 = vmatpush1.msra.mxu0 0.0
        %5230 = vmatprep.subr.mxu0 0.0
        %5231 = vmatpush1.msra.mxu0 0.0
        %5232 = vmatprep.subr.mxu0 0.0
        %5233 = vmatpush1.msra.mxu0 0.0
        %5234 = vmatprep.subr.mxu0 0.0
        %5235 = vmatpush1.msra.mxu0 0.0
        %5236 = vmatprep.subr.mxu0 0.0
        %5237 = vmatpush1.msra.mxu0 0.0
        %5238 = vmatprep.subr.mxu0 0.0
        %5239 = vmatpush1.msra.mxu0 0.0
        %5240 = vmatprep.subr.mxu0 0.0
        %5241 = vmatpush1.msra.mxu0 0.0
        %5242 = vmatprep.subr.mxu0 0.0
        %5243 = vmatpush1.msra.mxu0 0.0
        %5244 = vmatprep.subr.mxu0 0.0
        %5245 = vmatpush1.msra.mxu0 0.0
        %5246 = vmatprep.subr.mxu0 0.0
        %5247 = vmatpush1.msra.mxu0 0.0
        %5248 = vmatprep.subr.mxu0 0.0
        %5249 = vmatpush1.msra.mxu0 0.0
        %5250 = vmatprep.subr.mxu0 0.0
        %5251 = vmatpush1.msra.mxu0 0.0
        %5252 = vmatprep.subr.mxu0 0.0
        %5253 = vmatpush1.msra.mxu0 0.0
        %5254 = vmatprep.subr.mxu0 0.0
        %5255 = vmatpush1.msra.mxu0 0.0
        %5256 = vmatprep.subr.mxu0 0.0
        %5257 = vmatpush1.msra.mxu0 0.0
        %5258 = vmatprep.subr.mxu0 0.0
        %5259 = vmatpush1.msra.mxu0 0.0
        %5260 = vmatprep.subr.mxu0 0.0
        %5261 = vmatpush1.msra.mxu0 0.0
        %5262 = vmatprep.subr.mxu0 0.0
        %5263 = vmatpush1.msra.mxu0 0.0
        %5264 = vmatprep.mubr.f32.mxu0 0.0
        %v5265 = vand.u32 %v4849, 4294901760
        %5266 = vmatmul.mubr.f32.gmra.mrb[0].mxu0 %v5265
        %v5267 = vpop.f32.mrb[0].mxu0
        %v5268 = vadd.f32 %v5183, %v5267
        %v5269 = vpop.f32.mrb[0].mxu0
        %5270 = vmatprep.mubr.f32.mxu0 0.0
        %v5271 = vand.u32 %v4852, 4294901760
        %5272 = vmatmul.mubr.f32.gmra.mrb[0].mxu0 %v5271
        %v5273 = vpop.f32.mrb[0].mxu0
        %v5274 = vadd.f32 %v5191, %v5273
        %v5275 = vpop.f32.mrb[0].mxu0
        %5276 = vdwg.mxu0
        %5277 = vmatprep.subr.mxu0 0.0
        %v5278 = vand.u32 %v287, 4294901760
        %5279 = vmatpush1.msra.mxu0 %v5278
        %5280 = vmatprep.subr.mxu0 0.0
        %v5281 = vand.u32 %v288, 4294901760
        %5282 = vmatpush1.msra.mxu0 %v5281
        %5283 = vmatprep.subr.mxu0 0.0
        %5284 = vmatpush1.msra.mxu0 0.0
        %5285 = vmatprep.subr.mxu0 0.0
        %5286 = vmatpush1.msra.mxu0 0.0
        %5287 = vmatprep.subr.mxu0 0.0
        %5288 = vmatpush1.msra.mxu0 0.0
        %5289 = vmatprep.subr.mxu0 0.0
        %5290 = vmatpush1.msra.mxu0 0.0
        %5291 = vmatprep.subr.mxu0 0.0
        %5292 = vmatpush1.msra.mxu0 0.0
        %5293 = vmatprep.subr.mxu0 0.0
        %5294 = vmatpush1.msra.mxu0 0.0
        %5295 = vmatprep.subr.mxu0 0.0
        %5296 = vmatpush1.msra.mxu0 0.0
        %5297 = vmatprep.subr.mxu0 0.0
        %5298 = vmatpush1.msra.mxu0 0.0
        %5299 = vmatprep.subr.mxu0 0.0
        %5300 = vmatpush1.msra.mxu0 0.0
        %5301 = vmatprep.subr.mxu0 0.0
        %5302 = vmatpush1.msra.mxu0 0.0
        %5303 = vmatprep.subr.mxu0 0.0
        %5304 = vmatpush1.msra.mxu0 0.0
        %5305 = vmatprep.subr.mxu0 0.0
        %5306 = vmatpush1.msra.mxu0 0.0
        %5307 = vmatprep.subr.mxu0 0.0
        %5308 = vmatpush1.msra.mxu0 0.0
        %5309 = vmatprep.subr.mxu0 0.0
        %5310 = vmatpush1.msra.mxu0 0.0
        %5311 = vmatprep.subr.mxu0 0.0
        %5312 = vmatpush1.msra.mxu0 0.0
        %5313 = vmatprep.subr.mxu0 0.0
        %5314 = vmatpush1.msra.mxu0 0.0
        %5315 = vmatprep.subr.mxu0 0.0
        %5316 = vmatpush1.msra.mxu0 0.0
        %5317 = vmatprep.subr.mxu0 0.0
        %5318 = vmatpush1.msra.mxu0 0.0
        %5319 = vmatprep.subr.mxu0 0.0
        %5320 = vmatpush1.msra.mxu0 0.0
        %5321 = vmatprep.subr.mxu0 0.0
        %5322 = vmatpush1.msra.mxu0 0.0
        %5323 = vmatprep.subr.mxu0 0.0
        %5324 = vmatpush1.msra.mxu0 0.0
        %5325 = vmatprep.subr.mxu0 0.0
        %5326 = vmatpush1.msra.mxu0 0.0
        %5327 = vmatprep.subr.mxu0 0.0
        %5328 = vmatpush1.msra.mxu0 0.0
        %5329 = vmatprep.subr.mxu0 0.0
        %5330 = vmatpush1.msra.mxu0 0.0
        %5331 = vmatprep.subr.mxu0 0.0
        %5332 = vmatpush1.msra.mxu0 0.0
        %5333 = vmatprep.subr.mxu0 0.0
        %5334 = vmatpush1.msra.mxu0 0.0
        %5335 = vmatprep.subr.mxu0 0.0
        %5336 = vmatpush1.msra.mxu0 0.0
        %5337 = vmatprep.subr.mxu0 0.0
        %5338 = vmatpush1.msra.mxu0 0.0
        %5339 = vmatprep.subr.mxu0 0.0
        %5340 = vmatpush1.msra.mxu0 0.0
        %5341 = vmatprep.subr.mxu0 0.0
        %5342 = vmatpush1.msra.mxu0 0.0
        %5343 = vmatprep.mubr.f32.mxu0 0.0
        %v5344 = vand.u32 %v4849, 4294901760
        %5345 = vmatmul.mubr.f32.gmra.mrb[0].mxu0 %v5344
        %v5346 = vpop.f32.mrb[0].mxu0
        %v5347 = vadd.f32 %v5268, %v5346
        %v5348 = vpop.f32.mrb[0].mxu0
        %5349 = vmatprep.mubr.f32.mxu0 0.0
        %v5350 = vand.u32 %v4852, 4294901760
        %5351 = vmatmul.mubr.f32.gmra.mrb[0].mxu0 %v5350
        %v5352 = vpop.f32.mrb[0].mxu0
        %v5353 = vadd.f32 %v5274, %v5352
        %v5354 = vpop.f32.mrb[0].mxu0
        %5355 = vdwg.mxu0
        %v5356 = vmul.f32 %v1301, %v1301
        %v5357 = vmul.f32 %v1307, %v1307
        %v5358 = vmul.f32 %v2311, %v2311
        %v5359 = vmul.f32 %v2317, %v2317
        %v5360 = vmul.f32 %v1301, %v2311
        %v5361 = vmul.f32 %v1307, %v2317
        %v5362 = vsub.f32 %v3323, %v5356
        %v5363 = vsub.f32 %v3329, %v5357
        %v5364 = vsub.f32 %v4335, %v5358
        %v5365 = vsub.f32 %v4341, %v5359
        %v5366 = vsub.f32 %v5347, %v5360
        %v5367 = vsub.f32 %v5353, %v5361
        %v5368 = vmul.f32 %v5360, 2.0
        %v5369 = vmul.f32 %v5361, 2.0
        %v5370 = vadd.f32 %v5368, 0.0001
        %v5371 = vadd.f32 %v5369, 0.0001
        %v5372 = vmul.f32 %v5366, 2.0
        %v5373 = vmul.f32 %v5367, 2.0
        %v5374 = vadd.f32 %v5372, 0.0009
        %v5375 = vadd.f32 %v5373, 0.0009
        %v5376 = vmul.f32 %v5370, %v5374
        %v5377 = vmul.f32 %v5371, %v5375
        %v5378 = vadd.f32 %v5356, %v5358
        %v5379 = vadd.f32 %v5357, %v5359
        %v5380 = vadd.f32 %v5378, 0.0001
        %v5381 = vadd.f32 %v5379, 0.0001
        %v5382 = vadd.f32 %v5362, %v5364
        %v5383 = vadd.f32 %v5363, %v5365
        %v5384 = vadd.f32 %v5382, 0.0009
        %v5385 = vadd.f32 %v5383, 0.0009
        %v5386 = vmul.f32 %v5380, %v5384
        %v5387 = vmul.f32 %v5381, %v5385
        %v5388 = vrcp.pop %v5386
        %v5389 = vmul.f32 %v5376, %v5388
        %v5390 = vrcp.pop %v5387
        %v5391 = vmul.f32 %v5377, %v5390
        %5392 = vst.msk [vmem:[%s281] sm:$0xff] %vm293, %v5389
        %5393 = vst.msk [vmem:[%s281 + $0x8] sm:$0xff] %vm293, %v5391
        %s5394 = scalar_lea.vmem %s243, 16 [#allocation7]
        %v5395 = vld [vmem:[%s5394] sm:$0xff]
        %v5396 = vld [vmem:[%s5394 + $0x8] sm:$0xff]
        %s5397 = scalar_lea.vmem %s252, 16 [#allocation8]
        %v5398 = vld [vmem:[%s5397] sm:$0xff]
        %v5399 = vld [vmem:[%s5397 + $0x8] sm:$0xff]
        %5400 = vmatprep.subr.mxu0 0.0
        %v5401 = vand.u32 %v5395, 4294901760
        %5402 = vmatpush1.msra.mxu0 %v5401
        %5403 = vmatprep.subr.mxu0 0.0
        %v5404 = vand.u32 %v5396, 4294901760
        %5405 = vmatpush1.msra.mxu0 %v5404
        %5406 = vmatprep.subr.mxu0 0.0
        %5407 = vmatpush1.msra.mxu0 0.0
        %5408 = vmatprep.subr.mxu0 0.0
        %5409 = vmatpush1.msra.mxu0 0.0
        %5410 = vmatprep.subr.mxu0 0.0
        %5411 = vmatpush1.msra.mxu0 0.0
        %5412 = vmatprep.subr.mxu0 0.0
        %5413 = vmatpush1.msra.mxu0 0.0
        %5414 = vmatprep.subr.mxu0 0.0
        %5415 = vmatpush1.msra.mxu0 0.0
        %5416 = vmatprep.subr.mxu0 0.0
        %5417 = vmatpush1.msra.mxu0 0.0
        %5418 = vmatprep.subr.mxu0 0.0
        %5419 = vmatpush1.msra.mxu0 0.0
        %5420 = vmatprep.subr.mxu0 0.0
        %5421 = vmatpush1.msra.mxu0 0.0
        %5422 = vmatprep.subr.mxu0 0.0
        %5423 = vmatpush1.msra.mxu0 0.0
        %5424 = vmatprep.subr.mxu0 0.0
        %5425 = vmatpush1.msra.mxu0 0.0
        %5426 = vmatprep.subr.mxu0 0.0
        %5427 = vmatpush1.msra.mxu0 0.0
        %5428 = vmatprep.subr.mxu0 0.0
        %5429 = vmatpush1.msra.mxu0 0.0
        %5430 = vmatprep.subr.mxu0 0.0
        %5431 = vmatpush1.msra.mxu0 0.0
        %5432 = vmatprep.subr.mxu0 0.0
        %5433 = vmatpush1.msra.mxu0 0.0
        %5434 = vmatprep.subr.mxu0 0.0
        %5435 = vmatpush1.msra.mxu0 0.0
        %5436 = vmatprep.subr.mxu0 0.0
        %5437 = vmatpush1.msra.mxu0 0.0
        %5438 = vmatprep.subr.mxu0 0.0
        %5439 = vmatpush1.msra.mxu0 0.0
        %5440 = vmatprep.subr.mxu0 0.0
        %5441 = vmatpush1.msra.mxu0 0.0
        %5442 = vmatprep.subr.mxu0 0.0
        %5443 = vmatpush1.msra.mxu0 0.0
        %5444 = vmatprep.subr.mxu0 0.0
        %5445 = vmatpush1.msra.mxu0 0.0
        %5446 = vmatprep.subr.mxu0 0.0
        %5447 = vmatpush1.msra.mxu0 0.0
        %5448 = vmatprep.subr.mxu0 0.0
        %5449 = vmatpush1.msra.mxu0 0.0
        %5450 = vmatprep.subr.mxu0 0.0
        %5451 = vmatpush1.msra.mxu0 0.0
        %5452 = vmatprep.subr.mxu0 0.0
        %5453 = vmatpush1.msra.mxu0 0.0
        %5454 = vmatprep.subr.mxu0 0.0
        %5455 = vmatpush1.msra.mxu0 0.0
        %5456 = vmatprep.subr.mxu0 0.0
        %5457 = vmatpush1.msra.mxu0 0.0
        %5458 = vmatprep.subr.mxu0 0.0
        %5459 = vmatpush1.msra.mxu0 0.0
        %5460 = vmatprep.subr.mxu0 0.0
        %5461 = vmatpush1.msra.mxu0 0.0
        %5462 = vmatprep.subr.mxu0 0.0
        %5463 = vmatpush1.msra.mxu0 0.0
        %5464 = vmatprep.subr.mxu0 0.0
        %5465 = vmatpush1.msra.mxu0 0.0
        %5466 = vmatprep.mubr.f32.mxu0 0.0
        %v5467 = vand.u32 %v295, 4294901760
        %v5468 = vsub.f32 %v295, %v5467
        %v5469 = vand.u32 %v5468, 4294901760
        %v5470 = vsub.f32 %v5468, %v5469
        %v5471 = vand.u32 %v5470, 4294901760
        %5472 = vmatmul.mubr.f32.gmra.mrb[0].mxu0 %v5471
        %v5473 = vpop.f32.mrb[0].mxu0
        %v5474 = vadd.f32 0.0, %v5473
        %v5475 = vpop.f32.mrb[0].mxu0
        %5476 = vmatprep.mubr.f32.mxu0 0.0
        %v5477 = vand.u32 %v298, 4294901760
        %v5478 = vsub.f32 %v298, %v5477
        %v5479 = vand.u32 %v5478, 4294901760
        %v5480 = vsub.f32 %v5478, %v5479
        %v5481 = vand.u32 %v5480, 4294901760
        %5482 = vmatmul.mubr.f32.gmra.mrb[0].mxu0 %v5481
        %v5483 = vpop.f32.mrb[0].mxu0
        %v5484 = vadd.f32 0.0, %v5483
        %v5485 = vpop.f32.mrb[0].mxu0
        %5486 = vdwg.mxu0
        %5487 = vmatprep.subr.mxu0 0.0
        %v5488 = vand.u32 %v5395, 4294901760
        %v5489 = vsub.f32 %v5395, %v5488
        %v5490 = vand.u32 %v5489, 4294901760
        %v5491 = vsub.f32 %v5489, %v5490
        %v5492 = vand.u32 %v5491, 4294901760
        %5493 = vmatpush1.msra.mxu0 %v5492
        %5494 = vmatprep.subr.mxu0 0.0
        %v5495 = vand.u32 %v5396, 4294901760
        %v5496 = vsub.f32 %v5396, %v5495
        %v5497 = vand.u32 %v5496, 4294901760
        %v5498 = vsub.f32 %v5496, %v5497
        %v5499 = vand.u32 %v5498, 4294901760
        %5500 = vmatpush1.msra.mxu0 %v5499
        %5501 = vmatprep.subr.mxu0 0.0
        %5502 = vmatpush1.msra.mxu0 0.0
        %5503 = vmatprep.subr.mxu0 0.0
        %5504 = vmatpush1.msra.mxu0 0.0
        %5505 = vmatprep.subr.mxu0 0.0
        %5506 = vmatpush1.msra.mxu0 0.0
        %5507 = vmatprep.subr.mxu0 0.0
        %5508 = vmatpush1.msra.mxu0 0.0
        %5509 = vmatprep.subr.mxu0 0.0
        %5510 = vmatpush1.msra.mxu0 0.0
        %5511 = vmatprep.subr.mxu0 0.0
        %5512 = vmatpush1.msra.mxu0 0.0
        %5513 = vmatprep.subr.mxu0 0.0
        %5514 = vmatpush1.msra.mxu0 0.0
        %5515 = vmatprep.subr.mxu0 0.0
        %5516 = vmatpush1.msra.mxu0 0.0
        %5517 = vmatprep.subr.mxu0 0.0
        %5518 = vmatpush1.msra.mxu0 0.0
        %5519 = vmatprep.subr.mxu0 0.0
        %5520 = vmatpush1.msra.mxu0 0.0
        %5521 = vmatprep.subr.mxu0 0.0
        %5522 = vmatpush1.msra.mxu0 0.0
        %5523 = vmatprep.subr.mxu0 0.0
        %5524 = vmatpush1.msra.mxu0 0.0
        %5525 = vmatprep.subr.mxu0 0.0
        %5526 = vmatpush1.msra.mxu0 0.0
        %5527 = vmatprep.subr.mxu0 0.0
        %5528 = vmatpush1.msra.mxu0 0.0
        %5529 = vmatprep.subr.mxu0 0.0
        %5530 = vmatpush1.msra.mxu0 0.0
        %5531 = vmatprep.subr.mxu0 0.0
        %5532 = vmatpush1.msra.mxu0 0.0
        %5533 = vmatprep.subr.mxu0 0.0
        %5534 = vmatpush1.msra.mxu0 0.0
        %5535 = vmatprep.subr.mxu0 0.0
        %5536 = vmatpush1.msra.mxu0 0.0
        %5537 = vmatprep.subr.mxu0 0.0
        %5538 = vmatpush1.msra.mxu0 0.0
        %5539 = vmatprep.subr.mxu0 0.0
        %5540 = vmatpush1.msra.mxu0 0.0
        %5541 = vmatprep.subr.mxu0 0.0
        %5542 = vmatpush1.msra.mxu0 0.0
        %5543 = vmatprep.subr.mxu0 0.0
        %5544 = vmatpush1.msra.mxu0 0.0
        %5545 = vmatprep.subr.mxu0 0.0
        %5546 = vmatpush1.msra.mxu0 0.0
        %5547 = vmatprep.subr.mxu0 0.0
        %5548 = vmatpush1.msra.mxu0 0.0
        %5549 = vmatprep.subr.mxu0 0.0
        %5550 = vmatpush1.msra.mxu0 0.0
        %5551 = vmatprep.subr.mxu0 0.0
        %5552 = vmatpush1.msra.mxu0 0.0
        %5553 = vmatprep.subr.mxu0 0.0
        %5554 = vmatpush1.msra.mxu0 0.0
        %5555 = vmatprep.subr.mxu0 0.0
        %5556 = vmatpush1.msra.mxu0 0.0
        %5557 = vmatprep.subr.mxu0 0.0
        %5558 = vmatpush1.msra.mxu0 0.0
        %5559 = vmatprep.subr.mxu0 0.0
        %5560 = vmatpush1.msra.mxu0 0.0
        %5561 = vmatprep.mubr.f32.mxu0 0.0
        %v5562 = vand.u32 %v295, 4294901760
        %5563 = vmatmul.mubr.f32.gmra.mrb[0].mxu0 %v5562
        %v5564 = vpop.f32.mrb[0].mxu0
        %v5565 = vadd.f32 %v5474, %v5564
        %v5566 = vpop.f32.mrb[0].mxu0
        %5567 = vmatprep.mubr.f32.mxu0 0.0
        %v5568 = vand.u32 %v298, 4294901760
        %5569 = vmatmul.mubr.f32.gmra.mrb[0].mxu0 %v5568
        %v5570 = vpop.f32.mrb[0].mxu0
        %v5571 = vadd.f32 %v5484, %v5570
        %v5572 = vpop.f32.mrb[0].mxu0
        %5573 = vdwg.mxu0
        %5574 = vmatprep.subr.mxu0 0.0
        %v5575 = vand.u32 %v5395, 4294901760
        %v5576 = vsub.f32 %v5395, %v5575
        %5577 = vmatpush1.msra.mxu0 %v5576
        %5578 = vmatprep.subr.mxu0 0.0
        %v5579 = vand.u32 %v5396, 4294901760
        %v5580 = vsub.f32 %v5396, %v5579
        %5581 = vmatpush1.msra.mxu0 %v5580
        %5582 = vmatprep.subr.mxu0 0.0
        %5583 = vmatpush1.msra.mxu0 0.0
        %5584 = vmatprep.subr.mxu0 0.0
        %5585 = vmatpush1.msra.mxu0 0.0
        %5586 = vmatprep.subr.mxu0 0.0
        %5587 = vmatpush1.msra.mxu0 0.0
        %5588 = vmatprep.subr.mxu0 0.0
        %5589 = vmatpush1.msra.mxu0 0.0
        %5590 = vmatprep.subr.mxu0 0.0
        %5591 = vmatpush1.msra.mxu0 0.0
        %5592 = vmatprep.subr.mxu0 0.0
        %5593 = vmatpush1.msra.mxu0 0.0
        %5594 = vmatprep.subr.mxu0 0.0
        %5595 = vmatpush1.msra.mxu0 0.0
        %5596 = vmatprep.subr.mxu0 0.0
        %5597 = vmatpush1.msra.mxu0 0.0
        %5598 = vmatprep.subr.mxu0 0.0
        %5599 = vmatpush1.msra.mxu0 0.0
        %5600 = vmatprep.subr.mxu0 0.0
        %5601 = vmatpush1.msra.mxu0 0.0
        %5602 = vmatprep.subr.mxu0 0.0
        %5603 = vmatpush1.msra.mxu0 0.0
        %5604 = vmatprep.subr.mxu0 0.0
        %5605 = vmatpush1.msra.mxu0 0.0
        %5606 = vmatprep.subr.mxu0 0.0
        %5607 = vmatpush1.msra.mxu0 0.0
        %5608 = vmatprep.subr.mxu0 0.0
        %5609 = vmatpush1.msra.mxu0 0.0
        %5610 = vmatprep.subr.mxu0 0.0
        %5611 = vmatpush1.msra.mxu0 0.0
        %5612 = vmatprep.subr.mxu0 0.0
        %5613 = vmatpush1.msra.mxu0 0.0
        %5614 = vmatprep.subr.mxu0 0.0
        %5615 = vmatpush1.msra.mxu0 0.0
        %5616 = vmatprep.subr.mxu0 0.0
        %5617 = vmatpush1.msra.mxu0 0.0
        %5618 = vmatprep.subr.mxu0 0.0
        %5619 = vmatpush1.msra.mxu0 0.0
        %5620 = vmatprep.subr.mxu0 0.0
        %5621 = vmatpush1.msra.mxu0 0.0
        %5622 = vmatprep.subr.mxu0 0.0
        %5623 = vmatpush1.msra.mxu0 0.0
        %5624 = vmatprep.subr.mxu0 0.0
        %5625 = vmatpush1.msra.mxu0 0.0
        %5626 = vmatprep.subr.mxu0 0.0
        %5627 = vmatpush1.msra.mxu0 0.0
        %5628 = vmatprep.subr.mxu0 0.0
        %5629 = vmatpush1.msra.mxu0 0.0
        %5630 = vmatprep.subr.mxu0 0.0
        %5631 = vmatpush1.msra.mxu0 0.0
        %5632 = vmatprep.subr.mxu0 0.0
        %5633 = vmatpush1.msra.mxu0 0.0
        %5634 = vmatprep.subr.mxu0 0.0
        %5635 = vmatpush1.msra.mxu0 0.0
        %5636 = vmatprep.subr.mxu0 0.0
        %5637 = vmatpush1.msra.mxu0 0.0
        %5638 = vmatprep.subr.mxu0 0.0
        %5639 = vmatpush1.msra.mxu0 0.0
        %5640 = vmatprep.subr.mxu0 0.0
        %5641 = vmatpush1.msra.mxu0 0.0
        %5642 = vmatprep.mubr.f32.mxu0 0.0
        %v5643 = vand.u32 %v295, 4294901760
        %v5644 = vsub.f32 %v295, %v5643
        %5645 = vmatmul.mubr.f32.gmra.mrb[0].mxu0 %v5644
        %v5646 = vpop.f32.mrb[0].mxu0
        %v5647 = vadd.f32 %v5565, %v5646
        %v5648 = vpop.f32.mrb[0].mxu0
        %5649 = vmatprep.mubr.f32.mxu0 0.0
        %v5650 = vand.u32 %v298, 4294901760
        %v5651 = vsub.f32 %v298, %v5650
        %5652 = vmatmul.mubr.f32.gmra.mrb[0].mxu0 %v5651
        %v5653 = vpop.f32.mrb[0].mxu0
        %v5654 = vadd.f32 %v5571, %v5653
        %v5655 = vpop.f32.mrb[0].mxu0
        %5656 = vdwg.mxu0
        %5657 = vmatprep.subr.mxu0 0.0
        %v5658 = vand.u32 %v5395, 4294901760
        %5659 = vmatpush1.msra.mxu0 %v5658
        %5660 = vmatprep.subr.mxu0 0.0
        %v5661 = vand.u32 %v5396, 4294901760
        %5662 = vmatpush1.msra.mxu0 %v5661
        %5663 = vmatprep.subr.mxu0 0.0
        %5664 = vmatpush1.msra.mxu0 0.0
        %5665 = vmatprep.subr.mxu0 0.0
        %5666 = vmatpush1.msra.mxu0 0.0
        %5667 = vmatprep.subr.mxu0 0.0
        %5668 = vmatpush1.msra.mxu0 0.0
        %5669 = vmatprep.subr.mxu0 0.0
        %5670 = vmatpush1.msra.mxu0 0.0
        %5671 = vmatprep.subr.mxu0 0.0
        %5672 = vmatpush1.msra.mxu0 0.0
        %5673 = vmatprep.subr.mxu0 0.0
        %5674 = vmatpush1.msra.mxu0 0.0
        %5675 = vmatprep.subr.mxu0 0.0
        %5676 = vmatpush1.msra.mxu0 0.0
        %5677 = vmatprep.subr.mxu0 0.0
        %5678 = vmatpush1.msra.mxu0 0.0
        %5679 = vmatprep.subr.mxu0 0.0
        %5680 = vmatpush1.msra.mxu0 0.0
        %5681 = vmatprep.subr.mxu0 0.0
        %5682 = vmatpush1.msra.mxu0 0.0
        %5683 = vmatprep.subr.mxu0 0.0
        %5684 = vmatpush1.msra.mxu0 0.0
        %5685 = vmatprep.subr.mxu0 0.0
        %5686 = vmatpush1.msra.mxu0 0.0
        %5687 = vmatprep.subr.mxu0 0.0
        %5688 = vmatpush1.msra.mxu0 0.0
        %5689 = vmatprep.subr.mxu0 0.0
        %5690 = vmatpush1.msra.mxu0 0.0
        %5691 = vmatprep.subr.mxu0 0.0
        %5692 = vmatpush1.msra.mxu0 0.0
        %5693 = vmatprep.subr.mxu0 0.0
        %5694 = vmatpush1.msra.mxu0 0.0
        %5695 = vmatprep.subr.mxu0 0.0
        %5696 = vmatpush1.msra.mxu0 0.0
        %5697 = vmatprep.subr.mxu0 0.0
        %5698 = vmatpush1.msra.mxu0 0.0
        %5699 = vmatprep.subr.mxu0 0.0
        %5700 = vmatpush1.msra.mxu0 0.0
        %5701 = vmatprep.subr.mxu0 0.0
        %5702 = vmatpush1.msra.mxu0 0.0
        %5703 = vmatprep.subr.mxu0 0.0
        %5704 = vmatpush1.msra.mxu0 0.0
        %5705 = vmatprep.subr.mxu0 0.0
        %5706 = vmatpush1.msra.mxu0 0.0
        %5707 = vmatprep.subr.mxu0 0.0
        %5708 = vmatpush1.msra.mxu0 0.0
        %5709 = vmatprep.subr.mxu0 0.0
        %5710 = vmatpush1.msra.mxu0 0.0
        %5711 = vmatprep.subr.mxu0 0.0
        %5712 = vmatpush1.msra.mxu0 0.0
        %5713 = vmatprep.subr.mxu0 0.0
        %5714 = vmatpush1.msra.mxu0 0.0
        %5715 = vmatprep.subr.mxu0 0.0
        %5716 = vmatpush1.msra.mxu0 0.0
        %5717 = vmatprep.subr.mxu0 0.0
        %5718 = vmatpush1.msra.mxu0 0.0
        %5719 = vmatprep.subr.mxu0 0.0
        %5720 = vmatpush1.msra.mxu0 0.0
        %5721 = vmatprep.subr.mxu0 0.0
        %5722 = vmatpush1.msra.mxu0 0.0
        %5723 = vmatprep.mubr.f32.mxu0 0.0
        %v5724 = vand.u32 %v295, 4294901760
        %v5725 = vsub.f32 %v295, %v5724
        %v5726 = vand.u32 %v5725, 4294901760
        %5727 = vmatmul.mubr.f32.gmra.mrb[0].mxu0 %v5726
        %v5728 = vpop.f32.mrb[0].mxu0
        %v5729 = vadd.f32 %v5647, %v5728
        %v5730 = vpop.f32.mrb[0].mxu0
        %5731 = vmatprep.mubr.f32.mxu0 0.0
        %v5732 = vand.u32 %v298, 4294901760
        %v5733 = vsub.f32 %v298, %v5732
        %v5734 = vand.u32 %v5733, 4294901760
        %5735 = vmatmul.mubr.f32.gmra.mrb[0].mxu0 %v5734
        %v5736 = vpop.f32.mrb[0].mxu0
        %v5737 = vadd.f32 %v5654, %v5736
        %v5738 = vpop.f32.mrb[0].mxu0
        %5739 = vdwg.mxu0
        %5740 = vmatprep.subr.mxu0 0.0
        %v5741 = vand.u32 %v5395, 4294901760
        %v5742 = vsub.f32 %v5395, %v5741
        %v5743 = vand.u32 %v5742, 4294901760
        %5744 = vmatpush1.msra.mxu0 %v5743
        %5745 = vmatprep.subr.mxu0 0.0
        %v5746 = vand.u32 %v5396, 4294901760
        %v5747 = vsub.f32 %v5396, %v5746
        %v5748 = vand.u32 %v5747, 4294901760
        %5749 = vmatpush1.msra.mxu0 %v5748
        %5750 = vmatprep.subr.mxu0 0.0
        %5751 = vmatpush1.msra.mxu0 0.0
        %5752 = vmatprep.subr.mxu0 0.0
        %5753 = vmatpush1.msra.mxu0 0.0
        %5754 = vmatprep.subr.mxu0 0.0
        %5755 = vmatpush1.msra.mxu0 0.0
        %5756 = vmatprep.subr.mxu0 0.0
        %5757 = vmatpush1.msra.mxu0 0.0
        %5758 = vmatprep.subr.mxu0 0.0
        %5759 = vmatpush1.msra.mxu0 0.0
        %5760 = vmatprep.subr.mxu0 0.0
        %5761 = vmatpush1.msra.mxu0 0.0
        %5762 = vmatprep.subr.mxu0 0.0
        %5763 = vmatpush1.msra.mxu0 0.0
        %5764 = vmatprep.subr.mxu0 0.0
        %5765 = vmatpush1.msra.mxu0 0.0
        %5766 = vmatprep.subr.mxu0 0.0
        %5767 = vmatpush1.msra.mxu0 0.0
        %5768 = vmatprep.subr.mxu0 0.0
        %5769 = vmatpush1.msra.mxu0 0.0
        %5770 = vmatprep.subr.mxu0 0.0
        %5771 = vmatpush1.msra.mxu0 0.0
        %5772 = vmatprep.subr.mxu0 0.0
        %5773 = vmatpush1.msra.mxu0 0.0
        %5774 = vmatprep.subr.mxu0 0.0
        %5775 = vmatpush1.msra.mxu0 0.0
        %5776 = vmatprep.subr.mxu0 0.0
        %5777 = vmatpush1.msra.mxu0 0.0
        %5778 = vmatprep.subr.mxu0 0.0
        %5779 = vmatpush1.msra.mxu0 0.0
        %5780 = vmatprep.subr.mxu0 0.0
        %5781 = vmatpush1.msra.mxu0 0.0
        %5782 = vmatprep.subr.mxu0 0.0
        %5783 = vmatpush1.msra.mxu0 0.0
        %5784 = vmatprep.subr.mxu0 0.0
        %5785 = vmatpush1.msra.mxu0 0.0
        %5786 = vmatprep.subr.mxu0 0.0
        %5787 = vmatpush1.msra.mxu0 0.0
        %5788 = vmatprep.subr.mxu0 0.0
        %5789 = vmatpush1.msra.mxu0 0.0
        %5790 = vmatprep.subr.mxu0 0.0
        %5791 = vmatpush1.msra.mxu0 0.0
        %5792 = vmatprep.subr.mxu0 0.0
        %5793 = vmatpush1.msra.mxu0 0.0
        %5794 = vmatprep.subr.mxu0 0.0
        %5795 = vmatpush1.msra.mxu0 0.0
        %5796 = vmatprep.subr.mxu0 0.0
        %5797 = vmatpush1.msra.mxu0 0.0
        %5798 = vmatprep.subr.mxu0 0.0
        %5799 = vmatpush1.msra.mxu0 0.0
        %5800 = vmatprep.subr.mxu0 0.0
        %5801 = vmatpush1.msra.mxu0 0.0
        %5802 = vmatprep.subr.mxu0 0.0
        %5803 = vmatpush1.msra.mxu0 0.0
        %5804 = vmatprep.subr.mxu0 0.0
        %5805 = vmatpush1.msra.mxu0 0.0
        %5806 = vmatprep.subr.mxu0 0.0
        %5807 = vmatpush1.msra.mxu0 0.0
        %5808 = vmatprep.subr.mxu0 0.0
        %5809 = vmatpush1.msra.mxu0 0.0
        %5810 = vmatprep.mubr.f32.mxu0 0.0
        %v5811 = vand.u32 %v295, 4294901760
        %5812 = vmatmul.mubr.f32.gmra.mrb[0].mxu0 %v5811
        %v5813 = vpop.f32.mrb[0].mxu0
        %v5814 = vadd.f32 %v5729, %v5813
        %v5815 = vpop.f32.mrb[0].mxu0
        %5816 = vmatprep.mubr.f32.mxu0 0.0
        %v5817 = vand.u32 %v298, 4294901760
        %5818 = vmatmul.mubr.f32.gmra.mrb[0].mxu0 %v5817
        %v5819 = vpop.f32.mrb[0].mxu0
        %v5820 = vadd.f32 %v5737, %v5819
        %v5821 = vpop.f32.mrb[0].mxu0
        %5822 = vdwg.mxu0
        %5823 = vmatprep.subr.mxu0 0.0
        %v5824 = vand.u32 %v5395, 4294901760
        %5825 = vmatpush1.msra.mxu0 %v5824
        %5826 = vmatprep.subr.mxu0 0.0
        %v5827 = vand.u32 %v5396, 4294901760
        %5828 = vmatpush1.msra.mxu0 %v5827
        %5829 = vmatprep.subr.mxu0 0.0
        %5830 = vmatpush1.msra.mxu0 0.0
        %5831 = vmatprep.subr.mxu0 0.0
        %5832 = vmatpush1.msra.mxu0 0.0
        %5833 = vmatprep.subr.mxu0 0.0
        %5834 = vmatpush1.msra.mxu0 0.0
        %5835 = vmatprep.subr.mxu0 0.0
        %5836 = vmatpush1.msra.mxu0 0.0
        %5837 = vmatprep.subr.mxu0 0.0
        %5838 = vmatpush1.msra.mxu0 0.0
        %5839 = vmatprep.subr.mxu0 0.0
        %5840 = vmatpush1.msra.mxu0 0.0
        %5841 = vmatprep.subr.mxu0 0.0
        %5842 = vmatpush1.msra.mxu0 0.0
        %5843 = vmatprep.subr.mxu0 0.0
        %5844 = vmatpush1.msra.mxu0 0.0
        %5845 = vmatprep.subr.mxu0 0.0
        %5846 = vmatpush1.msra.mxu0 0.0
        %5847 = vmatprep.subr.mxu0 0.0
        %5848 = vmatpush1.msra.mxu0 0.0
        %5849 = vmatprep.subr.mxu0 0.0
        %5850 = vmatpush1.msra.mxu0 0.0
        %5851 = vmatprep.subr.mxu0 0.0
        %5852 = vmatpush1.msra.mxu0 0.0
        %5853 = vmatprep.subr.mxu0 0.0
        %5854 = vmatpush1.msra.mxu0 0.0
        %5855 = vmatprep.subr.mxu0 0.0
        %5856 = vmatpush1.msra.mxu0 0.0
        %5857 = vmatprep.subr.mxu0 0.0
        %5858 = vmatpush1.msra.mxu0 0.0
        %5859 = vmatprep.subr.mxu0 0.0
        %5860 = vmatpush1.msra.mxu0 0.0
        %5861 = vmatprep.subr.mxu0 0.0
        %5862 = vmatpush1.msra.mxu0 0.0
        %5863 = vmatprep.subr.mxu0 0.0
        %5864 = vmatpush1.msra.mxu0 0.0
        %5865 = vmatprep.subr.mxu0 0.0
        %5866 = vmatpush1.msra.mxu0 0.0
        %5867 = vmatprep.subr.mxu0 0.0
        %5868 = vmatpush1.msra.mxu0 0.0
        %5869 = vmatprep.subr.mxu0 0.0
        %5870 = vmatpush1.msra.mxu0 0.0
        %5871 = vmatprep.subr.mxu0 0.0
        %5872 = vmatpush1.msra.mxu0 0.0
        %5873 = vmatprep.subr.mxu0 0.0
        %5874 = vmatpush1.msra.mxu0 0.0
        %5875 = vmatprep.subr.mxu0 0.0
        %5876 = vmatpush1.msra.mxu0 0.0
        %5877 = vmatprep.subr.mxu0 0.0
        %5878 = vmatpush1.msra.mxu0 0.0
        %5879 = vmatprep.subr.mxu0 0.0
        %5880 = vmatpush1.msra.mxu0 0.0
        %5881 = vmatprep.subr.mxu0 0.0
        %5882 = vmatpush1.msra.mxu0 0.0
        %5883 = vmatprep.subr.mxu0 0.0
        %5884 = vmatpush1.msra.mxu0 0.0
        %5885 = vmatprep.subr.mxu0 0.0
        %5886 = vmatpush1.msra.mxu0 0.0
        %5887 = vmatprep.subr.mxu0 0.0
        %5888 = vmatpush1.msra.mxu0 0.0
        %5889 = vmatprep.mubr.f32.mxu0 0.0
        %v5890 = vand.u32 %v295, 4294901760
        %5891 = vmatmul.mubr.f32.gmra.mrb[0].mxu0 %v5890
        %v5892 = vpop.f32.mrb[0].mxu0
        %v5893 = vadd.f32 %v5814, %v5892
        %v5894 = vpop.f32.mrb[0].mxu0
        %5895 = vmatprep.mubr.f32.mxu0 0.0
        %v5896 = vand.u32 %v298, 4294901760
        %5897 = vmatmul.mubr.f32.gmra.mrb[0].mxu0 %v5896
        %v5898 = vpop.f32.mrb[0].mxu0
        %v5899 = vadd.f32 %v5820, %v5898
        %v5900 = vpop.f32.mrb[0].mxu0
        %5901 = vdwg.mxu0
        %v5903 = vsel %vm293, %v5893, 0
        %v5906 = vsel %vm293, %v5899, 0
        %5908 = vmatprep.subr.mxu0 0.0
        %v5909 = vand.u32 %v287, 4294901760
        %5910 = vmatpush1.msra.mxu0 %v5909
        %5911 = vmatprep.subr.mxu0 0.0
        %v5912 = vand.u32 %v288, 4294901760
        %5913 = vmatpush1.msra.mxu0 %v5912
        %5914 = vmatprep.subr.mxu0 0.0
        %5915 = vmatpush1.msra.mxu0 0.0
        %5916 = vmatprep.subr.mxu0 0.0
        %5917 = vmatpush1.msra.mxu0 0.0
        %5918 = vmatprep.subr.mxu0 0.0
        %5919 = vmatpush1.msra.mxu0 0.0
        %5920 = vmatprep.subr.mxu0 0.0
        %5921 = vmatpush1.msra.mxu0 0.0
        %5922 = vmatprep.subr.mxu0 0.0
        %5923 = vmatpush1.msra.mxu0 0.0
        %5924 = vmatprep.subr.mxu0 0.0
        %5925 = vmatpush1.msra.mxu0 0.0
        %5926 = vmatprep.subr.mxu0 0.0
        %5927 = vmatpush1.msra.mxu0 0.0
        %5928 = vmatprep.subr.mxu0 0.0
        %5929 = vmatpush1.msra.mxu0 0.0
        %5930 = vmatprep.subr.mxu0 0.0
        %5931 = vmatpush1.msra.mxu0 0.0
        %5932 = vmatprep.subr.mxu0 0.0
        %5933 = vmatpush1.msra.mxu0 0.0
        %5934 = vmatprep.subr.mxu0 0.0
        %5935 = vmatpush1.msra.mxu0 0.0
        %5936 = vmatprep.subr.mxu0 0.0
        %5937 = vmatpush1.msra.mxu0 0.0
        %5938 = vmatprep.subr.mxu0 0.0
        %5939 = vmatpush1.msra.mxu0 0.0
        %5940 = vmatprep.subr.mxu0 0.0
        %5941 = vmatpush1.msra.mxu0 0.0
        %5942 = vmatprep.subr.mxu0 0.0
        %5943 = vmatpush1.msra.mxu0 0.0
        %5944 = vmatprep.subr.mxu0 0.0
        %5945 = vmatpush1.msra.mxu0 0.0
        %5946 = vmatprep.subr.mxu0 0.0
        %5947 = vmatpush1.msra.mxu0 0.0
        %5948 = vmatprep.subr.mxu0 0.0
        %5949 = vmatpush1.msra.mxu0 0.0
        %5950 = vmatprep.subr.mxu0 0.0
        %5951 = vmatpush1.msra.mxu0 0.0
        %5952 = vmatprep.subr.mxu0 0.0
        %5953 = vmatpush1.msra.mxu0 0.0
        %5954 = vmatprep.subr.mxu0 0.0
        %5955 = vmatpush1.msra.mxu0 0.0
        %5956 = vmatprep.subr.mxu0 0.0
        %5957 = vmatpush1.msra.mxu0 0.0
        %5958 = vmatprep.subr.mxu0 0.0
        %5959 = vmatpush1.msra.mxu0 0.0
        %5960 = vmatprep.subr.mxu0 0.0
        %5961 = vmatpush1.msra.mxu0 0.0
        %5962 = vmatprep.subr.mxu0 0.0
        %5963 = vmatpush1.msra.mxu0 0.0
        %5964 = vmatprep.subr.mxu0 0.0
        %5965 = vmatpush1.msra.mxu0 0.0
        %5966 = vmatprep.subr.mxu0 0.0
        %5967 = vmatpush1.msra.mxu0 0.0
        %5968 = vmatprep.subr.mxu0 0.0
        %5969 = vmatpush1.msra.mxu0 0.0
        %5970 = vmatprep.subr.mxu0 0.0
        %5971 = vmatpush1.msra.mxu0 0.0
        %5972 = vmatprep.subr.mxu0 0.0
        %5973 = vmatpush1.msra.mxu0 0.0
        %5974 = vmatprep.mubr.f32.mxu0 0.0
        %v5975 = vand.u32 %v5903, 4294901760
        %v5976 = vsub.f32 %v5903, %v5975
        %v5977 = vand.u32 %v5976, 4294901760
        %v5978 = vsub.f32 %v5976, %v5977
        %v5979 = vand.u32 %v5978, 4294901760
        %5980 = vmatmul.mubr.f32.gmra.mrb[0].mxu0 %v5979
        %v5981 = vpop.f32.mrb[0].mxu0
        %v5982 = vadd.f32 0.0, %v5981
        %v5983 = vpop.f32.mrb[0].mxu0
        %5984 = vmatprep.mubr.f32.mxu0 0.0
        %v5985 = vand.u32 %v5906, 4294901760
        %v5986 = vsub.f32 %v5906, %v5985
        %v5987 = vand.u32 %v5986, 4294901760
        %v5988 = vsub.f32 %v5986, %v5987
        %v5989 = vand.u32 %v5988, 4294901760
        %5990 = vmatmul.mubr.f32.gmra.mrb[0].mxu0 %v5989
        %v5991 = vpop.f32.mrb[0].mxu0
        %v5992 = vadd.f32 0.0, %v5991
        %v5993 = vpop.f32.mrb[0].mxu0
        %5994 = vdwg.mxu0
        %5995 = vmatprep.subr.mxu0 0.0
        %v5996 = vand.u32 %v287, 4294901760
        %v5997 = vsub.f32 %v287, %v5996
        %v5998 = vand.u32 %v5997, 4294901760
        %v5999 = vsub.f32 %v5997, %v5998
        %v6000 = vand.u32 %v5999, 4294901760
        %6001 = vmatpush1.msra.mxu0 %v6000
        %6002 = vmatprep.subr.mxu0 0.0
        %v6003 = vand.u32 %v288, 4294901760
        %v6004 = vsub.f32 %v288, %v6003
        %v6005 = vand.u32 %v6004, 4294901760
        %v6006 = vsub.f32 %v6004, %v6005
        %v6007 = vand.u32 %v6006, 4294901760
        %6008 = vmatpush1.msra.mxu0 %v6007
        %6009 = vmatprep.subr.mxu0 0.0
        %6010 = vmatpush1.msra.mxu0 0.0
        %6011 = vmatprep.subr.mxu0 0.0
        %6012 = vmatpush1.msra.mxu0 0.0
        %6013 = vmatprep.subr.mxu0 0.0
        %6014 = vmatpush1.msra.mxu0 0.0
        %6015 = vmatprep.subr.mxu0 0.0
        %6016 = vmatpush1.msra.mxu0 0.0
        %6017 = vmatprep.subr.mxu0 0.0
        %6018 = vmatpush1.msra.mxu0 0.0
        %6019 = vmatprep.subr.mxu0 0.0
        %6020 = vmatpush1.msra.mxu0 0.0
        %6021 = vmatprep.subr.mxu0 0.0
        %6022 = vmatpush1.msra.mxu0 0.0
        %6023 = vmatprep.subr.mxu0 0.0
        %6024 = vmatpush1.msra.mxu0 0.0
        %6025 = vmatprep.subr.mxu0 0.0
        %6026 = vmatpush1.msra.mxu0 0.0
        %6027 = vmatprep.subr.mxu0 0.0
        %6028 = vmatpush1.msra.mxu0 0.0
        %6029 = vmatprep.subr.mxu0 0.0
        %6030 = vmatpush1.msra.mxu0 0.0
        %6031 = vmatprep.subr.mxu0 0.0
        %6032 = vmatpush1.msra.mxu0 0.0
        %6033 = vmatprep.subr.mxu0 0.0
        %6034 = vmatpush1.msra.mxu0 0.0
        %6035 = vmatprep.subr.mxu0 0.0
        %6036 = vmatpush1.msra.mxu0 0.0
        %6037 = vmatprep.subr.mxu0 0.0
        %6038 = vmatpush1.msra.mxu0 0.0
        %6039 = vmatprep.subr.mxu0 0.0
        %6040 = vmatpush1.msra.mxu0 0.0
        %6041 = vmatprep.subr.mxu0 0.0
        %6042 = vmatpush1.msra.mxu0 0.0
        %6043 = vmatprep.subr.mxu0 0.0
        %6044 = vmatpush1.msra.mxu0 0.0
        %6045 = vmatprep.subr.mxu0 0.0
        %6046 = vmatpush1.msra.mxu0 0.0
        %6047 = vmatprep.subr.mxu0 0.0
        %6048 = vmatpush1.msra.mxu0 0.0
        %6049 = vmatprep.subr.mxu0 0.0
        %6050 = vmatpush1.msra.mxu0 0.0
        %6051 = vmatprep.subr.mxu0 0.0
        %6052 = vmatpush1.msra.mxu0 0.0
        %6053 = vmatprep.subr.mxu0 0.0
        %6054 = vmatpush1.msra.mxu0 0.0
        %6055 = vmatprep.subr.mxu0 0.0
        %6056 = vmatpush1.msra.mxu0 0.0
        %6057 = vmatprep.subr.mxu0 0.0
        %6058 = vmatpush1.msra.mxu0 0.0
        %6059 = vmatprep.subr.mxu0 0.0
        %6060 = vmatpush1.msra.mxu0 0.0
        %6061 = vmatprep.subr.mxu0 0.0
        %6062 = vmatpush1.msra.mxu0 0.0
        %6063 = vmatprep.subr.mxu0 0.0
        %6064 = vmatpush1.msra.mxu0 0.0
        %6065 = vmatprep.subr.mxu0 0.0
        %6066 = vmatpush1.msra.mxu0 0.0
        %6067 = vmatprep.subr.mxu0 0.0
        %6068 = vmatpush1.msra.mxu0 0.0
        %6069 = vmatprep.mubr.f32.mxu0 0.0
        %v6070 = vand.u32 %v5903, 4294901760
        %6071 = vmatmul.mubr.f32.gmra.mrb[0].mxu0 %v6070
        %v6072 = vpop.f32.mrb[0].mxu0
        %v6073 = vadd.f32 %v5982, %v6072
        %v6074 = vpop.f32.mrb[0].mxu0
        %6075 = vmatprep.mubr.f32.mxu0 0.0
        %v6076 = vand.u32 %v5906, 4294901760
        %6077 = vmatmul.mubr.f32.gmra.mrb[0].mxu0 %v6076
        %v6078 = vpop.f32.mrb[0].mxu0
        %v6079 = vadd.f32 %v5992, %v6078
        %v6080 = vpop.f32.mrb[0].mxu0
        %6081 = vdwg.mxu0
        %6082 = vmatprep.subr.mxu0 0.0
        %v6083 = vand.u32 %v287, 4294901760
        %v6084 = vsub.f32 %v287, %v6083
        %6085 = vmatpush1.msra.mxu0 %v6084
        %6086 = vmatprep.subr.mxu0 0.0
        %v6087 = vand.u32 %v288, 4294901760
        %v6088 = vsub.f32 %v288, %v6087
        %6089 = vmatpush1.msra.mxu0 %v6088
        %6090 = vmatprep.subr.mxu0 0.0
        %6091 = vmatpush1.msra.mxu0 0.0
        %6092 = vmatprep.subr.mxu0 0.0
        %6093 = vmatpush1.msra.mxu0 0.0
        %6094 = vmatprep.subr.mxu0 0.0
        %6095 = vmatpush1.msra.mxu0 0.0
        %6096 = vmatprep.subr.mxu0 0.0
        %6097 = vmatpush1.msra.mxu0 0.0
        %6098 = vmatprep.subr.mxu0 0.0
        %6099 = vmatpush1.msra.mxu0 0.0
        %6100 = vmatprep.subr.mxu0 0.0
        %6101 = vmatpush1.msra.mxu0 0.0
        %6102 = vmatprep.subr.mxu0 0.0
        %6103 = vmatpush1.msra.mxu0 0.0
        %6104 = vmatprep.subr.mxu0 0.0
        %6105 = vmatpush1.msra.mxu0 0.0
        %6106 = vmatprep.subr.mxu0 0.0
        %6107 = vmatpush1.msra.mxu0 0.0
        %6108 = vmatprep.subr.mxu0 0.0
        %6109 = vmatpush1.msra.mxu0 0.0
        %6110 = vmatprep.subr.mxu0 0.0
        %6111 = vmatpush1.msra.mxu0 0.0
        %6112 = vmatprep.subr.mxu0 0.0
        %6113 = vmatpush1.msra.mxu0 0.0
        %6114 = vmatprep.subr.mxu0 0.0
        %6115 = vmatpush1.msra.mxu0 0.0
        %6116 = vmatprep.subr.mxu0 0.0
        %6117 = vmatpush1.msra.mxu0 0.0
        %6118 = vmatprep.subr.mxu0 0.0
        %6119 = vmatpush1.msra.mxu0 0.0
        %6120 = vmatprep.subr.mxu0 0.0
        %6121 = vmatpush1.msra.mxu0 0.0
        %6122 = vmatprep.subr.mxu0 0.0
        %6123 = vmatpush1.msra.mxu0 0.0
        %6124 = vmatprep.subr.mxu0 0.0
        %6125 = vmatpush1.msra.mxu0 0.0
        %6126 = vmatprep.subr.mxu0 0.0
        %6127 = vmatpush1.msra.mxu0 0.0
        %6128 = vmatprep.subr.mxu0 0.0
        %6129 = vmatpush1.msra.mxu0 0.0
        %6130 = vmatprep.subr.mxu0 0.0
        %6131 = vmatpush1.msra.mxu0 0.0
        %6132 = vmatprep.subr.mxu0 0.0
        %6133 = vmatpush1.msra.mxu0 0.0
        %6134 = vmatprep.subr.mxu0 0.0
        %6135 = vmatpush1.msra.mxu0 0.0
        %6136 = vmatprep.subr.mxu0 0.0
        %6137 = vmatpush1.msra.mxu0 0.0
        %6138 = vmatprep.subr.mxu0 0.0
        %6139 = vmatpush1.msra.mxu0 0.0
        %6140 = vmatprep.subr.mxu0 0.0
        %6141 = vmatpush1.msra.mxu0 0.0
        %6142 = vmatprep.subr.mxu0 0.0
        %6143 = vmatpush1.msra.mxu0 0.0
        %6144 = vmatprep.subr.mxu0 0.0
        %6145 = vmatpush1.msra.mxu0 0.0
        %6146 = vmatprep.subr.mxu0 0.0
        %6147 = vmatpush1.msra.mxu0 0.0
        %6148 = vmatprep.subr.mxu0 0.0
        %6149 = vmatpush1.msra.mxu0 0.0
        %6150 = vmatprep.mubr.f32.mxu0 0.0
        %v6151 = vand.u32 %v5903, 4294901760
        %v6152 = vsub.f32 %v5903, %v6151
        %6153 = vmatmul.mubr.f32.gmra.mrb[0].mxu0 %v6152
        %v6154 = vpop.f32.mrb[0].mxu0
        %v6155 = vadd.f32 %v6073, %v6154
        %v6156 = vpop.f32.mrb[0].mxu0
        %6157 = vmatprep.mubr.f32.mxu0 0.0
        %v6158 = vand.u32 %v5906, 4294901760
        %v6159 = vsub.f32 %v5906, %v6158
        %6160 = vmatmul.mubr.f32.gmra.mrb[0].mxu0 %v6159
        %v6161 = vpop.f32.mrb[0].mxu0
        %v6162 = vadd.f32 %v6079, %v6161
        %v6163 = vpop.f32.mrb[0].mxu0
        %6164 = vdwg.mxu0
        %6165 = vmatprep.subr.mxu0 0.0
        %v6166 = vand.u32 %v287, 4294901760
        %6167 = vmatpush1.msra.mxu0 %v6166
        %6168 = vmatprep.subr.mxu0 0.0
        %v6169 = vand.u32 %v288, 4294901760
        %6170 = vmatpush1.msra.mxu0 %v6169
        %6171 = vmatprep.subr.mxu0 0.0
        %6172 = vmatpush1.msra.mxu0 0.0
        %6173 = vmatprep.subr.mxu0 0.0
        %6174 = vmatpush1.msra.mxu0 0.0
        %6175 = vmatprep.subr.mxu0 0.0
        %6176 = vmatpush1.msra.mxu0 0.0
        %6177 = vmatprep.subr.mxu0 0.0
        %6178 = vmatpush1.msra.mxu0 0.0
        %6179 = vmatprep.subr.mxu0 0.0
        %6180 = vmatpush1.msra.mxu0 0.0
        %6181 = vmatprep.subr.mxu0 0.0
        %6182 = vmatpush1.msra.mxu0 0.0
        %6183 = vmatprep.subr.mxu0 0.0
        %6184 = vmatpush1.msra.mxu0 0.0
        %6185 = vmatprep.subr.mxu0 0.0
        %6186 = vmatpush1.msra.mxu0 0.0
        %6187 = vmatprep.subr.mxu0 0.0
        %6188 = vmatpush1.msra.mxu0 0.0
        %6189 = vmatprep.subr.mxu0 0.0
        %6190 = vmatpush1.msra.mxu0 0.0
        %6191 = vmatprep.subr.mxu0 0.0
        %6192 = vmatpush1.msra.mxu0 0.0
        %6193 = vmatprep.subr.mxu0 0.0
        %6194 = vmatpush1.msra.mxu0 0.0
        %6195 = vmatprep.subr.mxu0 0.0
        %6196 = vmatpush1.msra.mxu0 0.0
        %6197 = vmatprep.subr.mxu0 0.0
        %6198 = vmatpush1.msra.mxu0 0.0
        %6199 = vmatprep.subr.mxu0 0.0
        %6200 = vmatpush1.msra.mxu0 0.0
        %6201 = vmatprep.subr.mxu0 0.0
        %6202 = vmatpush1.msra.mxu0 0.0
        %6203 = vmatprep.subr.mxu0 0.0
        %6204 = vmatpush1.msra.mxu0 0.0
        %6205 = vmatprep.subr.mxu0 0.0
        %6206 = vmatpush1.msra.mxu0 0.0
        %6207 = vmatprep.subr.mxu0 0.0
        %6208 = vmatpush1.msra.mxu0 0.0
        %6209 = vmatprep.subr.mxu0 0.0
        %6210 = vmatpush1.msra.mxu0 0.0
        %6211 = vmatprep.subr.mxu0 0.0
        %6212 = vmatpush1.msra.mxu0 0.0
        %6213 = vmatprep.subr.mxu0 0.0
        %6214 = vmatpush1.msra.mxu0 0.0
        %6215 = vmatprep.subr.mxu0 0.0
        %6216 = vmatpush1.msra.mxu0 0.0
        %6217 = vmatprep.subr.mxu0 0.0
        %6218 = vmatpush1.msra.mxu0 0.0
        %6219 = vmatprep.subr.mxu0 0.0
        %6220 = vmatpush1.msra.mxu0 0.0
        %6221 = vmatprep.subr.mxu0 0.0
        %6222 = vmatpush1.msra.mxu0 0.0
        %6223 = vmatprep.subr.mxu0 0.0
        %6224 = vmatpush1.msra.mxu0 0.0
        %6225 = vmatprep.subr.mxu0 0.0
        %6226 = vmatpush1.msra.mxu0 0.0
        %6227 = vmatprep.subr.mxu0 0.0
        %6228 = vmatpush1.msra.mxu0 0.0
        %6229 = vmatprep.subr.mxu0 0.0
        %6230 = vmatpush1.msra.mxu0 0.0
        %6231 = vmatprep.mubr.f32.mxu0 0.0
        %v6232 = vand.u32 %v5903, 4294901760
        %v6233 = vsub.f32 %v5903, %v6232
        %v6234 = vand.u32 %v6233, 4294901760
        %6235 = vmatmul.mubr.f32.gmra.mrb[0].mxu0 %v6234
        %v6236 = vpop.f32.mrb[0].mxu0
        %v6237 = vadd.f32 %v6155, %v6236
        %v6238 = vpop.f32.mrb[0].mxu0
        %6239 = vmatprep.mubr.f32.mxu0 0.0
        %v6240 = vand.u32 %v5906, 4294901760
        %v6241 = vsub.f32 %v5906, %v6240
        %v6242 = vand.u32 %v6241, 4294901760
        %6243 = vmatmul.mubr.f32.gmra.mrb[0].mxu0 %v6242
        %v6244 = vpop.f32.mrb[0].mxu0
        %v6245 = vadd.f32 %v6162, %v6244
        %v6246 = vpop.f32.mrb[0].mxu0
        %6247 = vdwg.mxu0
        %6248 = vmatprep.subr.mxu0 0.0
        %v6249 = vand.u32 %v287, 4294901760
        %v6250 = vsub.f32 %v287, %v6249
        %v6251 = vand.u32 %v6250, 4294901760
        %6252 = vmatpush1.msra.mxu0 %v6251
        %6253 = vmatprep.subr.mxu0 0.0
        %v6254 = vand.u32 %v288, 4294901760
        %v6255 = vsub.f32 %v288, %v6254
        %v6256 = vand.u32 %v6255, 4294901760
        %6257 = vmatpush1.msra.mxu0 %v6256
        %6258 = vmatprep.subr.mxu0 0.0
        %6259 = vmatpush1.msra.mxu0 0.0
        %6260 = vmatprep.subr.mxu0 0.0
        %6261 = vmatpush1.msra.mxu0 0.0
        %6262 = vmatprep.subr.mxu0 0.0
        %6263 = vmatpush1.msra.mxu0 0.0
        %6264 = vmatprep.subr.mxu0 0.0
        %6265 = vmatpush1.msra.mxu0 0.0
        %6266 = vmatprep.subr.mxu0 0.0
        %6267 = vmatpush1.msra.mxu0 0.0
        %6268 = vmatprep.subr.mxu0 0.0
        %6269 = vmatpush1.msra.mxu0 0.0
        %6270 = vmatprep.subr.mxu0 0.0
        %6271 = vmatpush1.msra.mxu0 0.0
        %6272 = vmatprep.subr.mxu0 0.0
        %6273 = vmatpush1.msra.mxu0 0.0
        %6274 = vmatprep.subr.mxu0 0.0
        %6275 = vmatpush1.msra.mxu0 0.0
        %6276 = vmatprep.subr.mxu0 0.0
        %6277 = vmatpush1.msra.mxu0 0.0
        %6278 = vmatprep.subr.mxu0 0.0
        %6279 = vmatpush1.msra.mxu0 0.0
        %6280 = vmatprep.subr.mxu0 0.0
        %6281 = vmatpush1.msra.mxu0 0.0
        %6282 = vmatprep.subr.mxu0 0.0
        %6283 = vmatpush1.msra.mxu0 0.0
        %6284 = vmatprep.subr.mxu0 0.0
        %6285 = vmatpush1.msra.mxu0 0.0
        %6286 = vmatprep.subr.mxu0 0.0
        %6287 = vmatpush1.msra.mxu0 0.0
        %6288 = vmatprep.subr.mxu0 0.0
        %6289 = vmatpush1.msra.mxu0 0.0
        %6290 = vmatprep.subr.mxu0 0.0
        %6291 = vmatpush1.msra.mxu0 0.0
        %6292 = vmatprep.subr.mxu0 0.0
        %6293 = vmatpush1.msra.mxu0 0.0
        %6294 = vmatprep.subr.mxu0 0.0
        %6295 = vmatpush1.msra.mxu0 0.0
        %6296 = vmatprep.subr.mxu0 0.0
        %6297 = vmatpush1.msra.mxu0 0.0
        %6298 = vmatprep.subr.mxu0 0.0
        %6299 = vmatpush1.msra.mxu0 0.0
        %6300 = vmatprep.subr.mxu0 0.0
        %6301 = vmatpush1.msra.mxu0 0.0
        %6302 = vmatprep.subr.mxu0 0.0
        %6303 = vmatpush1.msra.mxu0 0.0
        %6304 = vmatprep.subr.mxu0 0.0
        %6305 = vmatpush1.msra.mxu0 0.0
        %6306 = vmatprep.subr.mxu0 0.0
        %6307 = vmatpush1.msra.mxu0 0.0
        %6308 = vmatprep.subr.mxu0 0.0
        %6309 = vmatpush1.msra.mxu0 0.0
        %6310 = vmatprep.subr.mxu0 0.0
        %6311 = vmatpush1.msra.mxu0 0.0
        %6312 = vmatprep.subr.mxu0 0.0
        %6313 = vmatpush1.msra.mxu0 0.0
        %6314 = vmatprep.subr.mxu0 0.0
        %6315 = vmatpush1.msra.mxu0 0.0
        %6316 = vmatprep.subr.mxu0 0.0
        %6317 = vmatpush1.msra.mxu0 0.0
        %6318 = vmatprep.mubr.f32.mxu0 0.0
        %v6319 = vand.u32 %v5903, 4294901760
        %6320 = vmatmul.mubr.f32.gmra.mrb[0].mxu0 %v6319
        %v6321 = vpop.f32.mrb[0].mxu0
        %v6322 = vadd.f32 %v6237, %v6321
        %v6323 = vpop.f32.mrb[0].mxu0
        %6324 = vmatprep.mubr.f32.mxu0 0.0
        %v6325 = vand.u32 %v5906, 4294901760
        %6326 = vmatmul.mubr.f32.gmra.mrb[0].mxu0 %v6325
        %v6327 = vpop.f32.mrb[0].mxu0
        %v6328 = vadd.f32 %v6245, %v6327
        %v6329 = vpop.f32.mrb[0].mxu0
        %6330 = vdwg.mxu0
        %6331 = vmatprep.subr.mxu0 0.0
        %v6332 = vand.u32 %v287, 4294901760
        %6333 = vmatpush1.msra.mxu0 %v6332
        %6334 = vmatprep.subr.mxu0 0.0
        %v6335 = vand.u32 %v288, 4294901760
        %6336 = vmatpush1.msra.mxu0 %v6335
        %6337 = vmatprep.subr.mxu0 0.0
        %6338 = vmatpush1.msra.mxu0 0.0
        %6339 = vmatprep.subr.mxu0 0.0
        %6340 = vmatpush1.msra.mxu0 0.0
        %6341 = vmatprep.subr.mxu0 0.0
        %6342 = vmatpush1.msra.mxu0 0.0
        %6343 = vmatprep.subr.mxu0 0.0
        %6344 = vmatpush1.msra.mxu0 0.0
        %6345 = vmatprep.subr.mxu0 0.0
        %6346 = vmatpush1.msra.mxu0 0.0
        %6347 = vmatprep.subr.mxu0 0.0
        %6348 = vmatpush1.msra.mxu0 0.0
        %6349 = vmatprep.subr.mxu0 0.0
        %6350 = vmatpush1.msra.mxu0 0.0
        %6351 = vmatprep.subr.mxu0 0.0
        %6352 = vmatpush1.msra.mxu0 0.0
        %6353 = vmatprep.subr.mxu0 0.0
        %6354 = vmatpush1.msra.mxu0 0.0
        %6355 = vmatprep.subr.mxu0 0.0
        %6356 = vmatpush1.msra.mxu0 0.0
        %6357 = vmatprep.subr.mxu0 0.0
        %6358 = vmatpush1.msra.mxu0 0.0
        %6359 = vmatprep.subr.mxu0 0.0
        %6360 = vmatpush1.msra.mxu0 0.0
        %6361 = vmatprep.subr.mxu0 0.0
        %6362 = vmatpush1.msra.mxu0 0.0
        %6363 = vmatprep.subr.mxu0 0.0
        %6364 = vmatpush1.msra.mxu0 0.0
        %6365 = vmatprep.subr.mxu0 0.0
        %6366 = vmatpush1.msra.mxu0 0.0
        %6367 = vmatprep.subr.mxu0 0.0
        %6368 = vmatpush1.msra.mxu0 0.0
        %6369 = vmatprep.subr.mxu0 0.0
        %6370 = vmatpush1.msra.mxu0 0.0
        %6371 = vmatprep.subr.mxu0 0.0
        %6372 = vmatpush1.msra.mxu0 0.0
        %6373 = vmatprep.subr.mxu0 0.0
        %6374 = vmatpush1.msra.mxu0 0.0
        %6375 = vmatprep.subr.mxu0 0.0
        %6376 = vmatpush1.msra.mxu0 0.0
        %6377 = vmatprep.subr.mxu0 0.0
        %6378 = vmatpush1.msra.mxu0 0.0
        %6379 = vmatprep.subr.mxu0 0.0
        %6380 = vmatpush1.msra.mxu0 0.0
        %6381 = vmatprep.subr.mxu0 0.0
        %6382 = vmatpush1.msra.mxu0 0.0
        %6383 = vmatprep.subr.mxu0 0.0
        %6384 = vmatpush1.msra.mxu0 0.0
        %6385 = vmatprep.subr.mxu0 0.0
        %6386 = vmatpush1.msra.mxu0 0.0
        %6387 = vmatprep.subr.mxu0 0.0
        %6388 = vmatpush1.msra.mxu0 0.0
        %6389 = vmatprep.subr.mxu0 0.0
        %6390 = vmatpush1.msra.mxu0 0.0
        %6391 = vmatprep.subr.mxu0 0.0
        %6392 = vmatpush1.msra.mxu0 0.0
        %6393 = vmatprep.subr.mxu0 0.0
        %6394 = vmatpush1.msra.mxu0 0.0
        %6395 = vmatprep.subr.mxu0 0.0
        %6396 = vmatpush1.msra.mxu0 0.0
        %6397 = vmatprep.mubr.f32.mxu0 0.0
        %v6398 = vand.u32 %v5903, 4294901760
        %6399 = vmatmul.mubr.f32.gmra.mrb[0].mxu0 %v6398
        %v6400 = vpop.f32.mrb[0].mxu0
        %v6401 = vadd.f32 %v6322, %v6400
        %v6402 = vpop.f32.mrb[0].mxu0
        %6403 = vmatprep.mubr.f32.mxu0 0.0
        %v6404 = vand.u32 %v5906, 4294901760
        %6405 = vmatmul.mubr.f32.gmra.mrb[0].mxu0 %v6404
        %v6406 = vpop.f32.mrb[0].mxu0
        %v6407 = vadd.f32 %v6328, %v6406
        %v6408 = vpop.f32.mrb[0].mxu0
        %6409 = vdwg.mxu0
        %6410 = vmatprep.subr.mxu0 0.0
        %v6411 = vand.u32 %v5398, 4294901760
        %6412 = vmatpush1.msra.mxu0 %v6411
        %6413 = vmatprep.subr.mxu0 0.0
        %v6414 = vand.u32 %v5399, 4294901760
        %6415 = vmatpush1.msra.mxu0 %v6414
        %6416 = vmatprep.subr.mxu0 0.0
        %6417 = vmatpush1.msra.mxu0 0.0
        %6418 = vmatprep.subr.mxu0 0.0
        %6419 = vmatpush1.msra.mxu0 0.0
        %6420 = vmatprep.subr.mxu0 0.0
        %6421 = vmatpush1.msra.mxu0 0.0
        %6422 = vmatprep.subr.mxu0 0.0
        %6423 = vmatpush1.msra.mxu0 0.0
        %6424 = vmatprep.subr.mxu0 0.0
        %6425 = vmatpush1.msra.mxu0 0.0
        %6426 = vmatprep.subr.mxu0 0.0
        %6427 = vmatpush1.msra.mxu0 0.0
        %6428 = vmatprep.subr.mxu0 0.0
        %6429 = vmatpush1.msra.mxu0 0.0
        %6430 = vmatprep.subr.mxu0 0.0
        %6431 = vmatpush1.msra.mxu0 0.0
        %6432 = vmatprep.subr.mxu0 0.0
        %6433 = vmatpush1.msra.mxu0 0.0
        %6434 = vmatprep.subr.mxu0 0.0
        %6435 = vmatpush1.msra.mxu0 0.0
        %6436 = vmatprep.subr.mxu0 0.0
        %6437 = vmatpush1.msra.mxu0 0.0
        %6438 = vmatprep.subr.mxu0 0.0
        %6439 = vmatpush1.msra.mxu0 0.0
        %6440 = vmatprep.subr.mxu0 0.0
        %6441 = vmatpush1.msra.mxu0 0.0
        %6442 = vmatprep.subr.mxu0 0.0
        %6443 = vmatpush1.msra.mxu0 0.0
        %6444 = vmatprep.subr.mxu0 0.0
        %6445 = vmatpush1.msra.mxu0 0.0
        %6446 = vmatprep.subr.mxu0 0.0
        %6447 = vmatpush1.msra.mxu0 0.0
        %6448 = vmatprep.subr.mxu0 0.0
        %6449 = vmatpush1.msra.mxu0 0.0
        %6450 = vmatprep.subr.mxu0 0.0
        %6451 = vmatpush1.msra.mxu0 0.0
        %6452 = vmatprep.subr.mxu0 0.0
        %6453 = vmatpush1.msra.mxu0 0.0
        %6454 = vmatprep.subr.mxu0 0.0
        %6455 = vmatpush1.msra.mxu0 0.0
        %6456 = vmatprep.subr.mxu0 0.0
        %6457 = vmatpush1.msra.mxu0 0.0
        %6458 = vmatprep.subr.mxu0 0.0
        %6459 = vmatpush1.msra.mxu0 0.0
        %6460 = vmatprep.subr.mxu0 0.0
        %6461 = vmatpush1.msra.mxu0 0.0
        %6462 = vmatprep.subr.mxu0 0.0
        %6463 = vmatpush1.msra.mxu0 0.0
        %6464 = vmatprep.subr.mxu0 0.0
        %6465 = vmatpush1.msra.mxu0 0.0
        %6466 = vmatprep.subr.mxu0 0.0
        %6467 = vmatpush1.msra.mxu0 0.0
        %6468 = vmatprep.subr.mxu0 0.0
        %6469 = vmatpush1.msra.mxu0 0.0
        %6470 = vmatprep.subr.mxu0 0.0
        %6471 = vmatpush1.msra.mxu0 0.0
        %6472 = vmatprep.subr.mxu0 0.0
        %6473 = vmatpush1.msra.mxu0 0.0
        %6474 = vmatprep.subr.mxu0 0.0
        %6475 = vmatpush1.msra.mxu0 0.0
        %6476 = vmatprep.mubr.f32.mxu0 0.0
        %v6477 = vand.u32 %v295, 4294901760
        %v6478 = vsub.f32 %v295, %v6477
        %v6479 = vand.u32 %v6478, 4294901760
        %v6480 = vsub.f32 %v6478, %v6479
        %v6481 = vand.u32 %v6480, 4294901760
        %6482 = vmatmul.mubr.f32.gmra.mrb[0].mxu0 %v6481
        %v6483 = vpop.f32.mrb[0].mxu0
        %v6484 = vadd.f32 0.0, %v6483
        %v6485 = vpop.f32.mrb[0].mxu0
        %6486 = vmatprep.mubr.f32.mxu0 0.0
        %v6487 = vand.u32 %v298, 4294901760
        %v6488 = vsub.f32 %v298, %v6487
        %v6489 = vand.u32 %v6488, 4294901760
        %v6490 = vsub.f32 %v6488, %v6489
        %v6491 = vand.u32 %v6490, 4294901760
        %6492 = vmatmul.mubr.f32.gmra.mrb[0].mxu0 %v6491
        %v6493 = vpop.f32.mrb[0].mxu0
        %v6494 = vadd.f32 0.0, %v6493
        %v6495 = vpop.f32.mrb[0].mxu0
        %6496 = vdwg.mxu0
        %6497 = vmatprep.subr.mxu0 0.0
        %v6498 = vand.u32 %v5398, 4294901760
        %v6499 = vsub.f32 %v5398, %v6498
        %v6500 = vand.u32 %v6499, 4294901760
        %v6501 = vsub.f32 %v6499, %v6500
        %v6502 = vand.u32 %v6501, 4294901760
        %6503 = vmatpush1.msra.mxu0 %v6502
        %6504 = vmatprep.subr.mxu0 0.0
        %v6505 = vand.u32 %v5399, 4294901760
        %v6506 = vsub.f32 %v5399, %v6505
        %v6507 = vand.u32 %v6506, 4294901760
        %v6508 = vsub.f32 %v6506, %v6507
        %v6509 = vand.u32 %v6508, 4294901760
        %6510 = vmatpush1.msra.mxu0 %v6509
        %6511 = vmatprep.subr.mxu0 0.0
        %6512 = vmatpush1.msra.mxu0 0.0
        %6513 = vmatprep.subr.mxu0 0.0
        %6514 = vmatpush1.msra.mxu0 0.0
        %6515 = vmatprep.subr.mxu0 0.0
        %6516 = vmatpush1.msra.mxu0 0.0
        %6517 = vmatprep.subr.mxu0 0.0
        %6518 = vmatpush1.msra.mxu0 0.0
        %6519 = vmatprep.subr.mxu0 0.0
        %6520 = vmatpush1.msra.mxu0 0.0
        %6521 = vmatprep.subr.mxu0 0.0
        %6522 = vmatpush1.msra.mxu0 0.0
        %6523 = vmatprep.subr.mxu0 0.0
        %6524 = vmatpush1.msra.mxu0 0.0
        %6525 = vmatprep.subr.mxu0 0.0
        %6526 = vmatpush1.msra.mxu0 0.0
        %6527 = vmatprep.subr.mxu0 0.0
        %6528 = vmatpush1.msra.mxu0 0.0
        %6529 = vmatprep.subr.mxu0 0.0
        %6530 = vmatpush1.msra.mxu0 0.0
        %6531 = vmatprep.subr.mxu0 0.0
        %6532 = vmatpush1.msra.mxu0 0.0
        %6533 = vmatprep.subr.mxu0 0.0
        %6534 = vmatpush1.msra.mxu0 0.0
        %6535 = vmatprep.subr.mxu0 0.0
        %6536 = vmatpush1.msra.mxu0 0.0
        %6537 = vmatprep.subr.mxu0 0.0
        %6538 = vmatpush1.msra.mxu0 0.0
        %6539 = vmatprep.subr.mxu0 0.0
        %6540 = vmatpush1.msra.mxu0 0.0
        %6541 = vmatprep.subr.mxu0 0.0
        %6542 = vmatpush1.msra.mxu0 0.0
        %6543 = vmatprep.subr.mxu0 0.0
        %6544 = vmatpush1.msra.mxu0 0.0
        %6545 = vmatprep.subr.mxu0 0.0
        %6546 = vmatpush1.msra.mxu0 0.0
        %6547 = vmatprep.subr.mxu0 0.0
        %6548 = vmatpush1.msra.mxu0 0.0
        %6549 = vmatprep.subr.mxu0 0.0
        %6550 = vmatpush1.msra.mxu0 0.0
        %6551 = vmatprep.subr.mxu0 0.0
        %6552 = vmatpush1.msra.mxu0 0.0
        %6553 = vmatprep.subr.mxu0 0.0
        %6554 = vmatpush1.msra.mxu0 0.0
        %6555 = vmatprep.subr.mxu0 0.0
        %6556 = vmatpush1.msra.mxu0 0.0
        %6557 = vmatprep.subr.mxu0 0.0
        %6558 = vmatpush1.msra.mxu0 0.0
        %6559 = vmatprep.subr.mxu0 0.0
        %6560 = vmatpush1.msra.mxu0 0.0
        %6561 = vmatprep.subr.mxu0 0.0
        %6562 = vmatpush1.msra.mxu0 0.0
        %6563 = vmatprep.subr.mxu0 0.0
        %6564 = vmatpush1.msra.mxu0 0.0
        %6565 = vmatprep.subr.mxu0 0.0
        %6566 = vmatpush1.msra.mxu0 0.0
        %6567 = vmatprep.subr.mxu0 0.0
        %6568 = vmatpush1.msra.mxu0 0.0
        %6569 = vmatprep.subr.mxu0 0.0
        %6570 = vmatpush1.msra.mxu0 0.0
        %6571 = vmatprep.mubr.f32.mxu0 0.0
        %v6572 = vand.u32 %v295, 4294901760
        %6573 = vmatmul.mubr.f32.gmra.mrb[0].mxu0 %v6572
        %v6574 = vpop.f32.mrb[0].mxu0
        %v6575 = vadd.f32 %v6484, %v6574
        %v6576 = vpop.f32.mrb[0].mxu0
        %6577 = vmatprep.mubr.f32.mxu0 0.0
        %v6578 = vand.u32 %v298, 4294901760
        %6579 = vmatmul.mubr.f32.gmra.mrb[0].mxu0 %v6578
        %v6580 = vpop.f32.mrb[0].mxu0
        %v6581 = vadd.f32 %v6494, %v6580
        %v6582 = vpop.f32.mrb[0].mxu0
        %6583 = vdwg.mxu0
        %6584 = vmatprep.subr.mxu0 0.0
        %v6585 = vand.u32 %v5398, 4294901760
        %v6586 = vsub.f32 %v5398, %v6585
        %6587 = vmatpush1.msra.mxu0 %v6586
        %6588 = vmatprep.subr.mxu0 0.0
        %v6589 = vand.u32 %v5399, 4294901760
        %v6590 = vsub.f32 %v5399, %v6589
        %6591 = vmatpush1.msra.mxu0 %v6590
        %6592 = vmatprep.subr.mxu0 0.0
        %6593 = vmatpush1.msra.mxu0 0.0
        %6594 = vmatprep.subr.mxu0 0.0
        %6595 = vmatpush1.msra.mxu0 0.0
        %6596 = vmatprep.subr.mxu0 0.0
        %6597 = vmatpush1.msra.mxu0 0.0
        %6598 = vmatprep.subr.mxu0 0.0
        %6599 = vmatpush1.msra.mxu0 0.0
        %6600 = vmatprep.subr.mxu0 0.0
        %6601 = vmatpush1.msra.mxu0 0.0
        %6602 = vmatprep.subr.mxu0 0.0
        %6603 = vmatpush1.msra.mxu0 0.0
        %6604 = vmatprep.subr.mxu0 0.0
        %6605 = vmatpush1.msra.mxu0 0.0
        %6606 = vmatprep.subr.mxu0 0.0
        %6607 = vmatpush1.msra.mxu0 0.0
        %6608 = vmatprep.subr.mxu0 0.0
        %6609 = vmatpush1.msra.mxu0 0.0
        %6610 = vmatprep.subr.mxu0 0.0
        %6611 = vmatpush1.msra.mxu0 0.0
        %6612 = vmatprep.subr.mxu0 0.0
        %6613 = vmatpush1.msra.mxu0 0.0
        %6614 = vmatprep.subr.mxu0 0.0
        %6615 = vmatpush1.msra.mxu0 0.0
        %6616 = vmatprep.subr.mxu0 0.0
        %6617 = vmatpush1.msra.mxu0 0.0
        %6618 = vmatprep.subr.mxu0 0.0
        %6619 = vmatpush1.msra.mxu0 0.0
        %6620 = vmatprep.subr.mxu0 0.0
        %6621 = vmatpush1.msra.mxu0 0.0
        %6622 = vmatprep.subr.mxu0 0.0
        %6623 = vmatpush1.msra.mxu0 0.0
        %6624 = vmatprep.subr.mxu0 0.0
        %6625 = vmatpush1.msra.mxu0 0.0
        %6626 = vmatprep.subr.mxu0 0.0
        %6627 = vmatpush1.msra.mxu0 0.0
        %6628 = vmatprep.subr.mxu0 0.0
        %6629 = vmatpush1.msra.mxu0 0.0
        %6630 = vmatprep.subr.mxu0 0.0
        %6631 = vmatpush1.msra.mxu0 0.0
        %6632 = vmatprep.subr.mxu0 0.0
        %6633 = vmatpush1.msra.mxu0 0.0
        %6634 = vmatprep.subr.mxu0 0.0
        %6635 = vmatpush1.msra.mxu0 0.0
        %6636 = vmatprep.subr.mxu0 0.0
        %6637 = vmatpush1.msra.mxu0 0.0
        %6638 = vmatprep.subr.mxu0 0.0
        %6639 = vmatpush1.msra.mxu0 0.0
        %6640 = vmatprep.subr.mxu0 0.0
        %6641 = vmatpush1.msra.mxu0 0.0
        %6642 = vmatprep.subr.mxu0 0.0
        %6643 = vmatpush1.msra.mxu0 0.0
        %6644 = vmatprep.subr.mxu0 0.0
        %6645 = vmatpush1.msra.mxu0 0.0
        %6646 = vmatprep.subr.mxu0 0.0
        %6647 = vmatpush1.msra.mxu0 0.0
        %6648 = vmatprep.subr.mxu0 0.0
        %6649 = vmatpush1.msra.mxu0 0.0
        %6650 = vmatprep.subr.mxu0 0.0
        %6651 = vmatpush1.msra.mxu0 0.0
        %6652 = vmatprep.mubr.f32.mxu0 0.0
        %v6653 = vand.u32 %v295, 4294901760
        %v6654 = vsub.f32 %v295, %v6653
        %6655 = vmatmul.mubr.f32.gmra.mrb[0].mxu0 %v6654
        %v6656 = vpop.f32.mrb[0].mxu0
        %v6657 = vadd.f32 %v6575, %v6656
        %v6658 = vpop.f32.mrb[0].mxu0
        %6659 = vmatprep.mubr.f32.mxu0 0.0
        %v6660 = vand.u32 %v298, 4294901760
        %v6661 = vsub.f32 %v298, %v6660
        %6662 = vmatmul.mubr.f32.gmra.mrb[0].mxu0 %v6661
        %v6663 = vpop.f32.mrb[0].mxu0
        %v6664 = vadd.f32 %v6581, %v6663
        %v6665 = vpop.f32.mrb[0].mxu0
        %6666 = vdwg.mxu0
        %6667 = vmatprep.subr.mxu0 0.0
        %v6668 = vand.u32 %v5398, 4294901760
        %6669 = vmatpush1.msra.mxu0 %v6668
        %6670 = vmatprep.subr.mxu0 0.0
        %v6671 = vand.u32 %v5399, 4294901760
        %6672 = vmatpush1.msra.mxu0 %v6671
        %6673 = vmatprep.subr.mxu0 0.0
        %6674 = vmatpush1.msra.mxu0 0.0
        %6675 = vmatprep.subr.mxu0 0.0
        %6676 = vmatpush1.msra.mxu0 0.0
        %6677 = vmatprep.subr.mxu0 0.0
        %6678 = vmatpush1.msra.mxu0 0.0
        %6679 = vmatprep.subr.mxu0 0.0
        %6680 = vmatpush1.msra.mxu0 0.0
        %6681 = vmatprep.subr.mxu0 0.0
        %6682 = vmatpush1.msra.mxu0 0.0
        %6683 = vmatprep.subr.mxu0 0.0
        %6684 = vmatpush1.msra.mxu0 0.0
        %6685 = vmatprep.subr.mxu0 0.0
        %6686 = vmatpush1.msra.mxu0 0.0
        %6687 = vmatprep.subr.mxu0 0.0
        %6688 = vmatpush1.msra.mxu0 0.0
        %6689 = vmatprep.subr.mxu0 0.0
        %6690 = vmatpush1.msra.mxu0 0.0
        %6691 = vmatprep.subr.mxu0 0.0
        %6692 = vmatpush1.msra.mxu0 0.0
        %6693 = vmatprep.subr.mxu0 0.0
        %6694 = vmatpush1.msra.mxu0 0.0
        %6695 = vmatprep.subr.mxu0 0.0
        %6696 = vmatpush1.msra.mxu0 0.0
        %6697 = vmatprep.subr.mxu0 0.0
        %6698 = vmatpush1.msra.mxu0 0.0
        %6699 = vmatprep.subr.mxu0 0.0
        %6700 = vmatpush1.msra.mxu0 0.0
        %6701 = vmatprep.subr.mxu0 0.0
        %6702 = vmatpush1.msra.mxu0 0.0
        %6703 = vmatprep.subr.mxu0 0.0
        %6704 = vmatpush1.msra.mxu0 0.0
        %6705 = vmatprep.subr.mxu0 0.0
        %6706 = vmatpush1.msra.mxu0 0.0
        %6707 = vmatprep.subr.mxu0 0.0
        %6708 = vmatpush1.msra.mxu0 0.0
        %6709 = vmatprep.subr.mxu0 0.0
        %6710 = vmatpush1.msra.mxu0 0.0
        %6711 = vmatprep.subr.mxu0 0.0
        %6712 = vmatpush1.msra.mxu0 0.0
        %6713 = vmatprep.subr.mxu0 0.0
        %6714 = vmatpush1.msra.mxu0 0.0
        %6715 = vmatprep.subr.mxu0 0.0
        %6716 = vmatpush1.msra.mxu0 0.0
        %6717 = vmatprep.subr.mxu0 0.0
        %6718 = vmatpush1.msra.mxu0 0.0
        %6719 = vmatprep.subr.mxu0 0.0
        %6720 = vmatpush1.msra.mxu0 0.0
        %6721 = vmatprep.subr.mxu0 0.0
        %6722 = vmatpush1.msra.mxu0 0.0
        %6723 = vmatprep.subr.mxu0 0.0
        %6724 = vmatpush1.msra.mxu0 0.0
        %6725 = vmatprep.subr.mxu0 0.0
        %6726 = vmatpush1.msra.mxu0 0.0
        %6727 = vmatprep.subr.mxu0 0.0
        %6728 = vmatpush1.msra.mxu0 0.0
        %6729 = vmatprep.subr.mxu0 0.0
        %6730 = vmatpush1.msra.mxu0 0.0
        %6731 = vmatprep.subr.mxu0 0.0
        %6732 = vmatpush1.msra.mxu0 0.0
        %6733 = vmatprep.mubr.f32.mxu0 0.0
        %v6734 = vand.u32 %v295, 4294901760
        %v6735 = vsub.f32 %v295, %v6734
        %v6736 = vand.u32 %v6735, 4294901760
        %6737 = vmatmul.mubr.f32.gmra.mrb[0].mxu0 %v6736
        %v6738 = vpop.f32.mrb[0].mxu0
        %v6739 = vadd.f32 %v6657, %v6738
        %v6740 = vpop.f32.mrb[0].mxu0
        %6741 = vmatprep.mubr.f32.mxu0 0.0
        %v6742 = vand.u32 %v298, 4294901760
        %v6743 = vsub.f32 %v298, %v6742
        %v6744 = vand.u32 %v6743, 4294901760
        %6745 = vmatmul.mubr.f32.gmra.mrb[0].mxu0 %v6744
        %v6746 = vpop.f32.mrb[0].mxu0
        %v6747 = vadd.f32 %v6664, %v6746
        %v6748 = vpop.f32.mrb[0].mxu0
        %6749 = vdwg.mxu0
        %6750 = vmatprep.subr.mxu0 0.0
        %v6751 = vand.u32 %v5398, 4294901760
        %v6752 = vsub.f32 %v5398, %v6751
        %v6753 = vand.u32 %v6752, 4294901760
        %6754 = vmatpush1.msra.mxu0 %v6753
        %6755 = vmatprep.subr.mxu0 0.0
        %v6756 = vand.u32 %v5399, 4294901760
        %v6757 = vsub.f32 %v5399, %v6756
        %v6758 = vand.u32 %v6757, 4294901760
        %6759 = vmatpush1.msra.mxu0 %v6758
        %6760 = vmatprep.subr.mxu0 0.0
        %6761 = vmatpush1.msra.mxu0 0.0
        %6762 = vmatprep.subr.mxu0 0.0
        %6763 = vmatpush1.msra.mxu0 0.0
        %6764 = vmatprep.subr.mxu0 0.0
        %6765 = vmatpush1.msra.mxu0 0.0
        %6766 = vmatprep.subr.mxu0 0.0
        %6767 = vmatpush1.msra.mxu0 0.0
        %6768 = vmatprep.subr.mxu0 0.0
        %6769 = vmatpush1.msra.mxu0 0.0
        %6770 = vmatprep.subr.mxu0 0.0
        %6771 = vmatpush1.msra.mxu0 0.0
        %6772 = vmatprep.subr.mxu0 0.0
        %6773 = vmatpush1.msra.mxu0 0.0
        %6774 = vmatprep.subr.mxu0 0.0
        %6775 = vmatpush1.msra.mxu0 0.0
        %6776 = vmatprep.subr.mxu0 0.0
        %6777 = vmatpush1.msra.mxu0 0.0
        %6778 = vmatprep.subr.mxu0 0.0
        %6779 = vmatpush1.msra.mxu0 0.0
        %6780 = vmatprep.subr.mxu0 0.0
        %6781 = vmatpush1.msra.mxu0 0.0
        %6782 = vmatprep.subr.mxu0 0.0
        %6783 = vmatpush1.msra.mxu0 0.0
        %6784 = vmatprep.subr.mxu0 0.0
        %6785 = vmatpush1.msra.mxu0 0.0
        %6786 = vmatprep.subr.mxu0 0.0
        %6787 = vmatpush1.msra.mxu0 0.0
        %6788 = vmatprep.subr.mxu0 0.0
        %6789 = vmatpush1.msra.mxu0 0.0
        %6790 = vmatprep.subr.mxu0 0.0
        %6791 = vmatpush1.msra.mxu0 0.0
        %6792 = vmatprep.subr.mxu0 0.0
        %6793 = vmatpush1.msra.mxu0 0.0
        %6794 = vmatprep.subr.mxu0 0.0
        %6795 = vmatpush1.msra.mxu0 0.0
        %6796 = vmatprep.subr.mxu0 0.0
        %6797 = vmatpush1.msra.mxu0 0.0
        %6798 = vmatprep.subr.mxu0 0.0
        %6799 = vmatpush1.msra.mxu0 0.0
        %6800 = vmatprep.subr.mxu0 0.0
        %6801 = vmatpush1.msra.mxu0 0.0
        %6802 = vmatprep.subr.mxu0 0.0
        %6803 = vmatpush1.msra.mxu0 0.0
        %6804 = vmatprep.subr.mxu0 0.0
        %6805 = vmatpush1.msra.mxu0 0.0
        %6806 = vmatprep.subr.mxu0 0.0
        %6807 = vmatpush1.msra.mxu0 0.0
        %6808 = vmatprep.subr.mxu0 0.0
        %6809 = vmatpush1.msra.mxu0 0.0
        %6810 = vmatprep.subr.mxu0 0.0
        %6811 = vmatpush1.msra.mxu0 0.0
        %6812 = vmatprep.subr.mxu0 0.0
        %6813 = vmatpush1.msra.mxu0 0.0
        %6814 = vmatprep.subr.mxu0 0.0
        %6815 = vmatpush1.msra.mxu0 0.0
        %6816 = vmatprep.subr.mxu0 0.0
        %6817 = vmatpush1.msra.mxu0 0.0
        %6818 = vmatprep.subr.mxu0 0.0
        %6819 = vmatpush1.msra.mxu0 0.0
        %6820 = vmatprep.mubr.f32.mxu0 0.0
        %v6821 = vand.u32 %v295, 4294901760
        %6822 = vmatmul.mubr.f32.gmra.mrb[0].mxu0 %v6821
        %v6823 = vpop.f32.mrb[0].mxu0
        %v6824 = vadd.f32 %v6739, %v6823
        %v6825 = vpop.f32.mrb[0].mxu0
        %6826 = vmatprep.mubr.f32.mxu0 0.0
        %v6827 = vand.u32 %v298, 4294901760
        %6828 = vmatmul.mubr.f32.gmra.mrb[0].mxu0 %v6827
        %v6829 = vpop.f32.mrb[0].mxu0
        %v6830 = vadd.f32 %v6747, %v6829
        %v6831 = vpop.f32.mrb[0].mxu0
        %6832 = vdwg.mxu0
        %6833 = vmatprep.subr.mxu0 0.0
        %v6834 = vand.u32 %v5398, 4294901760
        %6835 = vmatpush1.msra.mxu0 %v6834
        %6836 = vmatprep.subr.mxu0 0.0
        %v6837 = vand.u32 %v5399, 4294901760
        %6838 = vmatpush1.msra.mxu0 %v6837
        %6839 = vmatprep.subr.mxu0 0.0
        %6840 = vmatpush1.msra.mxu0 0.0
        %6841 = vmatprep.subr.mxu0 0.0
        %6842 = vmatpush1.msra.mxu0 0.0
        %6843 = vmatprep.subr.mxu0 0.0
        %6844 = vmatpush1.msra.mxu0 0.0
        %6845 = vmatprep.subr.mxu0 0.0
        %6846 = vmatpush1.msra.mxu0 0.0
        %6847 = vmatprep.subr.mxu0 0.0
        %6848 = vmatpush1.msra.mxu0 0.0
        %6849 = vmatprep.subr.mxu0 0.0
        %6850 = vmatpush1.msra.mxu0 0.0
        %6851 = vmatprep.subr.mxu0 0.0
        %6852 = vmatpush1.msra.mxu0 0.0
        %6853 = vmatprep.subr.mxu0 0.0
        %6854 = vmatpush1.msra.mxu0 0.0
        %6855 = vmatprep.subr.mxu0 0.0
        %6856 = vmatpush1.msra.mxu0 0.0
        %6857 = vmatprep.subr.mxu0 0.0
        %6858 = vmatpush1.msra.mxu0 0.0
        %6859 = vmatprep.subr.mxu0 0.0
        %6860 = vmatpush1.msra.mxu0 0.0
        %6861 = vmatprep.subr.mxu0 0.0
        %6862 = vmatpush1.msra.mxu0 0.0
        %6863 = vmatprep.subr.mxu0 0.0
        %6864 = vmatpush1.msra.mxu0 0.0
        %6865 = vmatprep.subr.mxu0 0.0
        %6866 = vmatpush1.msra.mxu0 0.0
        %6867 = vmatprep.subr.mxu0 0.0
        %6868 = vmatpush1.msra.mxu0 0.0
        %6869 = vmatprep.subr.mxu0 0.0
        %6870 = vmatpush1.msra.mxu0 0.0
        %6871 = vmatprep.subr.mxu0 0.0
        %6872 = vmatpush1.msra.mxu0 0.0
        %6873 = vmatprep.subr.mxu0 0.0
        %6874 = vmatpush1.msra.mxu0 0.0
        %6875 = vmatprep.subr.mxu0 0.0
        %6876 = vmatpush1.msra.mxu0 0.0
        %6877 = vmatprep.subr.mxu0 0.0
        %6878 = vmatpush1.msra.mxu0 0.0
        %6879 = vmatprep.subr.mxu0 0.0
        %6880 = vmatpush1.msra.mxu0 0.0
        %6881 = vmatprep.subr.mxu0 0.0
        %6882 = vmatpush1.msra.mxu0 0.0
        %6883 = vmatprep.subr.mxu0 0.0
        %6884 = vmatpush1.msra.mxu0 0.0
        %6885 = vmatprep.subr.mxu0 0.0
        %6886 = vmatpush1.msra.mxu0 0.0
        %6887 = vmatprep.subr.mxu0 0.0
        %6888 = vmatpush1.msra.mxu0 0.0
        %6889 = vmatprep.subr.mxu0 0.0
        %6890 = vmatpush1.msra.mxu0 0.0
        %6891 = vmatprep.subr.mxu0 0.0
        %6892 = vmatpush1.msra.mxu0 0.0
        %6893 = vmatprep.subr.mxu0 0.0
        %6894 = vmatpush1.msra.mxu0 0.0
        %6895 = vmatprep.subr.mxu0 0.0
        %6896 = vmatpush1.msra.mxu0 0.0
        %6897 = vmatprep.subr.mxu0 0.0
        %6898 = vmatpush1.msra.mxu0 0.0
        %6899 = vmatprep.mubr.f32.mxu0 0.0
        %v6900 = vand.u32 %v295, 4294901760
        %6901 = vmatmul.mubr.f32.gmra.mrb[0].mxu0 %v6900
        %v6902 = vpop.f32.mrb[0].mxu0
        %v6903 = vadd.f32 %v6824, %v6902
        %v6904 = vpop.f32.mrb[0].mxu0
        %6905 = vmatprep.mubr.f32.mxu0 0.0
        %v6906 = vand.u32 %v298, 4294901760
        %6907 = vmatmul.mubr.f32.gmra.mrb[0].mxu0 %v6906
        %v6908 = vpop.f32.mrb[0].mxu0
        %v6909 = vadd.f32 %v6830, %v6908
        %v6910 = vpop.f32.mrb[0].mxu0
        %6911 = vdwg.mxu0
        %v6913 = vsel %vm293, %v6903, 0
        %v6916 = vsel %vm293, %v6909, 0
        %6918 = vmatprep.subr.mxu0 0.0
        %v6919 = vand.u32 %v287, 4294901760
        %6920 = vmatpush1.msra.mxu0 %v6919
        %6921 = vmatprep.subr.mxu0 0.0
        %v6922 = vand.u32 %v288, 4294901760
        %6923 = vmatpush1.msra.mxu0 %v6922
        %6924 = vmatprep.subr.mxu0 0.0
        %6925 = vmatpush1.msra.mxu0 0.0
        %6926 = vmatprep.subr.mxu0 0.0
        %6927 = vmatpush1.msra.mxu0 0.0
        %6928 = vmatprep.subr.mxu0 0.0
        %6929 = vmatpush1.msra.mxu0 0.0
        %6930 = vmatprep.subr.mxu0 0.0
        %6931 = vmatpush1.msra.mxu0 0.0
        %6932 = vmatprep.subr.mxu0 0.0
        %6933 = vmatpush1.msra.mxu0 0.0
        %6934 = vmatprep.subr.mxu0 0.0
        %6935 = vmatpush1.msra.mxu0 0.0
        %6936 = vmatprep.subr.mxu0 0.0
        %6937 = vmatpush1.msra.mxu0 0.0
        %6938 = vmatprep.subr.mxu0 0.0
        %6939 = vmatpush1.msra.mxu0 0.0
        %6940 = vmatprep.subr.mxu0 0.0
        %6941 = vmatpush1.msra.mxu0 0.0
        %6942 = vmatprep.subr.mxu0 0.0
        %6943 = vmatpush1.msra.mxu0 0.0
        %6944 = vmatprep.subr.mxu0 0.0
        %6945 = vmatpush1.msra.mxu0 0.0
        %6946 = vmatprep.subr.mxu0 0.0
        %6947 = vmatpush1.msra.mxu0 0.0
        %6948 = vmatprep.subr.mxu0 0.0
        %6949 = vmatpush1.msra.mxu0 0.0
        %6950 = vmatprep.subr.mxu0 0.0
        %6951 = vmatpush1.msra.mxu0 0.0
        %6952 = vmatprep.subr.mxu0 0.0
        %6953 = vmatpush1.msra.mxu0 0.0
        %6954 = vmatprep.subr.mxu0 0.0
        %6955 = vmatpush1.msra.mxu0 0.0
        %6956 = vmatprep.subr.mxu0 0.0
        %6957 = vmatpush1.msra.mxu0 0.0
        %6958 = vmatprep.subr.mxu0 0.0
        %6959 = vmatpush1.msra.mxu0 0.0
        %6960 = vmatprep.subr.mxu0 0.0
        %6961 = vmatpush1.msra.mxu0 0.0
        %6962 = vmatprep.subr.mxu0 0.0
        %6963 = vmatpush1.msra.mxu0 0.0
        %6964 = vmatprep.subr.mxu0 0.0
        %6965 = vmatpush1.msra.mxu0 0.0
        %6966 = vmatprep.subr.mxu0 0.0
        %6967 = vmatpush1.msra.mxu0 0.0
        %6968 = vmatprep.subr.mxu0 0.0
        %6969 = vmatpush1.msra.mxu0 0.0
        %6970 = vmatprep.subr.mxu0 0.0
        %6971 = vmatpush1.msra.mxu0 0.0
        %6972 = vmatprep.subr.mxu0 0.0
        %6973 = vmatpush1.msra.mxu0 0.0
        %6974 = vmatprep.subr.mxu0 0.0
        %6975 = vmatpush1.msra.mxu0 0.0
        %6976 = vmatprep.subr.mxu0 0.0
        %6977 = vmatpush1.msra.mxu0 0.0
        %6978 = vmatprep.subr.mxu0 0.0
        %6979 = vmatpush1.msra.mxu0 0.0
        %6980 = vmatprep.subr.mxu0 0.0
        %6981 = vmatpush1.msra.mxu0 0.0
        %6982 = vmatprep.subr.mxu0 0.0
        %6983 = vmatpush1.msra.mxu0 0.0
        %6984 = vmatprep.mubr.f32.mxu0 0.0
        %v6985 = vand.u32 %v6913, 4294901760
        %v6986 = vsub.f32 %v6913, %v6985
        %v6987 = vand.u32 %v6986, 4294901760
        %v6988 = vsub.f32 %v6986, %v6987
        %v6989 = vand.u32 %v6988, 4294901760
        %6990 = vmatmul.mubr.f32.gmra.mrb[0].mxu0 %v6989
        %v6991 = vpop.f32.mrb[0].mxu0
        %v6992 = vadd.f32 0.0, %v6991
        %v6993 = vpop.f32.mrb[0].mxu0
        %6994 = vmatprep.mubr.f32.mxu0 0.0
        %v6995 = vand.u32 %v6916, 4294901760
        %v6996 = vsub.f32 %v6916, %v6995
        %v6997 = vand.u32 %v6996, 4294901760
        %v6998 = vsub.f32 %v6996, %v6997
        %v6999 = vand.u32 %v6998, 4294901760
        %7000 = vmatmul.mubr.f32.gmra.mrb[0].mxu0 %v6999
        %v7001 = vpop.f32.mrb[0].mxu0
        %v7002 = vadd.f32 0.0, %v7001
        %v7003 = vpop.f32.mrb[0].mxu0
        %7004 = vdwg.mxu0
        %7005 = vmatprep.subr.mxu0 0.0
        %v7006 = vand.u32 %v287, 4294901760
        %v7007 = vsub.f32 %v287, %v7006
        %v7008 = vand.u32 %v7007, 4294901760
        %v7009 = vsub.f32 %v7007, %v7008
        %v7010 = vand.u32 %v7009, 4294901760
        %7011 = vmatpush1.msra.mxu0 %v7010
        %7012 = vmatprep.subr.mxu0 0.0
        %v7013 = vand.u32 %v288, 4294901760
        %v7014 = vsub.f32 %v288, %v7013
        %v7015 = vand.u32 %v7014, 4294901760
        %v7016 = vsub.f32 %v7014, %v7015
        %v7017 = vand.u32 %v7016, 4294901760
        %7018 = vmatpush1.msra.mxu0 %v7017
        %7019 = vmatprep.subr.mxu0 0.0
        %7020 = vmatpush1.msra.mxu0 0.0
        %7021 = vmatprep.subr.mxu0 0.0
        %7022 = vmatpush1.msra.mxu0 0.0
        %7023 = vmatprep.subr.mxu0 0.0
        %7024 = vmatpush1.msra.mxu0 0.0
        %7025 = vmatprep.subr.mxu0 0.0
        %7026 = vmatpush1.msra.mxu0 0.0
        %7027 = vmatprep.subr.mxu0 0.0
        %7028 = vmatpush1.msra.mxu0 0.0
        %7029 = vmatprep.subr.mxu0 0.0
        %7030 = vmatpush1.msra.mxu0 0.0
        %7031 = vmatprep.subr.mxu0 0.0
        %7032 = vmatpush1.msra.mxu0 0.0
        %7033 = vmatprep.subr.mxu0 0.0
        %7034 = vmatpush1.msra.mxu0 0.0
        %7035 = vmatprep.subr.mxu0 0.0
        %7036 = vmatpush1.msra.mxu0 0.0
        %7037 = vmatprep.subr.mxu0 0.0
        %7038 = vmatpush1.msra.mxu0 0.0
        %7039 = vmatprep.subr.mxu0 0.0
        %7040 = vmatpush1.msra.mxu0 0.0
        %7041 = vmatprep.subr.mxu0 0.0
        %7042 = vmatpush1.msra.mxu0 0.0
        %7043 = vmatprep.subr.mxu0 0.0
        %7044 = vmatpush1.msra.mxu0 0.0
        %7045 = vmatprep.subr.mxu0 0.0
        %7046 = vmatpush1.msra.mxu0 0.0
        %7047 = vmatprep.subr.mxu0 0.0
        %7048 = vmatpush1.msra.mxu0 0.0
        %7049 = vmatprep.subr.mxu0 0.0
        %7050 = vmatpush1.msra.mxu0 0.0
        %7051 = vmatprep.subr.mxu0 0.0
        %7052 = vmatpush1.msra.mxu0 0.0
        %7053 = vmatprep.subr.mxu0 0.0
        %7054 = vmatpush1.msra.mxu0 0.0
        %7055 = vmatprep.subr.mxu0 0.0
        %7056 = vmatpush1.msra.mxu0 0.0
        %7057 = vmatprep.subr.mxu0 0.0
        %7058 = vmatpush1.msra.mxu0 0.0
        %7059 = vmatprep.subr.mxu0 0.0
        %7060 = vmatpush1.msra.mxu0 0.0
        %7061 = vmatprep.subr.mxu0 0.0
        %7062 = vmatpush1.msra.mxu0 0.0
        %7063 = vmatprep.subr.mxu0 0.0
        %7064 = vmatpush1.msra.mxu0 0.0
        %7065 = vmatprep.subr.mxu0 0.0
        %7066 = vmatpush1.msra.mxu0 0.0
        %7067 = vmatprep.subr.mxu0 0.0
        %7068 = vmatpush1.msra.mxu0 0.0
        %7069 = vmatprep.subr.mxu0 0.0
        %7070 = vmatpush1.msra.mxu0 0.0
        %7071 = vmatprep.subr.mxu0 0.0
        %7072 = vmatpush1.msra.mxu0 0.0
        %7073 = vmatprep.subr.mxu0 0.0
        %7074 = vmatpush1.msra.mxu0 0.0
        %7075 = vmatprep.subr.mxu0 0.0
        %7076 = vmatpush1.msra.mxu0 0.0
        %7077 = vmatprep.subr.mxu0 0.0
        %7078 = vmatpush1.msra.mxu0 0.0
        %7079 = vmatprep.mubr.f32.mxu0 0.0
        %v7080 = vand.u32 %v6913, 4294901760
        %7081 = vmatmul.mubr.f32.gmra.mrb[0].mxu0 %v7080
        %v7082 = vpop.f32.mrb[0].mxu0
        %v7083 = vadd.f32 %v6992, %v7082
        %v7084 = vpop.f32.mrb[0].mxu0
        %7085 = vmatprep.mubr.f32.mxu0 0.0
        %v7086 = vand.u32 %v6916, 4294901760
        %7087 = vmatmul.mubr.f32.gmra.mrb[0].mxu0 %v7086
        %v7088 = vpop.f32.mrb[0].mxu0
        %v7089 = vadd.f32 %v7002, %v7088
        %v7090 = vpop.f32.mrb[0].mxu0
        %7091 = vdwg.mxu0
        %7092 = vmatprep.subr.mxu0 0.0
        %v7093 = vand.u32 %v287, 4294901760
        %v7094 = vsub.f32 %v287, %v7093
        %7095 = vmatpush1.msra.mxu0 %v7094
        %7096 = vmatprep.subr.mxu0 0.0
        %v7097 = vand.u32 %v288, 4294901760
        %v7098 = vsub.f32 %v288, %v7097
        %7099 = vmatpush1.msra.mxu0 %v7098
        %7100 = vmatprep.subr.mxu0 0.0
        %7101 = vmatpush1.msra.mxu0 0.0
        %7102 = vmatprep.subr.mxu0 0.0
        %7103 = vmatpush1.msra.mxu0 0.0
        %7104 = vmatprep.subr.mxu0 0.0
        %7105 = vmatpush1.msra.mxu0 0.0
        %7106 = vmatprep.subr.mxu0 0.0
        %7107 = vmatpush1.msra.mxu0 0.0
        %7108 = vmatprep.subr.mxu0 0.0
        %7109 = vmatpush1.msra.mxu0 0.0
        %7110 = vmatprep.subr.mxu0 0.0
        %7111 = vmatpush1.msra.mxu0 0.0
        %7112 = vmatprep.subr.mxu0 0.0
        %7113 = vmatpush1.msra.mxu0 0.0
        %7114 = vmatprep.subr.mxu0 0.0
        %7115 = vmatpush1.msra.mxu0 0.0
        %7116 = vmatprep.subr.mxu0 0.0
        %7117 = vmatpush1.msra.mxu0 0.0
        %7118 = vmatprep.subr.mxu0 0.0
        %7119 = vmatpush1.msra.mxu0 0.0
        %7120 = vmatprep.subr.mxu0 0.0
        %7121 = vmatpush1.msra.mxu0 0.0
        %7122 = vmatprep.subr.mxu0 0.0
        %7123 = vmatpush1.msra.mxu0 0.0
        %7124 = vmatprep.subr.mxu0 0.0
        %7125 = vmatpush1.msra.mxu0 0.0
        %7126 = vmatprep.subr.mxu0 0.0
        %7127 = vmatpush1.msra.mxu0 0.0
        %7128 = vmatprep.subr.mxu0 0.0
        %7129 = vmatpush1.msra.mxu0 0.0
        %7130 = vmatprep.subr.mxu0 0.0
        %7131 = vmatpush1.msra.mxu0 0.0
        %7132 = vmatprep.subr.mxu0 0.0
        %7133 = vmatpush1.msra.mxu0 0.0
        %7134 = vmatprep.subr.mxu0 0.0
        %7135 = vmatpush1.msra.mxu0 0.0
        %7136 = vmatprep.subr.mxu0 0.0
        %7137 = vmatpush1.msra.mxu0 0.0
        %7138 = vmatprep.subr.mxu0 0.0
        %7139 = vmatpush1.msra.mxu0 0.0
        %7140 = vmatprep.subr.mxu0 0.0
        %7141 = vmatpush1.msra.mxu0 0.0
        %7142 = vmatprep.subr.mxu0 0.0
        %7143 = vmatpush1.msra.mxu0 0.0
        %7144 = vmatprep.subr.mxu0 0.0
        %7145 = vmatpush1.msra.mxu0 0.0
        %7146 = vmatprep.subr.mxu0 0.0
        %7147 = vmatpush1.msra.mxu0 0.0
        %7148 = vmatprep.subr.mxu0 0.0
        %7149 = vmatpush1.msra.mxu0 0.0
        %7150 = vmatprep.subr.mxu0 0.0
        %7151 = vmatpush1.msra.mxu0 0.0
        %7152 = vmatprep.subr.mxu0 0.0
        %7153 = vmatpush1.msra.mxu0 0.0
        %7154 = vmatprep.subr.mxu0 0.0
        %7155 = vmatpush1.msra.mxu0 0.0
        %7156 = vmatprep.subr.mxu0 0.0
        %7157 = vmatpush1.msra.mxu0 0.0
        %7158 = vmatprep.subr.mxu0 0.0
        %7159 = vmatpush1.msra.mxu0 0.0
        %7160 = vmatprep.mubr.f32.mxu0 0.0
        %v7161 = vand.u32 %v6913, 4294901760
        %v7162 = vsub.f32 %v6913, %v7161
        %7163 = vmatmul.mubr.f32.gmra.mrb[0].mxu0 %v7162
        %v7164 = vpop.f32.mrb[0].mxu0
        %v7165 = vadd.f32 %v7083, %v7164
        %v7166 = vpop.f32.mrb[0].mxu0
        %7167 = vmatprep.mubr.f32.mxu0 0.0
        %v7168 = vand.u32 %v6916, 4294901760
        %v7169 = vsub.f32 %v6916, %v7168
        %7170 = vmatmul.mubr.f32.gmra.mrb[0].mxu0 %v7169
        %v7171 = vpop.f32.mrb[0].mxu0
        %v7172 = vadd.f32 %v7089, %v7171
        %v7173 = vpop.f32.mrb[0].mxu0
        %7174 = vdwg.mxu0
        %7175 = vmatprep.subr.mxu0 0.0
        %v7176 = vand.u32 %v287, 4294901760
        %7177 = vmatpush1.msra.mxu0 %v7176
        %7178 = vmatprep.subr.mxu0 0.0
        %v7179 = vand.u32 %v288, 4294901760
        %7180 = vmatpush1.msra.mxu0 %v7179
        %7181 = vmatprep.subr.mxu0 0.0
        %7182 = vmatpush1.msra.mxu0 0.0
        %7183 = vmatprep.subr.mxu0 0.0
        %7184 = vmatpush1.msra.mxu0 0.0
        %7185 = vmatprep.subr.mxu0 0.0
        %7186 = vmatpush1.msra.mxu0 0.0
        %7187 = vmatprep.subr.mxu0 0.0
        %7188 = vmatpush1.msra.mxu0 0.0
        %7189 = vmatprep.subr.mxu0 0.0
        %7190 = vmatpush1.msra.mxu0 0.0
        %7191 = vmatprep.subr.mxu0 0.0
        %7192 = vmatpush1.msra.mxu0 0.0
        %7193 = vmatprep.subr.mxu0 0.0
        %7194 = vmatpush1.msra.mxu0 0.0
        %7195 = vmatprep.subr.mxu0 0.0
        %7196 = vmatpush1.msra.mxu0 0.0
        %7197 = vmatprep.subr.mxu0 0.0
        %7198 = vmatpush1.msra.mxu0 0.0
        %7199 = vmatprep.subr.mxu0 0.0
        %7200 = vmatpush1.msra.mxu0 0.0
        %7201 = vmatprep.subr.mxu0 0.0
        %7202 = vmatpush1.msra.mxu0 0.0
        %7203 = vmatprep.subr.mxu0 0.0
        %7204 = vmatpush1.msra.mxu0 0.0
        %7205 = vmatprep.subr.mxu0 0.0
        %7206 = vmatpush1.msra.mxu0 0.0
        %7207 = vmatprep.subr.mxu0 0.0
        %7208 = vmatpush1.msra.mxu0 0.0
        %7209 = vmatprep.subr.mxu0 0.0
        %7210 = vmatpush1.msra.mxu0 0.0
        %7211 = vmatprep.subr.mxu0 0.0
        %7212 = vmatpush1.msra.mxu0 0.0
        %7213 = vmatprep.subr.mxu0 0.0
        %7214 = vmatpush1.msra.mxu0 0.0
        %7215 = vmatprep.subr.mxu0 0.0
        %7216 = vmatpush1.msra.mxu0 0.0
        %7217 = vmatprep.subr.mxu0 0.0
        %7218 = vmatpush1.msra.mxu0 0.0
        %7219 = vmatprep.subr.mxu0 0.0
        %7220 = vmatpush1.msra.mxu0 0.0
        %7221 = vmatprep.subr.mxu0 0.0
        %7222 = vmatpush1.msra.mxu0 0.0
        %7223 = vmatprep.subr.mxu0 0.0
        %7224 = vmatpush1.msra.mxu0 0.0
        %7225 = vmatprep.subr.mxu0 0.0
        %7226 = vmatpush1.msra.mxu0 0.0
        %7227 = vmatprep.subr.mxu0 0.0
        %7228 = vmatpush1.msra.mxu0 0.0
        %7229 = vmatprep.subr.mxu0 0.0
        %7230 = vmatpush1.msra.mxu0 0.0
        %7231 = vmatprep.subr.mxu0 0.0
        %7232 = vmatpush1.msra.mxu0 0.0
        %7233 = vmatprep.subr.mxu0 0.0
        %7234 = vmatpush1.msra.mxu0 0.0
        %7235 = vmatprep.subr.mxu0 0.0
        %7236 = vmatpush1.msra.mxu0 0.0
        %7237 = vmatprep.subr.mxu0 0.0
        %7238 = vmatpush1.msra.mxu0 0.0
        %7239 = vmatprep.subr.mxu0 0.0
        %7240 = vmatpush1.msra.mxu0 0.0
        %7241 = vmatprep.mubr.f32.mxu0 0.0
        %v7242 = vand.u32 %v6913, 4294901760
        %v7243 = vsub.f32 %v6913, %v7242
        %v7244 = vand.u32 %v7243, 4294901760
        %7245 = vmatmul.mubr.f32.gmra.mrb[0].mxu0 %v7244
        %v7246 = vpop.f32.mrb[0].mxu0
        %v7247 = vadd.f32 %v7165, %v7246
        %v7248 = vpop.f32.mrb[0].mxu0
        %7249 = vmatprep.mubr.f32.mxu0 0.0
        %v7250 = vand.u32 %v6916, 4294901760
        %v7251 = vsub.f32 %v6916, %v7250
        %v7252 = vand.u32 %v7251, 4294901760
        %7253 = vmatmul.mubr.f32.gmra.mrb[0].mxu0 %v7252
        %v7254 = vpop.f32.mrb[0].mxu0
        %v7255 = vadd.f32 %v7172, %v7254
        %v7256 = vpop.f32.mrb[0].mxu0
        %7257 = vdwg.mxu0
        %7258 = vmatprep.subr.mxu0 0.0
        %v7259 = vand.u32 %v287, 4294901760
        %v7260 = vsub.f32 %v287, %v7259
        %v7261 = vand.u32 %v7260, 4294901760
        %7262 = vmatpush1.msra.mxu0 %v7261
        %7263 = vmatprep.subr.mxu0 0.0
        %v7264 = vand.u32 %v288, 4294901760
        %v7265 = vsub.f32 %v288, %v7264
        %v7266 = vand.u32 %v7265, 4294901760
        %7267 = vmatpush1.msra.mxu0 %v7266
        %7268 = vmatprep.subr.mxu0 0.0
        %7269 = vmatpush1.msra.mxu0 0.0
        %7270 = vmatprep.subr.mxu0 0.0
        %7271 = vmatpush1.msra.mxu0 0.0
        %7272 = vmatprep.subr.mxu0 0.0
        %7273 = vmatpush1.msra.mxu0 0.0
        %7274 = vmatprep.subr.mxu0 0.0
        %7275 = vmatpush1.msra.mxu0 0.0
        %7276 = vmatprep.subr.mxu0 0.0
        %7277 = vmatpush1.msra.mxu0 0.0
        %7278 = vmatprep.subr.mxu0 0.0
        %7279 = vmatpush1.msra.mxu0 0.0
        %7280 = vmatprep.subr.mxu0 0.0
        %7281 = vmatpush1.msra.mxu0 0.0
        %7282 = vmatprep.subr.mxu0 0.0
        %7283 = vmatpush1.msra.mxu0 0.0
        %7284 = vmatprep.subr.mxu0 0.0
        %7285 = vmatpush1.msra.mxu0 0.0
        %7286 = vmatprep.subr.mxu0 0.0
        %7287 = vmatpush1.msra.mxu0 0.0
        %7288 = vmatprep.subr.mxu0 0.0
        %7289 = vmatpush1.msra.mxu0 0.0
        %7290 = vmatprep.subr.mxu0 0.0
        %7291 = vmatpush1.msra.mxu0 0.0
        %7292 = vmatprep.subr.mxu0 0.0
        %7293 = vmatpush1.msra.mxu0 0.0
        %7294 = vmatprep.subr.mxu0 0.0
        %7295 = vmatpush1.msra.mxu0 0.0
        %7296 = vmatprep.subr.mxu0 0.0
        %7297 = vmatpush1.msra.mxu0 0.0
        %7298 = vmatprep.subr.mxu0 0.0
        %7299 = vmatpush1.msra.mxu0 0.0
        %7300 = vmatprep.subr.mxu0 0.0
        %7301 = vmatpush1.msra.mxu0 0.0
        %7302 = vmatprep.subr.mxu0 0.0
        %7303 = vmatpush1.msra.mxu0 0.0
        %7304 = vmatprep.subr.mxu0 0.0
        %7305 = vmatpush1.msra.mxu0 0.0
        %7306 = vmatprep.subr.mxu0 0.0
        %7307 = vmatpush1.msra.mxu0 0.0
        %7308 = vmatprep.subr.mxu0 0.0
        %7309 = vmatpush1.msra.mxu0 0.0
        %7310 = vmatprep.subr.mxu0 0.0
        %7311 = vmatpush1.msra.mxu0 0.0
        %7312 = vmatprep.subr.mxu0 0.0
        %7313 = vmatpush1.msra.mxu0 0.0
        %7314 = vmatprep.subr.mxu0 0.0
        %7315 = vmatpush1.msra.mxu0 0.0
        %7316 = vmatprep.subr.mxu0 0.0
        %7317 = vmatpush1.msra.mxu0 0.0
        %7318 = vmatprep.subr.mxu0 0.0
        %7319 = vmatpush1.msra.mxu0 0.0
        %7320 = vmatprep.subr.mxu0 0.0
        %7321 = vmatpush1.msra.mxu0 0.0
        %7322 = vmatprep.subr.mxu0 0.0
        %7323 = vmatpush1.msra.mxu0 0.0
        %7324 = vmatprep.subr.mxu0 0.0
        %7325 = vmatpush1.msra.mxu0 0.0
        %7326 = vmatprep.subr.mxu0 0.0
        %7327 = vmatpush1.msra.mxu0 0.0
        %7328 = vmatprep.mubr.f32.mxu0 0.0
        %v7329 = vand.u32 %v6913, 4294901760
        %7330 = vmatmul.mubr.f32.gmra.mrb[0].mxu0 %v7329
        %v7331 = vpop.f32.mrb[0].mxu0
        %v7332 = vadd.f32 %v7247, %v7331
        %v7333 = vpop.f32.mrb[0].mxu0
        %7334 = vmatprep.mubr.f32.mxu0 0.0
        %v7335 = vand.u32 %v6916, 4294901760
        %7336 = vmatmul.mubr.f32.gmra.mrb[0].mxu0 %v7335
        %v7337 = vpop.f32.mrb[0].mxu0
        %v7338 = vadd.f32 %v7255, %v7337
        %v7339 = vpop.f32.mrb[0].mxu0
        %7340 = vdwg.mxu0
        %7341 = vmatprep.subr.mxu0 0.0
        %v7342 = vand.u32 %v287, 4294901760
        %7343 = vmatpush1.msra.mxu0 %v7342
        %7344 = vmatprep.subr.mxu0 0.0
        %v7345 = vand.u32 %v288, 4294901760
        %7346 = vmatpush1.msra.mxu0 %v7345
        %7347 = vmatprep.subr.mxu0 0.0
        %7348 = vmatpush1.msra.mxu0 0.0
        %7349 = vmatprep.subr.mxu0 0.0
        %7350 = vmatpush1.msra.mxu0 0.0
        %7351 = vmatprep.subr.mxu0 0.0
        %7352 = vmatpush1.msra.mxu0 0.0
        %7353 = vmatprep.subr.mxu0 0.0
        %7354 = vmatpush1.msra.mxu0 0.0
        %7355 = vmatprep.subr.mxu0 0.0
        %7356 = vmatpush1.msra.mxu0 0.0
        %7357 = vmatprep.subr.mxu0 0.0
        %7358 = vmatpush1.msra.mxu0 0.0
        %7359 = vmatprep.subr.mxu0 0.0
        %7360 = vmatpush1.msra.mxu0 0.0
        %7361 = vmatprep.subr.mxu0 0.0
        %7362 = vmatpush1.msra.mxu0 0.0
        %7363 = vmatprep.subr.mxu0 0.0
        %7364 = vmatpush1.msra.mxu0 0.0
        %7365 = vmatprep.subr.mxu0 0.0
        %7366 = vmatpush1.msra.mxu0 0.0
        %7367 = vmatprep.subr.mxu0 0.0
        %7368 = vmatpush1.msra.mxu0 0.0
        %7369 = vmatprep.subr.mxu0 0.0
        %7370 = vmatpush1.msra.mxu0 0.0
        %7371 = vmatprep.subr.mxu0 0.0
        %7372 = vmatpush1.msra.mxu0 0.0
        %7373 = vmatprep.subr.mxu0 0.0
        %7374 = vmatpush1.msra.mxu0 0.0
        %7375 = vmatprep.subr.mxu0 0.0
        %7376 = vmatpush1.msra.mxu0 0.0
        %7377 = vmatprep.subr.mxu0 0.0
        %7378 = vmatpush1.msra.mxu0 0.0
        %7379 = vmatprep.subr.mxu0 0.0
        %7380 = vmatpush1.msra.mxu0 0.0
        %7381 = vmatprep.subr.mxu0 0.0
        %7382 = vmatpush1.msra.mxu0 0.0
        %7383 = vmatprep.subr.mxu0 0.0
        %7384 = vmatpush1.msra.mxu0 0.0
        %7385 = vmatprep.subr.mxu0 0.0
        %7386 = vmatpush1.msra.mxu0 0.0
        %7387 = vmatprep.subr.mxu0 0.0
        %7388 = vmatpush1.msra.mxu0 0.0
        %7389 = vmatprep.subr.mxu0 0.0
        %7390 = vmatpush1.msra.mxu0 0.0
        %7391 = vmatprep.subr.mxu0 0.0
        %7392 = vmatpush1.msra.mxu0 0.0
        %7393 = vmatprep.subr.mxu0 0.0
        %7394 = vmatpush1.msra.mxu0 0.0
        %7395 = vmatprep.subr.mxu0 0.0
        %7396 = vmatpush1.msra.mxu0 0.0
        %7397 = vmatprep.subr.mxu0 0.0
        %7398 = vmatpush1.msra.mxu0 0.0
        %7399 = vmatprep.subr.mxu0 0.0
        %7400 = vmatpush1.msra.mxu0 0.0
        %7401 = vmatprep.subr.mxu0 0.0
        %7402 = vmatpush1.msra.mxu0 0.0
        %7403 = vmatprep.subr.mxu0 0.0
        %7404 = vmatpush1.msra.mxu0 0.0
        %7405 = vmatprep.subr.mxu0 0.0
        %7406 = vmatpush1.msra.mxu0 0.0
        %7407 = vmatprep.mubr.f32.mxu0 0.0
        %v7408 = vand.u32 %v6913, 4294901760
        %7409 = vmatmul.mubr.f32.gmra.mrb[0].mxu0 %v7408
        %v7410 = vpop.f32.mrb[0].mxu0
        %v7411 = vadd.f32 %v7332, %v7410
        %v7412 = vpop.f32.mrb[0].mxu0
        %7413 = vmatprep.mubr.f32.mxu0 0.0
        %v7414 = vand.u32 %v6916, 4294901760
        %7415 = vmatmul.mubr.f32.gmra.mrb[0].mxu0 %v7414
        %v7416 = vpop.f32.mrb[0].mxu0
        %v7417 = vadd.f32 %v7338, %v7416
        %v7418 = vpop.f32.mrb[0].mxu0
        %7419 = vdwg.mxu0
        %v7420 = vmul.f32 %v5395, %v5395
        %v7421 = vmul.f32 %v5396, %v5396
        %7422 = vmatprep.subr.mxu0 0.0
        %v7423 = vand.u32 %v7420, 4294901760
        %7424 = vmatpush1.msra.mxu0 %v7423
        %7425 = vmatprep.subr.mxu0 0.0
        %v7426 = vand.u32 %v7421, 4294901760
        %7427 = vmatpush1.msra.mxu0 %v7426
        %7428 = vmatprep.subr.mxu0 0.0
        %7429 = vmatpush1.msra.mxu0 0.0
        %7430 = vmatprep.subr.mxu0 0.0
        %7431 = vmatpush1.msra.mxu0 0.0
        %7432 = vmatprep.subr.mxu0 0.0
        %7433 = vmatpush1.msra.mxu0 0.0
        %7434 = vmatprep.subr.mxu0 0.0
        %7435 = vmatpush1.msra.mxu0 0.0
        %7436 = vmatprep.subr.mxu0 0.0
        %7437 = vmatpush1.msra.mxu0 0.0
        %7438 = vmatprep.subr.mxu0 0.0
        %7439 = vmatpush1.msra.mxu0 0.0
        %7440 = vmatprep.subr.mxu0 0.0
        %7441 = vmatpush1.msra.mxu0 0.0
        %7442 = vmatprep.subr.mxu0 0.0
        %7443 = vmatpush1.msra.mxu0 0.0
        %7444 = vmatprep.subr.mxu0 0.0
        %7445 = vmatpush1.msra.mxu0 0.0
        %7446 = vmatprep.subr.mxu0 0.0
        %7447 = vmatpush1.msra.mxu0 0.0
        %7448 = vmatprep.subr.mxu0 0.0
        %7449 = vmatpush1.msra.mxu0 0.0
        %7450 = vmatprep.subr.mxu0 0.0
        %7451 = vmatpush1.msra.mxu0 0.0
        %7452 = vmatprep.subr.mxu0 0.0
        %7453 = vmatpush1.msra.mxu0 0.0
        %7454 = vmatprep.subr.mxu0 0.0
        %7455 = vmatpush1.msra.mxu0 0.0
        %7456 = vmatprep.subr.mxu0 0.0
        %7457 = vmatpush1.msra.mxu0 0.0
        %7458 = vmatprep.subr.mxu0 0.0
        %7459 = vmatpush1.msra.mxu0 0.0
        %7460 = vmatprep.subr.mxu0 0.0
        %7461 = vmatpush1.msra.mxu0 0.0
        %7462 = vmatprep.subr.mxu0 0.0
        %7463 = vmatpush1.msra.mxu0 0.0
        %7464 = vmatprep.subr.mxu0 0.0
        %7465 = vmatpush1.msra.mxu0 0.0
        %7466 = vmatprep.subr.mxu0 0.0
        %7467 = vmatpush1.msra.mxu0 0.0
        %7468 = vmatprep.subr.mxu0 0.0
        %7469 = vmatpush1.msra.mxu0 0.0
        %7470 = vmatprep.subr.mxu0 0.0
        %7471 = vmatpush1.msra.mxu0 0.0
        %7472 = vmatprep.subr.mxu0 0.0
        %7473 = vmatpush1.msra.mxu0 0.0
        %7474 = vmatprep.subr.mxu0 0.0
        %7475 = vmatpush1.msra.mxu0 0.0
        %7476 = vmatprep.subr.mxu0 0.0
        %7477 = vmatpush1.msra.mxu0 0.0
        %7478 = vmatprep.subr.mxu0 0.0
        %7479 = vmatpush1.msra.mxu0 0.0
        %7480 = vmatprep.subr.mxu0 0.0
        %7481 = vmatpush1.msra.mxu0 0.0
        %7482 = vmatprep.subr.mxu0 0.0
        %7483 = vmatpush1.msra.mxu0 0.0
        %7484 = vmatprep.subr.mxu0 0.0
        %7485 = vmatpush1.msra.mxu0 0.0
        %7486 = vmatprep.subr.mxu0 0.0
        %7487 = vmatpush1.msra.mxu0 0.0
        %7488 = vmatprep.mubr.f32.mxu0 0.0
        %v7489 = vand.u32 %v295, 4294901760
        %v7490 = vsub.f32 %v295, %v7489
        %v7491 = vand.u32 %v7490, 4294901760
        %v7492 = vsub.f32 %v7490, %v7491
        %v7493 = vand.u32 %v7492, 4294901760
        %7494 = vmatmul.mubr.f32.gmra.mrb[0].mxu0 %v7493
        %v7495 = vpop.f32.mrb[0].mxu0
        %v7496 = vadd.f32 0.0, %v7495
        %v7497 = vpop.f32.mrb[0].mxu0
        %7498 = vmatprep.mubr.f32.mxu0 0.0
        %v7499 = vand.u32 %v298, 4294901760
        %v7500 = vsub.f32 %v298, %v7499
        %v7501 = vand.u32 %v7500, 4294901760
        %v7502 = vsub.f32 %v7500, %v7501
        %v7503 = vand.u32 %v7502, 4294901760
        %7504 = vmatmul.mubr.f32.gmra.mrb[0].mxu0 %v7503
        %v7505 = vpop.f32.mrb[0].mxu0
        %v7506 = vadd.f32 0.0, %v7505
        %v7507 = vpop.f32.mrb[0].mxu0
        %7508 = vdwg.mxu0
        %7509 = vmatprep.subr.mxu0 0.0
        %v7510 = vand.u32 %v7420, 4294901760
        %v7511 = vsub.f32 %v7420, %v7510
        %v7512 = vand.u32 %v7511, 4294901760
        %v7513 = vsub.f32 %v7511, %v7512
        %v7514 = vand.u32 %v7513, 4294901760
        %7515 = vmatpush1.msra.mxu0 %v7514
        %7516 = vmatprep.subr.mxu0 0.0
        %v7517 = vand.u32 %v7421, 4294901760
        %v7518 = vsub.f32 %v7421, %v7517
        %v7519 = vand.u32 %v7518, 4294901760
        %v7520 = vsub.f32 %v7518, %v7519
        %v7521 = vand.u32 %v7520, 4294901760
        %7522 = vmatpush1.msra.mxu0 %v7521
        %7523 = vmatprep.subr.mxu0 0.0
        %7524 = vmatpush1.msra.mxu0 0.0
        %7525 = vmatprep.subr.mxu0 0.0
        %7526 = vmatpush1.msra.mxu0 0.0
        %7527 = vmatprep.subr.mxu0 0.0
        %7528 = vmatpush1.msra.mxu0 0.0
        %7529 = vmatprep.subr.mxu0 0.0
        %7530 = vmatpush1.msra.mxu0 0.0
        %7531 = vmatprep.subr.mxu0 0.0
        %7532 = vmatpush1.msra.mxu0 0.0
        %7533 = vmatprep.subr.mxu0 0.0
        %7534 = vmatpush1.msra.mxu0 0.0
        %7535 = vmatprep.subr.mxu0 0.0
        %7536 = vmatpush1.msra.mxu0 0.0
        %7537 = vmatprep.subr.mxu0 0.0
        %7538 = vmatpush1.msra.mxu0 0.0
        %7539 = vmatprep.subr.mxu0 0.0
        %7540 = vmatpush1.msra.mxu0 0.0
        %7541 = vmatprep.subr.mxu0 0.0
        %7542 = vmatpush1.msra.mxu0 0.0
        %7543 = vmatprep.subr.mxu0 0.0
        %7544 = vmatpush1.msra.mxu0 0.0
        %7545 = vmatprep.subr.mxu0 0.0
        %7546 = vmatpush1.msra.mxu0 0.0
        %7547 = vmatprep.subr.mxu0 0.0
        %7548 = vmatpush1.msra.mxu0 0.0
        %7549 = vmatprep.subr.mxu0 0.0
        %7550 = vmatpush1.msra.mxu0 0.0
        %7551 = vmatprep.subr.mxu0 0.0
        %7552 = vmatpush1.msra.mxu0 0.0
        %7553 = vmatprep.subr.mxu0 0.0
        %7554 = vmatpush1.msra.mxu0 0.0
        %7555 = vmatprep.subr.mxu0 0.0
        %7556 = vmatpush1.msra.mxu0 0.0
        %7557 = vmatprep.subr.mxu0 0.0
        %7558 = vmatpush1.msra.mxu0 0.0
        %7559 = vmatprep.subr.mxu0 0.0
        %7560 = vmatpush1.msra.mxu0 0.0
        %7561 = vmatprep.subr.mxu0 0.0
        %7562 = vmatpush1.msra.mxu0 0.0
        %7563 = vmatprep.subr.mxu0 0.0
        %7564 = vmatpush1.msra.mxu0 0.0
        %7565 = vmatprep.subr.mxu0 0.0
        %7566 = vmatpush1.msra.mxu0 0.0
        %7567 = vmatprep.subr.mxu0 0.0
        %7568 = vmatpush1.msra.mxu0 0.0
        %7569 = vmatprep.subr.mxu0 0.0
        %7570 = vmatpush1.msra.mxu0 0.0
        %7571 = vmatprep.subr.mxu0 0.0
        %7572 = vmatpush1.msra.mxu0 0.0
        %7573 = vmatprep.subr.mxu0 0.0
        %7574 = vmatpush1.msra.mxu0 0.0
        %7575 = vmatprep.subr.mxu0 0.0
        %7576 = vmatpush1.msra.mxu0 0.0
        %7577 = vmatprep.subr.mxu0 0.0
        %7578 = vmatpush1.msra.mxu0 0.0
        %7579 = vmatprep.subr.mxu0 0.0
        %7580 = vmatpush1.msra.mxu0 0.0
        %7581 = vmatprep.subr.mxu0 0.0
        %7582 = vmatpush1.msra.mxu0 0.0
        %7583 = vmatprep.mubr.f32.mxu0 0.0
        %v7584 = vand.u32 %v295, 4294901760
        %7585 = vmatmul.mubr.f32.gmra.mrb[0].mxu0 %v7584
        %v7586 = vpop.f32.mrb[0].mxu0
        %v7587 = vadd.f32 %v7496, %v7586
        %v7588 = vpop.f32.mrb[0].mxu0
        %7589 = vmatprep.mubr.f32.mxu0 0.0
        %v7590 = vand.u32 %v298, 4294901760
        %7591 = vmatmul.mubr.f32.gmra.mrb[0].mxu0 %v7590
        %v7592 = vpop.f32.mrb[0].mxu0
        %v7593 = vadd.f32 %v7506, %v7592
        %v7594 = vpop.f32.mrb[0].mxu0
        %7595 = vdwg.mxu0
        %7596 = vmatprep.subr.mxu0 0.0
        %v7597 = vand.u32 %v7420, 4294901760
        %v7598 = vsub.f32 %v7420, %v7597
        %7599 = vmatpush1.msra.mxu0 %v7598
        %7600 = vmatprep.subr.mxu0 0.0
        %v7601 = vand.u32 %v7421, 4294901760
        %v7602 = vsub.f32 %v7421, %v7601
        %7603 = vmatpush1.msra.mxu0 %v7602
        %7604 = vmatprep.subr.mxu0 0.0
        %7605 = vmatpush1.msra.mxu0 0.0
        %7606 = vmatprep.subr.mxu0 0.0
        %7607 = vmatpush1.msra.mxu0 0.0
        %7608 = vmatprep.subr.mxu0 0.0
        %7609 = vmatpush1.msra.mxu0 0.0
        %7610 = vmatprep.subr.mxu0 0.0
        %7611 = vmatpush1.msra.mxu0 0.0
        %7612 = vmatprep.subr.mxu0 0.0
        %7613 = vmatpush1.msra.mxu0 0.0
        %7614 = vmatprep.subr.mxu0 0.0
        %7615 = vmatpush1.msra.mxu0 0.0
        %7616 = vmatprep.subr.mxu0 0.0
        %7617 = vmatpush1.msra.mxu0 0.0
        %7618 = vmatprep.subr.mxu0 0.0
        %7619 = vmatpush1.msra.mxu0 0.0
        %7620 = vmatprep.subr.mxu0 0.0
        %7621 = vmatpush1.msra.mxu0 0.0
        %7622 = vmatprep.subr.mxu0 0.0
        %7623 = vmatpush1.msra.mxu0 0.0
        %7624 = vmatprep.subr.mxu0 0.0
        %7625 = vmatpush1.msra.mxu0 0.0
        %7626 = vmatprep.subr.mxu0 0.0
        %7627 = vmatpush1.msra.mxu0 0.0
        %7628 = vmatprep.subr.mxu0 0.0
        %7629 = vmatpush1.msra.mxu0 0.0
        %7630 = vmatprep.subr.mxu0 0.0
        %7631 = vmatpush1.msra.mxu0 0.0
        %7632 = vmatprep.subr.mxu0 0.0
        %7633 = vmatpush1.msra.mxu0 0.0
        %7634 = vmatprep.subr.mxu0 0.0
        %7635 = vmatpush1.msra.mxu0 0.0
        %7636 = vmatprep.subr.mxu0 0.0
        %7637 = vmatpush1.msra.mxu0 0.0
        %7638 = vmatprep.subr.mxu0 0.0
        %7639 = vmatpush1.msra.mxu0 0.0
        %7640 = vmatprep.subr.mxu0 0.0
        %7641 = vmatpush1.msra.mxu0 0.0
        %7642 = vmatprep.subr.mxu0 0.0
        %7643 = vmatpush1.msra.mxu0 0.0
        %7644 = vmatprep.subr.mxu0 0.0
        %7645 = vmatpush1.msra.mxu0 0.0
        %7646 = vmatprep.subr.mxu0 0.0
        %7647 = vmatpush1.msra.mxu0 0.0
        %7648 = vmatprep.subr.mxu0 0.0
        %7649 = vmatpush1.msra.mxu0 0.0
        %7650 = vmatprep.subr.mxu0 0.0
        %7651 = vmatpush1.msra.mxu0 0.0
        %7652 = vmatprep.subr.mxu0 0.0
        %7653 = vmatpush1.msra.mxu0 0.0
        %7654 = vmatprep.subr.mxu0 0.0
        %7655 = vmatpush1.msra.mxu0 0.0
        %7656 = vmatprep.subr.mxu0 0.0
        %7657 = vmatpush1.msra.mxu0 0.0
        %7658 = vmatprep.subr.mxu0 0.0
        %7659 = vmatpush1.msra.mxu0 0.0
        %7660 = vmatprep.subr.mxu0 0.0
        %7661 = vmatpush1.msra.mxu0 0.0
        %7662 = vmatprep.subr.mxu0 0.0
        %7663 = vmatpush1.msra.mxu0 0.0
        %7664 = vmatprep.mubr.f32.mxu0 0.0
        %v7665 = vand.u32 %v295, 4294901760
        %v7666 = vsub.f32 %v295, %v7665
        %7667 = vmatmul.mubr.f32.gmra.mrb[0].mxu0 %v7666
        %v7668 = vpop.f32.mrb[0].mxu0
        %v7669 = vadd.f32 %v7587, %v7668
        %v7670 = vpop.f32.mrb[0].mxu0
        %7671 = vmatprep.mubr.f32.mxu0 0.0
        %v7672 = vand.u32 %v298, 4294901760
        %v7673 = vsub.f32 %v298, %v7672
        %7674 = vmatmul.mubr.f32.gmra.mrb[0].mxu0 %v7673
        %v7675 = vpop.f32.mrb[0].mxu0
        %v7676 = vadd.f32 %v7593, %v7675
        %v7677 = vpop.f32.mrb[0].mxu0
        %7678 = vdwg.mxu0
        %7679 = vmatprep.subr.mxu0 0.0
        %v7680 = vand.u32 %v7420, 4294901760
        %7681 = vmatpush1.msra.mxu0 %v7680
        %7682 = vmatprep.subr.mxu0 0.0
        %v7683 = vand.u32 %v7421, 4294901760
        %7684 = vmatpush1.msra.mxu0 %v7683
        %7685 = vmatprep.subr.mxu0 0.0
        %7686 = vmatpush1.msra.mxu0 0.0
        %7687 = vmatprep.subr.mxu0 0.0
        %7688 = vmatpush1.msra.mxu0 0.0
        %7689 = vmatprep.subr.mxu0 0.0
        %7690 = vmatpush1.msra.mxu0 0.0
        %7691 = vmatprep.subr.mxu0 0.0
        %7692 = vmatpush1.msra.mxu0 0.0
        %7693 = vmatprep.subr.mxu0 0.0
        %7694 = vmatpush1.msra.mxu0 0.0
        %7695 = vmatprep.subr.mxu0 0.0
        %7696 = vmatpush1.msra.mxu0 0.0
        %7697 = vmatprep.subr.mxu0 0.0
        %7698 = vmatpush1.msra.mxu0 0.0
        %7699 = vmatprep.subr.mxu0 0.0
        %7700 = vmatpush1.msra.mxu0 0.0
        %7701 = vmatprep.subr.mxu0 0.0
        %7702 = vmatpush1.msra.mxu0 0.0
        %7703 = vmatprep.subr.mxu0 0.0
        %7704 = vmatpush1.msra.mxu0 0.0
        %7705 = vmatprep.subr.mxu0 0.0
        %7706 = vmatpush1.msra.mxu0 0.0
        %7707 = vmatprep.subr.mxu0 0.0
        %7708 = vmatpush1.msra.mxu0 0.0
        %7709 = vmatprep.subr.mxu0 0.0
        %7710 = vmatpush1.msra.mxu0 0.0
        %7711 = vmatprep.subr.mxu0 0.0
        %7712 = vmatpush1.msra.mxu0 0.0
        %7713 = vmatprep.subr.mxu0 0.0
        %7714 = vmatpush1.msra.mxu0 0.0
        %7715 = vmatprep.subr.mxu0 0.0
        %7716 = vmatpush1.msra.mxu0 0.0
        %7717 = vmatprep.subr.mxu0 0.0
        %7718 = vmatpush1.msra.mxu0 0.0
        %7719 = vmatprep.subr.mxu0 0.0
        %7720 = vmatpush1.msra.mxu0 0.0
        %7721 = vmatprep.subr.mxu0 0.0
        %7722 = vmatpush1.msra.mxu0 0.0
        %7723 = vmatprep.subr.mxu0 0.0
        %7724 = vmatpush1.msra.mxu0 0.0
        %7725 = vmatprep.subr.mxu0 0.0
        %7726 = vmatpush1.msra.mxu0 0.0
        %7727 = vmatprep.subr.mxu0 0.0
        %7728 = vmatpush1.msra.mxu0 0.0
        %7729 = vmatprep.subr.mxu0 0.0
        %7730 = vmatpush1.msra.mxu0 0.0
        %7731 = vmatprep.subr.mxu0 0.0
        %7732 = vmatpush1.msra.mxu0 0.0
        %7733 = vmatprep.subr.mxu0 0.0
        %7734 = vmatpush1.msra.mxu0 0.0
        %7735 = vmatprep.subr.mxu0 0.0
        %7736 = vmatpush1.msra.mxu0 0.0
        %7737 = vmatprep.subr.mxu0 0.0
        %7738 = vmatpush1.msra.mxu0 0.0
        %7739 = vmatprep.subr.mxu0 0.0
        %7740 = vmatpush1.msra.mxu0 0.0
        %7741 = vmatprep.subr.mxu0 0.0
        %7742 = vmatpush1.msra.mxu0 0.0
        %7743 = vmatprep.subr.mxu0 0.0
        %7744 = vmatpush1.msra.mxu0 0.0
        %7745 = vmatprep.mubr.f32.mxu0 0.0
        %v7746 = vand.u32 %v295, 4294901760
        %v7747 = vsub.f32 %v295, %v7746
        %v7748 = vand.u32 %v7747, 4294901760
        %7749 = vmatmul.mubr.f32.gmra.mrb[0].mxu0 %v7748
        %v7750 = vpop.f32.mrb[0].mxu0
        %v7751 = vadd.f32 %v7669, %v7750
        %v7752 = vpop.f32.mrb[0].mxu0
        %7753 = vmatprep.mubr.f32.mxu0 0.0
        %v7754 = vand.u32 %v298, 4294901760
        %v7755 = vsub.f32 %v298, %v7754
        %v7756 = vand.u32 %v7755, 4294901760
        %7757 = vmatmul.mubr.f32.gmra.mrb[0].mxu0 %v7756
        %v7758 = vpop.f32.mrb[0].mxu0
        %v7759 = vadd.f32 %v7676, %v7758
        %v7760 = vpop.f32.mrb[0].mxu0
        %7761 = vdwg.mxu0
        %7762 = vmatprep.subr.mxu0 0.0
        %v7763 = vand.u32 %v7420, 4294901760
        %v7764 = vsub.f32 %v7420, %v7763
        %v7765 = vand.u32 %v7764, 4294901760
        %7766 = vmatpush1.msra.mxu0 %v7765
        %7767 = vmatprep.subr.mxu0 0.0
        %v7768 = vand.u32 %v7421, 4294901760
        %v7769 = vsub.f32 %v7421, %v7768
        %v7770 = vand.u32 %v7769, 4294901760
        %7771 = vmatpush1.msra.mxu0 %v7770
        %7772 = vmatprep.subr.mxu0 0.0
        %7773 = vmatpush1.msra.mxu0 0.0
        %7774 = vmatprep.subr.mxu0 0.0
        %7775 = vmatpush1.msra.mxu0 0.0
        %7776 = vmatprep.subr.mxu0 0.0
        %7777 = vmatpush1.msra.mxu0 0.0
        %7778 = vmatprep.subr.mxu0 0.0
        %7779 = vmatpush1.msra.mxu0 0.0
        %7780 = vmatprep.subr.mxu0 0.0
        %7781 = vmatpush1.msra.mxu0 0.0
        %7782 = vmatprep.subr.mxu0 0.0
        %7783 = vmatpush1.msra.mxu0 0.0
        %7784 = vmatprep.subr.mxu0 0.0
        %7785 = vmatpush1.msra.mxu0 0.0
        %7786 = vmatprep.subr.mxu0 0.0
        %7787 = vmatpush1.msra.mxu0 0.0
        %7788 = vmatprep.subr.mxu0 0.0
        %7789 = vmatpush1.msra.mxu0 0.0
        %7790 = vmatprep.subr.mxu0 0.0
        %7791 = vmatpush1.msra.mxu0 0.0
        %7792 = vmatprep.subr.mxu0 0.0
        %7793 = vmatpush1.msra.mxu0 0.0
        %7794 = vmatprep.subr.mxu0 0.0
        %7795 = vmatpush1.msra.mxu0 0.0
        %7796 = vmatprep.subr.mxu0 0.0
        %7797 = vmatpush1.msra.mxu0 0.0
        %7798 = vmatprep.subr.mxu0 0.0
        %7799 = vmatpush1.msra.mxu0 0.0
        %7800 = vmatprep.subr.mxu0 0.0
        %7801 = vmatpush1.msra.mxu0 0.0
        %7802 = vmatprep.subr.mxu0 0.0
        %7803 = vmatpush1.msra.mxu0 0.0
        %7804 = vmatprep.subr.mxu0 0.0
        %7805 = vmatpush1.msra.mxu0 0.0
        %7806 = vmatprep.subr.mxu0 0.0
        %7807 = vmatpush1.msra.mxu0 0.0
        %7808 = vmatprep.subr.mxu0 0.0
        %7809 = vmatpush1.msra.mxu0 0.0
        %7810 = vmatprep.subr.mxu0 0.0
        %7811 = vmatpush1.msra.mxu0 0.0
        %7812 = vmatprep.subr.mxu0 0.0
        %7813 = vmatpush1.msra.mxu0 0.0
        %7814 = vmatprep.subr.mxu0 0.0
        %7815 = vmatpush1.msra.mxu0 0.0
        %7816 = vmatprep.subr.mxu0 0.0
        %7817 = vmatpush1.msra.mxu0 0.0
        %7818 = vmatprep.subr.mxu0 0.0
        %7819 = vmatpush1.msra.mxu0 0.0
        %7820 = vmatprep.subr.mxu0 0.0
        %7821 = vmatpush1.msra.mxu0 0.0
        %7822 = vmatprep.subr.mxu0 0.0
        %7823 = vmatpush1.msra.mxu0 0.0
        %7824 = vmatprep.subr.mxu0 0.0
        %7825 = vmatpush1.msra.mxu0 0.0
        %7826 = vmatprep.subr.mxu0 0.0
        %7827 = vmatpush1.msra.mxu0 0.0
        %7828 = vmatprep.subr.mxu0 0.0
        %7829 = vmatpush1.msra.mxu0 0.0
        %7830 = vmatprep.subr.mxu0 0.0
        %7831 = vmatpush1.msra.mxu0 0.0
        %7832 = vmatprep.mubr.f32.mxu0 0.0
        %v7833 = vand.u32 %v295, 4294901760
        %7834 = vmatmul.mubr.f32.gmra.mrb[0].mxu0 %v7833
        %v7835 = vpop.f32.mrb[0].mxu0
        %v7836 = vadd.f32 %v7751, %v7835
        %v7837 = vpop.f32.mrb[0].mxu0
        %7838 = vmatprep.mubr.f32.mxu0 0.0
        %v7839 = vand.u32 %v298, 4294901760
        %7840 = vmatmul.mubr.f32.gmra.mrb[0].mxu0 %v7839
        %v7841 = vpop.f32.mrb[0].mxu0
        %v7842 = vadd.f32 %v7759, %v7841
        %v7843 = vpop.f32.mrb[0].mxu0
        %7844 = vdwg.mxu0
        %7845 = vmatprep.subr.mxu0 0.0
        %v7846 = vand.u32 %v7420, 4294901760
        %7847 = vmatpush1.msra.mxu0 %v7846
        %7848 = vmatprep.subr.mxu0 0.0
        %v7849 = vand.u32 %v7421, 4294901760
        %7850 = vmatpush1.msra.mxu0 %v7849
        %7851 = vmatprep.subr.mxu0 0.0
        %7852 = vmatpush1.msra.mxu0 0.0
        %7853 = vmatprep.subr.mxu0 0.0
        %7854 = vmatpush1.msra.mxu0 0.0
        %7855 = vmatprep.subr.mxu0 0.0
        %7856 = vmatpush1.msra.mxu0 0.0
        %7857 = vmatprep.subr.mxu0 0.0
        %7858 = vmatpush1.msra.mxu0 0.0
        %7859 = vmatprep.subr.mxu0 0.0
        %7860 = vmatpush1.msra.mxu0 0.0
        %7861 = vmatprep.subr.mxu0 0.0
        %7862 = vmatpush1.msra.mxu0 0.0
        %7863 = vmatprep.subr.mxu0 0.0
        %7864 = vmatpush1.msra.mxu0 0.0
        %7865 = vmatprep.subr.mxu0 0.0
        %7866 = vmatpush1.msra.mxu0 0.0
        %7867 = vmatprep.subr.mxu0 0.0
        %7868 = vmatpush1.msra.mxu0 0.0
        %7869 = vmatprep.subr.mxu0 0.0
        %7870 = vmatpush1.msra.mxu0 0.0
        %7871 = vmatprep.subr.mxu0 0.0
        %7872 = vmatpush1.msra.mxu0 0.0
        %7873 = vmatprep.subr.mxu0 0.0
        %7874 = vmatpush1.msra.mxu0 0.0
        %7875 = vmatprep.subr.mxu0 0.0
        %7876 = vmatpush1.msra.mxu0 0.0
        %7877 = vmatprep.subr.mxu0 0.0
        %7878 = vmatpush1.msra.mxu0 0.0
        %7879 = vmatprep.subr.mxu0 0.0
        %7880 = vmatpush1.msra.mxu0 0.0
        %7881 = vmatprep.subr.mxu0 0.0
        %7882 = vmatpush1.msra.mxu0 0.0
        %7883 = vmatprep.subr.mxu0 0.0
        %7884 = vmatpush1.msra.mxu0 0.0
        %7885 = vmatprep.subr.mxu0 0.0
        %7886 = vmatpush1.msra.mxu0 0.0
        %7887 = vmatprep.subr.mxu0 0.0
        %7888 = vmatpush1.msra.mxu0 0.0
        %7889 = vmatprep.subr.mxu0 0.0
        %7890 = vmatpush1.msra.mxu0 0.0
        %7891 = vmatprep.subr.mxu0 0.0
        %7892 = vmatpush1.msra.mxu0 0.0
        %7893 = vmatprep.subr.mxu0 0.0
        %7894 = vmatpush1.msra.mxu0 0.0
        %7895 = vmatprep.subr.mxu0 0.0
        %7896 = vmatpush1.msra.mxu0 0.0
        %7897 = vmatprep.subr.mxu0 0.0
        %7898 = vmatpush1.msra.mxu0 0.0
        %7899 = vmatprep.subr.mxu0 0.0
        %7900 = vmatpush1.msra.mxu0 0.0
        %7901 = vmatprep.subr.mxu0 0.0
        %7902 = vmatpush1.msra.mxu0 0.0
        %7903 = vmatprep.subr.mxu0 0.0
        %7904 = vmatpush1.msra.mxu0 0.0
        %7905 = vmatprep.subr.mxu0 0.0
        %7906 = vmatpush1.msra.mxu0 0.0
        %7907 = vmatprep.subr.mxu0 0.0
        %7908 = vmatpush1.msra.mxu0 0.0
        %7909 = vmatprep.subr.mxu0 0.0
        %7910 = vmatpush1.msra.mxu0 0.0
        %7911 = vmatprep.mubr.f32.mxu0 0.0
        %v7912 = vand.u32 %v295, 4294901760
        %7913 = vmatmul.mubr.f32.gmra.mrb[0].mxu0 %v7912
        %v7914 = vpop.f32.mrb[0].mxu0
        %v7915 = vadd.f32 %v7836, %v7914
        %v7916 = vpop.f32.mrb[0].mxu0
        %7917 = vmatprep.mubr.f32.mxu0 0.0
        %v7918 = vand.u32 %v298, 4294901760
        %7919 = vmatmul.mubr.f32.gmra.mrb[0].mxu0 %v7918
        %v7920 = vpop.f32.mrb[0].mxu0
        %v7921 = vadd.f32 %v7842, %v7920
        %v7922 = vpop.f32.mrb[0].mxu0
        %7923 = vdwg.mxu0
        %v7925 = vsel %vm293, %v7915, 0
        %v7928 = vsel %vm293, %v7921, 0
        %7930 = vmatprep.subr.mxu0 0.0
        %v7931 = vand.u32 %v287, 4294901760
        %7932 = vmatpush1.msra.mxu0 %v7931
        %7933 = vmatprep.subr.mxu0 0.0
        %v7934 = vand.u32 %v288, 4294901760
        %7935 = vmatpush1.msra.mxu0 %v7934
        %7936 = vmatprep.subr.mxu0 0.0
        %7937 = vmatpush1.msra.mxu0 0.0
        %7938 = vmatprep.subr.mxu0 0.0
        %7939 = vmatpush1.msra.mxu0 0.0
        %7940 = vmatprep.subr.mxu0 0.0
        %7941 = vmatpush1.msra.mxu0 0.0
        %7942 = vmatprep.subr.mxu0 0.0
        %7943 = vmatpush1.msra.mxu0 0.0
        %7944 = vmatprep.subr.mxu0 0.0
        %7945 = vmatpush1.msra.mxu0 0.0
        %7946 = vmatprep.subr.mxu0 0.0
        %7947 = vmatpush1.msra.mxu0 0.0
        %7948 = vmatprep.subr.mxu0 0.0
        %7949 = vmatpush1.msra.mxu0 0.0
        %7950 = vmatprep.subr.mxu0 0.0
        %7951 = vmatpush1.msra.mxu0 0.0
        %7952 = vmatprep.subr.mxu0 0.0
        %7953 = vmatpush1.msra.mxu0 0.0
        %7954 = vmatprep.subr.mxu0 0.0
        %7955 = vmatpush1.msra.mxu0 0.0
        %7956 = vmatprep.subr.mxu0 0.0
        %7957 = vmatpush1.msra.mxu0 0.0
        %7958 = vmatprep.subr.mxu0 0.0
        %7959 = vmatpush1.msra.mxu0 0.0
        %7960 = vmatprep.subr.mxu0 0.0
        %7961 = vmatpush1.msra.mxu0 0.0
        %7962 = vmatprep.subr.mxu0 0.0
        %7963 = vmatpush1.msra.mxu0 0.0
        %7964 = vmatprep.subr.mxu0 0.0
        %7965 = vmatpush1.msra.mxu0 0.0
        %7966 = vmatprep.subr.mxu0 0.0
        %7967 = vmatpush1.msra.mxu0 0.0
        %7968 = vmatprep.subr.mxu0 0.0
        %7969 = vmatpush1.msra.mxu0 0.0
        %7970 = vmatprep.subr.mxu0 0.0
        %7971 = vmatpush1.msra.mxu0 0.0
        %7972 = vmatprep.subr.mxu0 0.0
        %7973 = vmatpush1.msra.mxu0 0.0
        %7974 = vmatprep.subr.mxu0 0.0
        %7975 = vmatpush1.msra.mxu0 0.0
        %7976 = vmatprep.subr.mxu0 0.0
        %7977 = vmatpush1.msra.mxu0 0.0
        %7978 = vmatprep.subr.mxu0 0.0
        %7979 = vmatpush1.msra.mxu0 0.0
        %7980 = vmatprep.subr.mxu0 0.0
        %7981 = vmatpush1.msra.mxu0 0.0
        %7982 = vmatprep.subr.mxu0 0.0
        %7983 = vmatpush1.msra.mxu0 0.0
        %7984 = vmatprep.subr.mxu0 0.0
        %7985 = vmatpush1.msra.mxu0 0.0
        %7986 = vmatprep.subr.mxu0 0.0
        %7987 = vmatpush1.msra.mxu0 0.0
        %7988 = vmatprep.subr.mxu0 0.0
        %7989 = vmatpush1.msra.mxu0 0.0
        %7990 = vmatprep.subr.mxu0 0.0
        %7991 = vmatpush1.msra.mxu0 0.0
        %7992 = vmatprep.subr.mxu0 0.0
        %7993 = vmatpush1.msra.mxu0 0.0
        %7994 = vmatprep.subr.mxu0 0.0
        %7995 = vmatpush1.msra.mxu0 0.0
        %7996 = vmatprep.mubr.f32.mxu0 0.0
        %v7997 = vand.u32 %v7925, 4294901760
        %v7998 = vsub.f32 %v7925, %v7997
        %v7999 = vand.u32 %v7998, 4294901760
        %v8000 = vsub.f32 %v7998, %v7999
        %v8001 = vand.u32 %v8000, 4294901760
        %8002 = vmatmul.mubr.f32.gmra.mrb[0].mxu0 %v8001
        %v8003 = vpop.f32.mrb[0].mxu0
        %v8004 = vadd.f32 0.0, %v8003
        %v8005 = vpop.f32.mrb[0].mxu0
        %8006 = vmatprep.mubr.f32.mxu0 0.0
        %v8007 = vand.u32 %v7928, 4294901760
        %v8008 = vsub.f32 %v7928, %v8007
        %v8009 = vand.u32 %v8008, 4294901760
        %v8010 = vsub.f32 %v8008, %v8009
        %v8011 = vand.u32 %v8010, 4294901760
        %8012 = vmatmul.mubr.f32.gmra.mrb[0].mxu0 %v8011
        %v8013 = vpop.f32.mrb[0].mxu0
        %v8014 = vadd.f32 0.0, %v8013
        %v8015 = vpop.f32.mrb[0].mxu0
        %8016 = vdwg.mxu0
        %8017 = vmatprep.subr.mxu0 0.0
        %v8018 = vand.u32 %v287, 4294901760
        %v8019 = vsub.f32 %v287, %v8018
        %v8020 = vand.u32 %v8019, 4294901760
        %v8021 = vsub.f32 %v8019, %v8020
        %v8022 = vand.u32 %v8021, 4294901760
        %8023 = vmatpush1.msra.mxu0 %v8022
        %8024 = vmatprep.subr.mxu0 0.0
        %v8025 = vand.u32 %v288, 4294901760
        %v8026 = vsub.f32 %v288, %v8025
        %v8027 = vand.u32 %v8026, 4294901760
        %v8028 = vsub.f32 %v8026, %v8027
        %v8029 = vand.u32 %v8028, 4294901760
        %8030 = vmatpush1.msra.mxu0 %v8029
        %8031 = vmatprep.subr.mxu0 0.0
        %8032 = vmatpush1.msra.mxu0 0.0
        %8033 = vmatprep.subr.mxu0 0.0
        %8034 = vmatpush1.msra.mxu0 0.0
        %8035 = vmatprep.subr.mxu0 0.0
        %8036 = vmatpush1.msra.mxu0 0.0
        %8037 = vmatprep.subr.mxu0 0.0
        %8038 = vmatpush1.msra.mxu0 0.0
        %8039 = vmatprep.subr.mxu0 0.0
        %8040 = vmatpush1.msra.mxu0 0.0
        %8041 = vmatprep.subr.mxu0 0.0
        %8042 = vmatpush1.msra.mxu0 0.0
        %8043 = vmatprep.subr.mxu0 0.0
        %8044 = vmatpush1.msra.mxu0 0.0
        %8045 = vmatprep.subr.mxu0 0.0
        %8046 = vmatpush1.msra.mxu0 0.0
        %8047 = vmatprep.subr.mxu0 0.0
        %8048 = vmatpush1.msra.mxu0 0.0
        %8049 = vmatprep.subr.mxu0 0.0
        %8050 = vmatpush1.msra.mxu0 0.0
        %8051 = vmatprep.subr.mxu0 0.0
        %8052 = vmatpush1.msra.mxu0 0.0
        %8053 = vmatprep.subr.mxu0 0.0
        %8054 = vmatpush1.msra.mxu0 0.0
        %8055 = vmatprep.subr.mxu0 0.0
        %8056 = vmatpush1.msra.mxu0 0.0
        %8057 = vmatprep.subr.mxu0 0.0
        %8058 = vmatpush1.msra.mxu0 0.0
        %8059 = vmatprep.subr.mxu0 0.0
        %8060 = vmatpush1.msra.mxu0 0.0
        %8061 = vmatprep.subr.mxu0 0.0
        %8062 = vmatpush1.msra.mxu0 0.0
        %8063 = vmatprep.subr.mxu0 0.0
        %8064 = vmatpush1.msra.mxu0 0.0
        %8065 = vmatprep.subr.mxu0 0.0
        %8066 = vmatpush1.msra.mxu0 0.0
        %8067 = vmatprep.subr.mxu0 0.0
        %8068 = vmatpush1.msra.mxu0 0.0
        %8069 = vmatprep.subr.mxu0 0.0
        %8070 = vmatpush1.msra.mxu0 0.0
        %8071 = vmatprep.subr.mxu0 0.0
        %8072 = vmatpush1.msra.mxu0 0.0
        %8073 = vmatprep.subr.mxu0 0.0
        %8074 = vmatpush1.msra.mxu0 0.0
        %8075 = vmatprep.subr.mxu0 0.0
        %8076 = vmatpush1.msra.mxu0 0.0
        %8077 = vmatprep.subr.mxu0 0.0
        %8078 = vmatpush1.msra.mxu0 0.0
        %8079 = vmatprep.subr.mxu0 0.0
        %8080 = vmatpush1.msra.mxu0 0.0
        %8081 = vmatprep.subr.mxu0 0.0
        %8082 = vmatpush1.msra.mxu0 0.0
        %8083 = vmatprep.subr.mxu0 0.0
        %8084 = vmatpush1.msra.mxu0 0.0
        %8085 = vmatprep.subr.mxu0 0.0
        %8086 = vmatpush1.msra.mxu0 0.0
        %8087 = vmatprep.subr.mxu0 0.0
        %8088 = vmatpush1.msra.mxu0 0.0
        %8089 = vmatprep.subr.mxu0 0.0
        %8090 = vmatpush1.msra.mxu0 0.0
        %8091 = vmatprep.mubr.f32.mxu0 0.0
        %v8092 = vand.u32 %v7925, 4294901760
        %8093 = vmatmul.mubr.f32.gmra.mrb[0].mxu0 %v8092
        %v8094 = vpop.f32.mrb[0].mxu0
        %v8095 = vadd.f32 %v8004, %v8094
        %v8096 = vpop.f32.mrb[0].mxu0
        %8097 = vmatprep.mubr.f32.mxu0 0.0
        %v8098 = vand.u32 %v7928, 4294901760
        %8099 = vmatmul.mubr.f32.gmra.mrb[0].mxu0 %v8098
        %v8100 = vpop.f32.mrb[0].mxu0
        %v8101 = vadd.f32 %v8014, %v8100
        %v8102 = vpop.f32.mrb[0].mxu0
        %8103 = vdwg.mxu0
        %8104 = vmatprep.subr.mxu0 0.0
        %v8105 = vand.u32 %v287, 4294901760
        %v8106 = vsub.f32 %v287, %v8105
        %8107 = vmatpush1.msra.mxu0 %v8106
        %8108 = vmatprep.subr.mxu0 0.0
        %v8109 = vand.u32 %v288, 4294901760
        %v8110 = vsub.f32 %v288, %v8109
        %8111 = vmatpush1.msra.mxu0 %v8110
        %8112 = vmatprep.subr.mxu0 0.0
        %8113 = vmatpush1.msra.mxu0 0.0
        %8114 = vmatprep.subr.mxu0 0.0
        %8115 = vmatpush1.msra.mxu0 0.0
        %8116 = vmatprep.subr.mxu0 0.0
        %8117 = vmatpush1.msra.mxu0 0.0
        %8118 = vmatprep.subr.mxu0 0.0
        %8119 = vmatpush1.msra.mxu0 0.0
        %8120 = vmatprep.subr.mxu0 0.0
        %8121 = vmatpush1.msra.mxu0 0.0
        %8122 = vmatprep.subr.mxu0 0.0
        %8123 = vmatpush1.msra.mxu0 0.0
        %8124 = vmatprep.subr.mxu0 0.0
        %8125 = vmatpush1.msra.mxu0 0.0
        %8126 = vmatprep.subr.mxu0 0.0
        %8127 = vmatpush1.msra.mxu0 0.0
        %8128 = vmatprep.subr.mxu0 0.0
        %8129 = vmatpush1.msra.mxu0 0.0
        %8130 = vmatprep.subr.mxu0 0.0
        %8131 = vmatpush1.msra.mxu0 0.0
        %8132 = vmatprep.subr.mxu0 0.0
        %8133 = vmatpush1.msra.mxu0 0.0
        %8134 = vmatprep.subr.mxu0 0.0
        %8135 = vmatpush1.msra.mxu0 0.0
        %8136 = vmatprep.subr.mxu0 0.0
        %8137 = vmatpush1.msra.mxu0 0.0
        %8138 = vmatprep.subr.mxu0 0.0
        %8139 = vmatpush1.msra.mxu0 0.0
        %8140 = vmatprep.subr.mxu0 0.0
        %8141 = vmatpush1.msra.mxu0 0.0
        %8142 = vmatprep.subr.mxu0 0.0
        %8143 = vmatpush1.msra.mxu0 0.0
        %8144 = vmatprep.subr.mxu0 0.0
        %8145 = vmatpush1.msra.mxu0 0.0
        %8146 = vmatprep.subr.mxu0 0.0
        %8147 = vmatpush1.msra.mxu0 0.0
        %8148 = vmatprep.subr.mxu0 0.0
        %8149 = vmatpush1.msra.mxu0 0.0
        %8150 = vmatprep.subr.mxu0 0.0
        %8151 = vmatpush1.msra.mxu0 0.0
        %8152 = vmatprep.subr.mxu0 0.0
        %8153 = vmatpush1.msra.mxu0 0.0
        %8154 = vmatprep.subr.mxu0 0.0
        %8155 = vmatpush1.msra.mxu0 0.0
        %8156 = vmatprep.subr.mxu0 0.0
        %8157 = vmatpush1.msra.mxu0 0.0
        %8158 = vmatprep.subr.mxu0 0.0
        %8159 = vmatpush1.msra.mxu0 0.0
        %8160 = vmatprep.subr.mxu0 0.0
        %8161 = vmatpush1.msra.mxu0 0.0
        %8162 = vmatprep.subr.mxu0 0.0
        %8163 = vmatpush1.msra.mxu0 0.0
        %8164 = vmatprep.subr.mxu0 0.0
        %8165 = vmatpush1.msra.mxu0 0.0
        %8166 = vmatprep.subr.mxu0 0.0
        %8167 = vmatpush1.msra.mxu0 0.0
        %8168 = vmatprep.subr.mxu0 0.0
        %8169 = vmatpush1.msra.mxu0 0.0
        %8170 = vmatprep.subr.mxu0 0.0
        %8171 = vmatpush1.msra.mxu0 0.0
        %8172 = vmatprep.mubr.f32.mxu0 0.0
        %v8173 = vand.u32 %v7925, 4294901760
        %v8174 = vsub.f32 %v7925, %v8173
        %8175 = vmatmul.mubr.f32.gmra.mrb[0].mxu0 %v8174
        %v8176 = vpop.f32.mrb[0].mxu0
        %v8177 = vadd.f32 %v8095, %v8176
        %v8178 = vpop.f32.mrb[0].mxu0
        %8179 = vmatprep.mubr.f32.mxu0 0.0
        %v8180 = vand.u32 %v7928, 4294901760
        %v8181 = vsub.f32 %v7928, %v8180
        %8182 = vmatmul.mubr.f32.gmra.mrb[0].mxu0 %v8181
        %v8183 = vpop.f32.mrb[0].mxu0
        %v8184 = vadd.f32 %v8101, %v8183
        %v8185 = vpop.f32.mrb[0].mxu0
        %8186 = vdwg.mxu0
        %8187 = vmatprep.subr.mxu0 0.0
        %v8188 = vand.u32 %v287, 4294901760
        %8189 = vmatpush1.msra.mxu0 %v8188
        %8190 = vmatprep.subr.mxu0 0.0
        %v8191 = vand.u32 %v288, 4294901760
        %8192 = vmatpush1.msra.mxu0 %v8191
        %8193 = vmatprep.subr.mxu0 0.0
        %8194 = vmatpush1.msra.mxu0 0.0
        %8195 = vmatprep.subr.mxu0 0.0
        %8196 = vmatpush1.msra.mxu0 0.0
        %8197 = vmatprep.subr.mxu0 0.0
        %8198 = vmatpush1.msra.mxu0 0.0
        %8199 = vmatprep.subr.mxu0 0.0
        %8200 = vmatpush1.msra.mxu0 0.0
        %8201 = vmatprep.subr.mxu0 0.0
        %8202 = vmatpush1.msra.mxu0 0.0
        %8203 = vmatprep.subr.mxu0 0.0
        %8204 = vmatpush1.msra.mxu0 0.0
        %8205 = vmatprep.subr.mxu0 0.0
        %8206 = vmatpush1.msra.mxu0 0.0
        %8207 = vmatprep.subr.mxu0 0.0
        %8208 = vmatpush1.msra.mxu0 0.0
        %8209 = vmatprep.subr.mxu0 0.0
        %8210 = vmatpush1.msra.mxu0 0.0
        %8211 = vmatprep.subr.mxu0 0.0
        %8212 = vmatpush1.msra.mxu0 0.0
        %8213 = vmatprep.subr.mxu0 0.0
        %8214 = vmatpush1.msra.mxu0 0.0
        %8215 = vmatprep.subr.mxu0 0.0
        %8216 = vmatpush1.msra.mxu0 0.0
        %8217 = vmatprep.subr.mxu0 0.0
        %8218 = vmatpush1.msra.mxu0 0.0
        %8219 = vmatprep.subr.mxu0 0.0
        %8220 = vmatpush1.msra.mxu0 0.0
        %8221 = vmatprep.subr.mxu0 0.0
        %8222 = vmatpush1.msra.mxu0 0.0
        %8223 = vmatprep.subr.mxu0 0.0
        %8224 = vmatpush1.msra.mxu0 0.0
        %8225 = vmatprep.subr.mxu0 0.0
        %8226 = vmatpush1.msra.mxu0 0.0
        %8227 = vmatprep.subr.mxu0 0.0
        %8228 = vmatpush1.msra.mxu0 0.0
        %8229 = vmatprep.subr.mxu0 0.0
        %8230 = vmatpush1.msra.mxu0 0.0
        %8231 = vmatprep.subr.mxu0 0.0
        %8232 = vmatpush1.msra.mxu0 0.0
        %8233 = vmatprep.subr.mxu0 0.0
        %8234 = vmatpush1.msra.mxu0 0.0
        %8235 = vmatprep.subr.mxu0 0.0
        %8236 = vmatpush1.msra.mxu0 0.0
        %8237 = vmatprep.subr.mxu0 0.0
        %8238 = vmatpush1.msra.mxu0 0.0
        %8239 = vmatprep.subr.mxu0 0.0
        %8240 = vmatpush1.msra.mxu0 0.0
        %8241 = vmatprep.subr.mxu0 0.0
        %8242 = vmatpush1.msra.mxu0 0.0
        %8243 = vmatprep.subr.mxu0 0.0
        %8244 = vmatpush1.msra.mxu0 0.0
        %8245 = vmatprep.subr.mxu0 0.0
        %8246 = vmatpush1.msra.mxu0 0.0
        %8247 = vmatprep.subr.mxu0 0.0
        %8248 = vmatpush1.msra.mxu0 0.0
        %8249 = vmatprep.subr.mxu0 0.0
        %8250 = vmatpush1.msra.mxu0 0.0
        %8251 = vmatprep.subr.mxu0 0.0
        %8252 = vmatpush1.msra.mxu0 0.0
        %8253 = vmatprep.mubr.f32.mxu0 0.0
        %v8254 = vand.u32 %v7925, 4294901760
        %v8255 = vsub.f32 %v7925, %v8254
        %v8256 = vand.u32 %v8255, 4294901760
        %8257 = vmatmul.mubr.f32.gmra.mrb[0].mxu0 %v8256
        %v8258 = vpop.f32.mrb[0].mxu0
        %v8259 = vadd.f32 %v8177, %v8258
        %v8260 = vpop.f32.mrb[0].mxu0
        %8261 = vmatprep.mubr.f32.mxu0 0.0
        %v8262 = vand.u32 %v7928, 4294901760
        %v8263 = vsub.f32 %v7928, %v8262
        %v8264 = vand.u32 %v8263, 4294901760
        %8265 = vmatmul.mubr.f32.gmra.mrb[0].mxu0 %v8264
        %v8266 = vpop.f32.mrb[0].mxu0
        %v8267 = vadd.f32 %v8184, %v8266
        %v8268 = vpop.f32.mrb[0].mxu0
        %8269 = vdwg.mxu0
        %8270 = vmatprep.subr.mxu0 0.0
        %v8271 = vand.u32 %v287, 4294901760
        %v8272 = vsub.f32 %v287, %v8271
        %v8273 = vand.u32 %v8272, 4294901760
        %8274 = vmatpush1.msra.mxu0 %v8273
        %8275 = vmatprep.subr.mxu0 0.0
        %v8276 = vand.u32 %v288, 4294901760
        %v8277 = vsub.f32 %v288, %v8276
        %v8278 = vand.u32 %v8277, 4294901760
        %8279 = vmatpush1.msra.mxu0 %v8278
        %8280 = vmatprep.subr.mxu0 0.0
        %8281 = vmatpush1.msra.mxu0 0.0
        %8282 = vmatprep.subr.mxu0 0.0
        %8283 = vmatpush1.msra.mxu0 0.0
        %8284 = vmatprep.subr.mxu0 0.0
        %8285 = vmatpush1.msra.mxu0 0.0
        %8286 = vmatprep.subr.mxu0 0.0
        %8287 = vmatpush1.msra.mxu0 0.0
        %8288 = vmatprep.subr.mxu0 0.0
        %8289 = vmatpush1.msra.mxu0 0.0
        %8290 = vmatprep.subr.mxu0 0.0
        %8291 = vmatpush1.msra.mxu0 0.0
        %8292 = vmatprep.subr.mxu0 0.0
        %8293 = vmatpush1.msra.mxu0 0.0
        %8294 = vmatprep.subr.mxu0 0.0
        %8295 = vmatpush1.msra.mxu0 0.0
        %8296 = vmatprep.subr.mxu0 0.0
        %8297 = vmatpush1.msra.mxu0 0.0
        %8298 = vmatprep.subr.mxu0 0.0
        %8299 = vmatpush1.msra.mxu0 0.0
        %8300 = vmatprep.subr.mxu0 0.0
        %8301 = vmatpush1.msra.mxu0 0.0
        %8302 = vmatprep.subr.mxu0 0.0
        %8303 = vmatpush1.msra.mxu0 0.0
        %8304 = vmatprep.subr.mxu0 0.0
        %8305 = vmatpush1.msra.mxu0 0.0
        %8306 = vmatprep.subr.mxu0 0.0
        %8307 = vmatpush1.msra.mxu0 0.0
        %8308 = vmatprep.subr.mxu0 0.0
        %8309 = vmatpush1.msra.mxu0 0.0
        %8310 = vmatprep.subr.mxu0 0.0
        %8311 = vmatpush1.msra.mxu0 0.0
        %8312 = vmatprep.subr.mxu0 0.0
        %8313 = vmatpush1.msra.mxu0 0.0
        %8314 = vmatprep.subr.mxu0 0.0
        %8315 = vmatpush1.msra.mxu0 0.0
        %8316 = vmatprep.subr.mxu0 0.0
        %8317 = vmatpush1.msra.mxu0 0.0
        %8318 = vmatprep.subr.mxu0 0.0
        %8319 = vmatpush1.msra.mxu0 0.0
        %8320 = vmatprep.subr.mxu0 0.0
        %8321 = vmatpush1.msra.mxu0 0.0
        %8322 = vmatprep.subr.mxu0 0.0
        %8323 = vmatpush1.msra.mxu0 0.0
        %8324 = vmatprep.subr.mxu0 0.0
        %8325 = vmatpush1.msra.mxu0 0.0
        %8326 = vmatprep.subr.mxu0 0.0
        %8327 = vmatpush1.msra.mxu0 0.0
        %8328 = vmatprep.subr.mxu0 0.0
        %8329 = vmatpush1.msra.mxu0 0.0
        %8330 = vmatprep.subr.mxu0 0.0
        %8331 = vmatpush1.msra.mxu0 0.0
        %8332 = vmatprep.subr.mxu0 0.0
        %8333 = vmatpush1.msra.mxu0 0.0
        %8334 = vmatprep.subr.mxu0 0.0
        %8335 = vmatpush1.msra.mxu0 0.0
        %8336 = vmatprep.subr.mxu0 0.0
        %8337 = vmatpush1.msra.mxu0 0.0
        %8338 = vmatprep.subr.mxu0 0.0
        %8339 = vmatpush1.msra.mxu0 0.0
        %8340 = vmatprep.mubr.f32.mxu0 0.0
        %v8341 = vand.u32 %v7925, 4294901760
        %8342 = vmatmul.mubr.f32.gmra.mrb[0].mxu0 %v8341
        %v8343 = vpop.f32.mrb[0].mxu0
        %v8344 = vadd.f32 %v8259, %v8343
        %v8345 = vpop.f32.mrb[0].mxu0
        %8346 = vmatprep.mubr.f32.mxu0 0.0
        %v8347 = vand.u32 %v7928, 4294901760
        %8348 = vmatmul.mubr.f32.gmra.mrb[0].mxu0 %v8347
        %v8349 = vpop.f32.mrb[0].mxu0
        %v8350 = vadd.f32 %v8267, %v8349
        %v8351 = vpop.f32.mrb[0].mxu0
        %8352 = vdwg.mxu0
        %8353 = vmatprep.subr.mxu0 0.0
        %v8354 = vand.u32 %v287, 4294901760
        %8355 = vmatpush1.msra.mxu0 %v8354
        %8356 = vmatprep.subr.mxu0 0.0
        %v8357 = vand.u32 %v288, 4294901760
        %8358 = vmatpush1.msra.mxu0 %v8357
        %8359 = vmatprep.subr.mxu0 0.0
        %8360 = vmatpush1.msra.mxu0 0.0
        %8361 = vmatprep.subr.mxu0 0.0
        %8362 = vmatpush1.msra.mxu0 0.0
        %8363 = vmatprep.subr.mxu0 0.0
        %8364 = vmatpush1.msra.mxu0 0.0
        %8365 = vmatprep.subr.mxu0 0.0
        %8366 = vmatpush1.msra.mxu0 0.0
        %8367 = vmatprep.subr.mxu0 0.0
        %8368 = vmatpush1.msra.mxu0 0.0
        %8369 = vmatprep.subr.mxu0 0.0
        %8370 = vmatpush1.msra.mxu0 0.0
        %8371 = vmatprep.subr.mxu0 0.0
        %8372 = vmatpush1.msra.mxu0 0.0
        %8373 = vmatprep.subr.mxu0 0.0
        %8374 = vmatpush1.msra.mxu0 0.0
        %8375 = vmatprep.subr.mxu0 0.0
        %8376 = vmatpush1.msra.mxu0 0.0
        %8377 = vmatprep.subr.mxu0 0.0
        %8378 = vmatpush1.msra.mxu0 0.0
        %8379 = vmatprep.subr.mxu0 0.0
        %8380 = vmatpush1.msra.mxu0 0.0
        %8381 = vmatprep.subr.mxu0 0.0
        %8382 = vmatpush1.msra.mxu0 0.0
        %8383 = vmatprep.subr.mxu0 0.0
        %8384 = vmatpush1.msra.mxu0 0.0
        %8385 = vmatprep.subr.mxu0 0.0
        %8386 = vmatpush1.msra.mxu0 0.0
        %8387 = vmatprep.subr.mxu0 0.0
        %8388 = vmatpush1.msra.mxu0 0.0
        %8389 = vmatprep.subr.mxu0 0.0
        %8390 = vmatpush1.msra.mxu0 0.0
        %8391 = vmatprep.subr.mxu0 0.0
        %8392 = vmatpush1.msra.mxu0 0.0
        %8393 = vmatprep.subr.mxu0 0.0
        %8394 = vmatpush1.msra.mxu0 0.0
        %8395 = vmatprep.subr.mxu0 0.0
        %8396 = vmatpush1.msra.mxu0 0.0
        %8397 = vmatprep.subr.mxu0 0.0
        %8398 = vmatpush1.msra.mxu0 0.0
        %8399 = vmatprep.subr.mxu0 0.0
        %8400 = vmatpush1.msra.mxu0 0.0
        %8401 = vmatprep.subr.mxu0 0.0
        %8402 = vmatpush1.msra.mxu0 0.0
        %8403 = vmatprep.subr.mxu0 0.0
        %8404 = vmatpush1.msra.mxu0 0.0
        %8405 = vmatprep.subr.mxu0 0.0
        %8406 = vmatpush1.msra.mxu0 0.0
        %8407 = vmatprep.subr.mxu0 0.0
        %8408 = vmatpush1.msra.mxu0 0.0
        %8409 = vmatprep.subr.mxu0 0.0
        %8410 = vmatpush1.msra.mxu0 0.0
        %8411 = vmatprep.subr.mxu0 0.0
        %8412 = vmatpush1.msra.mxu0 0.0
        %8413 = vmatprep.subr.mxu0 0.0
        %8414 = vmatpush1.msra.mxu0 0.0
        %8415 = vmatprep.subr.mxu0 0.0
        %8416 = vmatpush1.msra.mxu0 0.0
        %8417 = vmatprep.subr.mxu0 0.0
        %8418 = vmatpush1.msra.mxu0 0.0
        %8419 = vmatprep.mubr.f32.mxu0 0.0
        %v8420 = vand.u32 %v7925, 4294901760
        %8421 = vmatmul.mubr.f32.gmra.mrb[0].mxu0 %v8420
        %v8422 = vpop.f32.mrb[0].mxu0
        %v8423 = vadd.f32 %v8344, %v8422
        %v8424 = vpop.f32.mrb[0].mxu0
        %8425 = vmatprep.mubr.f32.mxu0 0.0
        %v8426 = vand.u32 %v7928, 4294901760
        %8427 = vmatmul.mubr.f32.gmra.mrb[0].mxu0 %v8426
        %v8428 = vpop.f32.mrb[0].mxu0
        %v8429 = vadd.f32 %v8350, %v8428
        %v8430 = vpop.f32.mrb[0].mxu0
        %8431 = vdwg.mxu0
        %v8432 = vmul.f32 %v5398, %v5398
        %v8433 = vmul.f32 %v5399, %v5399
        %8434 = vmatprep.subr.mxu0 0.0
        %v8435 = vand.u32 %v8432, 4294901760
        %8436 = vmatpush1.msra.mxu0 %v8435
        %8437 = vmatprep.subr.mxu0 0.0
        %v8438 = vand.u32 %v8433, 4294901760
        %8439 = vmatpush1.msra.mxu0 %v8438
        %8440 = vmatprep.subr.mxu0 0.0
        %8441 = vmatpush1.msra.mxu0 0.0
        %8442 = vmatprep.subr.mxu0 0.0
        %8443 = vmatpush1.msra.mxu0 0.0
        %8444 = vmatprep.subr.mxu0 0.0
        %8445 = vmatpush1.msra.mxu0 0.0
        %8446 = vmatprep.subr.mxu0 0.0
        %8447 = vmatpush1.msra.mxu0 0.0
        %8448 = vmatprep.subr.mxu0 0.0
        %8449 = vmatpush1.msra.mxu0 0.0
        %8450 = vmatprep.subr.mxu0 0.0
        %8451 = vmatpush1.msra.mxu0 0.0
        %8452 = vmatprep.subr.mxu0 0.0
        %8453 = vmatpush1.msra.mxu0 0.0
        %8454 = vmatprep.subr.mxu0 0.0
        %8455 = vmatpush1.msra.mxu0 0.0
        %8456 = vmatprep.subr.mxu0 0.0
        %8457 = vmatpush1.msra.mxu0 0.0
        %8458 = vmatprep.subr.mxu0 0.0
        %8459 = vmatpush1.msra.mxu0 0.0
        %8460 = vmatprep.subr.mxu0 0.0
        %8461 = vmatpush1.msra.mxu0 0.0
        %8462 = vmatprep.subr.mxu0 0.0
        %8463 = vmatpush1.msra.mxu0 0.0
        %8464 = vmatprep.subr.mxu0 0.0
        %8465 = vmatpush1.msra.mxu0 0.0
        %8466 = vmatprep.subr.mxu0 0.0
        %8467 = vmatpush1.msra.mxu0 0.0
        %8468 = vmatprep.subr.mxu0 0.0
        %8469 = vmatpush1.msra.mxu0 0.0
        %8470 = vmatprep.subr.mxu0 0.0
        %8471 = vmatpush1.msra.mxu0 0.0
        %8472 = vmatprep.subr.mxu0 0.0
        %8473 = vmatpush1.msra.mxu0 0.0
        %8474 = vmatprep.subr.mxu0 0.0
        %8475 = vmatpush1.msra.mxu0 0.0
        %8476 = vmatprep.subr.mxu0 0.0
        %8477 = vmatpush1.msra.mxu0 0.0
        %8478 = vmatprep.subr.mxu0 0.0
        %8479 = vmatpush1.msra.mxu0 0.0
        %8480 = vmatprep.subr.mxu0 0.0
        %8481 = vmatpush1.msra.mxu0 0.0
        %8482 = vmatprep.subr.mxu0 0.0
        %8483 = vmatpush1.msra.mxu0 0.0
        %8484 = vmatprep.subr.mxu0 0.0
        %8485 = vmatpush1.msra.mxu0 0.0
        %8486 = vmatprep.subr.mxu0 0.0
        %8487 = vmatpush1.msra.mxu0 0.0
        %8488 = vmatprep.subr.mxu0 0.0
        %8489 = vmatpush1.msra.mxu0 0.0
        %8490 = vmatprep.subr.mxu0 0.0
        %8491 = vmatpush1.msra.mxu0 0.0
        %8492 = vmatprep.subr.mxu0 0.0
        %8493 = vmatpush1.msra.mxu0 0.0
        %8494 = vmatprep.subr.mxu0 0.0
        %8495 = vmatpush1.msra.mxu0 0.0
        %8496 = vmatprep.subr.mxu0 0.0
        %8497 = vmatpush1.msra.mxu0 0.0
        %8498 = vmatprep.subr.mxu0 0.0
        %8499 = vmatpush1.msra.mxu0 0.0
        %8500 = vmatprep.mubr.f32.mxu0 0.0
        %v8501 = vand.u32 %v295, 4294901760
        %v8502 = vsub.f32 %v295, %v8501
        %v8503 = vand.u32 %v8502, 4294901760
        %v8504 = vsub.f32 %v8502, %v8503
        %v8505 = vand.u32 %v8504, 4294901760
        %8506 = vmatmul.mubr.f32.gmra.mrb[0].mxu0 %v8505
        %v8507 = vpop.f32.mrb[0].mxu0
        %v8508 = vadd.f32 0.0, %v8507
        %v8509 = vpop.f32.mrb[0].mxu0
        %8510 = vmatprep.mubr.f32.mxu0 0.0
        %v8511 = vand.u32 %v298, 4294901760
        %v8512 = vsub.f32 %v298, %v8511
        %v8513 = vand.u32 %v8512, 4294901760
        %v8514 = vsub.f32 %v8512, %v8513
        %v8515 = vand.u32 %v8514, 4294901760
        %8516 = vmatmul.mubr.f32.gmra.mrb[0].mxu0 %v8515
        %v8517 = vpop.f32.mrb[0].mxu0
        %v8518 = vadd.f32 0.0, %v8517
        %v8519 = vpop.f32.mrb[0].mxu0
        %8520 = vdwg.mxu0
        %8521 = vmatprep.subr.mxu0 0.0
        %v8522 = vand.u32 %v8432, 4294901760
        %v8523 = vsub.f32 %v8432, %v8522
        %v8524 = vand.u32 %v8523, 4294901760
        %v8525 = vsub.f32 %v8523, %v8524
        %v8526 = vand.u32 %v8525, 4294901760
        %8527 = vmatpush1.msra.mxu0 %v8526
        %8528 = vmatprep.subr.mxu0 0.0
        %v8529 = vand.u32 %v8433, 4294901760
        %v8530 = vsub.f32 %v8433, %v8529
        %v8531 = vand.u32 %v8530, 4294901760
        %v8532 = vsub.f32 %v8530, %v8531
        %v8533 = vand.u32 %v8532, 4294901760
        %8534 = vmatpush1.msra.mxu0 %v8533
        %8535 = vmatprep.subr.mxu0 0.0
        %8536 = vmatpush1.msra.mxu0 0.0
        %8537 = vmatprep.subr.mxu0 0.0
        %8538 = vmatpush1.msra.mxu0 0.0
        %8539 = vmatprep.subr.mxu0 0.0
        %8540 = vmatpush1.msra.mxu0 0.0
        %8541 = vmatprep.subr.mxu0 0.0
        %8542 = vmatpush1.msra.mxu0 0.0
        %8543 = vmatprep.subr.mxu0 0.0
        %8544 = vmatpush1.msra.mxu0 0.0
        %8545 = vmatprep.subr.mxu0 0.0
        %8546 = vmatpush1.msra.mxu0 0.0
        %8547 = vmatprep.subr.mxu0 0.0
        %8548 = vmatpush1.msra.mxu0 0.0
        %8549 = vmatprep.subr.mxu0 0.0
        %8550 = vmatpush1.msra.mxu0 0.0
        %8551 = vmatprep.subr.mxu0 0.0
        %8552 = vmatpush1.msra.mxu0 0.0
        %8553 = vmatprep.subr.mxu0 0.0
        %8554 = vmatpush1.msra.mxu0 0.0
        %8555 = vmatprep.subr.mxu0 0.0
        %8556 = vmatpush1.msra.mxu0 0.0
        %8557 = vmatprep.subr.mxu0 0.0
        %8558 = vmatpush1.msra.mxu0 0.0
        %8559 = vmatprep.subr.mxu0 0.0
        %8560 = vmatpush1.msra.mxu0 0.0
        %8561 = vmatprep.subr.mxu0 0.0
        %8562 = vmatpush1.msra.mxu0 0.0
        %8563 = vmatprep.subr.mxu0 0.0
        %8564 = vmatpush1.msra.mxu0 0.0
        %8565 = vmatprep.subr.mxu0 0.0
        %8566 = vmatpush1.msra.mxu0 0.0
        %8567 = vmatprep.subr.mxu0 0.0
        %8568 = vmatpush1.msra.mxu0 0.0
        %8569 = vmatprep.subr.mxu0 0.0
        %8570 = vmatpush1.msra.mxu0 0.0
        %8571 = vmatprep.subr.mxu0 0.0
        %8572 = vmatpush1.msra.mxu0 0.0
        %8573 = vmatprep.subr.mxu0 0.0
        %8574 = vmatpush1.msra.mxu0 0.0
        %8575 = vmatprep.subr.mxu0 0.0
        %8576 = vmatpush1.msra.mxu0 0.0
        %8577 = vmatprep.subr.mxu0 0.0
        %8578 = vmatpush1.msra.mxu0 0.0
        %8579 = vmatprep.subr.mxu0 0.0
        %8580 = vmatpush1.msra.mxu0 0.0
        %8581 = vmatprep.subr.mxu0 0.0
        %8582 = vmatpush1.msra.mxu0 0.0
        %8583 = vmatprep.subr.mxu0 0.0
        %8584 = vmatpush1.msra.mxu0 0.0
        %8585 = vmatprep.subr.mxu0 0.0
        %8586 = vmatpush1.msra.mxu0 0.0
        %8587 = vmatprep.subr.mxu0 0.0
        %8588 = vmatpush1.msra.mxu0 0.0
        %8589 = vmatprep.subr.mxu0 0.0
        %8590 = vmatpush1.msra.mxu0 0.0
        %8591 = vmatprep.subr.mxu0 0.0
        %8592 = vmatpush1.msra.mxu0 0.0
        %8593 = vmatprep.subr.mxu0 0.0
        %8594 = vmatpush1.msra.mxu0 0.0
        %8595 = vmatprep.mubr.f32.mxu0 0.0
        %v8596 = vand.u32 %v295, 4294901760
        %8597 = vmatmul.mubr.f32.gmra.mrb[0].mxu0 %v8596
        %v8598 = vpop.f32.mrb[0].mxu0
        %v8599 = vadd.f32 %v8508, %v8598
        %v8600 = vpop.f32.mrb[0].mxu0
        %8601 = vmatprep.mubr.f32.mxu0 0.0
        %v8602 = vand.u32 %v298, 4294901760
        %8603 = vmatmul.mubr.f32.gmra.mrb[0].mxu0 %v8602
        %v8604 = vpop.f32.mrb[0].mxu0
        %v8605 = vadd.f32 %v8518, %v8604
        %v8606 = vpop.f32.mrb[0].mxu0
        %8607 = vdwg.mxu0
        %8608 = vmatprep.subr.mxu0 0.0
        %v8609 = vand.u32 %v8432, 4294901760
        %v8610 = vsub.f32 %v8432, %v8609
        %8611 = vmatpush1.msra.mxu0 %v8610
        %8612 = vmatprep.subr.mxu0 0.0
        %v8613 = vand.u32 %v8433, 4294901760
        %v8614 = vsub.f32 %v8433, %v8613
        %8615 = vmatpush1.msra.mxu0 %v8614
        %8616 = vmatprep.subr.mxu0 0.0
        %8617 = vmatpush1.msra.mxu0 0.0
        %8618 = vmatprep.subr.mxu0 0.0
        %8619 = vmatpush1.msra.mxu0 0.0
        %8620 = vmatprep.subr.mxu0 0.0
        %8621 = vmatpush1.msra.mxu0 0.0
        %8622 = vmatprep.subr.mxu0 0.0
        %8623 = vmatpush1.msra.mxu0 0.0
        %8624 = vmatprep.subr.mxu0 0.0
        %8625 = vmatpush1.msra.mxu0 0.0
        %8626 = vmatprep.subr.mxu0 0.0
        %8627 = vmatpush1.msra.mxu0 0.0
        %8628 = vmatprep.subr.mxu0 0.0
        %8629 = vmatpush1.msra.mxu0 0.0
        %8630 = vmatprep.subr.mxu0 0.0
        %8631 = vmatpush1.msra.mxu0 0.0
        %8632 = vmatprep.subr.mxu0 0.0
        %8633 = vmatpush1.msra.mxu0 0.0
        %8634 = vmatprep.subr.mxu0 0.0
        %8635 = vmatpush1.msra.mxu0 0.0
        %8636 = vmatprep.subr.mxu0 0.0
        %8637 = vmatpush1.msra.mxu0 0.0
        %8638 = vmatprep.subr.mxu0 0.0
        %8639 = vmatpush1.msra.mxu0 0.0
        %8640 = vmatprep.subr.mxu0 0.0
        %8641 = vmatpush1.msra.mxu0 0.0
        %8642 = vmatprep.subr.mxu0 0.0
        %8643 = vmatpush1.msra.mxu0 0.0
        %8644 = vmatprep.subr.mxu0 0.0
        %8645 = vmatpush1.msra.mxu0 0.0
        %8646 = vmatprep.subr.mxu0 0.0
        %8647 = vmatpush1.msra.mxu0 0.0
        %8648 = vmatprep.subr.mxu0 0.0
        %8649 = vmatpush1.msra.mxu0 0.0
        %8650 = vmatprep.subr.mxu0 0.0
        %8651 = vmatpush1.msra.mxu0 0.0
        %8652 = vmatprep.subr.mxu0 0.0
        %8653 = vmatpush1.msra.mxu0 0.0
        %8654 = vmatprep.subr.mxu0 0.0
        %8655 = vmatpush1.msra.mxu0 0.0
        %8656 = vmatprep.subr.mxu0 0.0
        %8657 = vmatpush1.msra.mxu0 0.0
        %8658 = vmatprep.subr.mxu0 0.0
        %8659 = vmatpush1.msra.mxu0 0.0
        %8660 = vmatprep.subr.mxu0 0.0
        %8661 = vmatpush1.msra.mxu0 0.0
        %8662 = vmatprep.subr.mxu0 0.0
        %8663 = vmatpush1.msra.mxu0 0.0
        %8664 = vmatprep.subr.mxu0 0.0
        %8665 = vmatpush1.msra.mxu0 0.0
        %8666 = vmatprep.subr.mxu0 0.0
        %8667 = vmatpush1.msra.mxu0 0.0
        %8668 = vmatprep.subr.mxu0 0.0
        %8669 = vmatpush1.msra.mxu0 0.0
        %8670 = vmatprep.subr.mxu0 0.0
        %8671 = vmatpush1.msra.mxu0 0.0
        %8672 = vmatprep.subr.mxu0 0.0
        %8673 = vmatpush1.msra.mxu0 0.0
        %8674 = vmatprep.subr.mxu0 0.0
        %8675 = vmatpush1.msra.mxu0 0.0
        %8676 = vmatprep.mubr.f32.mxu0 0.0
        %v8677 = vand.u32 %v295, 4294901760
        %v8678 = vsub.f32 %v295, %v8677
        %8679 = vmatmul.mubr.f32.gmra.mrb[0].mxu0 %v8678
        %v8680 = vpop.f32.mrb[0].mxu0
        %v8681 = vadd.f32 %v8599, %v8680
        %v8682 = vpop.f32.mrb[0].mxu0
        %8683 = vmatprep.mubr.f32.mxu0 0.0
        %v8684 = vand.u32 %v298, 4294901760
        %v8685 = vsub.f32 %v298, %v8684
        %8686 = vmatmul.mubr.f32.gmra.mrb[0].mxu0 %v8685
        %v8687 = vpop.f32.mrb[0].mxu0
        %v8688 = vadd.f32 %v8605, %v8687
        %v8689 = vpop.f32.mrb[0].mxu0
        %8690 = vdwg.mxu0
        %8691 = vmatprep.subr.mxu0 0.0
        %v8692 = vand.u32 %v8432, 4294901760
        %8693 = vmatpush1.msra.mxu0 %v8692
        %8694 = vmatprep.subr.mxu0 0.0
        %v8695 = vand.u32 %v8433, 4294901760
        %8696 = vmatpush1.msra.mxu0 %v8695
        %8697 = vmatprep.subr.mxu0 0.0
        %8698 = vmatpush1.msra.mxu0 0.0
        %8699 = vmatprep.subr.mxu0 0.0
        %8700 = vmatpush1.msra.mxu0 0.0
        %8701 = vmatprep.subr.mxu0 0.0
        %8702 = vmatpush1.msra.mxu0 0.0
        %8703 = vmatprep.subr.mxu0 0.0
        %8704 = vmatpush1.msra.mxu0 0.0
        %8705 = vmatprep.subr.mxu0 0.0
        %8706 = vmatpush1.msra.mxu0 0.0
        %8707 = vmatprep.subr.mxu0 0.0
        %8708 = vmatpush1.msra.mxu0 0.0
        %8709 = vmatprep.subr.mxu0 0.0
        %8710 = vmatpush1.msra.mxu0 0.0
        %8711 = vmatprep.subr.mxu0 0.0
        %8712 = vmatpush1.msra.mxu0 0.0
        %8713 = vmatprep.subr.mxu0 0.0
        %8714 = vmatpush1.msra.mxu0 0.0
        %8715 = vmatprep.subr.mxu0 0.0
        %8716 = vmatpush1.msra.mxu0 0.0
        %8717 = vmatprep.subr.mxu0 0.0
        %8718 = vmatpush1.msra.mxu0 0.0
        %8719 = vmatprep.subr.mxu0 0.0
        %8720 = vmatpush1.msra.mxu0 0.0
        %8721 = vmatprep.subr.mxu0 0.0
        %8722 = vmatpush1.msra.mxu0 0.0
        %8723 = vmatprep.subr.mxu0 0.0
        %8724 = vmatpush1.msra.mxu0 0.0
        %8725 = vmatprep.subr.mxu0 0.0
        %8726 = vmatpush1.msra.mxu0 0.0
        %8727 = vmatprep.subr.mxu0 0.0
        %8728 = vmatpush1.msra.mxu0 0.0
        %8729 = vmatprep.subr.mxu0 0.0
        %8730 = vmatpush1.msra.mxu0 0.0
        %8731 = vmatprep.subr.mxu0 0.0
        %8732 = vmatpush1.msra.mxu0 0.0
        %8733 = vmatprep.subr.mxu0 0.0
        %8734 = vmatpush1.msra.mxu0 0.0
        %8735 = vmatprep.subr.mxu0 0.0
        %8736 = vmatpush1.msra.mxu0 0.0
        %8737 = vmatprep.subr.mxu0 0.0
        %8738 = vmatpush1.msra.mxu0 0.0
        %8739 = vmatprep.subr.mxu0 0.0
        %8740 = vmatpush1.msra.mxu0 0.0
        %8741 = vmatprep.subr.mxu0 0.0
        %8742 = vmatpush1.msra.mxu0 0.0
        %8743 = vmatprep.subr.mxu0 0.0
        %8744 = vmatpush1.msra.mxu0 0.0
        %8745 = vmatprep.subr.mxu0 0.0
        %8746 = vmatpush1.msra.mxu0 0.0
        %8747 = vmatprep.subr.mxu0 0.0
        %8748 = vmatpush1.msra.mxu0 0.0
        %8749 = vmatprep.subr.mxu0 0.0
        %8750 = vmatpush1.msra.mxu0 0.0
        %8751 = vmatprep.subr.mxu0 0.0
        %8752 = vmatpush1.msra.mxu0 0.0
        %8753 = vmatprep.subr.mxu0 0.0
        %8754 = vmatpush1.msra.mxu0 0.0
        %8755 = vmatprep.subr.mxu0 0.0
        %8756 = vmatpush1.msra.mxu0 0.0
        %8757 = vmatprep.mubr.f32.mxu0 0.0
        %v8758 = vand.u32 %v295, 4294901760
        %v8759 = vsub.f32 %v295, %v8758
        %v8760 = vand.u32 %v8759, 4294901760
        %8761 = vmatmul.mubr.f32.gmra.mrb[0].mxu0 %v8760
        %v8762 = vpop.f32.mrb[0].mxu0
        %v8763 = vadd.f32 %v8681, %v8762
        %v8764 = vpop.f32.mrb[0].mxu0
        %8765 = vmatprep.mubr.f32.mxu0 0.0
        %v8766 = vand.u32 %v298, 4294901760
        %v8767 = vsub.f32 %v298, %v8766
        %v8768 = vand.u32 %v8767, 4294901760
        %8769 = vmatmul.mubr.f32.gmra.mrb[0].mxu0 %v8768
        %v8770 = vpop.f32.mrb[0].mxu0
        %v8771 = vadd.f32 %v8688, %v8770
        %v8772 = vpop.f32.mrb[0].mxu0
        %8773 = vdwg.mxu0
        %8774 = vmatprep.subr.mxu0 0.0
        %v8775 = vand.u32 %v8432, 4294901760
        %v8776 = vsub.f32 %v8432, %v8775
        %v8777 = vand.u32 %v8776, 4294901760
        %8778 = vmatpush1.msra.mxu0 %v8777
        %8779 = vmatprep.subr.mxu0 0.0
        %v8780 = vand.u32 %v8433, 4294901760
        %v8781 = vsub.f32 %v8433, %v8780
        %v8782 = vand.u32 %v8781, 4294901760
        %8783 = vmatpush1.msra.mxu0 %v8782
        %8784 = vmatprep.subr.mxu0 0.0
        %8785 = vmatpush1.msra.mxu0 0.0
        %8786 = vmatprep.subr.mxu0 0.0
        %8787 = vmatpush1.msra.mxu0 0.0
        %8788 = vmatprep.subr.mxu0 0.0
        %8789 = vmatpush1.msra.mxu0 0.0
        %8790 = vmatprep.subr.mxu0 0.0
        %8791 = vmatpush1.msra.mxu0 0.0
        %8792 = vmatprep.subr.mxu0 0.0
        %8793 = vmatpush1.msra.mxu0 0.0
        %8794 = vmatprep.subr.mxu0 0.0
        %8795 = vmatpush1.msra.mxu0 0.0
        %8796 = vmatprep.subr.mxu0 0.0
        %8797 = vmatpush1.msra.mxu0 0.0
        %8798 = vmatprep.subr.mxu0 0.0
        %8799 = vmatpush1.msra.mxu0 0.0
        %8800 = vmatprep.subr.mxu0 0.0
        %8801 = vmatpush1.msra.mxu0 0.0
        %8802 = vmatprep.subr.mxu0 0.0
        %8803 = vmatpush1.msra.mxu0 0.0
        %8804 = vmatprep.subr.mxu0 0.0
        %8805 = vmatpush1.msra.mxu0 0.0
        %8806 = vmatprep.subr.mxu0 0.0
        %8807 = vmatpush1.msra.mxu0 0.0
        %8808 = vmatprep.subr.mxu0 0.0
        %8809 = vmatpush1.msra.mxu0 0.0
        %8810 = vmatprep.subr.mxu0 0.0
        %8811 = vmatpush1.msra.mxu0 0.0
        %8812 = vmatprep.subr.mxu0 0.0
        %8813 = vmatpush1.msra.mxu0 0.0
        %8814 = vmatprep.subr.mxu0 0.0
        %8815 = vmatpush1.msra.mxu0 0.0
        %8816 = vmatprep.subr.mxu0 0.0
        %8817 = vmatpush1.msra.mxu0 0.0
        %8818 = vmatprep.subr.mxu0 0.0
        %8819 = vmatpush1.msra.mxu0 0.0
        %8820 = vmatprep.subr.mxu0 0.0
        %8821 = vmatpush1.msra.mxu0 0.0
        %8822 = vmatprep.subr.mxu0 0.0
        %8823 = vmatpush1.msra.mxu0 0.0
        %8824 = vmatprep.subr.mxu0 0.0
        %8825 = vmatpush1.msra.mxu0 0.0
        %8826 = vmatprep.subr.mxu0 0.0
        %8827 = vmatpush1.msra.mxu0 0.0
        %8828 = vmatprep.subr.mxu0 0.0
        %8829 = vmatpush1.msra.mxu0 0.0
        %8830 = vmatprep.subr.mxu0 0.0
        %8831 = vmatpush1.msra.mxu0 0.0
        %8832 = vmatprep.subr.mxu0 0.0
        %8833 = vmatpush1.msra.mxu0 0.0
        %8834 = vmatprep.subr.mxu0 0.0
        %8835 = vmatpush1.msra.mxu0 0.0
        %8836 = vmatprep.subr.mxu0 0.0
        %8837 = vmatpush1.msra.mxu0 0.0
        %8838 = vmatprep.subr.mxu0 0.0
        %8839 = vmatpush1.msra.mxu0 0.0
        %8840 = vmatprep.subr.mxu0 0.0
        %8841 = vmatpush1.msra.mxu0 0.0
        %8842 = vmatprep.subr.mxu0 0.0
        %8843 = vmatpush1.msra.mxu0 0.0
        %8844 = vmatprep.mubr.f32.mxu0 0.0
        %v8845 = vand.u32 %v295, 4294901760
        %8846 = vmatmul.mubr.f32.gmra.mrb[0].mxu0 %v8845
        %v8847 = vpop.f32.mrb[0].mxu0
        %v8848 = vadd.f32 %v8763, %v8847
        %v8849 = vpop.f32.mrb[0].mxu0
        %8850 = vmatprep.mubr.f32.mxu0 0.0
        %v8851 = vand.u32 %v298, 4294901760
        %8852 = vmatmul.mubr.f32.gmra.mrb[0].mxu0 %v8851
        %v8853 = vpop.f32.mrb[0].mxu0
        %v8854 = vadd.f32 %v8771, %v8853
        %v8855 = vpop.f32.mrb[0].mxu0
        %8856 = vdwg.mxu0
        %8857 = vmatprep.subr.mxu0 0.0
        %v8858 = vand.u32 %v8432, 4294901760
        %8859 = vmatpush1.msra.mxu0 %v8858
        %8860 = vmatprep.subr.mxu0 0.0
        %v8861 = vand.u32 %v8433, 4294901760
        %8862 = vmatpush1.msra.mxu0 %v8861
        %8863 = vmatprep.subr.mxu0 0.0
        %8864 = vmatpush1.msra.mxu0 0.0
        %8865 = vmatprep.subr.mxu0 0.0
        %8866 = vmatpush1.msra.mxu0 0.0
        %8867 = vmatprep.subr.mxu0 0.0
        %8868 = vmatpush1.msra.mxu0 0.0
        %8869 = vmatprep.subr.mxu0 0.0
        %8870 = vmatpush1.msra.mxu0 0.0
        %8871 = vmatprep.subr.mxu0 0.0
        %8872 = vmatpush1.msra.mxu0 0.0
        %8873 = vmatprep.subr.mxu0 0.0
        %8874 = vmatpush1.msra.mxu0 0.0
        %8875 = vmatprep.subr.mxu0 0.0
        %8876 = vmatpush1.msra.mxu0 0.0
        %8877 = vmatprep.subr.mxu0 0.0
        %8878 = vmatpush1.msra.mxu0 0.0
        %8879 = vmatprep.subr.mxu0 0.0
        %8880 = vmatpush1.msra.mxu0 0.0
        %8881 = vmatprep.subr.mxu0 0.0
        %8882 = vmatpush1.msra.mxu0 0.0
        %8883 = vmatprep.subr.mxu0 0.0
        %8884 = vmatpush1.msra.mxu0 0.0
        %8885 = vmatprep.subr.mxu0 0.0
        %8886 = vmatpush1.msra.mxu0 0.0
        %8887 = vmatprep.subr.mxu0 0.0
        %8888 = vmatpush1.msra.mxu0 0.0
        %8889 = vmatprep.subr.mxu0 0.0
        %8890 = vmatpush1.msra.mxu0 0.0
        %8891 = vmatprep.subr.mxu0 0.0
        %8892 = vmatpush1.msra.mxu0 0.0
        %8893 = vmatprep.subr.mxu0 0.0
        %8894 = vmatpush1.msra.mxu0 0.0
        %8895 = vmatprep.subr.mxu0 0.0
        %8896 = vmatpush1.msra.mxu0 0.0
        %8897 = vmatprep.subr.mxu0 0.0
        %8898 = vmatpush1.msra.mxu0 0.0
        %8899 = vmatprep.subr.mxu0 0.0
        %8900 = vmatpush1.msra.mxu0 0.0
        %8901 = vmatprep.subr.mxu0 0.0
        %8902 = vmatpush1.msra.mxu0 0.0
        %8903 = vmatprep.subr.mxu0 0.0
        %8904 = vmatpush1.msra.mxu0 0.0
        %8905 = vmatprep.subr.mxu0 0.0
        %8906 = vmatpush1.msra.mxu0 0.0
        %8907 = vmatprep.subr.mxu0 0.0
        %8908 = vmatpush1.msra.mxu0 0.0
        %8909 = vmatprep.subr.mxu0 0.0
        %8910 = vmatpush1.msra.mxu0 0.0
        %8911 = vmatprep.subr.mxu0 0.0
        %8912 = vmatpush1.msra.mxu0 0.0
        %8913 = vmatprep.subr.mxu0 0.0
        %8914 = vmatpush1.msra.mxu0 0.0
        %8915 = vmatprep.subr.mxu0 0.0
        %8916 = vmatpush1.msra.mxu0 0.0
        %8917 = vmatprep.subr.mxu0 0.0
        %8918 = vmatpush1.msra.mxu0 0.0
        %8919 = vmatprep.subr.mxu0 0.0
        %8920 = vmatpush1.msra.mxu0 0.0
        %8921 = vmatprep.subr.mxu0 0.0
        %8922 = vmatpush1.msra.mxu0 0.0
        %8923 = vmatprep.mubr.f32.mxu0 0.0
        %v8924 = vand.u32 %v295, 4294901760
        %8925 = vmatmul.mubr.f32.gmra.mrb[0].mxu0 %v8924
        %v8926 = vpop.f32.mrb[0].mxu0
        %v8927 = vadd.f32 %v8848, %v8926
        %v8928 = vpop.f32.mrb[0].mxu0
        %8929 = vmatprep.mubr.f32.mxu0 0.0
        %v8930 = vand.u32 %v298, 4294901760
        %8931 = vmatmul.mubr.f32.gmra.mrb[0].mxu0 %v8930
        %v8932 = vpop.f32.mrb[0].mxu0
        %v8933 = vadd.f32 %v8854, %v8932
        %v8934 = vpop.f32.mrb[0].mxu0
        %8935 = vdwg.mxu0
        %v8937 = vsel %vm293, %v8927, 0
        %v8940 = vsel %vm293, %v8933, 0
        %8942 = vmatprep.subr.mxu0 0.0
        %v8943 = vand.u32 %v287, 4294901760
        %8944 = vmatpush1.msra.mxu0 %v8943
        %8945 = vmatprep.subr.mxu0 0.0
        %v8946 = vand.u32 %v288, 4294901760
        %8947 = vmatpush1.msra.mxu0 %v8946
        %8948 = vmatprep.subr.mxu0 0.0
        %8949 = vmatpush1.msra.mxu0 0.0
        %8950 = vmatprep.subr.mxu0 0.0
        %8951 = vmatpush1.msra.mxu0 0.0
        %8952 = vmatprep.subr.mxu0 0.0
        %8953 = vmatpush1.msra.mxu0 0.0
        %8954 = vmatprep.subr.mxu0 0.0
        %8955 = vmatpush1.msra.mxu0 0.0
        %8956 = vmatprep.subr.mxu0 0.0
        %8957 = vmatpush1.msra.mxu0 0.0
        %8958 = vmatprep.subr.mxu0 0.0
        %8959 = vmatpush1.msra.mxu0 0.0
        %8960 = vmatprep.subr.mxu0 0.0
        %8961 = vmatpush1.msra.mxu0 0.0
        %8962 = vmatprep.subr.mxu0 0.0
        %8963 = vmatpush1.msra.mxu0 0.0
        %8964 = vmatprep.subr.mxu0 0.0
        %8965 = vmatpush1.msra.mxu0 0.0
        %8966 = vmatprep.subr.mxu0 0.0
        %8967 = vmatpush1.msra.mxu0 0.0
        %8968 = vmatprep.subr.mxu0 0.0
        %8969 = vmatpush1.msra.mxu0 0.0
        %8970 = vmatprep.subr.mxu0 0.0
        %8971 = vmatpush1.msra.mxu0 0.0
        %8972 = vmatprep.subr.mxu0 0.0
        %8973 = vmatpush1.msra.mxu0 0.0
        %8974 = vmatprep.subr.mxu0 0.0
        %8975 = vmatpush1.msra.mxu0 0.0
        %8976 = vmatprep.subr.mxu0 0.0
        %8977 = vmatpush1.msra.mxu0 0.0
        %8978 = vmatprep.subr.mxu0 0.0
        %8979 = vmatpush1.msra.mxu0 0.0
        %8980 = vmatprep.subr.mxu0 0.0
        %8981 = vmatpush1.msra.mxu0 0.0
        %8982 = vmatprep.subr.mxu0 0.0
        %8983 = vmatpush1.msra.mxu0 0.0
        %8984 = vmatprep.subr.mxu0 0.0
        %8985 = vmatpush1.msra.mxu0 0.0
        %8986 = vmatprep.subr.mxu0 0.0
        %8987 = vmatpush1.msra.mxu0 0.0
        %8988 = vmatprep.subr.mxu0 0.0
        %8989 = vmatpush1.msra.mxu0 0.0
        %8990 = vmatprep.subr.mxu0 0.0
        %8991 = vmatpush1.msra.mxu0 0.0
        %8992 = vmatprep.subr.mxu0 0.0
        %8993 = vmatpush1.msra.mxu0 0.0
        %8994 = vmatprep.subr.mxu0 0.0
        %8995 = vmatpush1.msra.mxu0 0.0
        %8996 = vmatprep.subr.mxu0 0.0
        %8997 = vmatpush1.msra.mxu0 0.0
        %8998 = vmatprep.subr.mxu0 0.0
        %8999 = vmatpush1.msra.mxu0 0.0
        %9000 = vmatprep.subr.mxu0 0.0
        %9001 = vmatpush1.msra.mxu0 0.0
        %9002 = vmatprep.subr.mxu0 0.0
        %9003 = vmatpush1.msra.mxu0 0.0
        %9004 = vmatprep.subr.mxu0 0.0
        %9005 = vmatpush1.msra.mxu0 0.0
        %9006 = vmatprep.subr.mxu0 0.0
        %9007 = vmatpush1.msra.mxu0 0.0
        %9008 = vmatprep.mubr.f32.mxu0 0.0
        %v9009 = vand.u32 %v8937, 4294901760
        %v9010 = vsub.f32 %v8937, %v9009
        %v9011 = vand.u32 %v9010, 4294901760
        %v9012 = vsub.f32 %v9010, %v9011
        %v9013 = vand.u32 %v9012, 4294901760
        %9014 = vmatmul.mubr.f32.gmra.mrb[0].mxu0 %v9013
        %v9015 = vpop.f32.mrb[0].mxu0
        %v9016 = vadd.f32 0.0, %v9015
        %v9017 = vpop.f32.mrb[0].mxu0
        %9018 = vmatprep.mubr.f32.mxu0 0.0
        %v9019 = vand.u32 %v8940, 4294901760
        %v9020 = vsub.f32 %v8940, %v9019
        %v9021 = vand.u32 %v9020, 4294901760
        %v9022 = vsub.f32 %v9020, %v9021
        %v9023 = vand.u32 %v9022, 4294901760
        %9024 = vmatmul.mubr.f32.gmra.mrb[0].mxu0 %v9023
        %v9025 = vpop.f32.mrb[0].mxu0
        %v9026 = vadd.f32 0.0, %v9025
        %v9027 = vpop.f32.mrb[0].mxu0
        %9028 = vdwg.mxu0
        %9029 = vmatprep.subr.mxu0 0.0
        %v9030 = vand.u32 %v287, 4294901760
        %v9031 = vsub.f32 %v287, %v9030
        %v9032 = vand.u32 %v9031, 4294901760
        %v9033 = vsub.f32 %v9031, %v9032
        %v9034 = vand.u32 %v9033, 4294901760
        %9035 = vmatpush1.msra.mxu0 %v9034
        %9036 = vmatprep.subr.mxu0 0.0
        %v9037 = vand.u32 %v288, 4294901760
        %v9038 = vsub.f32 %v288, %v9037
        %v9039 = vand.u32 %v9038, 4294901760
        %v9040 = vsub.f32 %v9038, %v9039
        %v9041 = vand.u32 %v9040, 4294901760
        %9042 = vmatpush1.msra.mxu0 %v9041
        %9043 = vmatprep.subr.mxu0 0.0
        %9044 = vmatpush1.msra.mxu0 0.0
        %9045 = vmatprep.subr.mxu0 0.0
        %9046 = vmatpush1.msra.mxu0 0.0
        %9047 = vmatprep.subr.mxu0 0.0
        %9048 = vmatpush1.msra.mxu0 0.0
        %9049 = vmatprep.subr.mxu0 0.0
        %9050 = vmatpush1.msra.mxu0 0.0
        %9051 = vmatprep.subr.mxu0 0.0
        %9052 = vmatpush1.msra.mxu0 0.0
        %9053 = vmatprep.subr.mxu0 0.0
        %9054 = vmatpush1.msra.mxu0 0.0
        %9055 = vmatprep.subr.mxu0 0.0
        %9056 = vmatpush1.msra.mxu0 0.0
        %9057 = vmatprep.subr.mxu0 0.0
        %9058 = vmatpush1.msra.mxu0 0.0
        %9059 = vmatprep.subr.mxu0 0.0
        %9060 = vmatpush1.msra.mxu0 0.0
        %9061 = vmatprep.subr.mxu0 0.0
        %9062 = vmatpush1.msra.mxu0 0.0
        %9063 = vmatprep.subr.mxu0 0.0
        %9064 = vmatpush1.msra.mxu0 0.0
        %9065 = vmatprep.subr.mxu0 0.0
        %9066 = vmatpush1.msra.mxu0 0.0
        %9067 = vmatprep.subr.mxu0 0.0
        %9068 = vmatpush1.msra.mxu0 0.0
        %9069 = vmatprep.subr.mxu0 0.0
        %9070 = vmatpush1.msra.mxu0 0.0
        %9071 = vmatprep.subr.mxu0 0.0
        %9072 = vmatpush1.msra.mxu0 0.0
        %9073 = vmatprep.subr.mxu0 0.0
        %9074 = vmatpush1.msra.mxu0 0.0
        %9075 = vmatprep.subr.mxu0 0.0
        %9076 = vmatpush1.msra.mxu0 0.0
        %9077 = vmatprep.subr.mxu0 0.0
        %9078 = vmatpush1.msra.mxu0 0.0
        %9079 = vmatprep.subr.mxu0 0.0
        %9080 = vmatpush1.msra.mxu0 0.0
        %9081 = vmatprep.subr.mxu0 0.0
        %9082 = vmatpush1.msra.mxu0 0.0
        %9083 = vmatprep.subr.mxu0 0.0
        %9084 = vmatpush1.msra.mxu0 0.0
        %9085 = vmatprep.subr.mxu0 0.0
        %9086 = vmatpush1.msra.mxu0 0.0
        %9087 = vmatprep.subr.mxu0 0.0
        %9088 = vmatpush1.msra.mxu0 0.0
        %9089 = vmatprep.subr.mxu0 0.0
        %9090 = vmatpush1.msra.mxu0 0.0
        %9091 = vmatprep.subr.mxu0 0.0
        %9092 = vmatpush1.msra.mxu0 0.0
        %9093 = vmatprep.subr.mxu0 0.0
        %9094 = vmatpush1.msra.mxu0 0.0
        %9095 = vmatprep.subr.mxu0 0.0
        %9096 = vmatpush1.msra.mxu0 0.0
        %9097 = vmatprep.subr.mxu0 0.0
        %9098 = vmatpush1.msra.mxu0 0.0
        %9099 = vmatprep.subr.mxu0 0.0
        %9100 = vmatpush1.msra.mxu0 0.0
        %9101 = vmatprep.subr.mxu0 0.0
        %9102 = vmatpush1.msra.mxu0 0.0
        %9103 = vmatprep.mubr.f32.mxu0 0.0
        %v9104 = vand.u32 %v8937, 4294901760
        %9105 = vmatmul.mubr.f32.gmra.mrb[0].mxu0 %v9104
        %v9106 = vpop.f32.mrb[0].mxu0
        %v9107 = vadd.f32 %v9016, %v9106
        %v9108 = vpop.f32.mrb[0].mxu0
        %9109 = vmatprep.mubr.f32.mxu0 0.0
        %v9110 = vand.u32 %v8940, 4294901760
        %9111 = vmatmul.mubr.f32.gmra.mrb[0].mxu0 %v9110
        %v9112 = vpop.f32.mrb[0].mxu0
        %v9113 = vadd.f32 %v9026, %v9112
        %v9114 = vpop.f32.mrb[0].mxu0
        %9115 = vdwg.mxu0
        %9116 = vmatprep.subr.mxu0 0.0
        %v9117 = vand.u32 %v287, 4294901760
        %v9118 = vsub.f32 %v287, %v9117
        %9119 = vmatpush1.msra.mxu0 %v9118
        %9120 = vmatprep.subr.mxu0 0.0
        %v9121 = vand.u32 %v288, 4294901760
        %v9122 = vsub.f32 %v288, %v9121
        %9123 = vmatpush1.msra.mxu0 %v9122
        %9124 = vmatprep.subr.mxu0 0.0
        %9125 = vmatpush1.msra.mxu0 0.0
        %9126 = vmatprep.subr.mxu0 0.0
        %9127 = vmatpush1.msra.mxu0 0.0
        %9128 = vmatprep.subr.mxu0 0.0
        %9129 = vmatpush1.msra.mxu0 0.0
        %9130 = vmatprep.subr.mxu0 0.0
        %9131 = vmatpush1.msra.mxu0 0.0
        %9132 = vmatprep.subr.mxu0 0.0
        %9133 = vmatpush1.msra.mxu0 0.0
        %9134 = vmatprep.subr.mxu0 0.0
        %9135 = vmatpush1.msra.mxu0 0.0
        %9136 = vmatprep.subr.mxu0 0.0
        %9137 = vmatpush1.msra.mxu0 0.0
        %9138 = vmatprep.subr.mxu0 0.0
        %9139 = vmatpush1.msra.mxu0 0.0
        %9140 = vmatprep.subr.mxu0 0.0
        %9141 = vmatpush1.msra.mxu0 0.0
        %9142 = vmatprep.subr.mxu0 0.0
        %9143 = vmatpush1.msra.mxu0 0.0
        %9144 = vmatprep.subr.mxu0 0.0
        %9145 = vmatpush1.msra.mxu0 0.0
        %9146 = vmatprep.subr.mxu0 0.0
        %9147 = vmatpush1.msra.mxu0 0.0
        %9148 = vmatprep.subr.mxu0 0.0
        %9149 = vmatpush1.msra.mxu0 0.0
        %9150 = vmatprep.subr.mxu0 0.0
        %9151 = vmatpush1.msra.mxu0 0.0
        %9152 = vmatprep.subr.mxu0 0.0
        %9153 = vmatpush1.msra.mxu0 0.0
        %9154 = vmatprep.subr.mxu0 0.0
        %9155 = vmatpush1.msra.mxu0 0.0
        %9156 = vmatprep.subr.mxu0 0.0
        %9157 = vmatpush1.msra.mxu0 0.0
        %9158 = vmatprep.subr.mxu0 0.0
        %9159 = vmatpush1.msra.mxu0 0.0
        %9160 = vmatprep.subr.mxu0 0.0
        %9161 = vmatpush1.msra.mxu0 0.0
        %9162 = vmatprep.subr.mxu0 0.0
        %9163 = vmatpush1.msra.mxu0 0.0
        %9164 = vmatprep.subr.mxu0 0.0
        %9165 = vmatpush1.msra.mxu0 0.0
        %9166 = vmatprep.subr.mxu0 0.0
        %9167 = vmatpush1.msra.mxu0 0.0
        %9168 = vmatprep.subr.mxu0 0.0
        %9169 = vmatpush1.msra.mxu0 0.0
        %9170 = vmatprep.subr.mxu0 0.0
        %9171 = vmatpush1.msra.mxu0 0.0
        %9172 = vmatprep.subr.mxu0 0.0
        %9173 = vmatpush1.msra.mxu0 0.0
        %9174 = vmatprep.subr.mxu0 0.0
        %9175 = vmatpush1.msra.mxu0 0.0
        %9176 = vmatprep.subr.mxu0 0.0
        %9177 = vmatpush1.msra.mxu0 0.0
        %9178 = vmatprep.subr.mxu0 0.0
        %9179 = vmatpush1.msra.mxu0 0.0
        %9180 = vmatprep.subr.mxu0 0.0
        %9181 = vmatpush1.msra.mxu0 0.0
        %9182 = vmatprep.subr.mxu0 0.0
        %9183 = vmatpush1.msra.mxu0 0.0
        %9184 = vmatprep.mubr.f32.mxu0 0.0
        %v9185 = vand.u32 %v8937, 4294901760
        %v9186 = vsub.f32 %v8937, %v9185
        %9187 = vmatmul.mubr.f32.gmra.mrb[0].mxu0 %v9186
        %v9188 = vpop.f32.mrb[0].mxu0
        %v9189 = vadd.f32 %v9107, %v9188
        %v9190 = vpop.f32.mrb[0].mxu0
        %9191 = vmatprep.mubr.f32.mxu0 0.0
        %v9192 = vand.u32 %v8940, 4294901760
        %v9193 = vsub.f32 %v8940, %v9192
        %9194 = vmatmul.mubr.f32.gmra.mrb[0].mxu0 %v9193
        %v9195 = vpop.f32.mrb[0].mxu0
        %v9196 = vadd.f32 %v9113, %v9195
        %v9197 = vpop.f32.mrb[0].mxu0
        %9198 = vdwg.mxu0
        %9199 = vmatprep.subr.mxu0 0.0
        %v9200 = vand.u32 %v287, 4294901760
        %9201 = vmatpush1.msra.mxu0 %v9200
        %9202 = vmatprep.subr.mxu0 0.0
        %v9203 = vand.u32 %v288, 4294901760
        %9204 = vmatpush1.msra.mxu0 %v9203
        %9205 = vmatprep.subr.mxu0 0.0
        %9206 = vmatpush1.msra.mxu0 0.0
        %9207 = vmatprep.subr.mxu0 0.0
        %9208 = vmatpush1.msra.mxu0 0.0
        %9209 = vmatprep.subr.mxu0 0.0
        %9210 = vmatpush1.msra.mxu0 0.0
        %9211 = vmatprep.subr.mxu0 0.0
        %9212 = vmatpush1.msra.mxu0 0.0
        %9213 = vmatprep.subr.mxu0 0.0
        %9214 = vmatpush1.msra.mxu0 0.0
        %9215 = vmatprep.subr.mxu0 0.0
        %9216 = vmatpush1.msra.mxu0 0.0
        %9217 = vmatprep.subr.mxu0 0.0
        %9218 = vmatpush1.msra.mxu0 0.0
        %9219 = vmatprep.subr.mxu0 0.0
        %9220 = vmatpush1.msra.mxu0 0.0
        %9221 = vmatprep.subr.mxu0 0.0
        %9222 = vmatpush1.msra.mxu0 0.0
        %9223 = vmatprep.subr.mxu0 0.0
        %9224 = vmatpush1.msra.mxu0 0.0
        %9225 = vmatprep.subr.mxu0 0.0
        %9226 = vmatpush1.msra.mxu0 0.0
        %9227 = vmatprep.subr.mxu0 0.0
        %9228 = vmatpush1.msra.mxu0 0.0
        %9229 = vmatprep.subr.mxu0 0.0
        %9230 = vmatpush1.msra.mxu0 0.0
        %9231 = vmatprep.subr.mxu0 0.0
        %9232 = vmatpush1.msra.mxu0 0.0
        %9233 = vmatprep.subr.mxu0 0.0
        %9234 = vmatpush1.msra.mxu0 0.0
        %9235 = vmatprep.subr.mxu0 0.0
        %9236 = vmatpush1.msra.mxu0 0.0
        %9237 = vmatprep.subr.mxu0 0.0
        %9238 = vmatpush1.msra.mxu0 0.0
        %9239 = vmatprep.subr.mxu0 0.0
        %9240 = vmatpush1.msra.mxu0 0.0
        %9241 = vmatprep.subr.mxu0 0.0
        %9242 = vmatpush1.msra.mxu0 0.0
        %9243 = vmatprep.subr.mxu0 0.0
        %9244 = vmatpush1.msra.mxu0 0.0
        %9245 = vmatprep.subr.mxu0 0.0
        %9246 = vmatpush1.msra.mxu0 0.0
        %9247 = vmatprep.subr.mxu0 0.0
        %9248 = vmatpush1.msra.mxu0 0.0
        %9249 = vmatprep.subr.mxu0 0.0
        %9250 = vmatpush1.msra.mxu0 0.0
        %9251 = vmatprep.subr.mxu0 0.0
        %9252 = vmatpush1.msra.mxu0 0.0
        %9253 = vmatprep.subr.mxu0 0.0
        %9254 = vmatpush1.msra.mxu0 0.0
        %9255 = vmatprep.subr.mxu0 0.0
        %9256 = vmatpush1.msra.mxu0 0.0
        %9257 = vmatprep.subr.mxu0 0.0
        %9258 = vmatpush1.msra.mxu0 0.0
        %9259 = vmatprep.subr.mxu0 0.0
        %9260 = vmatpush1.msra.mxu0 0.0
        %9261 = vmatprep.subr.mxu0 0.0
        %9262 = vmatpush1.msra.mxu0 0.0
        %9263 = vmatprep.subr.mxu0 0.0
        %9264 = vmatpush1.msra.mxu0 0.0
        %9265 = vmatprep.mubr.f32.mxu0 0.0
        %v9266 = vand.u32 %v8937, 4294901760
        %v9267 = vsub.f32 %v8937, %v9266
        %v9268 = vand.u32 %v9267, 4294901760
        %9269 = vmatmul.mubr.f32.gmra.mrb[0].mxu0 %v9268
        %v9270 = vpop.f32.mrb[0].mxu0
        %v9271 = vadd.f32 %v9189, %v9270
        %v9272 = vpop.f32.mrb[0].mxu0
        %9273 = vmatprep.mubr.f32.mxu0 0.0
        %v9274 = vand.u32 %v8940, 4294901760
        %v9275 = vsub.f32 %v8940, %v9274
        %v9276 = vand.u32 %v9275, 4294901760
        %9277 = vmatmul.mubr.f32.gmra.mrb[0].mxu0 %v9276
        %v9278 = vpop.f32.mrb[0].mxu0
        %v9279 = vadd.f32 %v9196, %v9278
        %v9280 = vpop.f32.mrb[0].mxu0
        %9281 = vdwg.mxu0
        %9282 = vmatprep.subr.mxu0 0.0
        %v9283 = vand.u32 %v287, 4294901760
        %v9284 = vsub.f32 %v287, %v9283
        %v9285 = vand.u32 %v9284, 4294901760
        %9286 = vmatpush1.msra.mxu0 %v9285
        %9287 = vmatprep.subr.mxu0 0.0
        %v9288 = vand.u32 %v288, 4294901760
        %v9289 = vsub.f32 %v288, %v9288
        %v9290 = vand.u32 %v9289, 4294901760
        %9291 = vmatpush1.msra.mxu0 %v9290
        %9292 = vmatprep.subr.mxu0 0.0
        %9293 = vmatpush1.msra.mxu0 0.0
        %9294 = vmatprep.subr.mxu0 0.0
        %9295 = vmatpush1.msra.mxu0 0.0
        %9296 = vmatprep.subr.mxu0 0.0
        %9297 = vmatpush1.msra.mxu0 0.0
        %9298 = vmatprep.subr.mxu0 0.0
        %9299 = vmatpush1.msra.mxu0 0.0
        %9300 = vmatprep.subr.mxu0 0.0
        %9301 = vmatpush1.msra.mxu0 0.0
        %9302 = vmatprep.subr.mxu0 0.0
        %9303 = vmatpush1.msra.mxu0 0.0
        %9304 = vmatprep.subr.mxu0 0.0
        %9305 = vmatpush1.msra.mxu0 0.0
        %9306 = vmatprep.subr.mxu0 0.0
        %9307 = vmatpush1.msra.mxu0 0.0
        %9308 = vmatprep.subr.mxu0 0.0
        %9309 = vmatpush1.msra.mxu0 0.0
        %9310 = vmatprep.subr.mxu0 0.0
        %9311 = vmatpush1.msra.mxu0 0.0
        %9312 = vmatprep.subr.mxu0 0.0
        %9313 = vmatpush1.msra.mxu0 0.0
        %9314 = vmatprep.subr.mxu0 0.0
        %9315 = vmatpush1.msra.mxu0 0.0
        %9316 = vmatprep.subr.mxu0 0.0
        %9317 = vmatpush1.msra.mxu0 0.0
        %9318 = vmatprep.subr.mxu0 0.0
        %9319 = vmatpush1.msra.mxu0 0.0
        %9320 = vmatprep.subr.mxu0 0.0
        %9321 = vmatpush1.msra.mxu0 0.0
        %9322 = vmatprep.subr.mxu0 0.0
        %9323 = vmatpush1.msra.mxu0 0.0
        %9324 = vmatprep.subr.mxu0 0.0
        %9325 = vmatpush1.msra.mxu0 0.0
        %9326 = vmatprep.subr.mxu0 0.0
        %9327 = vmatpush1.msra.mxu0 0.0
        %9328 = vmatprep.subr.mxu0 0.0
        %9329 = vmatpush1.msra.mxu0 0.0
        %9330 = vmatprep.subr.mxu0 0.0
        %9331 = vmatpush1.msra.mxu0 0.0
        %9332 = vmatprep.subr.mxu0 0.0
        %9333 = vmatpush1.msra.mxu0 0.0
        %9334 = vmatprep.subr.mxu0 0.0
        %9335 = vmatpush1.msra.mxu0 0.0
        %9336 = vmatprep.subr.mxu0 0.0
        %9337 = vmatpush1.msra.mxu0 0.0
        %9338 = vmatprep.subr.mxu0 0.0
        %9339 = vmatpush1.msra.mxu0 0.0
        %9340 = vmatprep.subr.mxu0 0.0
        %9341 = vmatpush1.msra.mxu0 0.0
        %9342 = vmatprep.subr.mxu0 0.0
        %9343 = vmatpush1.msra.mxu0 0.0
        %9344 = vmatprep.subr.mxu0 0.0
        %9345 = vmatpush1.msra.mxu0 0.0
        %9346 = vmatprep.subr.mxu0 0.0
        %9347 = vmatpush1.msra.mxu0 0.0
        %9348 = vmatprep.subr.mxu0 0.0
        %9349 = vmatpush1.msra.mxu0 0.0
        %9350 = vmatprep.subr.mxu0 0.0
        %9351 = vmatpush1.msra.mxu0 0.0
        %9352 = vmatprep.mubr.f32.mxu0 0.0
        %v9353 = vand.u32 %v8937, 4294901760
        %9354 = vmatmul.mubr.f32.gmra.mrb[0].mxu0 %v9353
        %v9355 = vpop.f32.mrb[0].mxu0
        %v9356 = vadd.f32 %v9271, %v9355
        %v9357 = vpop.f32.mrb[0].mxu0
        %9358 = vmatprep.mubr.f32.mxu0 0.0
        %v9359 = vand.u32 %v8940, 4294901760
        %9360 = vmatmul.mubr.f32.gmra.mrb[0].mxu0 %v9359
        %v9361 = vpop.f32.mrb[0].mxu0
        %v9362 = vadd.f32 %v9279, %v9361
        %v9363 = vpop.f32.mrb[0].mxu0
        %9364 = vdwg.mxu0
        %9365 = vmatprep.subr.mxu0 0.0
        %v9366 = vand.u32 %v287, 4294901760
        %9367 = vmatpush1.msra.mxu0 %v9366
        %9368 = vmatprep.subr.mxu0 0.0
        %v9369 = vand.u32 %v288, 4294901760
        %9370 = vmatpush1.msra.mxu0 %v9369
        %9371 = vmatprep.subr.mxu0 0.0
        %9372 = vmatpush1.msra.mxu0 0.0
        %9373 = vmatprep.subr.mxu0 0.0
        %9374 = vmatpush1.msra.mxu0 0.0
        %9375 = vmatprep.subr.mxu0 0.0
        %9376 = vmatpush1.msra.mxu0 0.0
        %9377 = vmatprep.subr.mxu0 0.0
        %9378 = vmatpush1.msra.mxu0 0.0
        %9379 = vmatprep.subr.mxu0 0.0
        %9380 = vmatpush1.msra.mxu0 0.0
        %9381 = vmatprep.subr.mxu0 0.0
        %9382 = vmatpush1.msra.mxu0 0.0
        %9383 = vmatprep.subr.mxu0 0.0
        %9384 = vmatpush1.msra.mxu0 0.0
        %9385 = vmatprep.subr.mxu0 0.0
        %9386 = vmatpush1.msra.mxu0 0.0
        %9387 = vmatprep.subr.mxu0 0.0
        %9388 = vmatpush1.msra.mxu0 0.0
        %9389 = vmatprep.subr.mxu0 0.0
        %9390 = vmatpush1.msra.mxu0 0.0
        %9391 = vmatprep.subr.mxu0 0.0
        %9392 = vmatpush1.msra.mxu0 0.0
        %9393 = vmatprep.subr.mxu0 0.0
        %9394 = vmatpush1.msra.mxu0 0.0
        %9395 = vmatprep.subr.mxu0 0.0
        %9396 = vmatpush1.msra.mxu0 0.0
        %9397 = vmatprep.subr.mxu0 0.0
        %9398 = vmatpush1.msra.mxu0 0.0
        %9399 = vmatprep.subr.mxu0 0.0
        %9400 = vmatpush1.msra.mxu0 0.0
        %9401 = vmatprep.subr.mxu0 0.0
        %9402 = vmatpush1.msra.mxu0 0.0
        %9403 = vmatprep.subr.mxu0 0.0
        %9404 = vmatpush1.msra.mxu0 0.0
        %9405 = vmatprep.subr.mxu0 0.0
        %9406 = vmatpush1.msra.mxu0 0.0
        %9407 = vmatprep.subr.mxu0 0.0
        %9408 = vmatpush1.msra.mxu0 0.0
        %9409 = vmatprep.subr.mxu0 0.0
        %9410 = vmatpush1.msra.mxu0 0.0
        %9411 = vmatprep.subr.mxu0 0.0
        %9412 = vmatpush1.msra.mxu0 0.0
        %9413 = vmatprep.subr.mxu0 0.0
        %9414 = vmatpush1.msra.mxu0 0.0
        %9415 = vmatprep.subr.mxu0 0.0
        %9416 = vmatpush1.msra.mxu0 0.0
        %9417 = vmatprep.subr.mxu0 0.0
        %9418 = vmatpush1.msra.mxu0 0.0
        %9419 = vmatprep.subr.mxu0 0.0
        %9420 = vmatpush1.msra.mxu0 0.0
        %9421 = vmatprep.subr.mxu0 0.0
        %9422 = vmatpush1.msra.mxu0 0.0
        %9423 = vmatprep.subr.mxu0 0.0
        %9424 = vmatpush1.msra.mxu0 0.0
        %9425 = vmatprep.subr.mxu0 0.0
        %9426 = vmatpush1.msra.mxu0 0.0
        %9427 = vmatprep.subr.mxu0 0.0
        %9428 = vmatpush1.msra.mxu0 0.0
        %9429 = vmatprep.subr.mxu0 0.0
        %9430 = vmatpush1.msra.mxu0 0.0
        %9431 = vmatprep.mubr.f32.mxu0 0.0
        %v9432 = vand.u32 %v8937, 4294901760
        %9433 = vmatmul.mubr.f32.gmra.mrb[0].mxu0 %v9432
        %v9434 = vpop.f32.mrb[0].mxu0
        %v9435 = vadd.f32 %v9356, %v9434
        %v9436 = vpop.f32.mrb[0].mxu0
        %9437 = vmatprep.mubr.f32.mxu0 0.0
        %v9438 = vand.u32 %v8940, 4294901760
        %9439 = vmatmul.mubr.f32.gmra.mrb[0].mxu0 %v9438
        %v9440 = vpop.f32.mrb[0].mxu0
        %v9441 = vadd.f32 %v9362, %v9440
        %v9442 = vpop.f32.mrb[0].mxu0
        %9443 = vdwg.mxu0
        %v9444 = vmul.f32 %v5395, %v5398
        %v9445 = vmul.f32 %v5396, %v5399
        %9446 = vmatprep.subr.mxu0 0.0
        %v9447 = vand.u32 %v9444, 4294901760
        %9448 = vmatpush1.msra.mxu0 %v9447
        %9449 = vmatprep.subr.mxu0 0.0
        %v9450 = vand.u32 %v9445, 4294901760
        %9451 = vmatpush1.msra.mxu0 %v9450
        %9452 = vmatprep.subr.mxu0 0.0
        %9453 = vmatpush1.msra.mxu0 0.0
        %9454 = vmatprep.subr.mxu0 0.0
        %9455 = vmatpush1.msra.mxu0 0.0
        %9456 = vmatprep.subr.mxu0 0.0
        %9457 = vmatpush1.msra.mxu0 0.0
        %9458 = vmatprep.subr.mxu0 0.0
        %9459 = vmatpush1.msra.mxu0 0.0
        %9460 = vmatprep.subr.mxu0 0.0
        %9461 = vmatpush1.msra.mxu0 0.0
        %9462 = vmatprep.subr.mxu0 0.0
        %9463 = vmatpush1.msra.mxu0 0.0
        %9464 = vmatprep.subr.mxu0 0.0
        %9465 = vmatpush1.msra.mxu0 0.0
        %9466 = vmatprep.subr.mxu0 0.0
        %9467 = vmatpush1.msra.mxu0 0.0
        %9468 = vmatprep.subr.mxu0 0.0
        %9469 = vmatpush1.msra.mxu0 0.0
        %9470 = vmatprep.subr.mxu0 0.0
        %9471 = vmatpush1.msra.mxu0 0.0
        %9472 = vmatprep.subr.mxu0 0.0
        %9473 = vmatpush1.msra.mxu0 0.0
        %9474 = vmatprep.subr.mxu0 0.0
        %9475 = vmatpush1.msra.mxu0 0.0
        %9476 = vmatprep.subr.mxu0 0.0
        %9477 = vmatpush1.msra.mxu0 0.0
        %9478 = vmatprep.subr.mxu0 0.0
        %9479 = vmatpush1.msra.mxu0 0.0
        %9480 = vmatprep.subr.mxu0 0.0
        %9481 = vmatpush1.msra.mxu0 0.0
        %9482 = vmatprep.subr.mxu0 0.0
        %9483 = vmatpush1.msra.mxu0 0.0
        %9484 = vmatprep.subr.mxu0 0.0
        %9485 = vmatpush1.msra.mxu0 0.0
        %9486 = vmatprep.subr.mxu0 0.0
        %9487 = vmatpush1.msra.mxu0 0.0
        %9488 = vmatprep.subr.mxu0 0.0
        %9489 = vmatpush1.msra.mxu0 0.0
        %9490 = vmatprep.subr.mxu0 0.0
        %9491 = vmatpush1.msra.mxu0 0.0
        %9492 = vmatprep.subr.mxu0 0.0
        %9493 = vmatpush1.msra.mxu0 0.0
        %9494 = vmatprep.subr.mxu0 0.0
        %9495 = vmatpush1.msra.mxu0 0.0
        %9496 = vmatprep.subr.mxu0 0.0
        %9497 = vmatpush1.msra.mxu0 0.0
        %9498 = vmatprep.subr.mxu0 0.0
        %9499 = vmatpush1.msra.mxu0 0.0
        %9500 = vmatprep.subr.mxu0 0.0
        %9501 = vmatpush1.msra.mxu0 0.0
        %9502 = vmatprep.subr.mxu0 0.0
        %9503 = vmatpush1.msra.mxu0 0.0
        %9504 = vmatprep.subr.mxu0 0.0
        %9505 = vmatpush1.msra.mxu0 0.0
        %9506 = vmatprep.subr.mxu0 0.0
        %9507 = vmatpush1.msra.mxu0 0.0
        %9508 = vmatprep.subr.mxu0 0.0
        %9509 = vmatpush1.msra.mxu0 0.0
        %9510 = vmatprep.subr.mxu0 0.0
        %9511 = vmatpush1.msra.mxu0 0.0
        %9512 = vmatprep.mubr.f32.mxu0 0.0
        %v9513 = vand.u32 %v295, 4294901760
        %v9514 = vsub.f32 %v295, %v9513
        %v9515 = vand.u32 %v9514, 4294901760
        %v9516 = vsub.f32 %v9514, %v9515
        %v9517 = vand.u32 %v9516, 4294901760
        %9518 = vmatmul.mubr.f32.gmra.mrb[0].mxu0 %v9517
        %v9519 = vpop.f32.mrb[0].mxu0
        %v9520 = vadd.f32 0.0, %v9519
        %v9521 = vpop.f32.mrb[0].mxu0
        %9522 = vmatprep.mubr.f32.mxu0 0.0
        %v9523 = vand.u32 %v298, 4294901760
        %v9524 = vsub.f32 %v298, %v9523
        %v9525 = vand.u32 %v9524, 4294901760
        %v9526 = vsub.f32 %v9524, %v9525
        %v9527 = vand.u32 %v9526, 4294901760
        %9528 = vmatmul.mubr.f32.gmra.mrb[0].mxu0 %v9527
        %v9529 = vpop.f32.mrb[0].mxu0
        %v9530 = vadd.f32 0.0, %v9529
        %v9531 = vpop.f32.mrb[0].mxu0
        %9532 = vdwg.mxu0
        %9533 = vmatprep.subr.mxu0 0.0
        %v9534 = vand.u32 %v9444, 4294901760
        %v9535 = vsub.f32 %v9444, %v9534
        %v9536 = vand.u32 %v9535, 4294901760
        %v9537 = vsub.f32 %v9535, %v9536
        %v9538 = vand.u32 %v9537, 4294901760
        %9539 = vmatpush1.msra.mxu0 %v9538
        %9540 = vmatprep.subr.mxu0 0.0
        %v9541 = vand.u32 %v9445, 4294901760
        %v9542 = vsub.f32 %v9445, %v9541
        %v9543 = vand.u32 %v9542, 4294901760
        %v9544 = vsub.f32 %v9542, %v9543
        %v9545 = vand.u32 %v9544, 4294901760
        %9546 = vmatpush1.msra.mxu0 %v9545
        %9547 = vmatprep.subr.mxu0 0.0
        %9548 = vmatpush1.msra.mxu0 0.0
        %9549 = vmatprep.subr.mxu0 0.0
        %9550 = vmatpush1.msra.mxu0 0.0
        %9551 = vmatprep.subr.mxu0 0.0
        %9552 = vmatpush1.msra.mxu0 0.0
        %9553 = vmatprep.subr.mxu0 0.0
        %9554 = vmatpush1.msra.mxu0 0.0
        %9555 = vmatprep.subr.mxu0 0.0
        %9556 = vmatpush1.msra.mxu0 0.0
        %9557 = vmatprep.subr.mxu0 0.0
        %9558 = vmatpush1.msra.mxu0 0.0
        %9559 = vmatprep.subr.mxu0 0.0
        %9560 = vmatpush1.msra.mxu0 0.0
        %9561 = vmatprep.subr.mxu0 0.0
        %9562 = vmatpush1.msra.mxu0 0.0
        %9563 = vmatprep.subr.mxu0 0.0
        %9564 = vmatpush1.msra.mxu0 0.0
        %9565 = vmatprep.subr.mxu0 0.0
        %9566 = vmatpush1.msra.mxu0 0.0
        %9567 = vmatprep.subr.mxu0 0.0
        %9568 = vmatpush1.msra.mxu0 0.0
        %9569 = vmatprep.subr.mxu0 0.0
        %9570 = vmatpush1.msra.mxu0 0.0
        %9571 = vmatprep.subr.mxu0 0.0
        %9572 = vmatpush1.msra.mxu0 0.0
        %9573 = vmatprep.subr.mxu0 0.0
        %9574 = vmatpush1.msra.mxu0 0.0
        %9575 = vmatprep.subr.mxu0 0.0
        %9576 = vmatpush1.msra.mxu0 0.0
        %9577 = vmatprep.subr.mxu0 0.0
        %9578 = vmatpush1.msra.mxu0 0.0
        %9579 = vmatprep.subr.mxu0 0.0
        %9580 = vmatpush1.msra.mxu0 0.0
        %9581 = vmatprep.subr.mxu0 0.0
        %9582 = vmatpush1.msra.mxu0 0.0
        %9583 = vmatprep.subr.mxu0 0.0
        %9584 = vmatpush1.msra.mxu0 0.0
        %9585 = vmatprep.subr.mxu0 0.0
        %9586 = vmatpush1.msra.mxu0 0.0
        %9587 = vmatprep.subr.mxu0 0.0
        %9588 = vmatpush1.msra.mxu0 0.0
        %9589 = vmatprep.subr.mxu0 0.0
        %9590 = vmatpush1.msra.mxu0 0.0
        %9591 = vmatprep.subr.mxu0 0.0
        %9592 = vmatpush1.msra.mxu0 0.0
        %9593 = vmatprep.subr.mxu0 0.0
        %9594 = vmatpush1.msra.mxu0 0.0
        %9595 = vmatprep.subr.mxu0 0.0
        %9596 = vmatpush1.msra.mxu0 0.0
        %9597 = vmatprep.subr.mxu0 0.0
        %9598 = vmatpush1.msra.mxu0 0.0
        %9599 = vmatprep.subr.mxu0 0.0
        %9600 = vmatpush1.msra.mxu0 0.0
        %9601 = vmatprep.subr.mxu0 0.0
        %9602 = vmatpush1.msra.mxu0 0.0
        %9603 = vmatprep.subr.mxu0 0.0
        %9604 = vmatpush1.msra.mxu0 0.0
        %9605 = vmatprep.subr.mxu0 0.0
        %9606 = vmatpush1.msra.mxu0 0.0
        %9607 = vmatprep.mubr.f32.mxu0 0.0
        %v9608 = vand.u32 %v295, 4294901760
        %9609 = vmatmul.mubr.f32.gmra.mrb[0].mxu0 %v9608
        %v9610 = vpop.f32.mrb[0].mxu0
        %v9611 = vadd.f32 %v9520, %v9610
        %v9612 = vpop.f32.mrb[0].mxu0
        %9613 = vmatprep.mubr.f32.mxu0 0.0
        %v9614 = vand.u32 %v298, 4294901760
        %9615 = vmatmul.mubr.f32.gmra.mrb[0].mxu0 %v9614
        %v9616 = vpop.f32.mrb[0].mxu0
        %v9617 = vadd.f32 %v9530, %v9616
        %v9618 = vpop.f32.mrb[0].mxu0
        %9619 = vdwg.mxu0
        %9620 = vmatprep.subr.mxu0 0.0
        %v9621 = vand.u32 %v9444, 4294901760
        %v9622 = vsub.f32 %v9444, %v9621
        %9623 = vmatpush1.msra.mxu0 %v9622
        %9624 = vmatprep.subr.mxu0 0.0
        %v9625 = vand.u32 %v9445, 4294901760
        %v9626 = vsub.f32 %v9445, %v9625
        %9627 = vmatpush1.msra.mxu0 %v9626
        %9628 = vmatprep.subr.mxu0 0.0
        %9629 = vmatpush1.msra.mxu0 0.0
        %9630 = vmatprep.subr.mxu0 0.0
        %9631 = vmatpush1.msra.mxu0 0.0
        %9632 = vmatprep.subr.mxu0 0.0
        %9633 = vmatpush1.msra.mxu0 0.0
        %9634 = vmatprep.subr.mxu0 0.0
        %9635 = vmatpush1.msra.mxu0 0.0
        %9636 = vmatprep.subr.mxu0 0.0
        %9637 = vmatpush1.msra.mxu0 0.0
        %9638 = vmatprep.subr.mxu0 0.0
        %9639 = vmatpush1.msra.mxu0 0.0
        %9640 = vmatprep.subr.mxu0 0.0
        %9641 = vmatpush1.msra.mxu0 0.0
        %9642 = vmatprep.subr.mxu0 0.0
        %9643 = vmatpush1.msra.mxu0 0.0
        %9644 = vmatprep.subr.mxu0 0.0
        %9645 = vmatpush1.msra.mxu0 0.0
        %9646 = vmatprep.subr.mxu0 0.0
        %9647 = vmatpush1.msra.mxu0 0.0
        %9648 = vmatprep.subr.mxu0 0.0
        %9649 = vmatpush1.msra.mxu0 0.0
        %9650 = vmatprep.subr.mxu0 0.0
        %9651 = vmatpush1.msra.mxu0 0.0
        %9652 = vmatprep.subr.mxu0 0.0
        %9653 = vmatpush1.msra.mxu0 0.0
        %9654 = vmatprep.subr.mxu0 0.0
        %9655 = vmatpush1.msra.mxu0 0.0
        %9656 = vmatprep.subr.mxu0 0.0
        %9657 = vmatpush1.msra.mxu0 0.0
        %9658 = vmatprep.subr.mxu0 0.0
        %9659 = vmatpush1.msra.mxu0 0.0
        %9660 = vmatprep.subr.mxu0 0.0
        %9661 = vmatpush1.msra.mxu0 0.0
        %9662 = vmatprep.subr.mxu0 0.0
        %9663 = vmatpush1.msra.mxu0 0.0
        %9664 = vmatprep.subr.mxu0 0.0
        %9665 = vmatpush1.msra.mxu0 0.0
        %9666 = vmatprep.subr.mxu0 0.0
        %9667 = vmatpush1.msra.mxu0 0.0
        %9668 = vmatprep.subr.mxu0 0.0
        %9669 = vmatpush1.msra.mxu0 0.0
        %9670 = vmatprep.subr.mxu0 0.0
        %9671 = vmatpush1.msra.mxu0 0.0
        %9672 = vmatprep.subr.mxu0 0.0
        %9673 = vmatpush1.msra.mxu0 0.0
        %9674 = vmatprep.subr.mxu0 0.0
        %9675 = vmatpush1.msra.mxu0 0.0
        %9676 = vmatprep.subr.mxu0 0.0
        %9677 = vmatpush1.msra.mxu0 0.0
        %9678 = vmatprep.subr.mxu0 0.0
        %9679 = vmatpush1.msra.mxu0 0.0
        %9680 = vmatprep.subr.mxu0 0.0
        %9681 = vmatpush1.msra.mxu0 0.0
        %9682 = vmatprep.subr.mxu0 0.0
        %9683 = vmatpush1.msra.mxu0 0.0
        %9684 = vmatprep.subr.mxu0 0.0
        %9685 = vmatpush1.msra.mxu0 0.0
        %9686 = vmatprep.subr.mxu0 0.0
        %9687 = vmatpush1.msra.mxu0 0.0
        %9688 = vmatprep.mubr.f32.mxu0 0.0
        %v9689 = vand.u32 %v295, 4294901760
        %v9690 = vsub.f32 %v295, %v9689
        %9691 = vmatmul.mubr.f32.gmra.mrb[0].mxu0 %v9690
        %v9692 = vpop.f32.mrb[0].mxu0
        %v9693 = vadd.f32 %v9611, %v9692
        %v9694 = vpop.f32.mrb[0].mxu0
        %9695 = vmatprep.mubr.f32.mxu0 0.0
        %v9696 = vand.u32 %v298, 4294901760
        %v9697 = vsub.f32 %v298, %v9696
        %9698 = vmatmul.mubr.f32.gmra.mrb[0].mxu0 %v9697
        %v9699 = vpop.f32.mrb[0].mxu0
        %v9700 = vadd.f32 %v9617, %v9699
        %v9701 = vpop.f32.mrb[0].mxu0
        %9702 = vdwg.mxu0
        %9703 = vmatprep.subr.mxu0 0.0
        %v9704 = vand.u32 %v9444, 4294901760
        %9705 = vmatpush1.msra.mxu0 %v9704
        %9706 = vmatprep.subr.mxu0 0.0
        %v9707 = vand.u32 %v9445, 4294901760
        %9708 = vmatpush1.msra.mxu0 %v9707
        %9709 = vmatprep.subr.mxu0 0.0
        %9710 = vmatpush1.msra.mxu0 0.0
        %9711 = vmatprep.subr.mxu0 0.0
        %9712 = vmatpush1.msra.mxu0 0.0
        %9713 = vmatprep.subr.mxu0 0.0
        %9714 = vmatpush1.msra.mxu0 0.0
        %9715 = vmatprep.subr.mxu0 0.0
        %9716 = vmatpush1.msra.mxu0 0.0
        %9717 = vmatprep.subr.mxu0 0.0
        %9718 = vmatpush1.msra.mxu0 0.0
        %9719 = vmatprep.subr.mxu0 0.0
        %9720 = vmatpush1.msra.mxu0 0.0
        %9721 = vmatprep.subr.mxu0 0.0
        %9722 = vmatpush1.msra.mxu0 0.0
        %9723 = vmatprep.subr.mxu0 0.0
        %9724 = vmatpush1.msra.mxu0 0.0
        %9725 = vmatprep.subr.mxu0 0.0
        %9726 = vmatpush1.msra.mxu0 0.0
        %9727 = vmatprep.subr.mxu0 0.0
        %9728 = vmatpush1.msra.mxu0 0.0
        %9729 = vmatprep.subr.mxu0 0.0
        %9730 = vmatpush1.msra.mxu0 0.0
        %9731 = vmatprep.subr.mxu0 0.0
        %9732 = vmatpush1.msra.mxu0 0.0
        %9733 = vmatprep.subr.mxu0 0.0
        %9734 = vmatpush1.msra.mxu0 0.0
        %9735 = vmatprep.subr.mxu0 0.0
        %9736 = vmatpush1.msra.mxu0 0.0
        %9737 = vmatprep.subr.mxu0 0.0
        %9738 = vmatpush1.msra.mxu0 0.0
        %9739 = vmatprep.subr.mxu0 0.0
        %9740 = vmatpush1.msra.mxu0 0.0
        %9741 = vmatprep.subr.mxu0 0.0
        %9742 = vmatpush1.msra.mxu0 0.0
        %9743 = vmatprep.subr.mxu0 0.0
        %9744 = vmatpush1.msra.mxu0 0.0
        %9745 = vmatprep.subr.mxu0 0.0
        %9746 = vmatpush1.msra.mxu0 0.0
        %9747 = vmatprep.subr.mxu0 0.0
        %9748 = vmatpush1.msra.mxu0 0.0
        %9749 = vmatprep.subr.mxu0 0.0
        %9750 = vmatpush1.msra.mxu0 0.0
        %9751 = vmatprep.subr.mxu0 0.0
        %9752 = vmatpush1.msra.mxu0 0.0
        %9753 = vmatprep.subr.mxu0 0.0
        %9754 = vmatpush1.msra.mxu0 0.0
        %9755 = vmatprep.subr.mxu0 0.0
        %9756 = vmatpush1.msra.mxu0 0.0
        %9757 = vmatprep.subr.mxu0 0.0
        %9758 = vmatpush1.msra.mxu0 0.0
        %9759 = vmatprep.subr.mxu0 0.0
        %9760 = vmatpush1.msra.mxu0 0.0
        %9761 = vmatprep.subr.mxu0 0.0
        %9762 = vmatpush1.msra.mxu0 0.0
        %9763 = vmatprep.subr.mxu0 0.0
        %9764 = vmatpush1.msra.mxu0 0.0
        %9765 = vmatprep.subr.mxu0 0.0
        %9766 = vmatpush1.msra.mxu0 0.0
        %9767 = vmatprep.subr.mxu0 0.0
        %9768 = vmatpush1.msra.mxu0 0.0
        %9769 = vmatprep.mubr.f32.mxu0 0.0
        %v9770 = vand.u32 %v295, 4294901760
        %v9771 = vsub.f32 %v295, %v9770
        %v9772 = vand.u32 %v9771, 4294901760
        %9773 = vmatmul.mubr.f32.gmra.mrb[0].mxu0 %v9772
        %v9774 = vpop.f32.mrb[0].mxu0
        %v9775 = vadd.f32 %v9693, %v9774
        %v9776 = vpop.f32.mrb[0].mxu0
        %9777 = vmatprep.mubr.f32.mxu0 0.0
        %v9778 = vand.u32 %v298, 4294901760
        %v9779 = vsub.f32 %v298, %v9778
        %v9780 = vand.u32 %v9779, 4294901760
        %9781 = vmatmul.mubr.f32.gmra.mrb[0].mxu0 %v9780
        %v9782 = vpop.f32.mrb[0].mxu0
        %v9783 = vadd.f32 %v9700, %v9782
        %v9784 = vpop.f32.mrb[0].mxu0
        %9785 = vdwg.mxu0
        %9786 = vmatprep.subr.mxu0 0.0
        %v9787 = vand.u32 %v9444, 4294901760
        %v9788 = vsub.f32 %v9444, %v9787
        %v9789 = vand.u32 %v9788, 4294901760
        %9790 = vmatpush1.msra.mxu0 %v9789
        %9791 = vmatprep.subr.mxu0 0.0
        %v9792 = vand.u32 %v9445, 4294901760
        %v9793 = vsub.f32 %v9445, %v9792
        %v9794 = vand.u32 %v9793, 4294901760
        %9795 = vmatpush1.msra.mxu0 %v9794
        %9796 = vmatprep.subr.mxu0 0.0
        %9797 = vmatpush1.msra.mxu0 0.0
        %9798 = vmatprep.subr.mxu0 0.0
        %9799 = vmatpush1.msra.mxu0 0.0
        %9800 = vmatprep.subr.mxu0 0.0
        %9801 = vmatpush1.msra.mxu0 0.0
        %9802 = vmatprep.subr.mxu0 0.0
        %9803 = vmatpush1.msra.mxu0 0.0
        %9804 = vmatprep.subr.mxu0 0.0
        %9805 = vmatpush1.msra.mxu0 0.0
        %9806 = vmatprep.subr.mxu0 0.0
        %9807 = vmatpush1.msra.mxu0 0.0
        %9808 = vmatprep.subr.mxu0 0.0
        %9809 = vmatpush1.msra.mxu0 0.0
        %9810 = vmatprep.subr.mxu0 0.0
        %9811 = vmatpush1.msra.mxu0 0.0
        %9812 = vmatprep.subr.mxu0 0.0
        %9813 = vmatpush1.msra.mxu0 0.0
        %9814 = vmatprep.subr.mxu0 0.0
        %9815 = vmatpush1.msra.mxu0 0.0
        %9816 = vmatprep.subr.mxu0 0.0
        %9817 = vmatpush1.msra.mxu0 0.0
        %9818 = vmatprep.subr.mxu0 0.0
        %9819 = vmatpush1.msra.mxu0 0.0
        %9820 = vmatprep.subr.mxu0 0.0
        %9821 = vmatpush1.msra.mxu0 0.0
        %9822 = vmatprep.subr.mxu0 0.0
        %9823 = vmatpush1.msra.mxu0 0.0
        %9824 = vmatprep.subr.mxu0 0.0
        %9825 = vmatpush1.msra.mxu0 0.0
        %9826 = vmatprep.subr.mxu0 0.0
        %9827 = vmatpush1.msra.mxu0 0.0
        %9828 = vmatprep.subr.mxu0 0.0
        %9829 = vmatpush1.msra.mxu0 0.0
        %9830 = vmatprep.subr.mxu0 0.0
        %9831 = vmatpush1.msra.mxu0 0.0
        %9832 = vmatprep.subr.mxu0 0.0
        %9833 = vmatpush1.msra.mxu0 0.0
        %9834 = vmatprep.subr.mxu0 0.0
        %9835 = vmatpush1.msra.mxu0 0.0
        %9836 = vmatprep.subr.mxu0 0.0
        %9837 = vmatpush1.msra.mxu0 0.0
        %9838 = vmatprep.subr.mxu0 0.0
        %9839 = vmatpush1.msra.mxu0 0.0
        %9840 = vmatprep.subr.mxu0 0.0
        %9841 = vmatpush1.msra.mxu0 0.0
        %9842 = vmatprep.subr.mxu0 0.0
        %9843 = vmatpush1.msra.mxu0 0.0
        %9844 = vmatprep.subr.mxu0 0.0
        %9845 = vmatpush1.msra.mxu0 0.0
        %9846 = vmatprep.subr.mxu0 0.0
        %9847 = vmatpush1.msra.mxu0 0.0
        %9848 = vmatprep.subr.mxu0 0.0
        %9849 = vmatpush1.msra.mxu0 0.0
        %9850 = vmatprep.subr.mxu0 0.0
        %9851 = vmatpush1.msra.mxu0 0.0
        %9852 = vmatprep.subr.mxu0 0.0
        %9853 = vmatpush1.msra.mxu0 0.0
        %9854 = vmatprep.subr.mxu0 0.0
        %9855 = vmatpush1.msra.mxu0 0.0
        %9856 = vmatprep.mubr.f32.mxu0 0.0
        %v9857 = vand.u32 %v295, 4294901760
        %9858 = vmatmul.mubr.f32.gmra.mrb[0].mxu0 %v9857
        %v9859 = vpop.f32.mrb[0].mxu0
        %v9860 = vadd.f32 %v9775, %v9859
        %v9861 = vpop.f32.mrb[0].mxu0
        %9862 = vmatprep.mubr.f32.mxu0 0.0
        %v9863 = vand.u32 %v298, 4294901760
        %9864 = vmatmul.mubr.f32.gmra.mrb[0].mxu0 %v9863
        %v9865 = vpop.f32.mrb[0].mxu0
        %v9866 = vadd.f32 %v9783, %v9865
        %v9867 = vpop.f32.mrb[0].mxu0
        %9868 = vdwg.mxu0
        %9869 = vmatprep.subr.mxu0 0.0
        %v9870 = vand.u32 %v9444, 4294901760
        %9871 = vmatpush1.msra.mxu0 %v9870
        %9872 = vmatprep.subr.mxu0 0.0
        %v9873 = vand.u32 %v9445, 4294901760
        %9874 = vmatpush1.msra.mxu0 %v9873
        %9875 = vmatprep.subr.mxu0 0.0
        %9876 = vmatpush1.msra.mxu0 0.0
        %9877 = vmatprep.subr.mxu0 0.0
        %9878 = vmatpush1.msra.mxu0 0.0
        %9879 = vmatprep.subr.mxu0 0.0
        %9880 = vmatpush1.msra.mxu0 0.0
        %9881 = vmatprep.subr.mxu0 0.0
        %9882 = vmatpush1.msra.mxu0 0.0
        %9883 = vmatprep.subr.mxu0 0.0
        %9884 = vmatpush1.msra.mxu0 0.0
        %9885 = vmatprep.subr.mxu0 0.0
        %9886 = vmatpush1.msra.mxu0 0.0
        %9887 = vmatprep.subr.mxu0 0.0
        %9888 = vmatpush1.msra.mxu0 0.0
        %9889 = vmatprep.subr.mxu0 0.0
        %9890 = vmatpush1.msra.mxu0 0.0
        %9891 = vmatprep.subr.mxu0 0.0
        %9892 = vmatpush1.msra.mxu0 0.0
        %9893 = vmatprep.subr.mxu0 0.0
        %9894 = vmatpush1.msra.mxu0 0.0
        %9895 = vmatprep.subr.mxu0 0.0
        %9896 = vmatpush1.msra.mxu0 0.0
        %9897 = vmatprep.subr.mxu0 0.0
        %9898 = vmatpush1.msra.mxu0 0.0
        %9899 = vmatprep.subr.mxu0 0.0
        %9900 = vmatpush1.msra.mxu0 0.0
        %9901 = vmatprep.subr.mxu0 0.0
        %9902 = vmatpush1.msra.mxu0 0.0
        %9903 = vmatprep.subr.mxu0 0.0
        %9904 = vmatpush1.msra.mxu0 0.0
        %9905 = vmatprep.subr.mxu0 0.0
        %9906 = vmatpush1.msra.mxu0 0.0
        %9907 = vmatprep.subr.mxu0 0.0
        %9908 = vmatpush1.msra.mxu0 0.0
        %9909 = vmatprep.subr.mxu0 0.0
        %9910 = vmatpush1.msra.mxu0 0.0
        %9911 = vmatprep.subr.mxu0 0.0
        %9912 = vmatpush1.msra.mxu0 0.0
        %9913 = vmatprep.subr.mxu0 0.0
        %9914 = vmatpush1.msra.mxu0 0.0
        %9915 = vmatprep.subr.mxu0 0.0
        %9916 = vmatpush1.msra.mxu0 0.0
        %9917 = vmatprep.subr.mxu0 0.0
        %9918 = vmatpush1.msra.mxu0 0.0
        %9919 = vmatprep.subr.mxu0 0.0
        %9920 = vmatpush1.msra.mxu0 0.0
        %9921 = vmatprep.subr.mxu0 0.0
        %9922 = vmatpush1.msra.mxu0 0.0
        %9923 = vmatprep.subr.mxu0 0.0
        %9924 = vmatpush1.msra.mxu0 0.0
        %9925 = vmatprep.subr.mxu0 0.0
        %9926 = vmatpush1.msra.mxu0 0.0
        %9927 = vmatprep.subr.mxu0 0.0
        %9928 = vmatpush1.msra.mxu0 0.0
        %9929 = vmatprep.subr.mxu0 0.0
        %9930 = vmatpush1.msra.mxu0 0.0
        %9931 = vmatprep.subr.mxu0 0.0
        %9932 = vmatpush1.msra.mxu0 0.0
        %9933 = vmatprep.subr.mxu0 0.0
        %9934 = vmatpush1.msra.mxu0 0.0
        %9935 = vmatprep.mubr.f32.mxu0 0.0
        %v9936 = vand.u32 %v295, 4294901760
        %9937 = vmatmul.mubr.f32.gmra.mrb[0].mxu0 %v9936
        %v9938 = vpop.f32.mrb[0].mxu0
        %v9939 = vadd.f32 %v9860, %v9938
        %v9940 = vpop.f32.mrb[0].mxu0
        %9941 = vmatprep.mubr.f32.mxu0 0.0
        %v9942 = vand.u32 %v298, 4294901760
        %9943 = vmatmul.mubr.f32.gmra.mrb[0].mxu0 %v9942
        %v9944 = vpop.f32.mrb[0].mxu0
        %v9945 = vadd.f32 %v9866, %v9944
        %v9946 = vpop.f32.mrb[0].mxu0
        %9947 = vdwg.mxu0
        %v9949 = vsel %vm293, %v9939, 0
        %v9952 = vsel %vm293, %v9945, 0
        %9954 = vmatprep.subr.mxu0 0.0
        %v9955 = vand.u32 %v287, 4294901760
        %9956 = vmatpush1.msra.mxu0 %v9955
        %9957 = vmatprep.subr.mxu0 0.0
        %v9958 = vand.u32 %v288, 4294901760
        %9959 = vmatpush1.msra.mxu0 %v9958
        %9960 = vmatprep.subr.mxu0 0.0
        %9961 = vmatpush1.msra.mxu0 0.0
        %9962 = vmatprep.subr.mxu0 0.0
        %9963 = vmatpush1.msra.mxu0 0.0
        %9964 = vmatprep.subr.mxu0 0.0
        %9965 = vmatpush1.msra.mxu0 0.0
        %9966 = vmatprep.subr.mxu0 0.0
        %9967 = vmatpush1.msra.mxu0 0.0
        %9968 = vmatprep.subr.mxu0 0.0
        %9969 = vmatpush1.msra.mxu0 0.0
        %9970 = vmatprep.subr.mxu0 0.0
        %9971 = vmatpush1.msra.mxu0 0.0
        %9972 = vmatprep.subr.mxu0 0.0
        %9973 = vmatpush1.msra.mxu0 0.0
        %9974 = vmatprep.subr.mxu0 0.0
        %9975 = vmatpush1.msra.mxu0 0.0
        %9976 = vmatprep.subr.mxu0 0.0
        %9977 = vmatpush1.msra.mxu0 0.0
        %9978 = vmatprep.subr.mxu0 0.0
        %9979 = vmatpush1.msra.mxu0 0.0
        %9980 = vmatprep.subr.mxu0 0.0
        %9981 = vmatpush1.msra.mxu0 0.0
        %9982 = vmatprep.subr.mxu0 0.0
        %9983 = vmatpush1.msra.mxu0 0.0
        %9984 = vmatprep.subr.mxu0 0.0
        %9985 = vmatpush1.msra.mxu0 0.0
        %9986 = vmatprep.subr.mxu0 0.0
        %9987 = vmatpush1.msra.mxu0 0.0
        %9988 = vmatprep.subr.mxu0 0.0
        %9989 = vmatpush1.msra.mxu0 0.0
        %9990 = vmatprep.subr.mxu0 0.0
        %9991 = vmatpush1.msra.mxu0 0.0
        %9992 = vmatprep.subr.mxu0 0.0
        %9993 = vmatpush1.msra.mxu0 0.0
        %9994 = vmatprep.subr.mxu0 0.0
        %9995 = vmatpush1.msra.mxu0 0.0
        %9996 = vmatprep.subr.mxu0 0.0
        %9997 = vmatpush1.msra.mxu0 0.0
        %9998 = vmatprep.subr.mxu0 0.0
        %9999 = vmatpush1.msra.mxu0 0.0
        %10000 = vmatprep.subr.mxu0 0.0
        %10001 = vmatpush1.msra.mxu0 0.0
        %10002 = vmatprep.subr.mxu0 0.0
        %10003 = vmatpush1.msra.mxu0 0.0
        %10004 = vmatprep.subr.mxu0 0.0
        %10005 = vmatpush1.msra.mxu0 0.0
        %10006 = vmatprep.subr.mxu0 0.0
        %10007 = vmatpush1.msra.mxu0 0.0
        %10008 = vmatprep.subr.mxu0 0.0
        %10009 = vmatpush1.msra.mxu0 0.0
        %10010 = vmatprep.subr.mxu0 0.0
        %10011 = vmatpush1.msra.mxu0 0.0
        %10012 = vmatprep.subr.mxu0 0.0
        %10013 = vmatpush1.msra.mxu0 0.0
        %10014 = vmatprep.subr.mxu0 0.0
        %10015 = vmatpush1.msra.mxu0 0.0
        %10016 = vmatprep.subr.mxu0 0.0
        %10017 = vmatpush1.msra.mxu0 0.0
        %10018 = vmatprep.subr.mxu0 0.0
        %10019 = vmatpush1.msra.mxu0 0.0
        %10020 = vmatprep.mubr.f32.mxu0 0.0
        %v10021 = vand.u32 %v9949, 4294901760
        %v10022 = vsub.f32 %v9949, %v10021
        %v10023 = vand.u32 %v10022, 4294901760
        %v10024 = vsub.f32 %v10022, %v10023
        %v10025 = vand.u32 %v10024, 4294901760
        %10026 = vmatmul.mubr.f32.gmra.mrb[0].mxu0 %v10025
        %v10027 = vpop.f32.mrb[0].mxu0
        %v10028 = vadd.f32 0.0, %v10027
        %v10029 = vpop.f32.mrb[0].mxu0
        %10030 = vmatprep.mubr.f32.mxu0 0.0
        %v10031 = vand.u32 %v9952, 4294901760
        %v10032 = vsub.f32 %v9952, %v10031
        %v10033 = vand.u32 %v10032, 4294901760
        %v10034 = vsub.f32 %v10032, %v10033
        %v10035 = vand.u32 %v10034, 4294901760
        %10036 = vmatmul.mubr.f32.gmra.mrb[0].mxu0 %v10035
        %v10037 = vpop.f32.mrb[0].mxu0
        %v10038 = vadd.f32 0.0, %v10037
        %v10039 = vpop.f32.mrb[0].mxu0
        %10040 = vdwg.mxu0
        %10041 = vmatprep.subr.mxu0 0.0
        %v10042 = vand.u32 %v287, 4294901760
        %v10043 = vsub.f32 %v287, %v10042
        %v10044 = vand.u32 %v10043, 4294901760
        %v10045 = vsub.f32 %v10043, %v10044
        %v10046 = vand.u32 %v10045, 4294901760
        %10047 = vmatpush1.msra.mxu0 %v10046
        %10048 = vmatprep.subr.mxu0 0.0
        %v10049 = vand.u32 %v288, 4294901760
        %v10050 = vsub.f32 %v288, %v10049
        %v10051 = vand.u32 %v10050, 4294901760
        %v10052 = vsub.f32 %v10050, %v10051
        %v10053 = vand.u32 %v10052, 4294901760
        %10054 = vmatpush1.msra.mxu0 %v10053
        %10055 = vmatprep.subr.mxu0 0.0
        %10056 = vmatpush1.msra.mxu0 0.0
        %10057 = vmatprep.subr.mxu0 0.0
        %10058 = vmatpush1.msra.mxu0 0.0
        %10059 = vmatprep.subr.mxu0 0.0
        %10060 = vmatpush1.msra.mxu0 0.0
        %10061 = vmatprep.subr.mxu0 0.0
        %10062 = vmatpush1.msra.mxu0 0.0
        %10063 = vmatprep.subr.mxu0 0.0
        %10064 = vmatpush1.msra.mxu0 0.0
        %10065 = vmatprep.subr.mxu0 0.0
        %10066 = vmatpush1.msra.mxu0 0.0
        %10067 = vmatprep.subr.mxu0 0.0
        %10068 = vmatpush1.msra.mxu0 0.0
        %10069 = vmatprep.subr.mxu0 0.0
        %10070 = vmatpush1.msra.mxu0 0.0
        %10071 = vmatprep.subr.mxu0 0.0
        %10072 = vmatpush1.msra.mxu0 0.0
        %10073 = vmatprep.subr.mxu0 0.0
        %10074 = vmatpush1.msra.mxu0 0.0
        %10075 = vmatprep.subr.mxu0 0.0
        %10076 = vmatpush1.msra.mxu0 0.0
        %10077 = vmatprep.subr.mxu0 0.0
        %10078 = vmatpush1.msra.mxu0 0.0
        %10079 = vmatprep.subr.mxu0 0.0
        %10080 = vmatpush1.msra.mxu0 0.0
        %10081 = vmatprep.subr.mxu0 0.0
        %10082 = vmatpush1.msra.mxu0 0.0
        %10083 = vmatprep.subr.mxu0 0.0
        %10084 = vmatpush1.msra.mxu0 0.0
        %10085 = vmatprep.subr.mxu0 0.0
        %10086 = vmatpush1.msra.mxu0 0.0
        %10087 = vmatprep.subr.mxu0 0.0
        %10088 = vmatpush1.msra.mxu0 0.0
        %10089 = vmatprep.subr.mxu0 0.0
        %10090 = vmatpush1.msra.mxu0 0.0
        %10091 = vmatprep.subr.mxu0 0.0
        %10092 = vmatpush1.msra.mxu0 0.0
        %10093 = vmatprep.subr.mxu0 0.0
        %10094 = vmatpush1.msra.mxu0 0.0
        %10095 = vmatprep.subr.mxu0 0.0
        %10096 = vmatpush1.msra.mxu0 0.0
        %10097 = vmatprep.subr.mxu0 0.0
        %10098 = vmatpush1.msra.mxu0 0.0
        %10099 = vmatprep.subr.mxu0 0.0
        %10100 = vmatpush1.msra.mxu0 0.0
        %10101 = vmatprep.subr.mxu0 0.0
        %10102 = vmatpush1.msra.mxu0 0.0
        %10103 = vmatprep.subr.mxu0 0.0
        %10104 = vmatpush1.msra.mxu0 0.0
        %10105 = vmatprep.subr.mxu0 0.0
        %10106 = vmatpush1.msra.mxu0 0.0
        %10107 = vmatprep.subr.mxu0 0.0
        %10108 = vmatpush1.msra.mxu0 0.0
        %10109 = vmatprep.subr.mxu0 0.0
        %10110 = vmatpush1.msra.mxu0 0.0
        %10111 = vmatprep.subr.mxu0 0.0
        %10112 = vmatpush1.msra.mxu0 0.0
        %10113 = vmatprep.subr.mxu0 0.0
        %10114 = vmatpush1.msra.mxu0 0.0
        %10115 = vmatprep.mubr.f32.mxu0 0.0
        %v10116 = vand.u32 %v9949, 4294901760
        %10117 = vmatmul.mubr.f32.gmra.mrb[0].mxu0 %v10116
        %v10118 = vpop.f32.mrb[0].mxu0
        %v10119 = vadd.f32 %v10028, %v10118
        %v10120 = vpop.f32.mrb[0].mxu0
        %10121 = vmatprep.mubr.f32.mxu0 0.0
        %v10122 = vand.u32 %v9952, 4294901760
        %10123 = vmatmul.mubr.f32.gmra.mrb[0].mxu0 %v10122
        %v10124 = vpop.f32.mrb[0].mxu0
        %v10125 = vadd.f32 %v10038, %v10124
        %v10126 = vpop.f32.mrb[0].mxu0
        %10127 = vdwg.mxu0
        %10128 = vmatprep.subr.mxu0 0.0
        %v10129 = vand.u32 %v287, 4294901760
        %v10130 = vsub.f32 %v287, %v10129
        %10131 = vmatpush1.msra.mxu0 %v10130
        %10132 = vmatprep.subr.mxu0 0.0
        %v10133 = vand.u32 %v288, 4294901760
        %v10134 = vsub.f32 %v288, %v10133
        %10135 = vmatpush1.msra.mxu0 %v10134
        %10136 = vmatprep.subr.mxu0 0.0
        %10137 = vmatpush1.msra.mxu0 0.0
        %10138 = vmatprep.subr.mxu0 0.0
        %10139 = vmatpush1.msra.mxu0 0.0
        %10140 = vmatprep.subr.mxu0 0.0
        %10141 = vmatpush1.msra.mxu0 0.0
        %10142 = vmatprep.subr.mxu0 0.0
        %10143 = vmatpush1.msra.mxu0 0.0
        %10144 = vmatprep.subr.mxu0 0.0
        %10145 = vmatpush1.msra.mxu0 0.0
        %10146 = vmatprep.subr.mxu0 0.0
        %10147 = vmatpush1.msra.mxu0 0.0
        %10148 = vmatprep.subr.mxu0 0.0
        %10149 = vmatpush1.msra.mxu0 0.0
        %10150 = vmatprep.subr.mxu0 0.0
        %10151 = vmatpush1.msra.mxu0 0.0
        %10152 = vmatprep.subr.mxu0 0.0
        %10153 = vmatpush1.msra.mxu0 0.0
        %10154 = vmatprep.subr.mxu0 0.0
        %10155 = vmatpush1.msra.mxu0 0.0
        %10156 = vmatprep.subr.mxu0 0.0
        %10157 = vmatpush1.msra.mxu0 0.0
        %10158 = vmatprep.subr.mxu0 0.0
        %10159 = vmatpush1.msra.mxu0 0.0
        %10160 = vmatprep.subr.mxu0 0.0
        %10161 = vmatpush1.msra.mxu0 0.0
        %10162 = vmatprep.subr.mxu0 0.0
        %10163 = vmatpush1.msra.mxu0 0.0
        %10164 = vmatprep.subr.mxu0 0.0
        %10165 = vmatpush1.msra.mxu0 0.0
        %10166 = vmatprep.subr.mxu0 0.0
        %10167 = vmatpush1.msra.mxu0 0.0
        %10168 = vmatprep.subr.mxu0 0.0
        %10169 = vmatpush1.msra.mxu0 0.0
        %10170 = vmatprep.subr.mxu0 0.0
        %10171 = vmatpush1.msra.mxu0 0.0
        %10172 = vmatprep.subr.mxu0 0.0
        %10173 = vmatpush1.msra.mxu0 0.0
        %10174 = vmatprep.subr.mxu0 0.0
        %10175 = vmatpush1.msra.mxu0 0.0
        %10176 = vmatprep.subr.mxu0 0.0
        %10177 = vmatpush1.msra.mxu0 0.0
        %10178 = vmatprep.subr.mxu0 0.0
        %10179 = vmatpush1.msra.mxu0 0.0
        %10180 = vmatprep.subr.mxu0 0.0
        %10181 = vmatpush1.msra.mxu0 0.0
        %10182 = vmatprep.subr.mxu0 0.0
        %10183 = vmatpush1.msra.mxu0 0.0
        %10184 = vmatprep.subr.mxu0 0.0
        %10185 = vmatpush1.msra.mxu0 0.0
        %10186 = vmatprep.subr.mxu0 0.0
        %10187 = vmatpush1.msra.mxu0 0.0
        %10188 = vmatprep.subr.mxu0 0.0
        %10189 = vmatpush1.msra.mxu0 0.0
        %10190 = vmatprep.subr.mxu0 0.0
        %10191 = vmatpush1.msra.mxu0 0.0
        %10192 = vmatprep.subr.mxu0 0.0
        %10193 = vmatpush1.msra.mxu0 0.0
        %10194 = vmatprep.subr.mxu0 0.0
        %10195 = vmatpush1.msra.mxu0 0.0
        %10196 = vmatprep.mubr.f32.mxu0 0.0
        %v10197 = vand.u32 %v9949, 4294901760
        %v10198 = vsub.f32 %v9949, %v10197
        %10199 = vmatmul.mubr.f32.gmra.mrb[0].mxu0 %v10198
        %v10200 = vpop.f32.mrb[0].mxu0
        %v10201 = vadd.f32 %v10119, %v10200
        %v10202 = vpop.f32.mrb[0].mxu0
        %10203 = vmatprep.mubr.f32.mxu0 0.0
        %v10204 = vand.u32 %v9952, 4294901760
        %v10205 = vsub.f32 %v9952, %v10204
        %10206 = vmatmul.mubr.f32.gmra.mrb[0].mxu0 %v10205
        %v10207 = vpop.f32.mrb[0].mxu0
        %v10208 = vadd.f32 %v10125, %v10207
        %v10209 = vpop.f32.mrb[0].mxu0
        %10210 = vdwg.mxu0
        %10211 = vmatprep.subr.mxu0 0.0
        %v10212 = vand.u32 %v287, 4294901760
        %10213 = vmatpush1.msra.mxu0 %v10212
        %10214 = vmatprep.subr.mxu0 0.0
        %v10215 = vand.u32 %v288, 4294901760
        %10216 = vmatpush1.msra.mxu0 %v10215
        %10217 = vmatprep.subr.mxu0 0.0
        %10218 = vmatpush1.msra.mxu0 0.0
        %10219 = vmatprep.subr.mxu0 0.0
        %10220 = vmatpush1.msra.mxu0 0.0
        %10221 = vmatprep.subr.mxu0 0.0
        %10222 = vmatpush1.msra.mxu0 0.0
        %10223 = vmatprep.subr.mxu0 0.0
        %10224 = vmatpush1.msra.mxu0 0.0
        %10225 = vmatprep.subr.mxu0 0.0
        %10226 = vmatpush1.msra.mxu0 0.0
        %10227 = vmatprep.subr.mxu0 0.0
        %10228 = vmatpush1.msra.mxu0 0.0
        %10229 = vmatprep.subr.mxu0 0.0
        %10230 = vmatpush1.msra.mxu0 0.0
        %10231 = vmatprep.subr.mxu0 0.0
        %10232 = vmatpush1.msra.mxu0 0.0
        %10233 = vmatprep.subr.mxu0 0.0
        %10234 = vmatpush1.msra.mxu0 0.0
        %10235 = vmatprep.subr.mxu0 0.0
        %10236 = vmatpush1.msra.mxu0 0.0
        %10237 = vmatprep.subr.mxu0 0.0
        %10238 = vmatpush1.msra.mxu0 0.0
        %10239 = vmatprep.subr.mxu0 0.0
        %10240 = vmatpush1.msra.mxu0 0.0
        %10241 = vmatprep.subr.mxu0 0.0
        %10242 = vmatpush1.msra.mxu0 0.0
        %10243 = vmatprep.subr.mxu0 0.0
        %10244 = vmatpush1.msra.mxu0 0.0
        %10245 = vmatprep.subr.mxu0 0.0
        %10246 = vmatpush1.msra.mxu0 0.0
        %10247 = vmatprep.subr.mxu0 0.0
        %10248 = vmatpush1.msra.mxu0 0.0
        %10249 = vmatprep.subr.mxu0 0.0
        %10250 = vmatpush1.msra.mxu0 0.0
        %10251 = vmatprep.subr.mxu0 0.0
        %10252 = vmatpush1.msra.mxu0 0.0
        %10253 = vmatprep.subr.mxu0 0.0
        %10254 = vmatpush1.msra.mxu0 0.0
        %10255 = vmatprep.subr.mxu0 0.0
        %10256 = vmatpush1.msra.mxu0 0.0
        %10257 = vmatprep.subr.mxu0 0.0
        %10258 = vmatpush1.msra.mxu0 0.0
        %10259 = vmatprep.subr.mxu0 0.0
        %10260 = vmatpush1.msra.mxu0 0.0
        %10261 = vmatprep.subr.mxu0 0.0
        %10262 = vmatpush1.msra.mxu0 0.0
        %10263 = vmatprep.subr.mxu0 0.0
        %10264 = vmatpush1.msra.mxu0 0.0
        %10265 = vmatprep.subr.mxu0 0.0
        %10266 = vmatpush1.msra.mxu0 0.0
        %10267 = vmatprep.subr.mxu0 0.0
        %10268 = vmatpush1.msra.mxu0 0.0
        %10269 = vmatprep.subr.mxu0 0.0
        %10270 = vmatpush1.msra.mxu0 0.0
        %10271 = vmatprep.subr.mxu0 0.0
        %10272 = vmatpush1.msra.mxu0 0.0
        %10273 = vmatprep.subr.mxu0 0.0
        %10274 = vmatpush1.msra.mxu0 0.0
        %10275 = vmatprep.subr.mxu0 0.0
        %10276 = vmatpush1.msra.mxu0 0.0
        %10277 = vmatprep.mubr.f32.mxu0 0.0
        %v10278 = vand.u32 %v9949, 4294901760
        %v10279 = vsub.f32 %v9949, %v10278
        %v10280 = vand.u32 %v10279, 4294901760
        %10281 = vmatmul.mubr.f32.gmra.mrb[0].mxu0 %v10280
        %v10282 = vpop.f32.mrb[0].mxu0
        %v10283 = vadd.f32 %v10201, %v10282
        %v10284 = vpop.f32.mrb[0].mxu0
        %10285 = vmatprep.mubr.f32.mxu0 0.0
        %v10286 = vand.u32 %v9952, 4294901760
        %v10287 = vsub.f32 %v9952, %v10286
        %v10288 = vand.u32 %v10287, 4294901760
        %10289 = vmatmul.mubr.f32.gmra.mrb[0].mxu0 %v10288
        %v10290 = vpop.f32.mrb[0].mxu0
        %v10291 = vadd.f32 %v10208, %v10290
        %v10292 = vpop.f32.mrb[0].mxu0
        %10293 = vdwg.mxu0
        %10294 = vmatprep.subr.mxu0 0.0
        %v10295 = vand.u32 %v287, 4294901760
        %v10296 = vsub.f32 %v287, %v10295
        %v10297 = vand.u32 %v10296, 4294901760
        %10298 = vmatpush1.msra.mxu0 %v10297
        %10299 = vmatprep.subr.mxu0 0.0
        %v10300 = vand.u32 %v288, 4294901760
        %v10301 = vsub.f32 %v288, %v10300
        %v10302 = vand.u32 %v10301, 4294901760
        %10303 = vmatpush1.msra.mxu0 %v10302
        %10304 = vmatprep.subr.mxu0 0.0
        %10305 = vmatpush1.msra.mxu0 0.0
        %10306 = vmatprep.subr.mxu0 0.0
        %10307 = vmatpush1.msra.mxu0 0.0
        %10308 = vmatprep.subr.mxu0 0.0
        %10309 = vmatpush1.msra.mxu0 0.0
        %10310 = vmatprep.subr.mxu0 0.0
        %10311 = vmatpush1.msra.mxu0 0.0
        %10312 = vmatprep.subr.mxu0 0.0
        %10313 = vmatpush1.msra.mxu0 0.0
        %10314 = vmatprep.subr.mxu0 0.0
        %10315 = vmatpush1.msra.mxu0 0.0
        %10316 = vmatprep.subr.mxu0 0.0
        %10317 = vmatpush1.msra.mxu0 0.0
        %10318 = vmatprep.subr.mxu0 0.0
        %10319 = vmatpush1.msra.mxu0 0.0
        %10320 = vmatprep.subr.mxu0 0.0
        %10321 = vmatpush1.msra.mxu0 0.0
        %10322 = vmatprep.subr.mxu0 0.0
        %10323 = vmatpush1.msra.mxu0 0.0
        %10324 = vmatprep.subr.mxu0 0.0
        %10325 = vmatpush1.msra.mxu0 0.0
        %10326 = vmatprep.subr.mxu0 0.0
        %10327 = vmatpush1.msra.mxu0 0.0
        %10328 = vmatprep.subr.mxu0 0.0
        %10329 = vmatpush1.msra.mxu0 0.0
        %10330 = vmatprep.subr.mxu0 0.0
        %10331 = vmatpush1.msra.mxu0 0.0
        %10332 = vmatprep.subr.mxu0 0.0
        %10333 = vmatpush1.msra.mxu0 0.0
        %10334 = vmatprep.subr.mxu0 0.0
        %10335 = vmatpush1.msra.mxu0 0.0
        %10336 = vmatprep.subr.mxu0 0.0
        %10337 = vmatpush1.msra.mxu0 0.0
        %10338 = vmatprep.subr.mxu0 0.0
        %10339 = vmatpush1.msra.mxu0 0.0
        %10340 = vmatprep.subr.mxu0 0.0
        %10341 = vmatpush1.msra.mxu0 0.0
        %10342 = vmatprep.subr.mxu0 0.0
        %10343 = vmatpush1.msra.mxu0 0.0
        %10344 = vmatprep.subr.mxu0 0.0
        %10345 = vmatpush1.msra.mxu0 0.0
        %10346 = vmatprep.subr.mxu0 0.0
        %10347 = vmatpush1.msra.mxu0 0.0
        %10348 = vmatprep.subr.mxu0 0.0
        %10349 = vmatpush1.msra.mxu0 0.0
        %10350 = vmatprep.subr.mxu0 0.0
        %10351 = vmatpush1.msra.mxu0 0.0
        %10352 = vmatprep.subr.mxu0 0.0
        %10353 = vmatpush1.msra.mxu0 0.0
        %10354 = vmatprep.subr.mxu0 0.0
        %10355 = vmatpush1.msra.mxu0 0.0
        %10356 = vmatprep.subr.mxu0 0.0
        %10357 = vmatpush1.msra.mxu0 0.0
        %10358 = vmatprep.subr.mxu0 0.0
        %10359 = vmatpush1.msra.mxu0 0.0
        %10360 = vmatprep.subr.mxu0 0.0
        %10361 = vmatpush1.msra.mxu0 0.0
        %10362 = vmatprep.subr.mxu0 0.0
        %10363 = vmatpush1.msra.mxu0 0.0
        %10364 = vmatprep.mubr.f32.mxu0 0.0
        %v10365 = vand.u32 %v9949, 4294901760
        %10366 = vmatmul.mubr.f32.gmra.mrb[0].mxu0 %v10365
        %v10367 = vpop.f32.mrb[0].mxu0
        %v10368 = vadd.f32 %v10283, %v10367
        %v10369 = vpop.f32.mrb[0].mxu0
        %10370 = vmatprep.mubr.f32.mxu0 0.0
        %v10371 = vand.u32 %v9952, 4294901760
        %10372 = vmatmul.mubr.f32.gmra.mrb[0].mxu0 %v10371
        %v10373 = vpop.f32.mrb[0].mxu0
        %v10374 = vadd.f32 %v10291, %v10373
        %v10375 = vpop.f32.mrb[0].mxu0
        %10376 = vdwg.mxu0
        %10377 = vmatprep.subr.mxu0 0.0
        %v10378 = vand.u32 %v287, 4294901760
        %10379 = vmatpush1.msra.mxu0 %v10378
        %10380 = vmatprep.subr.mxu0 0.0
        %v10381 = vand.u32 %v288, 4294901760
        %10382 = vmatpush1.msra.mxu0 %v10381
        %10383 = vmatprep.subr.mxu0 0.0
        %10384 = vmatpush1.msra.mxu0 0.0
        %10385 = vmatprep.subr.mxu0 0.0
        %10386 = vmatpush1.msra.mxu0 0.0
        %10387 = vmatprep.subr.mxu0 0.0
        %10388 = vmatpush1.msra.mxu0 0.0
        %10389 = vmatprep.subr.mxu0 0.0
        %10390 = vmatpush1.msra.mxu0 0.0
        %10391 = vmatprep.subr.mxu0 0.0
        %10392 = vmatpush1.msra.mxu0 0.0
        %10393 = vmatprep.subr.mxu0 0.0
        %10394 = vmatpush1.msra.mxu0 0.0
        %10395 = vmatprep.subr.mxu0 0.0
        %10396 = vmatpush1.msra.mxu0 0.0
        %10397 = vmatprep.subr.mxu0 0.0
        %10398 = vmatpush1.msra.mxu0 0.0
        %10399 = vmatprep.subr.mxu0 0.0
        %10400 = vmatpush1.msra.mxu0 0.0
        %10401 = vmatprep.subr.mxu0 0.0
        %10402 = vmatpush1.msra.mxu0 0.0
        %10403 = vmatprep.subr.mxu0 0.0
        %10404 = vmatpush1.msra.mxu0 0.0
        %10405 = vmatprep.subr.mxu0 0.0
        %10406 = vmatpush1.msra.mxu0 0.0
        %10407 = vmatprep.subr.mxu0 0.0
        %10408 = vmatpush1.msra.mxu0 0.0
        %10409 = vmatprep.subr.mxu0 0.0
        %10410 = vmatpush1.msra.mxu0 0.0
        %10411 = vmatprep.subr.mxu0 0.0
        %10412 = vmatpush1.msra.mxu0 0.0
        %10413 = vmatprep.subr.mxu0 0.0
        %10414 = vmatpush1.msra.mxu0 0.0
        %10415 = vmatprep.subr.mxu0 0.0
        %10416 = vmatpush1.msra.mxu0 0.0
        %10417 = vmatprep.subr.mxu0 0.0
        %10418 = vmatpush1.msra.mxu0 0.0
        %10419 = vmatprep.subr.mxu0 0.0
        %10420 = vmatpush1.msra.mxu0 0.0
        %10421 = vmatprep.subr.mxu0 0.0
        %10422 = vmatpush1.msra.mxu0 0.0
        %10423 = vmatprep.subr.mxu0 0.0
        %10424 = vmatpush1.msra.mxu0 0.0
        %10425 = vmatprep.subr.mxu0 0.0
        %10426 = vmatpush1.msra.mxu0 0.0
        %10427 = vmatprep.subr.mxu0 0.0
        %10428 = vmatpush1.msra.mxu0 0.0
        %10429 = vmatprep.subr.mxu0 0.0
        %10430 = vmatpush1.msra.mxu0 0.0
        %10431 = vmatprep.subr.mxu0 0.0
        %10432 = vmatpush1.msra.mxu0 0.0
        %10433 = vmatprep.subr.mxu0 0.0
        %10434 = vmatpush1.msra.mxu0 0.0
        %10435 = vmatprep.subr.mxu0 0.0
        %10436 = vmatpush1.msra.mxu0 0.0
        %10437 = vmatprep.subr.mxu0 0.0
        %10438 = vmatpush1.msra.mxu0 0.0
        %10439 = vmatprep.subr.mxu0 0.0
        %10440 = vmatpush1.msra.mxu0 0.0
        %10441 = vmatprep.subr.mxu0 0.0
        %10442 = vmatpush1.msra.mxu0 0.0
        %10443 = vmatprep.mubr.f32.mxu0 0.0
        %v10444 = vand.u32 %v9949, 4294901760
        %10445 = vmatmul.mubr.f32.gmra.mrb[0].mxu0 %v10444
        %v10446 = vpop.f32.mrb[0].mxu0
        %v10447 = vadd.f32 %v10368, %v10446
        %v10448 = vpop.f32.mrb[0].mxu0
        %10449 = vmatprep.mubr.f32.mxu0 0.0
        %v10450 = vand.u32 %v9952, 4294901760
        %10451 = vmatmul.mubr.f32.gmra.mrb[0].mxu0 %v10450
        %v10452 = vpop.f32.mrb[0].mxu0
        %v10453 = vadd.f32 %v10374, %v10452
        %v10454 = vpop.f32.mrb[0].mxu0
        %10455 = vdwg.mxu0
        %v10456 = vmul.f32 %v6401, %v6401
        %v10457 = vmul.f32 %v6407, %v6407
        %v10458 = vmul.f32 %v7411, %v7411
        %v10459 = vmul.f32 %v7417, %v7417
        %v10460 = vmul.f32 %v6401, %v7411
        %v10461 = vmul.f32 %v6407, %v7417
        %v10462 = vsub.f32 %v8423, %v10456
        %v10463 = vsub.f32 %v8429, %v10457
        %v10464 = vsub.f32 %v9435, %v10458
        %v10465 = vsub.f32 %v9441, %v10459
        %v10466 = vsub.f32 %v10447, %v10460
        %v10467 = vsub.f32 %v10453, %v10461
        %v10468 = vmul.f32 %v10460, 2.0
        %v10469 = vmul.f32 %v10461, 2.0
        %v10470 = vadd.f32 %v10468, 0.0001
        %v10471 = vadd.f32 %v10469, 0.0001
        %v10472 = vmul.f32 %v10466, 2.0
        %v10473 = vmul.f32 %v10467, 2.0
        %v10474 = vadd.f32 %v10472, 0.0009
        %v10475 = vadd.f32 %v10473, 0.0009
        %v10476 = vmul.f32 %v10470, %v10474
        %v10477 = vmul.f32 %v10471, %v10475
        %v10478 = vadd.f32 %v10456, %v10458
        %v10479 = vadd.f32 %v10457, %v10459
        %v10480 = vadd.f32 %v10478, 0.0001
        %v10481 = vadd.f32 %v10479, 0.0001
        %v10482 = vadd.f32 %v10462, %v10464
        %v10483 = vadd.f32 %v10463, %v10465
        %v10484 = vadd.f32 %v10482, 0.0009
        %v10485 = vadd.f32 %v10483, 0.0009
        %v10486 = vmul.f32 %v10480, %v10484
        %v10487 = vmul.f32 %v10481, %v10485
        %v10488 = vrcp.pop %v10486
        %v10489 = vmul.f32 %v10476, %v10488
        %v10490 = vrcp.pop %v10487
        %v10491 = vmul.f32 %v10477, %v10490
        %s10492 = scalar_lea.vmem %s281, 16 [#allocation9]
        %10493 = vst.msk [vmem:[%s10492] sm:$0xff] %vm293, %v10489
        %10494 = vst.msk [vmem:[%s10492 + $0x8] sm:$0xff] %vm293, %v10491
        %s10495 = sand.u32 %s122, 1
        %s10496 = scalar_lea.sflag [#allocation4], %s10495
        %s10497 = sand.u32 %s122, 1
        %s10498 = smul.addr %s10497, 32
        %s10499 = scalar_lea.vmem [#allocation9], %s10498
        // Predicated region
        $region53: #{tpu_custom_call.1} parent=35 // pred_check
          %p10500 = pneg %p132
        $region54: #{tpu_custom_call.1} parent=35 // pred_check_branch
          %10502 = sbr.rel (%p10500) target = $region56
        $region55: #{tpu_custom_call.1} parent=35 // pred_region
          %s10503 = smul.u32 2, %s20
          %s10505 = ssub.s32 512, 512
          %10506 = vsyncadd %s10496, %s10505
          %s10507 = smul.addr %s10503, 2
          %s10508 = smul.addr %s10507, 128
          %s10509 = scalar_lea.hbm %s4, %s10508
          %s10510 = sshll.u32 %s10499, 4
          %s10511 = int_to_ptr.vmem [resolvable:$true] %s10510
          %10516 = dma.vmem_to_hbm [thread:$0]  %s10511, 512, %s10509, %s10496, 128, 128, 8
        $region56: #{tpu_custom_call.1} parent=35 // pred_fallthru
          _
      $region36: #{tpu_custom_call.1} parent=5 // pred_fallthru
        _
      %p10517 = scmp.le.s32.totalorder 2, %s15
      // Predicated region
      $region57: #{tpu_custom_call.1} parent=5 // pred_check
        %p10518 = pneg %p10517
      $region58: #{tpu_custom_call.1} parent=5 // pred_check_branch
        %10520 = sbr.rel (%p10518) target = $region60
      $region59: #{tpu_custom_call.1} parent=5 // pred_region
        %s10521 = ssub.s32 %s15, 2
        // Predicated region
        $region61: #{tpu_custom_call.1} parent=59 // pred_check
          %p10522 = pneg %p138
        $region62: #{tpu_custom_call.1} parent=59 // pred_check_branch
          %10524 = sbr.rel (%p10522) target = $region64
        $region63: #{tpu_custom_call.1} parent=59 // pred_region
          %s10525 = sand.u32 %s123, 1
          %s10526 = scalar_lea.sflag [#allocation4], %s10525
          %s10527 = sand.u32 %s123, 1
          %s10528 = smul.addr %s10527, 32
          %s10529 = scalar_lea.vmem [#allocation9], %s10528
          %10530 = dma.done %s10526, 512
        $region64: #{tpu_custom_call.1} parent=59 // pred_fallthru
          _
      $region60: #{tpu_custom_call.1} parent=5 // pred_fallthru
        _
    $region6: #{tpu_custom_call.1} parent=1 // loop_footer
      %s19 = sadd.s32 1, %s15
    $region7: #{tpu_custom_call.1} parent=1 // loop_footer_branch
      %14 = sbr.rel target = $region3
    $region8: #{tpu_custom_call.1} parent=1 // loop_exit
      _
    %10531 = vsyncpa [#allocation3], 1
    %s10532 = scalar_lea.sflag [#allocation3], 1
    %10533 = vsyncpa %s10532, 1
    %10534 = vsyncpa [#allocation6], 1
    %10535 = vsyncpa [#allocation4], 1
    %s10536 = scalar_lea.sflag [#allocation4], 1
    %10537 = vsyncpa %s10536, 1

</llo_original>
